<compile_context>
chip_gen: v7x
topology: tpu7x:2x2x1
jax: 0.10.0
libtpu: 0.0.40
codegen_flags: <defaults>
</compile_context>

<pallas_src>
import functools

import jax
import jax.numpy as jnp
from jax.experimental import pallas as pl
from jax.experimental.pallas import tpu as pltpu

BN_EPS = 1e-5
CP = 128  # resident channel padding (lane width)


def _round_up(x, m):
    return (x + m - 1) // m * m


def _row_tiling(m):
    """Pick (padded_rows, row_tile, grid_steps) for an (M,K)@(K,N) call."""
    if m < 64:
        return m, m, 1                              # single full block, no padding
    mt = min(512, _round_up((m + 1) // 2, 8))       # >=2 steps -> v7x dual-TC
    mp = _round_up(m, mt)
    return mp, mt, mp // mt


# ---------------------------------------------------------------------------
# Pallas kernels
# ---------------------------------------------------------------------------
def _conv_kernel(x_ref, w_ref, b_ref, o_ref, *, relu):
    y = jnp.dot(x_ref[...], w_ref[...], preferred_element_type=jnp.float32)
    y = y + b_ref[...]
    if relu:
        y = jnp.maximum(y, 0.0)
    o_ref[...] = y.astype(o_ref.dtype)


def _conv_res_kernel(x_ref, w_ref, b_ref, r_ref, o_ref, *, relu):
    y = jnp.dot(x_ref[...], w_ref[...], preferred_element_type=jnp.float32)
    y = y + b_ref[...] + r_ref[...].astype(jnp.float32)
    if relu:
        y = jnp.maximum(y, 0.0)
    o_ref[...] = y.astype(o_ref.dtype)


def _conv_down_kernel(x_ref, w1_ref, b1_ref, wd_ref, bd_ref, o1_ref, od_ref, *, c_off):
    # conv1 (3x3, folded BN) + ReLU, and the 1x1 stride-s downsample conv fused
    # into the same call: the downsample only needs the centre tap of the 3x3
    # im2col patches, i.e. a 128-lane slice of the already-loaded tile.
    x = x_ref[...]
    y1 = jnp.dot(x, w1_ref[...], preferred_element_type=jnp.float32) + b1_ref[...]
    o1_ref[...] = jnp.maximum(y1, 0.0).astype(o1_ref.dtype)
    cd = wd_ref.shape[0]
    xc = x[:, c_off:c_off + cd]
    yd = jnp.dot(xc, wd_ref[...], preferred_element_type=jnp.float32) + bd_ref[...]
    od_ref[...] = yd.astype(od_ref.dtype)


def _maxpool_kernel(xe_ref, xo_ref, o_ref):
    # xe_ref: (1, Hp, Wo+1, C) even columns of zero-padded input
    # xo_ref: (1, Hp, Wo,   C) odd  columns
    # o_ref : (1, Ho, Wo,   C)
    _, ho, wo, _ = o_ref.shape
    for oy in range(ho):
        m = None
        for dy in range(3):
            r = 2 * oy + dy
            e = xe_ref[0, r].astype(jnp.float32)        # (Wo+1, C)
            o = xo_ref[0, r].astype(jnp.float32)        # (Wo,   C)
            t = jnp.maximum(jnp.maximum(e[:wo], e[1:]), o)
            m = t if m is None else jnp.maximum(m, t)
        o_ref[0, oy] = m.astype(o_ref.dtype)


def _pool_fc_kernel(x_ref, w_ref, b_ref, o_ref):
    # global average pool over the spatial axis fused with the FC layer
    pooled = jnp.mean(x_ref[...].astype(jnp.float32), axis=1)       # (N, C)
    o_ref[...] = jnp.dot(pooled, w_ref[...],
                         preferred_element_type=jnp.float32) + b_ref[...]


# ---------------------------------------------------------------------------
# Pallas wrappers
# ---------------------------------------------------------------------------
def matmul_fused(x, w, shift, residual=None, relu=True, out_dtype=jnp.bfloat16):
    """bf16 (M,K)@(K,N) with f32 accumulation, +shift [+residual] [+ReLU]."""
    m, k = x.shape
    n = w.shape[1]
    mp, mt, steps = _row_tiling(m)
    if mp != m:
        x = jnp.pad(x, ((0, mp - m), (0, 0)))
        if residual is not None:
            residual = jnp.pad(residual, ((0, mp - m), (0, 0)))
    in_specs = [pl.BlockSpec((mt, k), lambda i: (i, 0)),
                pl.BlockSpec((k, n), lambda i: (0, 0)),
                pl.BlockSpec((1, n), lambda i: (0, 0))]
    args = [x, w, shift]
    if residual is None:
        kernel = functools.partial(_conv_kernel, relu=relu)
    else:
        in_specs.append(pl.BlockSpec((mt, n), lambda i: (i, 0)))
        args.append(residual)
        kernel = functools.partial(_conv_res_kernel, relu=relu)
    out = pl.pallas_call(
        kernel,
        out_shape=jax.ShapeDtypeStruct((mp, n), out_dtype),
        grid=(steps,),
        in_specs=in_specs,
        out_specs=pl.BlockSpec((mt, n), lambda i: (i, 0)),
        compiler_params=pltpu.CompilerParams(dimension_semantics=("parallel",)),
    )(*args)
    return out[:m] if mp != m else out


def matmul_conv_and_downsample(x, w1, b1, wd, bd, c_off):
    """conv1 (3x3 + BN + ReLU) and the 1x1 downsample conv in one Pallas call."""
    m, k = x.shape
    n = w1.shape[1]
    mp, mt, steps = _row_tiling(m)
    if mp != m:
        x = jnp.pad(x, ((0, mp - m), (0, 0)))
    out1, iden = pl.pallas_call(
        functools.partial(_conv_down_kernel, c_off=c_off),
        out_shape=(jax.ShapeDtypeStruct((mp, n), jnp.bfloat16),
                   jax.ShapeDtypeStruct((mp, n), jnp.bfloat16)),
        grid=(steps,),
        in_specs=[pl.BlockSpec((mt, k), lambda i: (i, 0)),
                  pl.BlockSpec((k, n), lambda i: (0, 0)),
                  pl.BlockSpec((1, n), lambda i: (0, 0)),
                  pl.BlockSpec((wd.shape[0], n), lambda i: (0, 0)),
                  pl.BlockSpec((1, n), lambda i: (0, 0))],
        out_specs=(pl.BlockSpec((mt, n), lambda i: (i, 0)),
                   pl.BlockSpec((mt, n), lambda i: (i, 0))),
        compiler_params=pltpu.CompilerParams(dimension_semantics=("parallel",)),
    )(x, w1, b1, wd, bd)
    if mp != m:
        out1, iden = out1[:m], iden[:m]
    return out1, iden


def maxpool_3x3_s2_p1(x):
    """MaxPool2d(3, stride=2, padding=1) on NHWC. Input is post-ReLU (>= 0),
    so zero padding is exact (no -inf sentinel)."""
    n, h, w, c = x.shape
    ho = (h - 1) // 2 + 1
    wo = (w - 1) // 2 + 1
    xp = jnp.pad(x, ((0, 0), (1, 1), (1, 1), (0, 0)))
    hp = h + 2
    xe = xp[:, :, 0:2 * wo + 1:2, :]        # even columns: (n, hp, wo+1, c)
    xo = xp[:, :, 1:2 * wo:2, :]            # odd  columns: (n, hp, wo,   c)
    return pl.pallas_call(
        _maxpool_kernel,
        out_shape=jax.ShapeDtypeStruct((n, ho, wo, c), x.dtype),
        grid=(n,),
        in_specs=[pl.BlockSpec((1, hp, wo + 1, c), lambda i: (i, 0, 0, 0)),
                  pl.BlockSpec((1, hp, wo, c), lambda i: (i, 0, 0, 0))],
        out_specs=pl.BlockSpec((1, ho, wo, c), lambda i: (i, 0, 0, 0)),
        compiler_params=pltpu.CompilerParams(dimension_semantics=("parallel",)),
    )(xe, xo)


def global_pool_fc(x, fc_w, fc_b):
    n, h, w, c = x.shape
    xr = x.reshape(n, h * w, c)
    return pl.pallas_call(
        _pool_fc_kernel,
        out_shape=jax.ShapeDtypeStruct((n, fc_w.shape[1]), jnp.float32),
    )(xr, fc_w, fc_b)


# ---------------------------------------------------------------------------
# Conv = im2col (host layout glue) + fused Pallas matmul
# ---------------------------------------------------------------------------
def _im2col(x, kh, kw, stride, pad):
    # TODO(synk): patch formation is host-side (XLA) layout glue; fusing it into
    # the conv kernel via halo'd VMEM tiles would cut activation HBM traffic by
    # ~kh*kw and is the remaining bandwidth optimization.
    n, h, w, c = x.shape
    ho = (h + 2 * pad - kh) // stride + 1
    wo = (w + 2 * pad - kw) // stride + 1
    xp = jnp.pad(x, ((0, 0), (pad, pad), (pad, pad), (0, 0)))
    cols = [xp[:, dy:dy + stride * (ho - 1) + 1:stride,
               dx:dx + stride * (wo - 1) + 1:stride, :]
            for dy in range(kh) for dx in range(kw)]
    patches = jnp.stack(cols, axis=3)                 # (n, ho, wo, kh*kw, c)
    return patches.reshape(n * ho * wo, kh * kw * c), ho, wo


# ---------------------------------------------------------------------------
# Parameters (deterministic synthetic init, mirroring the module's __init__)
# ---------------------------------------------------------------------------
def _kaiming_conv(key, cout, cin, kh, kw):
    fan_out = cout * kh * kw  # mode='fan_out', nonlinearity='relu'
    std = (2.0 / fan_out) ** 0.5
    return std * jax.random.normal(key, (cout, cin, kh, kw), jnp.float32)


def _bn_params(c):
    # weight=1, bias=0, running_mean=0, running_var=1 (inference statistics)
    return (jnp.ones(c), jnp.zeros(c), jnp.zeros(c), jnp.ones(c))


def _make_block(key, inplanes, planes, stride):
    k1, k2, k3 = jax.random.split(key, 3)
    p = {"conv1": _kaiming_conv(k1, planes, inplanes, 3, 3),
         "bn1": _bn_params(planes),
         "conv2": _kaiming_conv(k2, planes, planes, 3, 3),
         "bn2": _bn_params(planes),
         "stride": stride}
    if stride != 1 or inplanes != planes:  # block.expansion == 1
        p["down_conv"] = _kaiming_conv(k3, planes, inplanes, 1, 1)
        p["down_bn"] = _bn_params(planes)
    return p


def make_ada_resnet_params(key, layers=(1, 1, 1, 1), kernel_num=64, num_classes=10):
    keys = jax.random.split(key, 2 + sum(layers))
    params = {"conv1": _kaiming_conv(keys[0], 64, 3, 7, 7), "bn1": _bn_params(64)}
    inplanes = 64
    ki = 1
    for li, (nblocks, stride) in enumerate(zip(layers, (1, 2, 2, 2)), start=1):
        blocks = []
        for b in range(nblocks):
            blocks.append(_make_block(keys[ki], inplanes, kernel_num,
                                      stride if b == 0 else 1))
            ki += 1
            inplanes = kernel_num  # kernel_num * block.expansion
        params[f"layer{li}"] = blocks
    wkey, bkey = jax.random.split(keys[ki])
    bound = 1.0 / (kernel_num ** 0.5)
    params["fc_w"] = jax.random.uniform(wkey, (kernel_num, num_classes),
                                        jnp.float32, -bound, bound)
    params["fc_b"] = jax.random.uniform(bkey, (num_classes,),
                                        jnp.float32, -bound, bound)
    return params


# ---------------------------------------------------------------------------
# One-time parameter folding: BN -> weights, matmul layout, bf16, lane padding
# ---------------------------------------------------------------------------
def _fold_conv(w, bn, cin_pad, cout_pad):
    gamma, beta, mean, var = bn
    scale = gamma / jnp.sqrt(var + BN_EPS)
    shift = beta - mean * scale
    cout, cin, kh, kw = w.shape
    wf = jnp.transpose(w * scale[:, None, None, None], (2, 3, 1, 0))  # (kh,kw,cin,cout)
    wp = jnp.zeros((kh, kw, cin_pad, cout_pad), jnp.float32)
    wp = wp.at[:, :, :cin, :cout].set(wf)
    w_mat = wp.reshape(kh * kw * cin_pad, cout_pad).astype(jnp.bfloat16)
    b = jnp.zeros((1, cout_pad), jnp.float32).at[0, :cout].set(shift)
    return w_mat, b


def fold_params(params):
    fp = {}
    fp["stem_w"], fp["stem_b"] = _fold_conv(params["conv1"], params["bn1"], 3, CP)
    for li in range(1, 5):
        blocks = []
        for p in params[f"layer{li}"]:
            fb = {"stride": p["stride"]}
            fb["w1"], fb["b1"] = _fold_conv(p["conv1"], p["bn1"], CP, CP)
            fb["w2"], fb["b2"] = _fold_conv(p["conv2"], p["bn2"], CP, CP)
            if "down_conv" in p:
                fb["wd"], fb["bd"] = _fold_conv(p["down_conv"], p["down_bn"], CP, CP)
            blocks.append(fb)
        fp[f"layer{li}"] = blocks
    kn, nc = params["fc_w"].shape
    ncp = _round_up(nc, 128)
    fp["fc_w"] = jnp.zeros((CP, ncp), jnp.float32).at[:kn, :nc].set(params["fc_w"])
    fp["fc_b"] = jnp.zeros((1, ncp), jnp.float32).at[0, :nc].set(params["fc_b"])
    fp["num_classes"] = nc
    return fp


# ---------------------------------------------------------------------------
# Forward pass (Ada_ResNet.forward, kernel_selection path)
# ---------------------------------------------------------------------------
def _block_forward(p, x, kernel_selection=None):
    # TODO(synk): the Ada block's per-kernel gating via `kernel_selection` is not
    # defined in the provided source; the (B, 2, K) slice is accepted but unused
    # and a standard BasicBlock residual path is computed instead.
    n, h, w, c = x.shape
    cols, ho, wo = _im2col(x, 3, 3, p["stride"], 1)
    if "wd" in p:
        out1, identity = matmul_conv_and_downsample(
            cols, p["w1"], p["b1"], p["wd"], p["bd"], c_off=4 * c)
    else:  # no downsample -> stride == 1, identity is the block input
        out1 = matmul_fused(cols, p["w1"], p["b1"], relu=True)
        identity = x.reshape(n * ho * wo, c)
    cols2, _, _ = _im2col(out1.reshape(n, ho, wo, c), 3, 3, 1, 1)
    out = matmul_fused(cols2, p["w2"], p["b2"], residual=identity, relu=True)
    return out.reshape(n, ho, wo, c)


def ada_resnet_forward(fp, x_nchw, kernel_selection=None):
    x = jnp.transpose(x_nchw, (0, 2, 3, 1)).astype(jnp.bfloat16)  # NCHW -> NHWC
    n = x.shape[0]
    # stem: conv7x7/s2 (+folded BN) + ReLU, then maxpool3x3/s2
    cols, ho, wo = _im2col(x, 7, 7, 2, 3)
    x = matmul_fused(cols, fp["stem_w"], fp["stem_b"], relu=True)
    x = x.reshape(n, ho, wo, CP)
    x = maxpool_3x3_s2_p1(x)
    gate = 0
    for li in range(1, 5):
        for blk in fp[f"layer{li}"]:
            sel = None if kernel_selection is None else kernel_selection[:, gate:gate + 2, :]
            x = _block_forward(blk, x, sel)
            gate += 2
    logits = global_pool_fc(x, fp["fc_w"], fp["fc_b"])       # fused avgpool + FC
    return logits[:, :fp["num_classes"]]


if __name__ == "__main__":
    key = jax.random.PRNGKey(0)
    pkey, xkey, skey = jax.random.split(key, 3)

    layers = (1, 1, 1, 1)
    kernel_num = 64
    num_classes = 10

    params = make_ada_resnet_params(pkey, layers, kernel_num, num_classes)
    folded = fold_params(params)

    x = jax.random.normal(xkey, (2, 3, 32, 32), jnp.float32)          # NCHW input
    n_gates = 2 * sum(layers)
    kernel_selection = jax.random.uniform(skey, (2, n_gates, kernel_num), jnp.float32)

    fwd = jax.jit(lambda inp, sel: ada_resnet_forward(folded, inp, sel))
    out = jax.block_until_ready(fwd(x, kernel_selection))
    assert out.shape == (2, num_classes), out.shape
    print("KERNEL_OK")
</pallas_src>

<mosaic_0001>
module attributes {stable_mosaic.version = 11 : i64} {
  func.func @_conv_kernel(%arg0: i32, %arg1: memref<256x147xbf16, #tpu.memory_space<vmem>>, %arg2: memref<147x128xbf16, #tpu.memory_space<vmem>>, %arg3: memref<1x128xf32, #tpu.memory_space<vmem>>, %arg4: memref<256x128xbf16, #tpu.memory_space<vmem>>) attributes {dimension_semantics = [#tpu.dimension_semantics<parallel>], iteration_bounds = array<i64: 2>, scalar_prefetch = 0 : i64, scratch_operands = 0 : i64, tpu.core_type = #tpu.core_type<tc>, window_params = [{transform_indices = @transform_0, window_bounds = array<i64: 256, 147>}, {pipeline_mode = #tpu.pipeline_mode<synchronous>, transform_indices = @transform_1, window_bounds = array<i64: 147, 128>}, {pipeline_mode = #tpu.pipeline_mode<synchronous>, transform_indices = @transform_2, window_bounds = array<i64: 1, 128>}, {transform_indices = @transform_3, window_bounds = array<i64: 256, 128>}]} {
    %c0 = arith.constant 0 : index
    %c0_0 = arith.constant 0 : index
    %0 = vector.load %arg1[%c0, %c0_0] : memref<256x147xbf16, #tpu.memory_space<vmem>>, vector<256x147xbf16>
    %c0_1 = arith.constant 0 : index
    %c0_2 = arith.constant 0 : index
    %1 = vector.load %arg2[%c0_1, %c0_2] : memref<147x128xbf16, #tpu.memory_space<vmem>>, vector<147x128xbf16>
    %cst = arith.constant dense<0.000000e+00> : vector<256x128xf32>
    %2 = tpu.matmul %0, %1, %cst {dimension_numbers = #tpu.dot_dimension_numbers<[1], [0], [0], [1], [0, 0, 1, 1], [], []>} : vector<256x147xbf16>, vector<147x128xbf16>, vector<256x128xf32> -> vector<256x128xf32>
    %c0_3 = arith.constant 0 : index
    %c0_4 = arith.constant 0 : index
    %3 = vector.load %arg3[%c0_3, %c0_4] : memref<1x128xf32, #tpu.memory_space<vmem>>, vector<1x128xf32>
    %4 = vector.broadcast %3 : vector<1x128xf32> to vector<256x128xf32>
    %5 = arith.addf %2, %4 : vector<256x128xf32>
    %cst_5 = arith.constant 0.000000e+00 : f32
    %6 = vector.broadcast %cst_5 : f32 to vector<256x128xf32>
    %7 = arith.maximumf %5, %6 : vector<256x128xf32>
    %8 = arith.truncf %7 : vector<256x128xf32> to vector<256x128xbf16>
    %c0_6 = arith.constant 0 : index
    %c0_7 = arith.constant 0 : index
    %9 = vector.load %arg4[%c0_6, %c0_7] : memref<256x128xbf16, #tpu.memory_space<vmem>>, vector<256x128xbf16>
    tpu.vector_store %arg4[%c0_6, %c0_7], %8 {strides = array<i32>} : memref<256x128xbf16, #tpu.memory_space<vmem>>, vector<256x128xbf16>,
    return
  }
  func.func @transform_0(%arg0: i32) -> (i32, i32) {
    %c0_i32 = arith.constant 0 : i32
    %c0_i32_0 = arith.constant 0 : i32
    return %arg0, %c0_i32 : i32, i32
  }
  func.func @transform_1(%arg0: i32) -> (i32, i32) {
    %c0_i32 = arith.constant 0 : i32
    %c0_i32_0 = arith.constant 0 : i32
    %c0_i32_1 = arith.constant 0 : i32
    return %c0_i32, %c0_i32_0 : i32, i32
  }
  func.func @transform_2(%arg0: i32) -> (i32, i32) {
    %c0_i32 = arith.constant 0 : i32
    %c0_i32_0 = arith.constant 0 : i32
    %c0_i32_1 = arith.constant 0 : i32
    return %c0_i32, %c0_i32_0 : i32, i32
  }
  func.func @transform_3(%arg0: i32) -> (i32, i32) {
    %c0_i32 = arith.constant 0 : i32
    %c0_i32_0 = arith.constant 0 : i32
    return %arg0, %c0_i32 : i32, i32
  }
}

module attributes {stable_mosaic.version = 11 : i64} {
  func.func @_maxpool_kernel(%arg0: i32, %arg1: memref<1x18x9x128xbf16, #tpu.memory_space<vmem>>, %arg2: memref<1x18x8x128xbf16, #tpu.memory_space<vmem>>, %arg3: memref<1x8x8x128xbf16, #tpu.memory_space<vmem>>) attributes {dimension_semantics = [#tpu.dimension_semantics<parallel>], iteration_bounds = array<i64: 2>, scalar_prefetch = 0 : i64, scratch_operands = 0 : i64, tpu.core_type = #tpu.core_type<tc>, window_params = [{transform_indices = @transform_0, window_bounds = array<i64: 1, 18, 9, 128>}, {transform_indices = @transform_1, window_bounds = array<i64: 1, 18, 8, 128>}, {transform_indices = @transform_2, window_bounds = array<i64: 1, 8, 8, 128>}]} {
    %c0 = arith.constant 0 : index
    %c0_0 = arith.constant 0 : index
    %c0_1 = arith.constant 0 : index
    %c0_2 = arith.constant 0 : index
    %0 = vector.load %arg1[%c0, %c0_0, %c0_1, %c0_2] : memref<1x18x9x128xbf16, #tpu.memory_space<vmem>>, vector<1x1x9x128xbf16>
    %1 = vector.shape_cast %0 : vector<1x1x9x128xbf16> to vector<9x128xbf16>
    %2 = arith.extf %1 : vector<9x128xbf16> to vector<9x128xf32>
    %c0_3 = arith.constant 0 : index
    %c0_4 = arith.constant 0 : index
    %c0_5 = arith.constant 0 : index
    %c0_6 = arith.constant 0 : index
    %3 = vector.load %arg2[%c0_3, %c0_4, %c0_5, %c0_6] : memref<1x18x8x128xbf16, #tpu.memory_space<vmem>>, vector<1x1x8x128xbf16>
    %4 = vector.shape_cast %3 : vector<1x1x8x128xbf16> to vector<8x128xbf16>
    %5 = arith.extf %4 : vector<8x128xbf16> to vector<8x128xf32>
    %6 = vector.extract_strided_slice %2 {offsets = [0, 0], sizes = [8, 128], strides = [1, 1]} : vector<9x128xf32> to vector<8x128xf32>
    %7 = vector.extract_strided_slice %2 {offsets = [1, 0], sizes = [8, 128], strides = [1, 1]} : vector<9x128xf32> to vector<8x128xf32>
    %8 = arith.maximumf %6, %7 : vector<8x128xf32>
    %9 = arith.maximumf %8, %5 : vector<8x128xf32>
    %c0_7 = arith.constant 0 : index
    %c1 = arith.constant 1 : index
    %c0_8 = arith.constant 0 : index
    %c0_9 = arith.constant 0 : index
    %10 = vector.load %arg1[%c0_7, %c1, %c0_8, %c0_9] : memref<1x18x9x128xbf16, #tpu.memory_space<vmem>>, vector<1x1x9x128xbf16>
    %11 = vector.shape_cast %10 : vector<1x1x9x128xbf16> to vector<9x128xbf16>
    %12 = arith.extf %11 : vector<9x128xbf16> to vector<9x128xf32>
    %c0_10 = arith.constant 0 : index
    %c1_11 = arith.constant 1 : index
    %c0_12 = arith.constant 0 : index
    %c0_13 = arith.constant 0 : index
    %13 = vector.load %arg2[%c0_10, %c1_11, %c0_12, %c0_13] : memref<1x18x8x128xbf16, #tpu.memory_space<vmem>>, vector<1x1x8x128xbf16>
    %14 = vector.shape_cast %13 : vector<1x1x8x128xbf16> to vector<8x128xbf16>
    %15 = arith.extf %14 : vector<8x128xbf16> to vector<8x128xf32>
    %16 = vector.extract_strided_slice %12 {offsets = [0, 0], sizes = [8, 128], strides = [1, 1]} : vector<9x128xf32> to vector<8x128xf32>
    %17 = vector.extract_strided_slice %12 {offsets = [1, 0], sizes = [8, 128], strides = [1, 1]} : vector<9x128xf32> to vector<8x128xf32>
    %18 = arith.maximumf %16, %17 : vector<8x128xf32>
    %19 = arith.maximumf %18, %15 : vector<8x128xf32>
    %20 = arith.maximumf %9, %19 : vector<8x128xf32>
    %c0_14 = arith.constant 0 : index
    %c2 = arith.constant 2 : index
    %c0_15 = arith.constant 0 : index
    %c0_16 = arith.constant 0 : index
    %21 = vector.load %arg1[%c0_14, %c2, %c0_15, %c0_16] : memref<1x18x9x128xbf16, #tpu.memory_space<vmem>>, vector<1x1x9x128xbf16>
    %22 = vector.shape_cast %21 : vector<1x1x9x128xbf16> to vector<9x128xbf16>
    %23 = arith.extf %22 : vector<9x128xbf16> to vector<9x128xf32>
    %c0_17 = arith.constant 0 : index
    %c2_18 = arith.constant 2 : index
    %c0_19 = arith.constant 0 : index
    %c0_20 = arith.constant 0 : index
    %24 = vector.load %arg2[%c0_17, %c2_18, %c0_19, %c0_20] : memref<1x18x8x128xbf16, #tpu.memory_space<vmem>>, vector<1x1x8x128xbf16>
    %25 = vector.shape_cast %24 : vector<1x1x8x128xbf16> to vector<8x128xbf16>
    %26 = arith.extf %25 : vector<8x128xbf16> to vector<8x128xf32>
    %27 = vector.extract_strided_slice %23 {offsets = [0, 0], sizes = [8, 128], strides = [1, 1]} : vector<9x128xf32> to vector<8x128xf32>
    %28 = vector.extract_strided_slice %23 {offsets = [1, 0], sizes = [8, 128], strides = [1, 1]} : vector<9x128xf32> to vector<8x128xf32>
    %29 = arith.maximumf %27, %28 : vector<8x128xf32>
    %30 = arith.maximumf %29, %26 : vector<8x128xf32>
    %31 = arith.maximumf %20, %30 : vector<8x128xf32>
    %32 = arith.truncf %31 : vector<8x128xf32> to vector<8x128xbf16>
    %c0_21 = arith.constant 0 : index
    %c0_22 = arith.constant 0 : index
    %c0_23 = arith.constant 0 : index
    %c0_24 = arith.constant 0 : index
    %33 = vector.load %arg3[%c0_21, %c0_22, %c0_23, %c0_24] : memref<1x8x8x128xbf16, #tpu.memory_space<vmem>>, vector<1x1x8x128xbf16>
    %34 = vector.shape_cast %33 : vector<1x1x8x128xbf16> to vector<8x128xbf16>
    %35 = vector.shape_cast %32 : vector<8x128xbf16> to vector<1x1x8x128xbf16>
    tpu.vector_store %arg3[%c0_21, %c0_22, %c0_23, %c0_24], %35 {strides = array<i32>} : memref<1x8x8x128xbf16, #tpu.memory_space<vmem>>, vector<1x1x8x128xbf16>,
    %c0_25 = arith.constant 0 : index
    %c2_26 = arith.constant 2 : index
    %c0_27 = arith.constant 0 : index
    %c0_28 = arith.constant 0 : index
    %36 = vector.load %arg1[%c0_25, %c2_26, %c0_27, %c0_28] : memref<1x18x9x128xbf16, #tpu.memory_space<vmem>>, vector<1x1x9x128xbf16>
    %37 = vector.shape_cast %36 : vector<1x1x9x128xbf16> to vector<9x128xbf16>
    %38 = arith.extf %37 : vector<9x128xbf16> to vector<9x128xf32>
    %c0_29 = arith.constant 0 : index
    %c2_30 = arith.constant 2 : index
    %c0_31 = arith.constant 0 : index
    %c0_32 = arith.constant 0 : index
    %39 = vector.load %arg2[%c0_29, %c2_30, %c0_31, %c0_32] : memref<1x18x8x128xbf16, #tpu.memory_space<vmem>>, vector<1x1x8x128xbf16>
    %40 = vector.shape_cast %39 : vector<1x1x8x128xbf16> to vector<8x128xbf16>
    %41 = arith.extf %40 : vector<8x128xbf16> to vector<8x128xf32>
    %42 = vector.extract_strided_slice %38 {offsets = [0, 0], sizes = [8, 128], strides = [1, 1]} : vector<9x128xf32> to vector<8x128xf32>
    %43 = vector.extract_strided_slice %38 {offsets = [1, 0], sizes = [8, 128], strides = [1, 1]} : vector<9x128xf32> to vector<8x128xf32>
    %44 = arith.maximumf %42, %43 : vector<8x128xf32>
    %45 = arith.maximumf %44, %41 : vector<8x128xf32>
    %c0_33 = arith.constant 0 : index
    %c3 = arith.constant 3 : index
    %c0_34 = arith.constant 0 : index
    %c0_35 = arith.constant 0 : index
    %46 = vector.load %arg1[%c0_33, %c3, %c0_34, %c0_35] : memref<1x18x9x128xbf16, #tpu.memory_space<vmem>>, vector<1x1x9x128xbf16>
    %47 = vector.shape_cast %46 : vector<1x1x9x128xbf16> to vector<9x128xbf16>
    %48 = arith.extf %47 : vector<9x128xbf16> to vector<9x128xf32>
    %c0_36 = arith.constant 0 : index
    %c3_37 = arith.constant 3 : index
    %c0_38 = arith.constant 0 : index
    %c0_39 = arith.constant 0 : index
    %49 = vector.load %arg2[%c0_36, %c3_37, %c0_38, %c0_39] : memref<1x18x8x128xbf16, #tpu.memory_space<vmem>>, vector<1x1x8x128xbf16>
    %50 = vector.shape_cast %49 : vector<1x1x8x128xbf16> to vector<8x128xbf16>
    %51 = arith.extf %50 : vector<8x128xbf16> to vector<8x128xf32>
    %52 = vector.extract_strided_slice %48 {offsets = [0, 0], sizes = [8, 128], strides = [1, 1]} : vector<9x128xf32> to vector<8x128xf32>
    %53 = vector.extract_strided_slice %48 {offsets = [1, 0], sizes = [8, 128], strides = [1, 1]} : vector<9x128xf32> to vector<8x128xf32>
    %54 = arith.maximumf %52, %53 : vector<8x128xf32>
    %55 = arith.maximumf %54, %51 : vector<8x128xf32>
    %56 = arith.maximumf %45, %55 : vector<8x128xf32>
    %c0_40 = arith.constant 0 : index
    %c4 = arith.constant 4 : index
    %c0_41 = arith.constant 0 : index
    %c0_42 = arith.constant 0 : index
    %57 = vector.load %arg1[%c0_40, %c4, %c0_41, %c0_42] : memref<1x18x9x128xbf16, #tpu.memory_space<vmem>>, vector<1x1x9x128xbf16>
    %58 = vector.shape_cast %57 : vector<1x1x9x128xbf16> to vector<9x128xbf16>
    %59 = arith.extf %58 : vector<9x128xbf16> to vector<9x128xf32>
    %c0_43 = arith.constant 0 : index
    %c4_44 = arith.constant 4 : index
    %c0_45 = arith.constant 0 : index
    %c0_46 = arith.constant 0 : index
    %60 = vector.load %arg2[%c0_43, %c4_44, %c0_45, %c0_46] : memref<1x18x8x128xbf16, #tpu.memory_space<vmem>>, vector<1x1x8x128xbf16>
    %61 = vector.shape_cast %60 : vector<1x1x8x128xbf16> to vector<8x128xbf16>
    %62 = arith.extf %61 : vector<8x128xbf16> to vector<8x128xf32>
    %63 = vector.extract_strided_slice %59 {offsets = [0, 0], sizes = [8, 128], strides = [1, 1]} : vector<9x128xf32> to vector<8x128xf32>
    %64 = vector.extract_strided_slice %59 {offsets = [1, 0], sizes = [8, 128], strides = [1, 1]} : vector<9x128xf32> to vector<8x128xf32>
    %65 = arith.maximumf %63, %64 : vector<8x128xf32>
    %66 = arith.maximumf %65, %62 : vector<8x128xf32>
    %67 = arith.maximumf %56, %66 : vector<8x128xf32>
    %68 = arith.truncf %67 : vector<8x128xf32> to vector<8x128xbf16>
    %c0_47 = arith.constant 0 : index
    %c1_48 = arith.constant 1 : index
    %c0_49 = arith.constant 0 : index
    %c0_50 = arith.constant 0 : index
    %69 = vector.load %arg3[%c0_47, %c1_48, %c0_49, %c0_50] : memref<1x8x8x128xbf16, #tpu.memory_space<vmem>>, vector<1x1x8x128xbf16>
    %70 = vector.shape_cast %69 : vector<1x1x8x128xbf16> to vector<8x128xbf16>
    %71 = vector.shape_cast %68 : vector<8x128xbf16> to vector<1x1x8x128xbf16>
    tpu.vector_store %arg3[%c0_47, %c1_48, %c0_49, %c0_50], %71 {strides = array<i32>} : memref<1x8x8x128xbf16, #tpu.memory_space<vmem>>, vector<1x1x8x128xbf16>,
    %c0_51 = arith.constant 0 : index
    %c4_52 = arith.constant 4 : index
    %c0_53 = arith.constant 0 : index
    %c0_54 = arith.constant 0 : index
    %72 = vector.load %arg1[%c0_51, %c4_52, %c0_53, %c0_54] : memref<1x18x9x128xbf16, #tpu.memory_space<vmem>>, vector<1x1x9x128xbf16>
    %73 = vector.shape_cast %72 : vector<1x1x9x128xbf16> to vector<9x128xbf16>
    %74 = arith.extf %73 : vector<9x128xbf16> to vector<9x128xf32>
    %c0_55 = arith.constant 0 : index
    %c4_56 = arith.constant 4 : index
    %c0_57 = arith.constant 0 : index
    %c0_58 = arith.constant 0 : index
    %75 = vector.load %arg2[%c0_55, %c4_56, %c0_57, %c0_58] : memref<1x18x8x128xbf16, #tpu.memory_space<vmem>>, vector<1x1x8x128xbf16>
    %76 = vector.shape_cast %75 : vector<1x1x8x128xbf16> to vector<8x128xbf16>
    %77 = arith.extf %76 : vector<8x128xbf16> to vector<8x128xf32>
    %78 = vector.extract_strided_slice %74 {offsets = [0, 0], sizes = [8, 128], strides = [1, 1]} : vector<9x128xf32> to vector<8x128xf32>
    %79 = vector.extract_strided_slice %74 {offsets = [1, 0], sizes = [8, 128], strides = [1, 1]} : vector<9x128xf32> to vector<8x128xf32>
    %80 = arith.maximumf %78, %79 : vector<8x128xf32>
    %81 = arith.maximumf %80, %77 : vector<8x128xf32>
    %c0_59 = arith.constant 0 : index
    %c5 = arith.constant 5 : index
    %c0_60 = arith.constant 0 : index
    %c0_61 = arith.constant 0 : index
    %82 = vector.load %arg1[%c0_59, %c5, %c0_60, %c0_61] : memref<1x18x9x128xbf16, #tpu.memory_space<vmem>>, vector<1x1x9x128xbf16>
    %83 = vector.shape_cast %82 : vector<1x1x9x128xbf16> to vector<9x128xbf16>
    %84 = arith.extf %83 : vector<9x128xbf16> to vector<9x128xf32>
    %c0_62 = arith.constant 0 : index
    %c5_63 = arith.constant 5 : index
    %c0_64 = arith.constant 0 : index
    %c0_65 = arith.constant 0 : index
    %85 = vector.load %arg2[%c0_62, %c5_63, %c0_64, %c0_65] : memref<1x18x8x128xbf16, #tpu.memory_space<vmem>>, vector<1x1x8x128xbf16>
    %86 = vector.shape_cast %85 : vector<1x1x8x128xbf16> to vector<8x128xbf16>
    %87 = arith.extf %86 : vector<8x128xbf16> to vector<8x128xf32>
    %88 = vector.extract_strided_slice %84 {offsets = [0, 0], sizes = [8, 128], strides = [1, 1]} : vector<9x128xf32> to vector<8x128xf32>
    %89 = vector.extract_strided_slice %84 {offsets = [1, 0], sizes = [8, 128], strides = [1, 1]} : vector<9x128xf32> to vector<8x128xf32>
    %90 = arith.maximumf %88, %89 : vector<8x128xf32>
    %91 = arith.maximumf %90, %87 : vector<8x128xf32>
    %92 = arith.maximumf %81, %91 : vector<8x128xf32>
    %c0_66 = arith.constant 0 : index
    %c6 = arith.constant 6 : index
    %c0_67 = arith.constant 0 : index
    %c0_68 = arith.constant 0 : index
    %93 = vector.load %arg1[%c0_66, %c6, %c0_67, %c0_68] : memref<1x18x9x128xbf16, #tpu.memory_space<vmem>>, vector<1x1x9x128xbf16>
    %94 = vector.shape_cast %93 : vector<1x1x9x128xbf16> to vector<9x128xbf16>
    %95 = arith.extf %94 : vector<9x128xbf16> to vector<9x128xf32>
    %c0_69 = arith.constant 0 : index
    %c6_70 = arith.constant 6 : index
    %c0_71 = arith.constant 0 : index
    %c0_72 = arith.constant 0 : index
    %96 = vector.load %arg2[%c0_69, %c6_70, %c0_71, %c0_72] : memref<1x18x8x128xbf16, #tpu.memory_space<vmem>>, vector<1x1x8x128xbf16>
    %97 = vector.shape_cast %96 : vector<1x1x8x128xbf16> to vector<8x128xbf16>
    %98 = arith.extf %97 : vector<8x128xbf16> to vector<8x128xf32>
    %99 = vector.extract_strided_slice %95 {offsets = [0, 0], sizes = [8, 128], strides = [1, 1]} : vector<9x128xf32> to vector<8x128xf32>
    %100 = vector.extract_strided_slice %95 {offsets = [1, 0], sizes = [8, 128], strides = [1, 1]} : vector<9x128xf32> to vector<8x128xf32>
    %101 = arith.maximumf %99, %100 : vector<8x128xf32>
    %102 = arith.maximumf %101, %98 : vector<8x128xf32>
    %103 = arith.maximumf %92, %102 : vector<8x128xf32>
    %104 = arith.truncf %103 : vector<8x128xf32> to vector<8x128xbf16>
    %c0_73 = arith.constant 0 : index
    %c2_74 = arith.constant 2 : index
    %c0_75 = arith.constant 0 : index
    %c0_76 = arith.constant 0 : index
    %105 = vector.load %arg3[%c0_73, %c2_74, %c0_75, %c0_76] : memref<1x8x8x128xbf16, #tpu.memory_space<vmem>>, vector<1x1x8x128xbf16>
    %106 = vector.shape_cast %105 : vector<1x1x8x128xbf16> to vector<8x128xbf16>
    %107 = vector.shape_cast %104 : vector<8x128xbf16> to vector<1x1x8x128xbf16>
    tpu.vector_store %arg3[%c0_73, %c2_74, %c0_75, %c0_76], %107 {strides = array<i32>} : memref<1x8x8x128xbf16, #tpu.memory_space<vmem>>, vector<1x1x8x128xbf16>,
    %c0_77 = arith.constant 0 : index
    %c6_78 = arith.constant 6 : index
    %c0_79 = arith.constant 0 : index
    %c0_80 = arith.constant 0 : index
    %108 = vector.load %arg1[%c0_77, %c6_78, %c0_79, %c0_80] : memref<1x18x9x128xbf16, #tpu.memory_space<vmem>>, vector<1x1x9x128xbf16>
    %109 = vector.shape_cast %108 : vector<1x1x9x128xbf16> to vector<9x128xbf16>
    %110 = arith.extf %109 : vector<9x128xbf16> to vector<9x128xf32>
    %c0_81 = arith.constant 0 : index
    %c6_82 = arith.constant 6 : index
    %c0_83 = arith.constant 0 : index
    %c0_84 = arith.constant 0 : index
    %111 = vector.load %arg2[%c0_81, %c6_82, %c0_83, %c0_84] : memref<1x18x8x128xbf16, #tpu.memory_space<vmem>>, vector<1x1x8x128xbf16>
    %112 = vector.shape_cast %111 : vector<1x1x8x128xbf16> to vector<8x128xbf16>
    %113 = arith.extf %112 : vector<8x128xbf16> to vector<8x128xf32>
    %114 = vector.extract_strided_slice %110 {offsets = [0, 0], sizes = [8, 128], strides = [1, 1]} : vector<9x128xf32> to vector<8x128xf32>
    %115 = vector.extract_strided_slice %110 {offsets = [1, 0], sizes = [8, 128], strides = [1, 1]} : vector<9x128xf32> to vector<8x128xf32>
    %116 = arith.maximumf %114, %115 : vector<8x128xf32>
    %117 = arith.maximumf %116, %113 : vector<8x128xf32>
    %c0_85 = arith.constant 0 : index
    %c7 = arith.constant 7 : index
    %c0_86 = arith.constant 0 : index
    %c0_87 = arith.constant 0 : index
    %118 = vector.load %arg1[%c0_85, %c7, %c0_86, %c0_87] : memref<1x18x9x128xbf16, #tpu.memory_space<vmem>>, vector<1x1x9x128xbf16>
    %119 = vector.shape_cast %118 : vector<1x1x9x128xbf16> to vector<9x128xbf16>
    %120 = arith.extf %119 : vector<9x128xbf16> to vector<9x128xf32>
    %c0_88 = arith.constant 0 : index
    %c7_89 = arith.constant 7 : index
    %c0_90 = arith.constant 0 : index
    %c0_91 = arith.constant 0 : index
    %121 = vector.load %arg2[%c0_88, %c7_89, %c0_90, %c0_91] : memref<1x18x8x128xbf16, #tpu.memory_space<vmem>>, vector<1x1x8x128xbf16>
    %122 = vector.shape_cast %121 : vector<1x1x8x128xbf16> to vector<8x128xbf16>
    %123 = arith.extf %122 : vector<8x128xbf16> to vector<8x128xf32>
    %124 = vector.extract_strided_slice %120 {offsets = [0, 0], sizes = [8, 128], strides = [1, 1]} : vector<9x128xf32> to vector<8x128xf32>
    %125 = vector.extract_strided_slice %120 {offsets = [1, 0], sizes = [8, 128], strides = [1, 1]} : vector<9x128xf32> to vector<8x128xf32>
    %126 = arith.maximumf %124, %125 : vector<8x128xf32>
    %127 = arith.maximumf %126, %123 : vector<8x128xf32>
    %128 = arith.maximumf %117, %127 : vector<8x128xf32>
    %c0_92 = arith.constant 0 : index
    %c8 = arith.constant 8 : index
    %c0_93 = arith.constant 0 : index
    %c0_94 = arith.constant 0 : index
    %129 = vector.load %arg1[%c0_92, %c8, %c0_93, %c0_94] : memref<1x18x9x128xbf16, #tpu.memory_space<vmem>>, vector<1x1x9x128xbf16>
    %130 = vector.shape_cast %129 : vector<1x1x9x128xbf16> to vector<9x128xbf16>
    %131 = arith.extf %130 : vector<9x128xbf16> to vector<9x128xf32>
    %c0_95 = arith.constant 0 : index
    %c8_96 = arith.constant 8 : index
    %c0_97 = arith.constant 0 : index
    %c0_98 = arith.constant 0 : index
    %132 = vector.load %arg2[%c0_95, %c8_96, %c0_97, %c0_98] : memref<1x18x8x128xbf16, #tpu.memory_space<vmem>>, vector<1x1x8x128xbf16>
    %133 = vector.shape_cast %132 : vector<1x1x8x128xbf16> to vector<8x128xbf16>
    %134 = arith.extf %133 : vector<8x128xbf16> to vector<8x128xf32>
    %135 = vector.extract_strided_slice %131 {offsets = [0, 0], sizes = [8, 128], strides = [1, 1]} : vector<9x128xf32> to vector<8x128xf32>
    %136 = vector.extract_strided_slice %131 {offsets = [1, 0], sizes = [8, 128], strides = [1, 1]} : vector<9x128xf32> to vector<8x128xf32>
    %137 = arith.maximumf %135, %136 : vector<8x128xf32>
    %138 = arith.maximumf %137, %134 : vector<8x128xf32>
    %139 = arith.maximumf %128, %138 : vector<8x128xf32>
    %140 = arith.truncf %139 : vector<8x128xf32> to vector<8x128xbf16>
    %c0_99 = arith.constant 0 : index
    %c3_100 = arith.constant 3 : index
    %c0_101 = arith.constant 0 : index
    %c0_102 = arith.constant 0 : index
    %141 = vector.load %arg3[%c0_99, %c3_100, %c0_101, %c0_102] : memref<1x8x8x128xbf16, #tpu.memory_space<vmem>>, vector<1x1x8x128xbf16>
    %142 = vector.shape_cast %141 : vector<1x1x8x128xbf16> to vector<8x128xbf16>
    %143 = vector.shape_cast %140 : vector<8x128xbf16> to vector<1x1x8x128xbf16>
    tpu.vector_store %arg3[%c0_99, %c3_100, %c0_101, %c0_102], %143 {strides = array<i32>} : memref<1x8x8x128xbf16, #tpu.memory_space<vmem>>, vector<1x1x8x128xbf16>,
    %c0_103 = arith.constant 0 : index
    %c8_104 = arith.constant 8 : index
    %c0_105 = arith.constant 0 : index
    %c0_106 = arith.constant 0 : index
    %144 = vector.load %arg1[%c0_103, %c8_104, %c0_105, %c0_106] : memref<1x18x9x128xbf16, #tpu.memory_space<vmem>>, vector<1x1x9x128xbf16>
    %145 = vector.shape_cast %144 : vector<1x1x9x128xbf16> to vector<9x128xbf16>
    %146 = arith.extf %145 : vector<9x128xbf16> to vector<9x128xf32>
    %c0_107 = arith.constant 0 : index
    %c8_108 = arith.constant 8 : index
    %c0_109 = arith.constant 0 : index
    %c0_110 = arith.constant 0 : index
    %147 = vector.load %arg2[%c0_107, %c8_108, %c0_109, %c0_110] : memref<1x18x8x128xbf16, #tpu.memory_space<vmem>>, vector<1x1x8x128xbf16>
    %148 = vector.shape_cast %147 : vector<1x1x8x128xbf16> to vector<8x128xbf16>
    %149 = arith.extf %148 : vector<8x128xbf16> to vector<8x128xf32>
    %150 = vector.extract_strided_slice %146 {offsets = [0, 0], sizes = [8, 128], strides = [1, 1]} : vector<9x128xf32> to vector<8x128xf32>
    %151 = vector.extract_strided_slice %146 {offsets = [1, 0], sizes = [8, 128], strides = [1, 1]} : vector<9x128xf32> to vector<8x128xf32>
    %152 = arith.maximumf %150, %151 : vector<8x128xf32>
    %153 = arith.maximumf %152, %149 : vector<8x128xf32>
    %c0_111 = arith.constant 0 : index
    %c9 = arith.constant 9 : index
    %c0_112 = arith.constant 0 : index
    %c0_113 = arith.constant 0 : index
    %154 = vector.load %arg1[%c0_111, %c9, %c0_112, %c0_113] : memref<1x18x9x128xbf16, #tpu.memory_space<vmem>>, vector<1x1x9x128xbf16>
    %155 = vector.shape_cast %154 : vector<1x1x9x128xbf16> to vector<9x128xbf16>
    %156 = arith.extf %155 : vector<9x128xbf16> to vector<9x128xf32>
    %c0_114 = arith.constant 0 : index
    %c9_115 = arith.constant 9 : index
    %c0_116 = arith.constant 0 : index
    %c0_117 = arith.constant 0 : index
    %157 = vector.load %arg2[%c0_114, %c9_115, %c0_116, %c0_117] : memref<1x18x8x128xbf16, #tpu.memory_space<vmem>>, vector<1x1x8x128xbf16>
    %158 = vector.shape_cast %157 : vector<1x1x8x128xbf16> to vector<8x128xbf16>
    %159 = arith.extf %158 : vector<8x128xbf16> to vector<8x128xf32>
    %160 = vector.extract_strided_slice %156 {offsets = [0, 0], sizes = [8, 128], strides = [1, 1]} : vector<9x128xf32> to vector<8x128xf32>
    %161 = vector.extract_strided_slice %156 {offsets = [1, 0], sizes = [8, 128], strides = [1, 1]} : vector<9x128xf32> to vector<8x128xf32>
    %162 = arith.maximumf %160, %161 : vector<8x128xf32>
    %163 = arith.maximumf %162, %159 : vector<8x128xf32>
    %164 = arith.maximumf %153, %163 : vector<8x128xf32>
    %c0_118 = arith.constant 0 : index
    %c10 = arith.constant 10 : index
    %c0_119 = arith.constant 0 : index
    %c0_120 = arith.constant 0 : index
    %165 = vector.load %arg1[%c0_118, %c10, %c0_119, %c0_120] : memref<1x18x9x128xbf16, #tpu.memory_space<vmem>>, vector<1x1x9x128xbf16>
    %166 = vector.shape_cast %165 : vector<1x1x9x128xbf16> to vector<9x128xbf16>
    %167 = arith.extf %166 : vector<9x128xbf16> to vector<9x128xf32>
    %c0_121 = arith.constant 0 : index
    %c10_122 = arith.constant 10 : index
    %c0_123 = arith.constant 0 : index
    %c0_124 = arith.constant 0 : index
    %168 = vector.load %arg2[%c0_121, %c10_122, %c0_123, %c0_124] : memref<1x18x8x128xbf16, #tpu.memory_space<vmem>>, vector<1x1x8x128xbf16>
    %169 = vector.shape_cast %168 : vector<1x1x8x128xbf16> to vector<8x128xbf16>
    %170 = arith.extf %169 : vector<8x128xbf16> to vector<8x128xf32>
    %171 = vector.extract_strided_slice %167 {offsets = [0, 0], sizes = [8, 128], strides = [1, 1]} : vector<9x128xf32> to vector<8x128xf32>
    %172 = vector.extract_strided_slice %167 {offsets = [1, 0], sizes = [8, 128], strides = [1, 1]} : vector<9x128xf32> to vector<8x128xf32>
    %173 = arith.maximumf %171, %172 : vector<8x128xf32>
    %174 = arith.maximumf %173, %170 : vector<8x128xf32>
    %175 = arith.maximumf %164, %174 : vector<8x128xf32>
    %176 = arith.truncf %175 : vector<8x128xf32> to vector<8x128xbf16>
    %c0_125 = arith.constant 0 : index
    %c4_126 = arith.constant 4 : index
    %c0_127 = arith.constant 0 : index
    %c0_128 = arith.constant 0 : index
    %177 = vector.load %arg3[%c0_125, %c4_126, %c0_127, %c0_128] : memref<1x8x8x128xbf16, #tpu.memory_space<vmem>>, vector<1x1x8x128xbf16>
    %178 = vector.shape_cast %177 : vector<1x1x8x128xbf16> to vector<8x128xbf16>
    %179 = vector.shape_cast %176 : vector<8x128xbf16> to vector<1x1x8x128xbf16>
    tpu.vector_store %arg3[%c0_125, %c4_126, %c0_127, %c0_128], %179 {strides = array<i32>} : memref<1x8x8x128xbf16, #tpu.memory_space<vmem>>, vector<1x1x8x128xbf16>,
    %c0_129 = arith.constant 0 : index
    %c10_130 = arith.constant 10 : index
    %c0_131 = arith.constant 0 : index
    %c0_132 = arith.constant 0 : index
    %180 = vector.load %arg1[%c0_129, %c10_130, %c0_131, %c0_132] : memref<1x18x9x128xbf16, #tpu.memory_space<vmem>>, vector<1x1x9x128xbf16>
    %181 = vector.shape_cast %180 : vector<1x1x9x128xbf16> to vector<9x128xbf16>
    %182 = arith.extf %181 : vector<9x128xbf16> to vector<9x128xf32>
    %c0_133 = arith.constant 0 : index
    %c10_134 = arith.constant 10 : index
    %c0_135 = arith.constant 0 : index
    %c0_136 = arith.constant 0 : index
    %183 = vector.load %arg2[%c0_133, %c10_134, %c0_135, %c0_136] : memref<1x18x8x128xbf16, #tpu.memory_space<vmem>>, vector<1x1x8x128xbf16>
    %184 = vector.shape_cast %183 : vector<1x1x8x128xbf16> to vector<8x128xbf16>
    %185 = arith.extf %184 : vector<8x128xbf16> to vector<8x128xf32>
    %186 = vector.extract_strided_slice %182 {offsets = [0, 0], sizes = [8, 128], strides = [1, 1]} : vector<9x128xf32> to vector<8x128xf32>
    %187 = vector.extract_strided_slice %182 {offsets = [1, 0], sizes = [8, 128], strides = [1, 1]} : vector<9x128xf32> to vector<8x128xf32>
    %188 = arith.maximumf %186, %187 : vector<8x128xf32>
    %189 = arith.maximumf %188, %185 : vector<8x128xf32>
    %c0_137 = arith.constant 0 : index
    %c11 = arith.constant 11 : index
    %c0_138 = arith.constant 0 : index
    %c0_139 = arith.constant 0 : index
    %190 = vector.load %arg1[%c0_137, %c11, %c0_138, %c0_139] : memref<1x18x9x128xbf16, #tpu.memory_space<vmem>>, vector<1x1x9x128xbf16>
    %191 = vector.shape_cast %190 : vector<1x1x9x128xbf16> to vector<9x128xbf16>
    %192 = arith.extf %191 : vector<9x128xbf16> to vector<9x128xf32>
    %c0_140 = arith.constant 0 : index
    %c11_141 = arith.constant 11 : index
    %c0_142 = arith.constant 0 : index
    %c0_143 = arith.constant 0 : index
    %193 = vector.load %arg2[%c0_140, %c11_141, %c0_142, %c0_143] : memref<1x18x8x128xbf16, #tpu.memory_space<vmem>>, vector<1x1x8x128xbf16>
    %194 = vector.shape_cast %193 : vector<1x1x8x128xbf16> to vector<8x128xbf16>
    %195 = arith.extf %194 : vector<8x128xbf16> to vector<8x128xf32>
    %196 = vector.extract_strided_slice %192 {offsets = [0, 0], sizes = [8, 128], strides = [1, 1]} : vector<9x128xf32> to vector<8x128xf32>
    %197 = vector.extract_strided_slice %192 {offsets = [1, 0], sizes = [8, 128], strides = [1, 1]} : vector<9x128xf32> to vector<8x128xf32>
    %198 = arith.maximumf %196, %197 : vector<8x128xf32>
    %199 = arith.maximumf %198, %195 : vector<8x128xf32>
    %200 = arith.maximumf %189, %199 : vector<8x128xf32>
    %c0_144 = arith.constant 0 : index
    %c12 = arith.constant 12 : index
    %c0_145 = arith.constant 0 : index
    %c0_146 = arith.constant 0 : index
    %201 = vector.load %arg1[%c0_144, %c12, %c0_145, %c0_146] : memref<1x18x9x128xbf16, #tpu.memory_space<vmem>>, vector<1x1x9x128xbf16>
    %202 = vector.shape_cast %201 : vector<1x1x9x128xbf16> to vector<9x128xbf16>
    %203 = arith.extf %202 : vector<9x128xbf16> to vector<9x128xf32>
    %c0_147 = arith.constant 0 : index
    %c12_148 = arith.constant 12 : index
    %c0_149 = arith.constant 0 : index
    %c0_150 = arith.constant 0 : index
    %204 = vector.load %arg2[%c0_147, %c12_148, %c0_149, %c0_150] : memref<1x18x8x128xbf16, #tpu.memory_space<vmem>>, vector<1x1x8x128xbf16>
    %205 = vector.shape_cast %204 : vector<1x1x8x128xbf16> to vector<8x128xbf16>
    %206 = arith.extf %205 : vector<8x128xbf16> to vector<8x128xf32>
    %207 = vector.extract_strided_slice %203 {offsets = [0, 0], sizes = [8, 128], strides = [1, 1]} : vector<9x128xf32> to vector<8x128xf32>
    %208 = vector.extract_strided_slice %203 {offsets = [1, 0], sizes = [8, 128], strides = [1, 1]} : vector<9x128xf32> to vector<8x128xf32>
    %209 = arith.maximumf %207, %208 : vector<8x128xf32>
    %210 = arith.maximumf %209, %206 : vector<8x128xf32>
    %211 = arith.maximumf %200, %210 : vector<8x128xf32>
    %212 = arith.truncf %211 : vector<8x128xf32> to vector<8x128xbf16>
    %c0_151 = arith.constant 0 : index
    %c5_152 = arith.constant 5 : index
    %c0_153 = arith.constant 0 : index
    %c0_154 = arith.constant 0 : index
    %213 = vector.load %arg3[%c0_151, %c5_152, %c0_153, %c0_154] : memref<1x8x8x128xbf16, #tpu.memory_space<vmem>>, vector<1x1x8x128xbf16>
    %214 = vector.shape_cast %213 : vector<1x1x8x128xbf16> to vector<8x128xbf16>
    %215 = vector.shape_cast %212 : vector<8x128xbf16> to vector<1x1x8x128xbf16>
    tpu.vector_store %arg3[%c0_151, %c5_152, %c0_153, %c0_154], %215 {strides = array<i32>} : memref<1x8x8x128xbf16, #tpu.memory_space<vmem>>, vector<1x1x8x128xbf16>,
    %c0_155 = arith.constant 0 : index
    %c12_156 = arith.constant 12 : index
    %c0_157 = arith.constant 0 : index
    %c0_158 = arith.constant 0 : index
    %216 = vector.load %arg1[%c0_155, %c12_156, %c0_157, %c0_158] : memref<1x18x9x128xbf16, #tpu.memory_space<vmem>>, vector<1x1x9x128xbf16>
    %217 = vector.shape_cast %216 : vector<1x1x9x128xbf16> to vector<9x128xbf16>
    %218 = arith.extf %217 : vector<9x128xbf16> to vector<9x128xf32>
    %c0_159 = arith.constant 0 : index
    %c12_160 = arith.constant 12 : index
    %c0_161 = arith.constant 0 : index
    %c0_162 = arith.constant 0 : index
    %219 = vector.load %arg2[%c0_159, %c12_160, %c0_161, %c0_162] : memref<1x18x8x128xbf16, #tpu.memory_space<vmem>>, vector<1x1x8x128xbf16>
    %220 = vector.shape_cast %219 : vector<1x1x8x128xbf16> to vector<8x128xbf16>
    %221 = arith.extf %220 : vector<8x128xbf16> to vector<8x128xf32>
    %222 = vector.extract_strided_slice %218 {offsets = [0, 0], sizes = [8, 128], strides = [1, 1]} : vector<9x128xf32> to vector<8x128xf32>
    %223 = vector.extract_strided_slice %218 {offsets = [1, 0], sizes = [8, 128], strides = [1, 1]} : vector<9x128xf32> to vector<8x128xf32>
    %224 = arith.maximumf %222, %223 : vector<8x128xf32>
    %225 = arith.maximumf %224, %221 : vector<8x128xf32>
    %c0_163 = arith.constant 0 : index
    %c13 = arith.constant 13 : index
    %c0_164 = arith.constant 0 : index
    %c0_165 = arith.constant 0 : index
    %226 = vector.load %arg1[%c0_163, %c13, %c0_164, %c0_165] : memref<1x18x9x128xbf16, #tpu.memory_space<vmem>>, vector<1x1x9x128xbf16>
    %227 = vector.shape_cast %226 : vector<1x1x9x128xbf16> to vector<9x128xbf16>
    %228 = arith.extf %227 : vector<9x128xbf16> to vector<9x128xf32>
    %c0_166 = arith.constant 0 : index
    %c13_167 = arith.constant 13 : index
    %c0_168 = arith.constant 0 : index
    %c0_169 = arith.constant 0 : index
    %229 = vector.load %arg2[%c0_166, %c13_167, %c0_168, %c0_169] : memref<1x18x8x128xbf16, #tpu.memory_space<vmem>>, vector<1x1x8x128xbf16>
    %230 = vector.shape_cast %229 : vector<1x1x8x128xbf16> to vector<8x128xbf16>
    %231 = arith.extf %230 : vector<8x128xbf16> to vector<8x128xf32>
    %232 = vector.extract_strided_slice %228 {offsets = [0, 0], sizes = [8, 128], strides = [1, 1]} : vector<9x128xf32> to vector<8x128xf32>
    %233 = vector.extract_strided_slice %228 {offsets = [1, 0], sizes = [8, 128], strides = [1, 1]} : vector<9x128xf32> to vector<8x128xf32>
    %234 = arith.maximumf %232, %233 : vector<8x128xf32>
    %235 = arith.maximumf %234, %231 : vector<8x128xf32>
    %236 = arith.maximumf %225, %235 : vector<8x128xf32>
    %c0_170 = arith.constant 0 : index
    %c14 = arith.constant 14 : index
    %c0_171 = arith.constant 0 : index
    %c0_172 = arith.constant 0 : index
    %237 = vector.load %arg1[%c0_170, %c14, %c0_171, %c0_172] : memref<1x18x9x128xbf16, #tpu.memory_space<vmem>>, vector<1x1x9x128xbf16>
    %238 = vector.shape_cast %237 : vector<1x1x9x128xbf16> to vector<9x128xbf16>
    %239 = arith.extf %238 : vector<9x128xbf16> to vector<9x128xf32>
    %c0_173 = arith.constant 0 : index
    %c14_174 = arith.constant 14 : index
    %c0_175 = arith.constant 0 : index
    %c0_176 = arith.constant 0 : index
    %240 = vector.load %arg2[%c0_173, %c14_174, %c0_175, %c0_176] : memref<1x18x8x128xbf16, #tpu.memory_space<vmem>>, vector<1x1x8x128xbf16>
    %241 = vector.shape_cast %240 : vector<1x1x8x128xbf16> to vector<8x128xbf16>
    %242 = arith.extf %241 : vector<8x128xbf16> to vector<8x128xf32>
    %243 = vector.extract_strided_slice %239 {offsets = [0, 0], sizes = [8, 128], strides = [1, 1]} : vector<9x128xf32> to vector<8x128xf32>
    %244 = vector.extract_strided_slice %239 {offsets = [1, 0], sizes = [8, 128], strides = [1, 1]} : vector<9x128xf32> to vector<8x128xf32>
    %245 = arith.maximumf %243, %244 : vector<8x128xf32>
    %246 = arith.maximumf %245, %242 : vector<8x128xf32>
    %247 = arith.maximumf %236, %246 : vector<8x128xf32>
    %248 = arith.truncf %247 : vector<8x128xf32> to vector<8x128xbf16>
    %c0_177 = arith.constant 0 : index
    %c6_178 = arith.constant 6 : index
    %c0_179 = arith.constant 0 : index
    %c0_180 = arith.constant 0 : index
    %249 = vector.load %arg3[%c0_177, %c6_178, %c0_179, %c0_180] : memref<1x8x8x128xbf16, #tpu.memory_space<vmem>>, vector<1x1x8x128xbf16>
    %250 = vector.shape_cast %249 : vector<1x1x8x128xbf16> to vector<8x128xbf16>
    %251 = vector.shape_cast %248 : vector<8x128xbf16> to vector<1x1x8x128xbf16>
    tpu.vector_store %arg3[%c0_177, %c6_178, %c0_179, %c0_180], %251 {strides = array<i32>} : memref<1x8x8x128xbf16, #tpu.memory_space<vmem>>, vector<1x1x8x128xbf16>,
    %c0_181 = arith.constant 0 : index
    %c14_182 = arith.constant 14 : index
    %c0_183 = arith.constant 0 : index
    %c0_184 = arith.constant 0 : index
    %252 = vector.load %arg1[%c0_181, %c14_182, %c0_183, %c0_184] : memref<1x18x9x128xbf16, #tpu.memory_space<vmem>>, vector<1x1x9x128xbf16>
    %253 = vector.shape_cast %252 : vector<1x1x9x128xbf16> to vector<9x128xbf16>
    %254 = arith.extf %253 : vector<9x128xbf16> to vector<9x128xf32>
    %c0_185 = arith.constant 0 : index
    %c14_186 = arith.constant 14 : index
    %c0_187 = arith.constant 0 : index
    %c0_188 = arith.constant 0 : index
    %255 = vector.load %arg2[%c0_185, %c14_186, %c0_187, %c0_188] : memref<1x18x8x128xbf16, #tpu.memory_space<vmem>>, vector<1x1x8x128xbf16>
    %256 = vector.shape_cast %255 : vector<1x1x8x128xbf16> to vector<8x128xbf16>
    %257 = arith.extf %256 : vector<8x128xbf16> to vector<8x128xf32>
    %258 = vector.extract_strided_slice %254 {offsets = [0, 0], sizes = [8, 128], strides = [1, 1]} : vector<9x128xf32> to vector<8x128xf32>
    %259 = vector.extract_strided_slice %254 {offsets = [1, 0], sizes = [8, 128], strides = [1, 1]} : vector<9x128xf32> to vector<8x128xf32>
    %260 = arith.maximumf %258, %259 : vector<8x128xf32>
    %261 = arith.maximumf %260, %257 : vector<8x128xf32>
    %c0_189 = arith.constant 0 : index
    %c15 = arith.constant 15 : index
    %c0_190 = arith.constant 0 : index
    %c0_191 = arith.constant 0 : index
    %262 = vector.load %arg1[%c0_189, %c15, %c0_190, %c0_191] : memref<1x18x9x128xbf16, #tpu.memory_space<vmem>>, vector<1x1x9x128xbf16>
    %263 = vector.shape_cast %262 : vector<1x1x9x128xbf16> to vector<9x128xbf16>
    %264 = arith.extf %263 : vector<9x128xbf16> to vector<9x128xf32>
    %c0_192 = arith.constant 0 : index
    %c15_193 = arith.constant 15 : index
    %c0_194 = arith.constant 0 : index
    %c0_195 = arith.constant 0 : index
    %265 = vector.load %arg2[%c0_192, %c15_193, %c0_194, %c0_195] : memref<1x18x8x128xbf16, #tpu.memory_space<vmem>>, vector<1x1x8x128xbf16>
    %266 = vector.shape_cast %265 : vector<1x1x8x128xbf16> to vector<8x128xbf16>
    %267 = arith.extf %266 : vector<8x128xbf16> to vector<8x128xf32>
    %268 = vector.extract_strided_slice %264 {offsets = [0, 0], sizes = [8, 128], strides = [1, 1]} : vector<9x128xf32> to vector<8x128xf32>
    %269 = vector.extract_strided_slice %264 {offsets = [1, 0], sizes = [8, 128], strides = [1, 1]} : vector<9x128xf32> to vector<8x128xf32>
    %270 = arith.maximumf %268, %269 : vector<8x128xf32>
    %271 = arith.maximumf %270, %267 : vector<8x128xf32>
    %272 = arith.maximumf %261, %271 : vector<8x128xf32>
    %c0_196 = arith.constant 0 : index
    %c16 = arith.constant 16 : index
    %c0_197 = arith.constant 0 : index
    %c0_198 = arith.constant 0 : index
    %273 = vector.load %arg1[%c0_196, %c16, %c0_197, %c0_198] : memref<1x18x9x128xbf16, #tpu.memory_space<vmem>>, vector<1x1x9x128xbf16>
    %274 = vector.shape_cast %273 : vector<1x1x9x128xbf16> to vector<9x128xbf16>
    %275 = arith.extf %274 : vector<9x128xbf16> to vector<9x128xf32>
    %c0_199 = arith.constant 0 : index
    %c16_200 = arith.constant 16 : index
    %c0_201 = arith.constant 0 : index
    %c0_202 = arith.constant 0 : index
    %276 = vector.load %arg2[%c0_199, %c16_200, %c0_201, %c0_202] : memref<1x18x8x128xbf16, #tpu.memory_space<vmem>>, vector<1x1x8x128xbf16>
    %277 = vector.shape_cast %276 : vector<1x1x8x128xbf16> to vector<8x128xbf16>
    %278 = arith.extf %277 : vector<8x128xbf16> to vector<8x128xf32>
    %279 = vector.extract_strided_slice %275 {offsets = [0, 0], sizes = [8, 128], strides = [1, 1]} : vector<9x128xf32> to vector<8x128xf32>
    %280 = vector.extract_strided_slice %275 {offsets = [1, 0], sizes = [8, 128], strides = [1, 1]} : vector<9x128xf32> to vector<8x128xf32>
    %281 = arith.maximumf %279, %280 : vector<8x128xf32>
    %282 = arith.maximumf %281, %278 : vector<8x128xf32>
    %283 = arith.maximumf %272, %282 : vector<8x128xf32>
    %284 = arith.truncf %283 : vector<8x128xf32> to vector<8x128xbf16>
    %c0_203 = arith.constant 0 : index
    %c7_204 = arith.constant 7 : index
    %c0_205 = arith.constant 0 : index
    %c0_206 = arith.constant 0 : index
    %285 = vector.load %arg3[%c0_203, %c7_204, %c0_205, %c0_206] : memref<1x8x8x128xbf16, #tpu.memory_space<vmem>>, vector<1x1x8x128xbf16>
    %286 = vector.shape_cast %285 : vector<1x1x8x128xbf16> to vector<8x128xbf16>
    %287 = vector.shape_cast %284 : vector<8x128xbf16> to vector<1x1x8x128xbf16>
    tpu.vector_store %arg3[%c0_203, %c7_204, %c0_205, %c0_206], %287 {strides = array<i32>} : memref<1x8x8x128xbf16, #tpu.memory_space<vmem>>, vector<1x1x8x128xbf16>,
    return
  }
  func.func @transform_0(%arg0: i32) -> (i32, i32, i32, i32) {
    %c0_i32 = arith.constant 0 : i32
    %c0_i32_0 = arith.constant 0 : i32
    %c0_i32_1 = arith.constant 0 : i32
    %c0_i32_2 = arith.constant 0 : i32
    return %arg0, %c0_i32, %c0_i32_0, %c0_i32_1 : i32, i32, i32, i32
  }
  func.func @transform_1(%arg0: i32) -> (i32, i32, i32, i32) {
    %c0_i32 = arith.constant 0 : i32
    %c0_i32_0 = arith.constant 0 : i32
    %c0_i32_1 = arith.constant 0 : i32
    %c0_i32_2 = arith.constant 0 : i32
    return %arg0, %c0_i32, %c0_i32_0, %c0_i32_1 : i32, i32, i32, i32
  }
  func.func @transform_2(%arg0: i32) -> (i32, i32, i32, i32) {
    %c0_i32 = arith.constant 0 : i32
    %c0_i32_0 = arith.constant 0 : i32
    %c0_i32_1 = arith.constant 0 : i32
    %c0_i32_2 = arith.constant 0 : i32
    return %arg0, %c0_i32, %c0_i32_0, %c0_i32_1 : i32, i32, i32, i32
  }
}

module attributes {stable_mosaic.version = 11 : i64} {
  func.func @_conv_kernel(%arg0: i32, %arg1: memref<64x1152xbf16, #tpu.memory_space<vmem>>, %arg2: memref<1152x128xbf16, #tpu.memory_space<vmem>>, %arg3: memref<1x128xf32, #tpu.memory_space<vmem>>, %arg4: memref<64x128xbf16, #tpu.memory_space<vmem>>) attributes {dimension_semantics = [#tpu.dimension_semantics<parallel>], iteration_bounds = array<i64: 2>, scalar_prefetch = 0 : i64, scratch_operands = 0 : i64, tpu.core_type = #tpu.core_type<tc>, window_params = [{transform_indices = @transform_0, window_bounds = array<i64: 64, 1152>}, {pipeline_mode = #tpu.pipeline_mode<synchronous>, transform_indices = @transform_1, window_bounds = array<i64: 1152, 128>}, {pipeline_mode = #tpu.pipeline_mode<synchronous>, transform_indices = @transform_2, window_bounds = array<i64: 1, 128>}, {transform_indices = @transform_3, window_bounds = array<i64: 64, 128>}]} {
    %c0 = arith.constant 0 : index
    %c0_0 = arith.constant 0 : index
    %0 = vector.load %arg1[%c0, %c0_0] : memref<64x1152xbf16, #tpu.memory_space<vmem>>, vector<64x1152xbf16>
    %c0_1 = arith.constant 0 : index
    %c0_2 = arith.constant 0 : index
    %1 = vector.load %arg2[%c0_1, %c0_2] : memref<1152x128xbf16, #tpu.memory_space<vmem>>, vector<1152x128xbf16>
    %cst = arith.constant dense<0.000000e+00> : vector<64x128xf32>
    %2 = tpu.matmul %0, %1, %cst {dimension_numbers = #tpu.dot_dimension_numbers<[1], [0], [0], [1], [0, 0, 1, 1], [], []>} : vector<64x1152xbf16>, vector<1152x128xbf16>, vector<64x128xf32> -> vector<64x128xf32>
    %c0_3 = arith.constant 0 : index
    %c0_4 = arith.constant 0 : index
    %3 = vector.load %arg3[%c0_3, %c0_4] : memref<1x128xf32, #tpu.memory_space<vmem>>, vector<1x128xf32>
    %4 = vector.broadcast %3 : vector<1x128xf32> to vector<64x128xf32>
    %5 = arith.addf %2, %4 : vector<64x128xf32>
    %cst_5 = arith.constant 0.000000e+00 : f32
    %6 = vector.broadcast %cst_5 : f32 to vector<64x128xf32>
    %7 = arith.maximumf %5, %6 : vector<64x128xf32>
    %8 = arith.truncf %7 : vector<64x128xf32> to vector<64x128xbf16>
    %c0_6 = arith.constant 0 : index
    %c0_7 = arith.constant 0 : index
    %9 = vector.load %arg4[%c0_6, %c0_7] : memref<64x128xbf16, #tpu.memory_space<vmem>>, vector<64x128xbf16>
    tpu.vector_store %arg4[%c0_6, %c0_7], %8 {strides = array<i32>} : memref<64x128xbf16, #tpu.memory_space<vmem>>, vector<64x128xbf16>,
    return
  }
  func.func @transform_0(%arg0: i32) -> (i32, i32) {
    %c0_i32 = arith.constant 0 : i32
    %c0_i32_0 = arith.constant 0 : i32
    return %arg0, %c0_i32 : i32, i32
  }
  func.func @transform_1(%arg0: i32) -> (i32, i32) {
    %c0_i32 = arith.constant 0 : i32
    %c0_i32_0 = arith.constant 0 : i32
    %c0_i32_1 = arith.constant 0 : i32
    return %c0_i32, %c0_i32_0 : i32, i32
  }
  func.func @transform_2(%arg0: i32) -> (i32, i32) {
    %c0_i32 = arith.constant 0 : i32
    %c0_i32_0 = arith.constant 0 : i32
    %c0_i32_1 = arith.constant 0 : i32
    return %c0_i32, %c0_i32_0 : i32, i32
  }
  func.func @transform_3(%arg0: i32) -> (i32, i32) {
    %c0_i32 = arith.constant 0 : i32
    %c0_i32_0 = arith.constant 0 : i32
    return %arg0, %c0_i32 : i32, i32
  }
}

module attributes {stable_mosaic.version = 11 : i64} {
  func.func @_conv_res_kernel(%arg0: i32, %arg1: memref<64x1152xbf16, #tpu.memory_space<vmem>>, %arg2: memref<1152x128xbf16, #tpu.memory_space<vmem>>, %arg3: memref<1x128xf32, #tpu.memory_space<vmem>>, %arg4: memref<64x128xbf16, #tpu.memory_space<vmem>>, %arg5: memref<64x128xbf16, #tpu.memory_space<vmem>>) attributes {dimension_semantics = [#tpu.dimension_semantics<parallel>], iteration_bounds = array<i64: 2>, scalar_prefetch = 0 : i64, scratch_operands = 0 : i64, tpu.core_type = #tpu.core_type<tc>, window_params = [{transform_indices = @transform_0, window_bounds = array<i64: 64, 1152>}, {pipeline_mode = #tpu.pipeline_mode<synchronous>, transform_indices = @transform_1, window_bounds = array<i64: 1152, 128>}, {pipeline_mode = #tpu.pipeline_mode<synchronous>, transform_indices = @transform_2, window_bounds = array<i64: 1, 128>}, {transform_indices = @transform_3, window_bounds = array<i64: 64, 128>}, {transform_indices = @transform_4, window_bounds = array<i64: 64, 128>}]} {
    %c0 = arith.constant 0 : index
    %c0_0 = arith.constant 0 : index
    %0 = vector.load %arg1[%c0, %c0_0] : memref<64x1152xbf16, #tpu.memory_space<vmem>>, vector<64x1152xbf16>
    %c0_1 = arith.constant 0 : index
    %c0_2 = arith.constant 0 : index
    %1 = vector.load %arg2[%c0_1, %c0_2] : memref<1152x128xbf16, #tpu.memory_space<vmem>>, vector<1152x128xbf16>
    %cst = arith.constant dense<0.000000e+00> : vector<64x128xf32>
    %2 = tpu.matmul %0, %1, %cst {dimension_numbers = #tpu.dot_dimension_numbers<[1], [0], [0], [1], [0, 0, 1, 1], [], []>} : vector<64x1152xbf16>, vector<1152x128xbf16>, vector<64x128xf32> -> vector<64x128xf32>
    %c0_3 = arith.constant 0 : index
    %c0_4 = arith.constant 0 : index
    %3 = vector.load %arg3[%c0_3, %c0_4] : memref<1x128xf32, #tpu.memory_space<vmem>>, vector<1x128xf32>
    %4 = vector.broadcast %3 : vector<1x128xf32> to vector<64x128xf32>
    %5 = arith.addf %2, %4 : vector<64x128xf32>
    %c0_5 = arith.constant 0 : index
    %c0_6 = arith.constant 0 : index
    %6 = vector.load %arg4[%c0_5, %c0_6] : memref<64x128xbf16, #tpu.memory_space<vmem>>, vector<64x128xbf16>
    %7 = arith.extf %6 : vector<64x128xbf16> to vector<64x128xf32>
    %8 = arith.addf %5, %7 : vector<64x128xf32>
    %cst_7 = arith.constant 0.000000e+00 : f32
    %9 = vector.broadcast %cst_7 : f32 to vector<64x128xf32>
    %10 = arith.maximumf %8, %9 : vector<64x128xf32>
    %11 = arith.truncf %10 : vector<64x128xf32> to vector<64x128xbf16>
    %c0_8 = arith.constant 0 : index
    %c0_9 = arith.constant 0 : index
    %12 = vector.load %arg5[%c0_8, %c0_9] : memref<64x128xbf16, #tpu.memory_space<vmem>>, vector<64x128xbf16>
    tpu.vector_store %arg5[%c0_8, %c0_9], %11 {strides = array<i32>} : memref<64x128xbf16, #tpu.memory_space<vmem>>, vector<64x128xbf16>,
    return
  }
  func.func @transform_0(%arg0: i32) -> (i32, i32) {
    %c0_i32 = arith.constant 0 : i32
    %c0_i32_0 = arith.constant 0 : i32
    return %arg0, %c0_i32 : i32, i32
  }
  func.func @transform_1(%arg0: i32) -> (i32, i32) {
    %c0_i32 = arith.constant 0 : i32
    %c0_i32_0 = arith.constant 0 : i32
    %c0_i32_1 = arith.constant 0 : i32
    return %c0_i32, %c0_i32_0 : i32, i32
  }
  func.func @transform_2(%arg0: i32) -> (i32, i32) {
    %c0_i32 = arith.constant 0 : i32
    %c0_i32_0 = arith.constant 0 : i32
    %c0_i32_1 = arith.constant 0 : i32
    return %c0_i32, %c0_i32_0 : i32, i32
  }
  func.func @transform_3(%arg0: i32) -> (i32, i32) {
    %c0_i32 = arith.constant 0 : i32
    %c0_i32_0 = arith.constant 0 : i32
    return %arg0, %c0_i32 : i32, i32
  }
  func.func @transform_4(%arg0: i32) -> (i32, i32) {
    %c0_i32 = arith.constant 0 : i32
    %c0_i32_0 = arith.constant 0 : i32
    return %arg0, %c0_i32 : i32, i32
  }
}

module attributes {stable_mosaic.version = 11 : i64} {
  func.func @_conv_down_kernel(%arg0: i32, %arg1: memref<32x1152xbf16, #tpu.memory_space<vmem>>, %arg2: memref<1152x128xbf16, #tpu.memory_space<vmem>>, %arg3: memref<1x128xf32, #tpu.memory_space<vmem>>, %arg4: memref<128x128xbf16, #tpu.memory_space<vmem>>, %arg5: memref<1x128xf32, #tpu.memory_space<vmem>>, %arg6: memref<32x128xbf16, #tpu.memory_space<vmem>>, %arg7: memref<32x128xbf16, #tpu.memory_space<vmem>>) attributes {dimension_semantics = [#tpu.dimension_semantics<parallel>], iteration_bounds = array<i64: 1>, scalar_prefetch = 0 : i64, scratch_operands = 0 : i64, tpu.core_type = #tpu.core_type<tc>, window_params = [{transform_indices = @transform_0, window_bounds = array<i64: 32, 1152>}, {pipeline_mode = #tpu.pipeline_mode<synchronous>, transform_indices = @transform_1, window_bounds = array<i64: 1152, 128>}, {pipeline_mode = #tpu.pipeline_mode<synchronous>, transform_indices = @transform_2, window_bounds = array<i64: 1, 128>}, {pipeline_mode = #tpu.pipeline_mode<synchronous>, transform_indices = @transform_3, window_bounds = array<i64: 128, 128>}, {pipeline_mode = #tpu.pipeline_mode<synchronous>, transform_indices = @transform_4, window_bounds = array<i64: 1, 128>}, {transform_indices = @transform_5, window_bounds = array<i64: 32, 128>}, {transform_indices = @transform_6, window_bounds = array<i64: 32, 128>}]} {
    %c0 = arith.constant 0 : index
    %c0_0 = arith.constant 0 : index
    %0 = vector.load %arg1[%c0, %c0_0] : memref<32x1152xbf16, #tpu.memory_space<vmem>>, vector<32x1152xbf16>
    %c0_1 = arith.constant 0 : index
    %c0_2 = arith.constant 0 : index
    %1 = vector.load %arg2[%c0_1, %c0_2] : memref<1152x128xbf16, #tpu.memory_space<vmem>>, vector<1152x128xbf16>
    %cst = arith.constant dense<0.000000e+00> : vector<32x128xf32>
    %2 = tpu.matmul %0, %1, %cst {dimension_numbers = #tpu.dot_dimension_numbers<[1], [0], [0], [1], [0, 0, 1, 1], [], []>} : vector<32x1152xbf16>, vector<1152x128xbf16>, vector<32x128xf32> -> vector<32x128xf32>
    %c0_3 = arith.constant 0 : index
    %c0_4 = arith.constant 0 : index
    %3 = vector.load %arg3[%c0_3, %c0_4] : memref<1x128xf32, #tpu.memory_space<vmem>>, vector<1x128xf32>
    %4 = vector.broadcast %3 : vector<1x128xf32> to vector<32x128xf32>
    %5 = arith.addf %2, %4 : vector<32x128xf32>
    %cst_5 = arith.constant 0.000000e+00 : f32
    %6 = vector.broadcast %cst_5 : f32 to vector<32x128xf32>
    %7 = arith.maximumf %5, %6 : vector<32x128xf32>
    %8 = arith.truncf %7 : vector<32x128xf32> to vector<32x128xbf16>
    %c0_6 = arith.constant 0 : index
    %c0_7 = arith.constant 0 : index
    %9 = vector.load %arg6[%c0_6, %c0_7] : memref<32x128xbf16, #tpu.memory_space<vmem>>, vector<32x128xbf16>
    tpu.vector_store %arg6[%c0_6, %c0_7], %8 {strides = array<i32>} : memref<32x128xbf16, #tpu.memory_space<vmem>>, vector<32x128xbf16>,
    %10 = vector.extract_strided_slice %0 {offsets = [0, 512], sizes = [32, 128], strides = [1, 1]} : vector<32x1152xbf16> to vector<32x128xbf16>
    %c0_8 = arith.constant 0 : index
    %c0_9 = arith.constant 0 : index
    %11 = vector.load %arg4[%c0_8, %c0_9] : memref<128x128xbf16, #tpu.memory_space<vmem>>, vector<128x128xbf16>
    %cst_10 = arith.constant dense<0.000000e+00> : vector<32x128xf32>
    %12 = tpu.matmul %10, %11, %cst_10 {dimension_numbers = #tpu.dot_dimension_numbers<[1], [0], [0], [1], [0, 0, 1, 1], [], []>} : vector<32x128xbf16>, vector<128x128xbf16>, vector<32x128xf32> -> vector<32x128xf32>
    %c0_11 = arith.constant 0 : index
    %c0_12 = arith.constant 0 : index
    %13 = vector.load %arg5[%c0_11, %c0_12] : memref<1x128xf32, #tpu.memory_space<vmem>>, vector<1x128xf32>
    %14 = vector.broadcast %13 : vector<1x128xf32> to vector<32x128xf32>
    %15 = arith.addf %12, %14 : vector<32x128xf32>
    %16 = arith.truncf %15 : vector<32x128xf32> to vector<32x128xbf16>
    %c0_13 = arith.constant 0 : index
    %c0_14 = arith.constant 0 : index
    %17 = vector.load %arg7[%c0_13, %c0_14] : memref<32x128xbf16, #tpu.memory_space<vmem>>, vector<32x128xbf16>
    tpu.vector_store %arg7[%c0_13, %c0_14], %16 {strides = array<i32>} : memref<32x128xbf16, #tpu.memory_space<vmem>>, vector<32x128xbf16>,
    return
  }
  func.func @transform_0(%arg0: i32) -> (i32, i32) {
    %c0_i32 = arith.constant 0 : i32
    %c0_i32_0 = arith.constant 0 : i32
    return %arg0, %c0_i32 : i32, i32
  }
  func.func @transform_1(%arg0: i32) -> (i32, i32) {
    %c0_i32 = arith.constant 0 : i32
    %c0_i32_0 = arith.constant 0 : i32
    %c0_i32_1 = arith.constant 0 : i32
    return %c0_i32, %c0_i32_0 : i32, i32
  }
  func.func @transform_2(%arg0: i32) -> (i32, i32) {
    %c0_i32 = arith.constant 0 : i32
    %c0_i32_0 = arith.constant 0 : i32
    %c0_i32_1 = arith.constant 0 : i32
    return %c0_i32, %c0_i32_0 : i32, i32
  }
  func.func @transform_3(%arg0: i32) -> (i32, i32) {
    %c0_i32 = arith.constant 0 : i32
    %c0_i32_0 = arith.constant 0 : i32
    %c0_i32_1 = arith.constant 0 : i32
    return %c0_i32, %c0_i32_0 : i32, i32
  }
  func.func @transform_4(%arg0: i32) -> (i32, i32) {
    %c0_i32 = arith.constant 0 : i32
    %c0_i32_0 = arith.constant 0 : i32
    %c0_i32_1 = arith.constant 0 : i32
    return %c0_i32, %c0_i32_0 : i32, i32
  }
  func.func @transform_5(%arg0: i32) -> (i32, i32) {
    %c0_i32 = arith.constant 0 : i32
    %c0_i32_0 = arith.constant 0 : i32
    return %arg0, %c0_i32 : i32, i32
  }
  func.func @transform_6(%arg0: i32) -> (i32, i32) {
    %c0_i32 = arith.constant 0 : i32
    %c0_i32_0 = arith.constant 0 : i32
    return %arg0, %c0_i32 : i32, i32
  }
}

module attributes {stable_mosaic.version = 11 : i64} {
  func.func @_conv_res_kernel(%arg0: i32, %arg1: memref<32x1152xbf16, #tpu.memory_space<vmem>>, %arg2: memref<1152x128xbf16, #tpu.memory_space<vmem>>, %arg3: memref<1x128xf32, #tpu.memory_space<vmem>>, %arg4: memref<32x128xbf16, #tpu.memory_space<vmem>>, %arg5: memref<32x128xbf16, #tpu.memory_space<vmem>>) attributes {dimension_semantics = [#tpu.dimension_semantics<parallel>], iteration_bounds = array<i64: 1>, scalar_prefetch = 0 : i64, scratch_operands = 0 : i64, tpu.core_type = #tpu.core_type<tc>, window_params = [{transform_indices = @transform_0, window_bounds = array<i64: 32, 1152>}, {pipeline_mode = #tpu.pipeline_mode<synchronous>, transform_indices = @transform_1, window_bounds = array<i64: 1152, 128>}, {pipeline_mode = #tpu.pipeline_mode<synchronous>, transform_indices = @transform_2, window_bounds = array<i64: 1, 128>}, {transform_indices = @transform_3, window_bounds = array<i64: 32, 128>}, {transform_indices = @transform_4, window_bounds = array<i64: 32, 128>}]} {
    %c0 = arith.constant 0 : index
    %c0_0 = arith.constant 0 : index
    %0 = vector.load %arg1[%c0, %c0_0] : memref<32x1152xbf16, #tpu.memory_space<vmem>>, vector<32x1152xbf16>
    %c0_1 = arith.constant 0 : index
    %c0_2 = arith.constant 0 : index
    %1 = vector.load %arg2[%c0_1, %c0_2] : memref<1152x128xbf16, #tpu.memory_space<vmem>>, vector<1152x128xbf16>
    %cst = arith.constant dense<0.000000e+00> : vector<32x128xf32>
    %2 = tpu.matmul %0, %1, %cst {dimension_numbers = #tpu.dot_dimension_numbers<[1], [0], [0], [1], [0, 0, 1, 1], [], []>} : vector<32x1152xbf16>, vector<1152x128xbf16>, vector<32x128xf32> -> vector<32x128xf32>
    %c0_3 = arith.constant 0 : index
    %c0_4 = arith.constant 0 : index
    %3 = vector.load %arg3[%c0_3, %c0_4] : memref<1x128xf32, #tpu.memory_space<vmem>>, vector<1x128xf32>
    %4 = vector.broadcast %3 : vector<1x128xf32> to vector<32x128xf32>
    %5 = arith.addf %2, %4 : vector<32x128xf32>
    %c0_5 = arith.constant 0 : index
    %c0_6 = arith.constant 0 : index
    %6 = vector.load %arg4[%c0_5, %c0_6] : memref<32x128xbf16, #tpu.memory_space<vmem>>, vector<32x128xbf16>
    %7 = arith.extf %6 : vector<32x128xbf16> to vector<32x128xf32>
    %8 = arith.addf %5, %7 : vector<32x128xf32>
    %cst_7 = arith.constant 0.000000e+00 : f32
    %9 = vector.broadcast %cst_7 : f32 to vector<32x128xf32>
    %10 = arith.maximumf %8, %9 : vector<32x128xf32>
    %11 = arith.truncf %10 : vector<32x128xf32> to vector<32x128xbf16>
    %c0_8 = arith.constant 0 : index
    %c0_9 = arith.constant 0 : index
    %12 = vector.load %arg5[%c0_8, %c0_9] : memref<32x128xbf16, #tpu.memory_space<vmem>>, vector<32x128xbf16>
    tpu.vector_store %arg5[%c0_8, %c0_9], %11 {strides = array<i32>} : memref<32x128xbf16, #tpu.memory_space<vmem>>, vector<32x128xbf16>,
    return
  }
  func.func @transform_0(%arg0: i32) -> (i32, i32) {
    %c0_i32 = arith.constant 0 : i32
    %c0_i32_0 = arith.constant 0 : i32
    return %arg0, %c0_i32 : i32, i32
  }
  func.func @transform_1(%arg0: i32) -> (i32, i32) {
    %c0_i32 = arith.constant 0 : i32
    %c0_i32_0 = arith.constant 0 : i32
    %c0_i32_1 = arith.constant 0 : i32
    return %c0_i32, %c0_i32_0 : i32, i32
  }
  func.func @transform_2(%arg0: i32) -> (i32, i32) {
    %c0_i32 = arith.constant 0 : i32
    %c0_i32_0 = arith.constant 0 : i32
    %c0_i32_1 = arith.constant 0 : i32
    return %c0_i32, %c0_i32_0 : i32, i32
  }
  func.func @transform_3(%arg0: i32) -> (i32, i32) {
    %c0_i32 = arith.constant 0 : i32
    %c0_i32_0 = arith.constant 0 : i32
    return %arg0, %c0_i32 : i32, i32
  }
  func.func @transform_4(%arg0: i32) -> (i32, i32) {
    %c0_i32 = arith.constant 0 : i32
    %c0_i32_0 = arith.constant 0 : i32
    return %arg0, %c0_i32 : i32, i32
  }
}

module attributes {stable_mosaic.version = 11 : i64} {
  func.func @_conv_down_kernel(%arg0: i32, %arg1: memref<8x1152xbf16, #tpu.memory_space<vmem>>, %arg2: memref<1152x128xbf16, #tpu.memory_space<vmem>>, %arg3: memref<1x128xf32, #tpu.memory_space<vmem>>, %arg4: memref<128x128xbf16, #tpu.memory_space<vmem>>, %arg5: memref<1x128xf32, #tpu.memory_space<vmem>>, %arg6: memref<8x128xbf16, #tpu.memory_space<vmem>>, %arg7: memref<8x128xbf16, #tpu.memory_space<vmem>>) attributes {dimension_semantics = [#tpu.dimension_semantics<parallel>], iteration_bounds = array<i64: 1>, scalar_prefetch = 0 : i64, scratch_operands = 0 : i64, tpu.core_type = #tpu.core_type<tc>, window_params = [{transform_indices = @transform_0, window_bounds = array<i64: 8, 1152>}, {pipeline_mode = #tpu.pipeline_mode<synchronous>, transform_indices = @transform_1, window_bounds = array<i64: 1152, 128>}, {pipeline_mode = #tpu.pipeline_mode<synchronous>, transform_indices = @transform_2, window_bounds = array<i64: 1, 128>}, {pipeline_mode = #tpu.pipeline_mode<synchronous>, transform_indices = @transform_3, window_bounds = array<i64: 128, 128>}, {pipeline_mode = #tpu.pipeline_mode<synchronous>, transform_indices = @transform_4, window_bounds = array<i64: 1, 128>}, {transform_indices = @transform_5, window_bounds = array<i64: 8, 128>}, {transform_indices = @transform_6, window_bounds = array<i64: 8, 128>}]} {
    %c0 = arith.constant 0 : index
    %c0_0 = arith.constant 0 : index
    %0 = vector.load %arg1[%c0, %c0_0] : memref<8x1152xbf16, #tpu.memory_space<vmem>>, vector<8x1152xbf16>
    %c0_1 = arith.constant 0 : index
    %c0_2 = arith.constant 0 : index
    %1 = vector.load %arg2[%c0_1, %c0_2] : memref<1152x128xbf16, #tpu.memory_space<vmem>>, vector<1152x128xbf16>
    %cst = arith.constant dense<0.000000e+00> : vector<8x128xf32>
    %2 = tpu.matmul %0, %1, %cst {dimension_numbers = #tpu.dot_dimension_numbers<[1], [0], [0], [1], [0, 0, 1, 1], [], []>} : vector<8x1152xbf16>, vector<1152x128xbf16>, vector<8x128xf32> -> vector<8x128xf32>
    %c0_3 = arith.constant 0 : index
    %c0_4 = arith.constant 0 : index
    %3 = vector.load %arg3[%c0_3, %c0_4] : memref<1x128xf32, #tpu.memory_space<vmem>>, vector<1x128xf32>
    %4 = vector.broadcast %3 : vector<1x128xf32> to vector<8x128xf32>
    %5 = arith.addf %2, %4 : vector<8x128xf32>
    %cst_5 = arith.constant 0.000000e+00 : f32
    %6 = vector.broadcast %cst_5 : f32 to vector<8x128xf32>
    %7 = arith.maximumf %5, %6 : vector<8x128xf32>
    %8 = arith.truncf %7 : vector<8x128xf32> to vector<8x128xbf16>
    %c0_6 = arith.constant 0 : index
    %c0_7 = arith.constant 0 : index
    %9 = vector.load %arg6[%c0_6, %c0_7] : memref<8x128xbf16, #tpu.memory_space<vmem>>, vector<8x128xbf16>
    tpu.vector_store %arg6[%c0_6, %c0_7], %8 {strides = array<i32>} : memref<8x128xbf16, #tpu.memory_space<vmem>>, vector<8x128xbf16>,
    %10 = vector.extract_strided_slice %0 {offsets = [0, 512], sizes = [8, 128], strides = [1, 1]} : vector<8x1152xbf16> to vector<8x128xbf16>
    %c0_8 = arith.constant 0 : index
    %c0_9 = arith.constant 0 : index
    %11 = vector.load %arg4[%c0_8, %c0_9] : memref<128x128xbf16, #tpu.memory_space<vmem>>, vector<128x128xbf16>
    %cst_10 = arith.constant dense<0.000000e+00> : vector<8x128xf32>
    %12 = tpu.matmul %10, %11, %cst_10 {dimension_numbers = #tpu.dot_dimension_numbers<[1], [0], [0], [1], [0, 0, 1, 1], [], []>} : vector<8x128xbf16>, vector<128x128xbf16>, vector<8x128xf32> -> vector<8x128xf32>
    %c0_11 = arith.constant 0 : index
    %c0_12 = arith.constant 0 : index
    %13 = vector.load %arg5[%c0_11, %c0_12] : memref<1x128xf32, #tpu.memory_space<vmem>>, vector<1x128xf32>
    %14 = vector.broadcast %13 : vector<1x128xf32> to vector<8x128xf32>
    %15 = arith.addf %12, %14 : vector<8x128xf32>
    %16 = arith.truncf %15 : vector<8x128xf32> to vector<8x128xbf16>
    %c0_13 = arith.constant 0 : index
    %c0_14 = arith.constant 0 : index
    %17 = vector.load %arg7[%c0_13, %c0_14] : memref<8x128xbf16, #tpu.memory_space<vmem>>, vector<8x128xbf16>
    tpu.vector_store %arg7[%c0_13, %c0_14], %16 {strides = array<i32>} : memref<8x128xbf16, #tpu.memory_space<vmem>>, vector<8x128xbf16>,
    return
  }
  func.func @transform_0(%arg0: i32) -> (i32, i32) {
    %c0_i32 = arith.constant 0 : i32
    %c0_i32_0 = arith.constant 0 : i32
    return %arg0, %c0_i32 : i32, i32
  }
  func.func @transform_1(%arg0: i32) -> (i32, i32) {
    %c0_i32 = arith.constant 0 : i32
    %c0_i32_0 = arith.constant 0 : i32
    %c0_i32_1 = arith.constant 0 : i32
    return %c0_i32, %c0_i32_0 : i32, i32
  }
  func.func @transform_2(%arg0: i32) -> (i32, i32) {
    %c0_i32 = arith.constant 0 : i32
    %c0_i32_0 = arith.constant 0 : i32
    %c0_i32_1 = arith.constant 0 : i32
    return %c0_i32, %c0_i32_0 : i32, i32
  }
  func.func @transform_3(%arg0: i32) -> (i32, i32) {
    %c0_i32 = arith.constant 0 : i32
    %c0_i32_0 = arith.constant 0 : i32
    %c0_i32_1 = arith.constant 0 : i32
    return %c0_i32, %c0_i32_0 : i32, i32
  }
  func.func @transform_4(%arg0: i32) -> (i32, i32) {
    %c0_i32 = arith.constant 0 : i32
    %c0_i32_0 = arith.constant 0 : i32
    %c0_i32_1 = arith.constant 0 : i32
    return %c0_i32, %c0_i32_0 : i32, i32
  }
  func.func @transform_5(%arg0: i32) -> (i32, i32) {
    %c0_i32 = arith.constant 0 : i32
    %c0_i32_0 = arith.constant 0 : i32
    return %arg0, %c0_i32 : i32, i32
  }
  func.func @transform_6(%arg0: i32) -> (i32, i32) {
    %c0_i32 = arith.constant 0 : i32
    %c0_i32_0 = arith.constant 0 : i32
    return %arg0, %c0_i32 : i32, i32
  }
}

module attributes {stable_mosaic.version = 11 : i64} {
  func.func @_conv_res_kernel(%arg0: i32, %arg1: memref<8x1152xbf16, #tpu.memory_space<vmem>>, %arg2: memref<1152x128xbf16, #tpu.memory_space<vmem>>, %arg3: memref<1x128xf32, #tpu.memory_space<vmem>>, %arg4: memref<8x128xbf16, #tpu.memory_space<vmem>>, %arg5: memref<8x128xbf16, #tpu.memory_space<vmem>>) attributes {dimension_semantics = [#tpu.dimension_semantics<parallel>], iteration_bounds = array<i64: 1>, scalar_prefetch = 0 : i64, scratch_operands = 0 : i64, tpu.core_type = #tpu.core_type<tc>, window_params = [{transform_indices = @transform_0, window_bounds = array<i64: 8, 1152>}, {pipeline_mode = #tpu.pipeline_mode<synchronous>, transform_indices = @transform_1, window_bounds = array<i64: 1152, 128>}, {pipeline_mode = #tpu.pipeline_mode<synchronous>, transform_indices = @transform_2, window_bounds = array<i64: 1, 128>}, {transform_indices = @transform_3, window_bounds = array<i64: 8, 128>}, {transform_indices = @transform_4, window_bounds = array<i64: 8, 128>}]} {
    %c0 = arith.constant 0 : index
    %c0_0 = arith.constant 0 : index
    %0 = vector.load %arg1[%c0, %c0_0] : memref<8x1152xbf16, #tpu.memory_space<vmem>>, vector<8x1152xbf16>
    %c0_1 = arith.constant 0 : index
    %c0_2 = arith.constant 0 : index
    %1 = vector.load %arg2[%c0_1, %c0_2] : memref<1152x128xbf16, #tpu.memory_space<vmem>>, vector<1152x128xbf16>
    %cst = arith.constant dense<0.000000e+00> : vector<8x128xf32>
    %2 = tpu.matmul %0, %1, %cst {dimension_numbers = #tpu.dot_dimension_numbers<[1], [0], [0], [1], [0, 0, 1, 1], [], []>} : vector<8x1152xbf16>, vector<1152x128xbf16>, vector<8x128xf32> -> vector<8x128xf32>
    %c0_3 = arith.constant 0 : index
    %c0_4 = arith.constant 0 : index
    %3 = vector.load %arg3[%c0_3, %c0_4] : memref<1x128xf32, #tpu.memory_space<vmem>>, vector<1x128xf32>
    %4 = vector.broadcast %3 : vector<1x128xf32> to vector<8x128xf32>
    %5 = arith.addf %2, %4 : vector<8x128xf32>
    %c0_5 = arith.constant 0 : index
    %c0_6 = arith.constant 0 : index
    %6 = vector.load %arg4[%c0_5, %c0_6] : memref<8x128xbf16, #tpu.memory_space<vmem>>, vector<8x128xbf16>
    %7 = arith.extf %6 : vector<8x128xbf16> to vector<8x128xf32>
    %8 = arith.addf %5, %7 : vector<8x128xf32>
    %cst_7 = arith.constant 0.000000e+00 : f32
    %9 = vector.broadcast %cst_7 : f32 to vector<8x128xf32>
    %10 = arith.maximumf %8, %9 : vector<8x128xf32>
    %11 = arith.truncf %10 : vector<8x128xf32> to vector<8x128xbf16>
    %c0_8 = arith.constant 0 : index
    %c0_9 = arith.constant 0 : index
    %12 = vector.load %arg5[%c0_8, %c0_9] : memref<8x128xbf16, #tpu.memory_space<vmem>>, vector<8x128xbf16>
    tpu.vector_store %arg5[%c0_8, %c0_9], %11 {strides = array<i32>} : memref<8x128xbf16, #tpu.memory_space<vmem>>, vector<8x128xbf16>,
    return
  }
  func.func @transform_0(%arg0: i32) -> (i32, i32) {
    %c0_i32 = arith.constant 0 : i32
    %c0_i32_0 = arith.constant 0 : i32
    return %arg0, %c0_i32 : i32, i32
  }
  func.func @transform_1(%arg0: i32) -> (i32, i32) {
    %c0_i32 = arith.constant 0 : i32
    %c0_i32_0 = arith.constant 0 : i32
    %c0_i32_1 = arith.constant 0 : i32
    return %c0_i32, %c0_i32_0 : i32, i32
  }
  func.func @transform_2(%arg0: i32) -> (i32, i32) {
    %c0_i32 = arith.constant 0 : i32
    %c0_i32_0 = arith.constant 0 : i32
    %c0_i32_1 = arith.constant 0 : i32
    return %c0_i32, %c0_i32_0 : i32, i32
  }
  func.func @transform_3(%arg0: i32) -> (i32, i32) {
    %c0_i32 = arith.constant 0 : i32
    %c0_i32_0 = arith.constant 0 : i32
    return %arg0, %c0_i32 : i32, i32
  }
  func.func @transform_4(%arg0: i32) -> (i32, i32) {
    %c0_i32 = arith.constant 0 : i32
    %c0_i32_0 = arith.constant 0 : i32
    return %arg0, %c0_i32 : i32, i32
  }
}

module attributes {stable_mosaic.version = 11 : i64} {
  func.func @_conv_down_kernel(%arg0: i32, %arg1: memref<2x1152xbf16, #tpu.memory_space<vmem>>, %arg2: memref<1152x128xbf16, #tpu.memory_space<vmem>>, %arg3: memref<1x128xf32, #tpu.memory_space<vmem>>, %arg4: memref<128x128xbf16, #tpu.memory_space<vmem>>, %arg5: memref<1x128xf32, #tpu.memory_space<vmem>>, %arg6: memref<2x128xbf16, #tpu.memory_space<vmem>>, %arg7: memref<2x128xbf16, #tpu.memory_space<vmem>>) attributes {dimension_semantics = [#tpu.dimension_semantics<parallel>], iteration_bounds = array<i64: 1>, scalar_prefetch = 0 : i64, scratch_operands = 0 : i64, tpu.core_type = #tpu.core_type<tc>, window_params = [{transform_indices = @transform_0, window_bounds = array<i64: 2, 1152>}, {pipeline_mode = #tpu.pipeline_mode<synchronous>, transform_indices = @transform_1, window_bounds = array<i64: 1152, 128>}, {pipeline_mode = #tpu.pipeline_mode<synchronous>, transform_indices = @transform_2, window_bounds = array<i64: 1, 128>}, {pipeline_mode = #tpu.pipeline_mode<synchronous>, transform_indices = @transform_3, window_bounds = array<i64: 128, 128>}, {pipeline_mode = #tpu.pipeline_mode<synchronous>, transform_indices = @transform_4, window_bounds = array<i64: 1, 128>}, {transform_indices = @transform_5, window_bounds = array<i64: 2, 128>}, {transform_indices = @transform_6, window_bounds = array<i64: 2, 128>}]} {
    %c0 = arith.constant 0 : index
    %c0_0 = arith.constant 0 : index
    %0 = vector.load %arg1[%c0, %c0_0] : memref<2x1152xbf16, #tpu.memory_space<vmem>>, vector<2x1152xbf16>
    %c0_1 = arith.constant 0 : index
    %c0_2 = arith.constant 0 : index
    %1 = vector.load %arg2[%c0_1, %c0_2] : memref<1152x128xbf16, #tpu.memory_space<vmem>>, vector<1152x128xbf16>
    %cst = arith.constant dense<0.000000e+00> : vector<2x128xf32>
    %2 = tpu.matmul %0, %1, %cst {dimension_numbers = #tpu.dot_dimension_numbers<[1], [0], [0], [1], [0, 0, 1, 1], [], []>} : vector<2x1152xbf16>, vector<1152x128xbf16>, vector<2x128xf32> -> vector<2x128xf32>
    %c0_3 = arith.constant 0 : index
    %c0_4 = arith.constant 0 : index
    %3 = vector.load %arg3[%c0_3, %c0_4] : memref<1x128xf32, #tpu.memory_space<vmem>>, vector<1x128xf32>
    %4 = vector.broadcast %3 : vector<1x128xf32> to vector<2x128xf32>
    %5 = arith.addf %2, %4 : vector<2x128xf32>
    %cst_5 = arith.constant 0.000000e+00 : f32
    %6 = vector.broadcast %cst_5 : f32 to vector<2x128xf32>
    %7 = arith.maximumf %5, %6 : vector<2x128xf32>
    %8 = arith.truncf %7 : vector<2x128xf32> to vector<2x128xbf16>
    %c0_6 = arith.constant 0 : index
    %c0_7 = arith.constant 0 : index
    %9 = vector.load %arg6[%c0_6, %c0_7] : memref<2x128xbf16, #tpu.memory_space<vmem>>, vector<2x128xbf16>
    tpu.vector_store %arg6[%c0_6, %c0_7], %8 {strides = array<i32>} : memref<2x128xbf16, #tpu.memory_space<vmem>>, vector<2x128xbf16>,
    %10 = vector.extract_strided_slice %0 {offsets = [0, 512], sizes = [2, 128], strides = [1, 1]} : vector<2x1152xbf16> to vector<2x128xbf16>
    %c0_8 = arith.constant 0 : index
    %c0_9 = arith.constant 0 : index
    %11 = vector.load %arg4[%c0_8, %c0_9] : memref<128x128xbf16, #tpu.memory_space<vmem>>, vector<128x128xbf16>
    %cst_10 = arith.constant dense<0.000000e+00> : vector<2x128xf32>
    %12 = tpu.matmul %10, %11, %cst_10 {dimension_numbers = #tpu.dot_dimension_numbers<[1], [0], [0], [1], [0, 0, 1, 1], [], []>} : vector<2x128xbf16>, vector<128x128xbf16>, vector<2x128xf32> -> vector<2x128xf32>
    %c0_11 = arith.constant 0 : index
    %c0_12 = arith.constant 0 : index
    %13 = vector.load %arg5[%c0_11, %c0_12] : memref<1x128xf32, #tpu.memory_space<vmem>>, vector<1x128xf32>
    %14 = vector.broadcast %13 : vector<1x128xf32> to vector<2x128xf32>
    %15 = arith.addf %12, %14 : vector<2x128xf32>
    %16 = arith.truncf %15 : vector<2x128xf32> to vector<2x128xbf16>
    %c0_13 = arith.constant 0 : index
    %c0_14 = arith.constant 0 : index
    %17 = vector.load %arg7[%c0_13, %c0_14] : memref<2x128xbf16, #tpu.memory_space<vmem>>, vector<2x128xbf16>
    tpu.vector_store %arg7[%c0_13, %c0_14], %16 {strides = array<i32>} : memref<2x128xbf16, #tpu.memory_space<vmem>>, vector<2x128xbf16>,
    return
  }
  func.func @transform_0(%arg0: i32) -> (i32, i32) {
    %c0_i32 = arith.constant 0 : i32
    %c0_i32_0 = arith.constant 0 : i32
    return %arg0, %c0_i32 : i32, i32
  }
  func.func @transform_1(%arg0: i32) -> (i32, i32) {
    %c0_i32 = arith.constant 0 : i32
    %c0_i32_0 = arith.constant 0 : i32
    %c0_i32_1 = arith.constant 0 : i32
    return %c0_i32, %c0_i32_0 : i32, i32
  }
  func.func @transform_2(%arg0: i32) -> (i32, i32) {
    %c0_i32 = arith.constant 0 : i32
    %c0_i32_0 = arith.constant 0 : i32
    %c0_i32_1 = arith.constant 0 : i32
    return %c0_i32, %c0_i32_0 : i32, i32
  }
  func.func @transform_3(%arg0: i32) -> (i32, i32) {
    %c0_i32 = arith.constant 0 : i32
    %c0_i32_0 = arith.constant 0 : i32
    %c0_i32_1 = arith.constant 0 : i32
    return %c0_i32, %c0_i32_0 : i32, i32
  }
  func.func @transform_4(%arg0: i32) -> (i32, i32) {
    %c0_i32 = arith.constant 0 : i32
    %c0_i32_0 = arith.constant 0 : i32
    %c0_i32_1 = arith.constant 0 : i32
    return %c0_i32, %c0_i32_0 : i32, i32
  }
  func.func @transform_5(%arg0: i32) -> (i32, i32) {
    %c0_i32 = arith.constant 0 : i32
    %c0_i32_0 = arith.constant 0 : i32
    return %arg0, %c0_i32 : i32, i32
  }
  func.func @transform_6(%arg0: i32) -> (i32, i32) {
    %c0_i32 = arith.constant 0 : i32
    %c0_i32_0 = arith.constant 0 : i32
    return %arg0, %c0_i32 : i32, i32
  }
}

module attributes {stable_mosaic.version = 11 : i64} {
  func.func @_conv_res_kernel(%arg0: i32, %arg1: memref<2x1152xbf16, #tpu.memory_space<vmem>>, %arg2: memref<1152x128xbf16, #tpu.memory_space<vmem>>, %arg3: memref<1x128xf32, #tpu.memory_space<vmem>>, %arg4: memref<2x128xbf16, #tpu.memory_space<vmem>>, %arg5: memref<2x128xbf16, #tpu.memory_space<vmem>>) attributes {dimension_semantics = [#tpu.dimension_semantics<parallel>], iteration_bounds = array<i64: 1>, scalar_prefetch = 0 : i64, scratch_operands = 0 : i64, tpu.core_type = #tpu.core_type<tc>, window_params = [{transform_indices = @transform_0, window_bounds = array<i64: 2, 1152>}, {pipeline_mode = #tpu.pipeline_mode<synchronous>, transform_indices = @transform_1, window_bounds = array<i64: 1152, 128>}, {pipeline_mode = #tpu.pipeline_mode<synchronous>, transform_indices = @transform_2, window_bounds = array<i64: 1, 128>}, {transform_indices = @transform_3, window_bounds = array<i64: 2, 128>}, {transform_indices = @transform_4, window_bounds = array<i64: 2, 128>}]} {
    %c0 = arith.constant 0 : index
    %c0_0 = arith.constant 0 : index
    %0 = vector.load %arg1[%c0, %c0_0] : memref<2x1152xbf16, #tpu.memory_space<vmem>>, vector<2x1152xbf16>
    %c0_1 = arith.constant 0 : index
    %c0_2 = arith.constant 0 : index
    %1 = vector.load %arg2[%c0_1, %c0_2] : memref<1152x128xbf16, #tpu.memory_space<vmem>>, vector<1152x128xbf16>
    %cst = arith.constant dense<0.000000e+00> : vector<2x128xf32>
    %2 = tpu.matmul %0, %1, %cst {dimension_numbers = #tpu.dot_dimension_numbers<[1], [0], [0], [1], [0, 0, 1, 1], [], []>} : vector<2x1152xbf16>, vector<1152x128xbf16>, vector<2x128xf32> -> vector<2x128xf32>
    %c0_3 = arith.constant 0 : index
    %c0_4 = arith.constant 0 : index
    %3 = vector.load %arg3[%c0_3, %c0_4] : memref<1x128xf32, #tpu.memory_space<vmem>>, vector<1x128xf32>
    %4 = vector.broadcast %3 : vector<1x128xf32> to vector<2x128xf32>
    %5 = arith.addf %2, %4 : vector<2x128xf32>
    %c0_5 = arith.constant 0 : index
    %c0_6 = arith.constant 0 : index
    %6 = vector.load %arg4[%c0_5, %c0_6] : memref<2x128xbf16, #tpu.memory_space<vmem>>, vector<2x128xbf16>
    %7 = arith.extf %6 : vector<2x128xbf16> to vector<2x128xf32>
    %8 = arith.addf %5, %7 : vector<2x128xf32>
    %cst_7 = arith.constant 0.000000e+00 : f32
    %9 = vector.broadcast %cst_7 : f32 to vector<2x128xf32>
    %10 = arith.maximumf %8, %9 : vector<2x128xf32>
    %11 = arith.truncf %10 : vector<2x128xf32> to vector<2x128xbf16>
    %c0_8 = arith.constant 0 : index
    %c0_9 = arith.constant 0 : index
    %12 = vector.load %arg5[%c0_8, %c0_9] : memref<2x128xbf16, #tpu.memory_space<vmem>>, vector<2x128xbf16>
    tpu.vector_store %arg5[%c0_8, %c0_9], %11 {strides = array<i32>} : memref<2x128xbf16, #tpu.memory_space<vmem>>, vector<2x128xbf16>,
    return
  }
  func.func @transform_0(%arg0: i32) -> (i32, i32) {
    %c0_i32 = arith.constant 0 : i32
    %c0_i32_0 = arith.constant 0 : i32
    return %arg0, %c0_i32 : i32, i32
  }
  func.func @transform_1(%arg0: i32) -> (i32, i32) {
    %c0_i32 = arith.constant 0 : i32
    %c0_i32_0 = arith.constant 0 : i32
    %c0_i32_1 = arith.constant 0 : i32
    return %c0_i32, %c0_i32_0 : i32, i32
  }
  func.func @transform_2(%arg0: i32) -> (i32, i32) {
    %c0_i32 = arith.constant 0 : i32
    %c0_i32_0 = arith.constant 0 : i32
    %c0_i32_1 = arith.constant 0 : i32
    return %c0_i32, %c0_i32_0 : i32, i32
  }
  func.func @transform_3(%arg0: i32) -> (i32, i32) {
    %c0_i32 = arith.constant 0 : i32
    %c0_i32_0 = arith.constant 0 : i32
    return %arg0, %c0_i32 : i32, i32
  }
  func.func @transform_4(%arg0: i32) -> (i32, i32) {
    %c0_i32 = arith.constant 0 : i32
    %c0_i32_0 = arith.constant 0 : i32
    return %arg0, %c0_i32 : i32, i32
  }
}

module attributes {stable_mosaic.version = 11 : i64} {
  func.func @_pool_fc_kernel(%arg0: memref<2x1x128xbf16, #tpu.memory_space<vmem>>, %arg1: memref<128x128xf32, #tpu.memory_space<vmem>>, %arg2: memref<1x128xf32, #tpu.memory_space<vmem>>, %arg3: memref<2x128xf32, #tpu.memory_space<vmem>>) attributes {dimension_semantics = [], scalar_prefetch = 0 : i64, scratch_operands = 0 : i64, tpu.core_type = #tpu.core_type<tc>} {
    %c0 = arith.constant 0 : index
    %c0_0 = arith.constant 0 : index
    %c0_1 = arith.constant 0 : index
    %0 = vector.load %arg0[%c0, %c0_0, %c0_1] : memref<2x1x128xbf16, #tpu.memory_space<vmem>>, vector<2x1x128xbf16>
    %1 = arith.extf %0 : vector<2x1x128xbf16> to vector<2x1x128xf32>
    %cst = arith.constant dense<0.000000e+00> : vector<2x128xf32>
    %2 = vector.multi_reduction <add>, %1, %cst [1] : vector<2x1x128xf32> to vector<2x128xf32>
    %cst_2 = arith.constant 1.000000e+00 : f32
    %3 = vector.broadcast %cst_2 : f32 to vector<2x128xf32>
    %4 = arith.divf %2, %3 : vector<2x128xf32>
    %c0_3 = arith.constant 0 : index
    %c0_4 = arith.constant 0 : index
    %5 = vector.load %arg1[%c0_3, %c0_4] : memref<128x128xf32, #tpu.memory_space<vmem>>, vector<128x128xf32>
    %cst_5 = arith.constant dense<0.000000e+00> : vector<2x128xf32>
    %6 = tpu.matmul %4, %5, %cst_5 {dimension_numbers = #tpu.dot_dimension_numbers<[1], [0], [0], [1], [0, 0, 1, 1], [], []>} : vector<2x128xf32>, vector<128x128xf32>, vector<2x128xf32> -> vector<2x128xf32>
    %c0_6 = arith.constant 0 : index
    %c0_7 = arith.constant 0 : index
    %7 = vector.load %arg2[%c0_6, %c0_7] : memref<1x128xf32, #tpu.memory_space<vmem>>, vector<1x128xf32>
    %8 = vector.broadcast %7 : vector<1x128xf32> to vector<2x128xf32>
    %9 = arith.addf %6, %8 : vector<2x128xf32>
    %c0_8 = arith.constant 0 : index
    %c0_9 = arith.constant 0 : index
    %10 = vector.load %arg3[%c0_8, %c0_9] : memref<2x128xf32, #tpu.memory_space<vmem>>, vector<2x128xf32>
    tpu.vector_store %arg3[%c0_8, %c0_9], %9 {strides = array<i32>} : memref<2x128xf32, #tpu.memory_space<vmem>>, vector<2x128xf32>,
    return
  }
}

</mosaic_0001>

<llo_original>
// kernel: _lambda_.12
$region0: #{_lambda_.12}
  #allocation0 [shape = 'u32[]', space=smem, size = 0x4, offset = 0x4, fixed_abs, tag = 'smem constant byte address 0x4 - core index']
  #allocation1 [shape = 'u32[144,128]{1,0:T(1,128)}', space=vmem, size = 0x12000, scoped, tag = 'internal scratch']
  %s0 = inlined_call_operand.vmem [shape: bf16[512,147], index: 0, kind: input, shape index: {}]
  %s1 = inlined_call_operand.vmem [shape: bf16[147,128], index: 1, kind: input, shape index: {}]
  %s2 = inlined_call_operand.vmem [shape: f32[1,128], index: 2, kind: input, shape index: {}]
  %s3 = inlined_call_operand.vmem [shape: bf16[512,128], index: 3, kind: output, shape index: {}]
  %s4 = sld [smem:[#allocation0]]
  $region45: #{_lambda_.12} parent=0
    _
  %s6 = ssub.s32 1, %s4
  %s7 = scalar_select 0, %s6, %s4
  loop: start=0, step=1, limit=4
  $region2: #{_lambda_.12} parent=0 // loop_pre_header
    _
  $region3: #{_lambda_.12} parent=0 // loop_header
    %s9 = sphi 0, %s13
    %p10 = scmp.ge.s32.totalorder %s9, 4
    %s19 = sphi 0, %s21
    %s22 = sphi 0, %s19
    %s23 = sphi 0, %s22
    %s39 = sphi 0, %s23
    %s43 = sphi 0, %s43
    %s45 = sphi 0, %s43
    %s46 = sphi 0, %s45
    %s60 = sphi 0, %s46
    %s64 = sphi 0, %s64
    %s66 = sphi 0, %s64
    %s67 = sphi 0, %s66
    %s81 = sphi 0, %s67
    %s87 = sphi 0, %s89
    %s90 = sphi 0, %s87
    %s91 = sphi 0, %s90
    %s107 = sphi 0, %s91
  $region4: #{_lambda_.12} parent=0 // loop_header_branch
    %12 = sbr.rel (%p10) target = $region8
  $region5: #{_lambda_.12} parent=0 // loop_body
    %s14 = ssub.s32 %s9, 1
    %s15 = ssub.s32 %s9, 2
    %s16 = sadd.s32 %s9, 1
    %s17 = ssub.s32 %s9, %s16
    %p18 = scmp.eq.s32.totalorder %s17, 0
    %s20 = sadd.s32 %s19, 1
    %s21 = scalar_select %p18, %s19, %s20
    %p24 = pneg %p18
    %p25 = scmp.eq.s32.totalorder %s9, 1
    %p26 = por %p24, %p25
    %p27 = scmp.ne.s32.totalorder %s19, %s22
    %p28 = scmp.eq.s32.totalorder %s9, 0
    %p29 = por %p27, %p28
    %p30 = scmp.ne.s32.totalorder %s19, %s22
    %p31 = scmp.eq.s32.totalorder %s14, 1
    %p32 = por %p30, %p31
    %p33 = scmp.ne.s32.totalorder %s22, %s23
    %p34 = scmp.eq.s32.totalorder %s14, 0
    %p35 = por %p33, %p34
    %p36 = scmp.ne.s32.totalorder %s22, %s23
    %p37 = scmp.eq.s32.totalorder %s15, 1
    %p38 = por %p36, %p37
    %p40 = scmp.ne.s32.totalorder %s23, %s39
    %p41 = scmp.eq.s32.totalorder %s15, 0
    %p42 = por %p40, %p41
    %s44 = sadd.s32 %s43, 1
    %p47 = scmp.eq.s32.totalorder %s9, 1
    %p48 = scmp.ne.s32.totalorder %s43, %s45
    %p49 = scmp.eq.s32.totalorder %s9, 0
    %p50 = por %p48, %p49
    %p51 = scmp.ne.s32.totalorder %s43, %s45
    %p52 = scmp.eq.s32.totalorder %s14, 1
    %p53 = por %p51, %p52
    %p54 = scmp.ne.s32.totalorder %s45, %s46
    %p55 = scmp.eq.s32.totalorder %s14, 0
    %p56 = por %p54, %p55
    %p57 = scmp.ne.s32.totalorder %s45, %s46
    %p58 = scmp.eq.s32.totalorder %s15, 1
    %p59 = por %p57, %p58
    %p61 = scmp.ne.s32.totalorder %s46, %s60
    %p62 = scmp.eq.s32.totalorder %s15, 0
    %p63 = por %p61, %p62
    %s65 = sadd.s32 %s64, 1
    %p68 = scmp.eq.s32.totalorder %s9, 1
    %p69 = scmp.ne.s32.totalorder %s64, %s66
    %p70 = scmp.eq.s32.totalorder %s9, 0
    %p71 = por %p69, %p70
    %p72 = scmp.ne.s32.totalorder %s64, %s66
    %p73 = scmp.eq.s32.totalorder %s14, 1
    %p74 = por %p72, %p73
    %p75 = scmp.ne.s32.totalorder %s66, %s67
    %p76 = scmp.eq.s32.totalorder %s14, 0
    %p77 = por %p75, %p76
    %p78 = scmp.ne.s32.totalorder %s66, %s67
    %p79 = scmp.eq.s32.totalorder %s15, 1
    %p80 = por %p78, %p79
    %p82 = scmp.ne.s32.totalorder %s67, %s81
    %p83 = scmp.eq.s32.totalorder %s15, 0
    %p84 = por %p82, %p83
    %s85 = ssub.s32 %s9, %s16
    %p86 = scmp.eq.s32.totalorder %s85, 0
    %s88 = sadd.s32 %s87, 1
    %s89 = scalar_select %p86, %s87, %s88
    %p92 = pneg %p86
    %p93 = scmp.eq.s32.totalorder %s9, 1
    %p94 = por %p92, %p93
    %p95 = scmp.ne.s32.totalorder %s87, %s90
    %p96 = scmp.eq.s32.totalorder %s9, 0
    %p97 = por %p95, %p96
    %p98 = scmp.ne.s32.totalorder %s87, %s90
    %p99 = scmp.eq.s32.totalorder %s14, 1
    %p100 = por %p98, %p99
    %p101 = scmp.ne.s32.totalorder %s90, %s91
    %p102 = scmp.eq.s32.totalorder %s14, 0
    %p103 = por %p101, %p102
    %p104 = scmp.ne.s32.totalorder %s90, %s91
    %p105 = scmp.eq.s32.totalorder %s15, 1
    %p106 = por %p104, %p105
    %p108 = scmp.ne.s32.totalorder %s91, %s107
    %p109 = scmp.eq.s32.totalorder %s15, 0
    %p110 = por %p108, %p109
    %p111 = scmp.le.s32.totalorder 1, %s9
    %p112 = scmp.lt.s32.totalorder %s9, 3
    %p113 = pnand %p111, %p112
    %p114 = pneg %p113
    // Predicated region
    $region9: #{_lambda_.12} parent=5 // pred_check
      _
    $region10: #{_lambda_.12} parent=5 // pred_check_branch
      %116 = sbr.rel (%p113) target = $region12
    $region11: #{_lambda_.12} parent=5 // pred_region
      %s117 = ssub.s32 %s9, 1
      // Predicated region
      $region13: #{_lambda_.12} parent=11 // pred_check
        %p118 = pneg %p56
      $region14: #{_lambda_.12} parent=11 // pred_check_branch
        %120 = sbr.rel (%p118) target = $region16
      $region15: #{_lambda_.12} parent=11 // pred_region
        _
      $region16: #{_lambda_.12} parent=11 // pred_fallthru
        _
      // Predicated region
      $region17: #{_lambda_.12} parent=11 // pred_check
        %p121 = pneg %p77
      $region18: #{_lambda_.12} parent=11 // pred_check_branch
        %123 = sbr.rel (%p121) target = $region20
      $region19: #{_lambda_.12} parent=11 // pred_region
        _
      $region20: #{_lambda_.12} parent=11 // pred_fallthru
        _
    $region12: #{_lambda_.12} parent=5 // pred_fallthru
      _
    %p124 = scmp.lt.s32.totalorder %s9, 2
    // Predicated region
    $region21: #{_lambda_.12} parent=5 // pred_check
      %p125 = pneg %p124
    $region22: #{_lambda_.12} parent=5 // pred_check_branch
      %127 = sbr.rel (%p125) target = $region24
    $region23: #{_lambda_.12} parent=5 // pred_region
      // Predicated region
      $region25: #{_lambda_.12} parent=23 // pred_check
        %p128 = pneg %p29
      $region26: #{_lambda_.12} parent=23 // pred_check_branch
        %130 = sbr.rel (%p128) target = $region28
      $region27: #{_lambda_.12} parent=23 // pred_region
        %s131 = smul.u32 32, %s9
        %p132 = scmp.lt.s32.totalorder %s131, 63
        %s133 = scalar_select %p132, %s131, 63
        %s134 = smul.addr %s133, 2
        %s135 = smul.addr %s134, 4
        %s136 = scalar_lea.vmem %s0, %s135
        %s137 = smul.u32 32, %s9
      $region28: #{_lambda_.12} parent=23 // pred_fallthru
        _
    $region24: #{_lambda_.12} parent=5 // pred_fallthru
      _
    %p138 = scmp.le.s32.totalorder 1, %s9
    %p139 = scmp.lt.s32.totalorder %s9, 3
    %p140 = pnand %p138, %p139
    %p141 = pneg %p140
    // Predicated region
    $region29: #{_lambda_.12} parent=5 // pred_check
      _
    $region30: #{_lambda_.12} parent=5 // pred_check_branch
      %143 = sbr.rel (%p140) target = $region32
    $region31: #{_lambda_.12} parent=5 // pred_region
      %s144 = ssub.s32 %s9, 1
      %s145 = smul.u32 32, %s14
      %p146 = scmp.lt.s32.totalorder %s145, 63
      %s147 = scalar_select %p146, %s145, 63
      %s148 = smul.addr %s147, 2
      %s149 = smul.addr %s148, 4
      %s150 = scalar_lea.vmem %s0, %s149
      %p151 = pneg %p35
      %p152 = pneg %p32
      %p153 = pneg %p56
      %p154 = pneg %p53
      %p155 = pneg %p77
      %p156 = pneg %p74
      %p157 = pneg %p103
      %p158 = pneg %p100
      %s159 = smul.u32 32, %s14
      %p160 = scmp.lt.s32.totalorder %s159, 63
      %s161 = scalar_select %p160, %s159, 63
      %s162 = smul.addr %s161, 4
      %s163 = scalar_lea.vmem %s3, %s162
      %s164 = smul.u32 32, %s14
      %p165 = scmp.lt.s32.totalorder %s164, 63
      %s166 = scalar_select %p165, %s164, 63
      %s167 = smul.addr %s166, 2
      %s168 = smul.addr %s167, 4
      %s169 = scalar_lea.vmem %s0, %s168
      %s170 = smul.u32 32, %s14
      %s171 = smul.u32 32, %s14
      %p172 = scmp.lt.s32.totalorder %s171, 63
      %s173 = scalar_select %p172, %s171, 63
      %s174 = smul.addr %s173, 4
      %s175 = scalar_lea.vmem %s3, %s174
      %s176 = smul.u32 32, %s14
      %v178 = vld [vmem:[%s169] sm:$0xff]
      %v179 = vld [vmem:[%s169 + $0x8] sm:$0xff]
      %v180 = vld [vmem:[%s169 + $0x10] sm:$0xff]
      %v181 = vld [vmem:[%s169 + $0x18] sm:$0xff]
      %v182 = vld [vmem:[%s169 + $0x20] sm:$0xff]
      %v183 = vld [vmem:[%s169 + $0x28] sm:$0xff]
      %v184 = vld [vmem:[%s169 + $0x30] sm:$0xff]
      %v185 = vld [vmem:[%s169 + $0x38] sm:$0xff]
      %v186 = vld [vmem:[%s169 + $0x40] sm:$0xff]
      %v187 = vld [vmem:[%s169 + $0x48] sm:$0xff]
      %v188 = vld [vmem:[%s169 + $0x50] sm:$0xff]
      %v189 = vld [vmem:[%s169 + $0x58] sm:$0xff]
      %v190 = vld [vmem:[%s169 + $0x60] sm:$0xff]
      %v191 = vld [vmem:[%s169 + $0x68] sm:$0xff]
      %v192 = vld [vmem:[%s169 + $0x70] sm:$0xff]
      %v193 = vld [vmem:[%s169 + $0x78] sm:$0xff]
      %v194 = vld [vmem:[%s169 + $0x80] sm:$0xff]
      %v195 = vld [vmem:[%s169 + $0x88] sm:$0xff]
      %v196 = vld [vmem:[%s169 + $0x90] sm:$0xff]
      %v197 = vld [vmem:[%s169 + $0x98] sm:$0xff]
      %v198 = vld [vmem:[%s169 + $0xa0] sm:$0xff]
      %v199 = vld [vmem:[%s169 + $0xa8] sm:$0xff]
      %v200 = vld [vmem:[%s169 + $0xb0] sm:$0xff]
      %v201 = vld [vmem:[%s169 + $0xb8] sm:$0xff]
      %v202 = vld [vmem:[%s169 + $0xc0] sm:$0xff]
      %v203 = vld [vmem:[%s169 + $0xc8] sm:$0xff]
      %v204 = vld [vmem:[%s169 + $0xd0] sm:$0xff]
      %v205 = vld [vmem:[%s169 + $0xd8] sm:$0xff]
      %v206 = vld [vmem:[%s169 + $0xe0] sm:$0xff]
      %v207 = vld [vmem:[%s169 + $0xe8] sm:$0xff]
      %v208 = vld [vmem:[%s169 + $0xf0] sm:$0xff]
      %v209 = vld [vmem:[%s169 + $0xf8] sm:$0xff]
      %v210 = vld [vmem:[%s1] sm:$0xf]
      %v211 = vld [vmem:[%s1 + $0x4] sm:$0xf]
      %v212 = vld [vmem:[%s1 + $0x8] sm:$0xf]
      %v213 = vld [vmem:[%s1 + $0xc] sm:$0xf]
      %v214 = vld [vmem:[%s1 + $0x10] sm:$0xf]
      %v215 = vld [vmem:[%s1 + $0x14] sm:$0xf]
      %v216 = vld [vmem:[%s1 + $0x18] sm:$0xf]
      %v217 = vld [vmem:[%s1 + $0x1c] sm:$0xf]
      %v218 = vld [vmem:[%s1 + $0x20] sm:$0xf]
      %v219 = vld [vmem:[%s1 + $0x24] sm:$0xf]
      %v220 = vld [vmem:[%s1 + $0x28] sm:$0xf]
      %v221 = vld [vmem:[%s1 + $0x2c] sm:$0xf]
      %v222 = vld [vmem:[%s1 + $0x30] sm:$0xf]
      %v223 = vld [vmem:[%s1 + $0x34] sm:$0xf]
      %v224 = vld [vmem:[%s1 + $0x38] sm:$0xf]
      %v225 = vld [vmem:[%s1 + $0x3c] sm:$0xf]
      %v226 = vld [vmem:[%s1 + $0x40] sm:$0xf]
      %v227 = vld [vmem:[%s1 + $0x44] sm:$0xf]
      %v228 = vld [vmem:[%s1 + $0x48] sm:$0x3]
      %v229 = vld [vmem:[%s2] sm:$0x1]
      %v231 = vlaneseq
      %v232 = vshrl.u32 %v231, 7
      %v233 = vsub.s32 0, %v232
      %v234 = vrot.slane %v229, %v233
      %v268 = vunpack.c.l.b16 %v178
      %v269 = vunpack.c.h.b16 %v178
      %v270 = vunpack.c.l.b16 %v179
      %v271 = vunpack.c.h.b16 %v179
      %v272 = vunpack.c.l.b16 %v180
      %v273 = vunpack.c.h.b16 %v180
      %v274 = vunpack.c.l.b16 %v181
      %v275 = vunpack.c.h.b16 %v181
      %v276 = vunpack.c.l.b16 %v182
      %v277 = vunpack.c.h.b16 %v182
      %v278 = vunpack.c.l.b16 %v183
      %v279 = vunpack.c.h.b16 %v183
      %v280 = vunpack.c.l.b16 %v184
      %v281 = vunpack.c.h.b16 %v184
      %v282 = vunpack.c.l.b16 %v185
      %v283 = vunpack.c.h.b16 %v185
      %v284 = vunpack.c.l.b16 %v186
      %v285 = vunpack.c.h.b16 %v186
      %v286 = vunpack.c.l.b16 %v187
      %v287 = vunpack.c.h.b16 %v187
      %v288 = vunpack.c.l.b16 %v188
      %v289 = vunpack.c.h.b16 %v188
      %v290 = vunpack.c.l.b16 %v189
      %v291 = vunpack.c.h.b16 %v189
      %v292 = vunpack.c.l.b16 %v190
      %v293 = vunpack.c.h.b16 %v190
      %v294 = vunpack.c.l.b16 %v191
      %v295 = vunpack.c.h.b16 %v191
      %v296 = vunpack.c.l.b16 %v192
      %v297 = vunpack.c.h.b16 %v192
      %v298 = vunpack.c.l.b16 %v193
      %v299 = vunpack.c.h.b16 %v193
      %v300 = vunpack.c.l.b16 %v194
      %v301 = vunpack.c.h.b16 %v194
      %v302 = vunpack.c.l.b16 %v195
      %v303 = vunpack.c.h.b16 %v195
      %v304 = vunpack.c.l.b16 %v196
      %v305 = vunpack.c.h.b16 %v196
      %v306 = vunpack.c.l.b16 %v197
      %v307 = vunpack.c.h.b16 %v197
      %v308 = vunpack.c.l.b16 %v198
      %v309 = vunpack.c.h.b16 %v198
      %v310 = vunpack.c.l.b16 %v199
      %v311 = vunpack.c.h.b16 %v199
      %v312 = vunpack.c.l.b16 %v200
      %v313 = vunpack.c.h.b16 %v200
      %v314 = vunpack.c.l.b16 %v201
      %v315 = vunpack.c.h.b16 %v201
      %v316 = vunpack.c.l.b16 %v202
      %v317 = vunpack.c.h.b16 %v202
      %v318 = vunpack.c.l.b16 %v203
      %v319 = vunpack.c.h.b16 %v203
      %v320 = vunpack.c.l.b16 %v204
      %v321 = vunpack.c.h.b16 %v204
      %v322 = vunpack.c.l.b16 %v205
      %v323 = vunpack.c.h.b16 %v205
      %v324 = vunpack.c.l.b16 %v206
      %v325 = vunpack.c.h.b16 %v206
      %v326 = vunpack.c.l.b16 %v207
      %v327 = vunpack.c.h.b16 %v207
      %v328 = vunpack.c.l.b16 %v208
      %v329 = vunpack.c.h.b16 %v208
      %v330 = vunpack.c.l.b16 %v209
      %v331 = vunpack.c.h.b16 %v209
      %v332 = vpack.c.b16 %v270, %v268
      %v333 = vpack.c.b16 %v271, %v269
      %v334 = vpack.c.b16 %v274, %v272
      %v335 = vpack.c.b16 %v275, %v273
      %v336 = vpack.c.b16 %v278, %v276
      %v337 = vpack.c.b16 %v279, %v277
      %v338 = vpack.c.b16 %v282, %v280
      %v339 = vpack.c.b16 %v283, %v281
      %v340 = vpack.c.b16 %v286, %v284
      %v341 = vpack.c.b16 %v287, %v285
      %v342 = vpack.c.b16 %v290, %v288
      %v343 = vpack.c.b16 %v291, %v289
      %v344 = vpack.c.b16 %v294, %v292
      %v345 = vpack.c.b16 %v295, %v293
      %v346 = vpack.c.b16 %v298, %v296
      %v347 = vpack.c.b16 %v299, %v297
      %v348 = vpack.c.b16 %v302, %v300
      %v349 = vpack.c.b16 %v303, %v301
      %v350 = vpack.c.b16 %v306, %v304
      %v351 = vpack.c.b16 %v307, %v305
      %v352 = vpack.c.b16 %v310, %v308
      %v353 = vpack.c.b16 %v311, %v309
      %v354 = vpack.c.b16 %v314, %v312
      %v355 = vpack.c.b16 %v315, %v313
      %v356 = vpack.c.b16 %v318, %v316
      %v357 = vpack.c.b16 %v319, %v317
      %v358 = vpack.c.b16 %v322, %v320
      %v359 = vpack.c.b16 %v323, %v321
      %v360 = vpack.c.b16 %v326, %v324
      %v361 = vpack.c.b16 %v327, %v325
      %v362 = vpack.c.b16 %v330, %v328
      %v363 = vpack.c.b16 %v331, %v329
      %v399 = vunpack.c.l.b16 %v210
      %v400 = vunpack.c.l.b16 %v211
      %v401 = vunpack.c.l.b16 %v212
      %v402 = vunpack.c.l.b16 %v213
      %v403 = vunpack.c.l.b16 %v214
      %v404 = vunpack.c.l.b16 %v215
      %v405 = vunpack.c.l.b16 %v216
      %v406 = vunpack.c.l.b16 %v217
      %v407 = vunpack.c.l.b16 %v218
      %v408 = vunpack.c.l.b16 %v219
      %v409 = vunpack.c.l.b16 %v220
      %v410 = vunpack.c.l.b16 %v221
      %v411 = vunpack.c.l.b16 %v222
      %v412 = vunpack.c.l.b16 %v223
      %v413 = vunpack.c.l.b16 %v224
      %v414 = vunpack.c.l.b16 %v225
      %v415 = vunpack.c.l.b16 %v226
      %v416 = vunpack.c.l.b16 %v227
      %v417 = vunpack.c.l.b16 %v228
      %v418 = vpack.c.b16 %v400, %v399
      %v419 = vpack.c.b16 %v402, %v401
      %v420 = vpack.c.b16 %v404, %v403
      %v421 = vpack.c.b16 %v406, %v405
      %v422 = vpack.c.b16 %v408, %v407
      %v423 = vpack.c.b16 %v410, %v409
      %v424 = vpack.c.b16 %v412, %v411
      %v425 = vpack.c.b16 %v414, %v413
      %v426 = vpack.c.b16 %v416, %v415
      %v427 = vpack.c.b16 %v417, %v417
      %vm437 = vcmask 154624
      %v439 = vsel %vm437, %v333, 0
      %v442 = vsel %vm437, %v335, 0
      %v445 = vsel %vm437, %v337, 0
      %v448 = vsel %vm437, %v339, 0
      %v451 = vsel %vm437, %v341, 0
      %v454 = vsel %vm437, %v343, 0
      %v457 = vsel %vm437, %v345, 0
      %v460 = vsel %vm437, %v347, 0
      %v463 = vsel %vm437, %v349, 0
      %v466 = vsel %vm437, %v351, 0
      %v469 = vsel %vm437, %v353, 0
      %v472 = vsel %vm437, %v355, 0
      %v475 = vsel %vm437, %v357, 0
      %v478 = vsel %vm437, %v359, 0
      %v481 = vsel %vm437, %v361, 0
      %v484 = vsel %vm437, %v363, 0
      %vm486 = vcmask 1040384
      %vm487 = vcmask 1041408
      %v488 = vsel %vm486, 4294967295, 65535
      %v489 = vsel %vm487, %v488, 0
      %v491 = vand.u32 %v427, %v489
      %493 = vmatprep.subr.bf16.mxu0 0
      %494 = vmatpush1.bf16.msra.mxu0 %v418
      %495 = vmatprep.subr.bf16.mxu0 0
      %496 = vmatpush1.bf16.msra.mxu0 %v419
      %497 = vmatprep.subr.bf16.mxu0 0
      %498 = vmatpush1.bf16.msra.mxu0 %v420
      %499 = vmatprep.subr.bf16.mxu0 0
      %500 = vmatpush1.bf16.msra.mxu0 %v421
      %501 = vmatprep.subr.bf16.mxu0 0
      %502 = vmatpush1.bf16.msra.mxu0 %v422
      %503 = vmatprep.subr.bf16.mxu0 0
      %504 = vmatpush1.bf16.msra.mxu0 %v423
      %505 = vmatprep.subr.bf16.mxu0 0
      %506 = vmatpush1.bf16.msra.mxu0 %v424
      %507 = vmatprep.subr.bf16.mxu0 0
      %508 = vmatpush1.bf16.msra.mxu0 %v425
      %509 = vmatprep.subr.bf16.mxu0 0
      %510 = vmatpush1.bf16.msra.mxu0 %v426
      %511 = vmatprep.subr.bf16.mxu0 0
      %512 = vmatpush1.bf16.msra.mxu0 %v491
      %513 = vmatprep.subr.bf16.mxu0 0
      %514 = vmatpush1.bf16.msra.mxu0 0
      %515 = vmatprep.subr.bf16.mxu0 0
      %516 = vmatpush1.bf16.msra.mxu0 0
      %517 = vmatprep.subr.bf16.mxu0 0
      %518 = vmatpush1.bf16.msra.mxu0 0
      %519 = vmatprep.subr.bf16.mxu0 0
      %520 = vmatpush1.bf16.msra.mxu0 0
      %521 = vmatprep.subr.bf16.mxu0 0
      %522 = vmatpush1.bf16.msra.mxu0 0
      %523 = vmatprep.subr.bf16.mxu0 0
      %524 = vmatpush1.bf16.msra.mxu0 0
      %525 = vmatprep.mubr.bf16.mxu0 %v439
      %526 = vmatmul.mubr.bf16.gmra.mrb[0].mxu0 %v332
      %v527 = vpop.f32.mrb[0].mxu0
      %v528 = vadd.f32 %v234, %v527
      %v529 = vpop.f32.mrb[0].mxu0
      %v530 = vpop.f32.mrb[0].mxu0
      %v531 = vadd.f32 %v234, %v530
      %v532 = vpop.f32.mrb[0].mxu0
      %533 = vmatprep.mubr.bf16.mxu0 %v442
      %534 = vmatmul.mubr.bf16.gmra.mrb[0].mxu0 %v334
      %v535 = vpop.f32.mrb[0].mxu0
      %v536 = vadd.f32 %v234, %v535
      %v537 = vpop.f32.mrb[0].mxu0
      %v538 = vpop.f32.mrb[0].mxu0
      %v539 = vadd.f32 %v234, %v538
      %v540 = vpop.f32.mrb[0].mxu0
      %541 = vmatprep.mubr.bf16.mxu0 %v445
      %542 = vmatmul.mubr.bf16.gmra.mrb[0].mxu0 %v336
      %v543 = vpop.f32.mrb[0].mxu0
      %v544 = vadd.f32 %v234, %v543
      %v545 = vpop.f32.mrb[0].mxu0
      %v546 = vpop.f32.mrb[0].mxu0
      %v547 = vadd.f32 %v234, %v546
      %v548 = vpop.f32.mrb[0].mxu0
      %549 = vmatprep.mubr.bf16.mxu0 %v448
      %550 = vmatmul.mubr.bf16.gmra.mrb[0].mxu0 %v338
      %v551 = vpop.f32.mrb[0].mxu0
      %v552 = vadd.f32 %v234, %v551
      %v553 = vpop.f32.mrb[0].mxu0
      %v554 = vpop.f32.mrb[0].mxu0
      %v555 = vadd.f32 %v234, %v554
      %v556 = vpop.f32.mrb[0].mxu0
      %557 = vmatprep.mubr.bf16.mxu0 %v451
      %558 = vmatmul.mubr.bf16.gmra.mrb[0].mxu0 %v340
      %v559 = vpop.f32.mrb[0].mxu0
      %v560 = vadd.f32 %v234, %v559
      %v561 = vpop.f32.mrb[0].mxu0
      %v562 = vpop.f32.mrb[0].mxu0
      %v563 = vadd.f32 %v234, %v562
      %v564 = vpop.f32.mrb[0].mxu0
      %565 = vmatprep.mubr.bf16.mxu0 %v454
      %566 = vmatmul.mubr.bf16.gmra.mrb[0].mxu0 %v342
      %v567 = vpop.f32.mrb[0].mxu0
      %v568 = vadd.f32 %v234, %v567
      %v569 = vpop.f32.mrb[0].mxu0
      %v570 = vpop.f32.mrb[0].mxu0
      %v571 = vadd.f32 %v234, %v570
      %v572 = vpop.f32.mrb[0].mxu0
      %573 = vmatprep.mubr.bf16.mxu0 %v457
      %574 = vmatmul.mubr.bf16.gmra.mrb[0].mxu0 %v344
      %v575 = vpop.f32.mrb[0].mxu0
      %v576 = vadd.f32 %v234, %v575
      %v577 = vpop.f32.mrb[0].mxu0
      %v578 = vpop.f32.mrb[0].mxu0
      %v579 = vadd.f32 %v234, %v578
      %v580 = vpop.f32.mrb[0].mxu0
      %581 = vmatprep.mubr.bf16.mxu0 %v460
      %582 = vmatmul.mubr.bf16.gmra.mrb[0].mxu0 %v346
      %v583 = vpop.f32.mrb[0].mxu0
      %v584 = vadd.f32 %v234, %v583
      %v585 = vpop.f32.mrb[0].mxu0
      %v586 = vpop.f32.mrb[0].mxu0
      %v587 = vadd.f32 %v234, %v586
      %v588 = vpop.f32.mrb[0].mxu0
      %589 = vmatprep.mubr.bf16.mxu0 %v463
      %590 = vmatmul.mubr.bf16.gmra.mrb[0].mxu0 %v348
      %v591 = vpop.f32.mrb[0].mxu0
      %v592 = vadd.f32 %v234, %v591
      %v593 = vpop.f32.mrb[0].mxu0
      %v594 = vpop.f32.mrb[0].mxu0
      %v595 = vadd.f32 %v234, %v594
      %v596 = vpop.f32.mrb[0].mxu0
      %597 = vmatprep.mubr.bf16.mxu0 %v466
      %598 = vmatmul.mubr.bf16.gmra.mrb[0].mxu0 %v350
      %v599 = vpop.f32.mrb[0].mxu0
      %v600 = vadd.f32 %v234, %v599
      %v601 = vpop.f32.mrb[0].mxu0
      %v602 = vpop.f32.mrb[0].mxu0
      %v603 = vadd.f32 %v234, %v602
      %v604 = vpop.f32.mrb[0].mxu0
      %605 = vmatprep.mubr.bf16.mxu0 %v469
      %606 = vmatmul.mubr.bf16.gmra.mrb[0].mxu0 %v352
      %v607 = vpop.f32.mrb[0].mxu0
      %v608 = vadd.f32 %v234, %v607
      %v609 = vpop.f32.mrb[0].mxu0
      %v610 = vpop.f32.mrb[0].mxu0
      %v611 = vadd.f32 %v234, %v610
      %v612 = vpop.f32.mrb[0].mxu0
      %613 = vmatprep.mubr.bf16.mxu0 %v472
      %614 = vmatmul.mubr.bf16.gmra.mrb[0].mxu0 %v354
      %v615 = vpop.f32.mrb[0].mxu0
      %v616 = vadd.f32 %v234, %v615
      %v617 = vpop.f32.mrb[0].mxu0
      %v618 = vpop.f32.mrb[0].mxu0
      %v619 = vadd.f32 %v234, %v618
      %v620 = vpop.f32.mrb[0].mxu0
      %621 = vmatprep.mubr.bf16.mxu0 %v475
      %622 = vmatmul.mubr.bf16.gmra.mrb[0].mxu0 %v356
      %v623 = vpop.f32.mrb[0].mxu0
      %v624 = vadd.f32 %v234, %v623
      %v625 = vpop.f32.mrb[0].mxu0
      %v626 = vpop.f32.mrb[0].mxu0
      %v627 = vadd.f32 %v234, %v626
      %v628 = vpop.f32.mrb[0].mxu0
      %629 = vmatprep.mubr.bf16.mxu0 %v478
      %630 = vmatmul.mubr.bf16.gmra.mrb[0].mxu0 %v358
      %v631 = vpop.f32.mrb[0].mxu0
      %v632 = vadd.f32 %v234, %v631
      %v633 = vpop.f32.mrb[0].mxu0
      %v634 = vpop.f32.mrb[0].mxu0
      %v635 = vadd.f32 %v234, %v634
      %v636 = vpop.f32.mrb[0].mxu0
      %637 = vmatprep.mubr.bf16.mxu0 %v481
      %638 = vmatmul.mubr.bf16.gmra.mrb[0].mxu0 %v360
      %v639 = vpop.f32.mrb[0].mxu0
      %v640 = vadd.f32 %v234, %v639
      %v641 = vpop.f32.mrb[0].mxu0
      %v642 = vpop.f32.mrb[0].mxu0
      %v643 = vadd.f32 %v234, %v642
      %v644 = vpop.f32.mrb[0].mxu0
      %645 = vmatprep.mubr.bf16.mxu0 %v484
      %646 = vmatmul.mubr.bf16.gmra.mrb[0].mxu0 %v362
      %v647 = vpop.f32.mrb[0].mxu0
      %v648 = vadd.f32 %v234, %v647
      %v649 = vpop.f32.mrb[0].mxu0
      %v650 = vpop.f32.mrb[0].mxu0
      %v651 = vadd.f32 %v234, %v650
      %v652 = vpop.f32.mrb[0].mxu0
      %653 = vdwg.mxu0
      %v654 = vmax.f32 %v528, 0.0
      %v655 = vmax.f32 %v531, 0.0
      %v656 = vmax.f32 %v536, 0.0
      %v657 = vmax.f32 %v539, 0.0
      %v658 = vmax.f32 %v544, 0.0
      %v659 = vmax.f32 %v547, 0.0
      %v660 = vmax.f32 %v552, 0.0
      %v661 = vmax.f32 %v555, 0.0
      %v662 = vmax.f32 %v560, 0.0
      %v663 = vmax.f32 %v563, 0.0
      %v664 = vmax.f32 %v568, 0.0
      %v665 = vmax.f32 %v571, 0.0
      %v666 = vmax.f32 %v576, 0.0
      %v667 = vmax.f32 %v579, 0.0
      %v668 = vmax.f32 %v584, 0.0
      %v669 = vmax.f32 %v587, 0.0
      %v670 = vmax.f32 %v592, 0.0
      %v671 = vmax.f32 %v595, 0.0
      %v672 = vmax.f32 %v600, 0.0
      %v673 = vmax.f32 %v603, 0.0
      %v674 = vmax.f32 %v608, 0.0
      %v675 = vmax.f32 %v611, 0.0
      %v676 = vmax.f32 %v616, 0.0
      %v677 = vmax.f32 %v619, 0.0
      %v678 = vmax.f32 %v624, 0.0
      %v679 = vmax.f32 %v627, 0.0
      %v680 = vmax.f32 %v632, 0.0
      %v681 = vmax.f32 %v635, 0.0
      %v682 = vmax.f32 %v640, 0.0
      %v683 = vmax.f32 %v643, 0.0
      %v684 = vmax.f32 %v648, 0.0
      %v685 = vmax.f32 %v651, 0.0
      %v686 = vpack.c.bf16 %v655, %v654
      %v687 = vpack.c.bf16 %v657, %v656
      %v688 = vpack.c.bf16 %v659, %v658
      %v689 = vpack.c.bf16 %v661, %v660
      %v690 = vpack.c.bf16 %v663, %v662
      %v691 = vpack.c.bf16 %v665, %v664
      %v692 = vpack.c.bf16 %v667, %v666
      %v693 = vpack.c.bf16 %v669, %v668
      %v694 = vpack.c.bf16 %v671, %v670
      %v695 = vpack.c.bf16 %v673, %v672
      %v696 = vpack.c.bf16 %v675, %v674
      %v697 = vpack.c.bf16 %v677, %v676
      %v698 = vpack.c.bf16 %v679, %v678
      %v699 = vpack.c.bf16 %v681, %v680
      %v700 = vpack.c.bf16 %v683, %v682
      %v701 = vpack.c.bf16 %v685, %v684
      %v718 = vunpack.c.l.b16 %v686
      %v719 = vunpack.c.h.b16 %v686
      %v720 = vunpack.c.l.b16 %v687
      %v721 = vunpack.c.h.b16 %v687
      %v722 = vunpack.c.l.b16 %v688
      %v723 = vunpack.c.h.b16 %v688
      %v724 = vunpack.c.l.b16 %v689
      %v725 = vunpack.c.h.b16 %v689
      %v726 = vunpack.c.l.b16 %v690
      %v727 = vunpack.c.h.b16 %v690
      %v728 = vunpack.c.l.b16 %v691
      %v729 = vunpack.c.h.b16 %v691
      %v730 = vunpack.c.l.b16 %v692
      %v731 = vunpack.c.h.b16 %v692
      %v732 = vunpack.c.l.b16 %v693
      %v733 = vunpack.c.h.b16 %v693
      %v734 = vunpack.c.l.b16 %v694
      %v735 = vunpack.c.h.b16 %v694
      %v736 = vunpack.c.l.b16 %v695
      %v737 = vunpack.c.h.b16 %v695
      %v738 = vunpack.c.l.b16 %v696
      %v739 = vunpack.c.h.b16 %v696
      %v740 = vunpack.c.l.b16 %v697
      %v741 = vunpack.c.h.b16 %v697
      %v742 = vunpack.c.l.b16 %v698
      %v743 = vunpack.c.h.b16 %v698
      %v744 = vunpack.c.l.b16 %v699
      %v745 = vunpack.c.h.b16 %v699
      %v746 = vunpack.c.l.b16 %v700
      %v747 = vunpack.c.h.b16 %v700
      %v748 = vunpack.c.l.b16 %v701
      %v749 = vunpack.c.h.b16 %v701
      %v750 = vpack.c.b16 %v718, %v718
      %v751 = vpack.c.b16 %v719, %v719
      %v752 = vpack.c.b16 %v720, %v720
      %v753 = vpack.c.b16 %v721, %v721
      %v754 = vpack.c.b16 %v722, %v722
      %v755 = vpack.c.b16 %v723, %v723
      %v756 = vpack.c.b16 %v724, %v724
      %v757 = vpack.c.b16 %v725, %v725
      %v758 = vpack.c.b16 %v726, %v726
      %v759 = vpack.c.b16 %v727, %v727
      %v760 = vpack.c.b16 %v728, %v728
      %v761 = vpack.c.b16 %v729, %v729
      %v762 = vpack.c.b16 %v730, %v730
      %v763 = vpack.c.b16 %v731, %v731
      %v764 = vpack.c.b16 %v732, %v732
      %v765 = vpack.c.b16 %v733, %v733
      %v766 = vpack.c.b16 %v734, %v734
      %v767 = vpack.c.b16 %v735, %v735
      %v768 = vpack.c.b16 %v736, %v736
      %v769 = vpack.c.b16 %v737, %v737
      %v770 = vpack.c.b16 %v738, %v738
      %v771 = vpack.c.b16 %v739, %v739
      %v772 = vpack.c.b16 %v740, %v740
      %v773 = vpack.c.b16 %v741, %v741
      %v774 = vpack.c.b16 %v742, %v742
      %v775 = vpack.c.b16 %v743, %v743
      %v776 = vpack.c.b16 %v744, %v744
      %v777 = vpack.c.b16 %v745, %v745
      %v778 = vpack.c.b16 %v746, %v746
      %v779 = vpack.c.b16 %v747, %v747
      %v780 = vpack.c.b16 %v748, %v748
      %v781 = vpack.c.b16 %v749, %v749
      %814 = vst [vmem:[%s175] sm:$0xf] %v750
      %815 = vst [vmem:[%s175 + $0x4] sm:$0xf] %v751
      %816 = vst [vmem:[%s175 + $0x8] sm:$0xf] %v752
      %817 = vst [vmem:[%s175 + $0xc] sm:$0xf] %v753
      %818 = vst [vmem:[%s175 + $0x10] sm:$0xf] %v754
      %819 = vst [vmem:[%s175 + $0x14] sm:$0xf] %v755
      %820 = vst [vmem:[%s175 + $0x18] sm:$0xf] %v756
      %821 = vst [vmem:[%s175 + $0x1c] sm:$0xf] %v757
      %822 = vst [vmem:[%s175 + $0x20] sm:$0xf] %v758
      %823 = vst [vmem:[%s175 + $0x24] sm:$0xf] %v759
      %824 = vst [vmem:[%s175 + $0x28] sm:$0xf] %v760
      %825 = vst [vmem:[%s175 + $0x2c] sm:$0xf] %v761
      %826 = vst [vmem:[%s175 + $0x30] sm:$0xf] %v762
      %827 = vst [vmem:[%s175 + $0x34] sm:$0xf] %v763
      %828 = vst [vmem:[%s175 + $0x38] sm:$0xf] %v764
      %829 = vst [vmem:[%s175 + $0x3c] sm:$0xf] %v765
      %830 = vst [vmem:[%s175 + $0x40] sm:$0xf] %v766
      %831 = vst [vmem:[%s175 + $0x44] sm:$0xf] %v767
      %832 = vst [vmem:[%s175 + $0x48] sm:$0xf] %v768
      %833 = vst [vmem:[%s175 + $0x4c] sm:$0xf] %v769
      %834 = vst [vmem:[%s175 + $0x50] sm:$0xf] %v770
      %835 = vst [vmem:[%s175 + $0x54] sm:$0xf] %v771
      %836 = vst [vmem:[%s175 + $0x58] sm:$0xf] %v772
      %837 = vst [vmem:[%s175 + $0x5c] sm:$0xf] %v773
      %838 = vst [vmem:[%s175 + $0x60] sm:$0xf] %v774
      %839 = vst [vmem:[%s175 + $0x64] sm:$0xf] %v775
      %840 = vst [vmem:[%s175 + $0x68] sm:$0xf] %v776
      %841 = vst [vmem:[%s175 + $0x6c] sm:$0xf] %v777
      %842 = vst [vmem:[%s175 + $0x70] sm:$0xf] %v778
      %843 = vst [vmem:[%s175 + $0x74] sm:$0xf] %v779
      %844 = vst [vmem:[%s175 + $0x78] sm:$0xf] %v780
      %845 = vst [vmem:[%s175 + $0x7c] sm:$0xf] %v781
      %s846 = smul.u32 32, %s14
      %p847 = scmp.lt.s32.totalorder %s846, 63
      %s848 = scalar_select %p847, %s846, 63
      %s849 = smul.addr %s848, 4
      %s850 = scalar_lea.vmem %s3, %s849
      // Predicated region
      $region33: #{_lambda_.12} parent=31 // pred_check
        %p851 = pneg %p100
      $region34: #{_lambda_.12} parent=31 // pred_check_branch
        %853 = sbr.rel (%p851) target = $region36
      $region35: #{_lambda_.12} parent=31 // pred_region
        %s854 = smul.u32 32, %s14
      $region36: #{_lambda_.12} parent=31 // pred_fallthru
        _
    $region32: #{_lambda_.12} parent=5 // pred_fallthru
      _
    %p855 = scmp.le.s32.totalorder 2, %s9
    // Predicated region
    $region37: #{_lambda_.12} parent=5 // pred_check
      %p856 = pneg %p855
    $region38: #{_lambda_.12} parent=5 // pred_check_branch
      %858 = sbr.rel (%p856) target = $region40
    $region39: #{_lambda_.12} parent=5 // pred_region
      %s859 = ssub.s32 %s9, 2
      // Predicated region
      $region41: #{_lambda_.12} parent=39 // pred_check
        %p860 = pneg %p106
      $region42: #{_lambda_.12} parent=39 // pred_check_branch
        %862 = sbr.rel (%p860) target = $region44
      $region43: #{_lambda_.12} parent=39 // pred_region
        %s863 = smul.u32 32, %s15
        %p864 = scmp.lt.s32.totalorder %s863, 63
        %s865 = scalar_select %p864, %s863, 63
        %s866 = smul.addr %s865, 4
        %s867 = scalar_lea.vmem %s3, %s866
      $region44: #{_lambda_.12} parent=39 // pred_fallthru
        _
    $region40: #{_lambda_.12} parent=5 // pred_fallthru
      _
  $region6: #{_lambda_.12} parent=0 // loop_footer
    %s13 = sadd.s32 1, %s9
  $region7: #{_lambda_.12} parent=0 // loop_footer_branch
    %8 = sbr.rel target = $region3
  $region8: #{_lambda_.12} parent=0 // loop_exit
    _

// kernel: _lambda_.13
$region0: #{_lambda_.13}
  #allocation0 [shape = 'u32[]', space=smem, size = 0x4, offset = 0x4, fixed_abs, tag = 'smem constant byte address 0x4 - core index']
  #allocation1 [shape = 'u32[144,128]{1,0:T(1,128)}', space=vmem, size = 0x12000, scoped, tag = 'internal scratch']
  %s0 = inlined_call_operand.vmem [shape: bf16[2,18,9,128], index: 0, kind: input, shape index: {}]
  %s1 = inlined_call_operand.vmem [shape: bf16[2,18,8,128], index: 1, kind: input, shape index: {}]
  %s2 = inlined_call_operand.vmem [shape: bf16[2,8,8,128], index: 2, kind: output, shape index: {}]
  %s3 = sld [smem:[#allocation0]]
  $region41: #{_lambda_.13} parent=0
    _
  %s5 = ssub.s32 1, %s3
  %s6 = scalar_select 0, %s5, %s3
  loop: start=0, step=1, limit=4
  $region2: #{_lambda_.13} parent=0 // loop_pre_header
    _
  $region3: #{_lambda_.13} parent=0 // loop_header
    %s8 = sphi 0, %s12
    %p9 = scmp.ge.s32.totalorder %s8, 4
    %s18 = sphi 0, %s20
    %s21 = sphi 0, %s18
    %s22 = sphi 0, %s21
    %s38 = sphi 0, %s22
    %s44 = sphi 0, %s46
    %s47 = sphi 0, %s44
    %s48 = sphi 0, %s47
    %s64 = sphi 0, %s48
    %s70 = sphi 0, %s72
    %s73 = sphi 0, %s70
    %s74 = sphi 0, %s73
    %s90 = sphi 0, %s74
  $region4: #{_lambda_.13} parent=0 // loop_header_branch
    %11 = sbr.rel (%p9) target = $region8
  $region5: #{_lambda_.13} parent=0 // loop_body
    %s13 = ssub.s32 %s8, 1
    %s14 = ssub.s32 %s8, 2
    %s15 = sadd.s32 %s8, 1
    %s16 = ssub.s32 %s8, %s15
    %p17 = scmp.eq.s32.totalorder %s16, 0
    %s19 = sadd.s32 %s18, 1
    %s20 = scalar_select %p17, %s18, %s19
    %p23 = pneg %p17
    %p24 = scmp.eq.s32.totalorder %s8, 1
    %p25 = por %p23, %p24
    %p26 = scmp.ne.s32.totalorder %s18, %s21
    %p27 = scmp.eq.s32.totalorder %s8, 0
    %p28 = por %p26, %p27
    %p29 = scmp.ne.s32.totalorder %s18, %s21
    %p30 = scmp.eq.s32.totalorder %s13, 1
    %p31 = por %p29, %p30
    %p32 = scmp.ne.s32.totalorder %s21, %s22
    %p33 = scmp.eq.s32.totalorder %s13, 0
    %p34 = por %p32, %p33
    %p35 = scmp.ne.s32.totalorder %s21, %s22
    %p36 = scmp.eq.s32.totalorder %s14, 1
    %p37 = por %p35, %p36
    %p39 = scmp.ne.s32.totalorder %s22, %s38
    %p40 = scmp.eq.s32.totalorder %s14, 0
    %p41 = por %p39, %p40
    %s42 = ssub.s32 %s8, %s15
    %p43 = scmp.eq.s32.totalorder %s42, 0
    %s45 = sadd.s32 %s44, 1
    %s46 = scalar_select %p43, %s44, %s45
    %p49 = pneg %p43
    %p50 = scmp.eq.s32.totalorder %s8, 1
    %p51 = por %p49, %p50
    %p52 = scmp.ne.s32.totalorder %s44, %s47
    %p53 = scmp.eq.s32.totalorder %s8, 0
    %p54 = por %p52, %p53
    %p55 = scmp.ne.s32.totalorder %s44, %s47
    %p56 = scmp.eq.s32.totalorder %s13, 1
    %p57 = por %p55, %p56
    %p58 = scmp.ne.s32.totalorder %s47, %s48
    %p59 = scmp.eq.s32.totalorder %s13, 0
    %p60 = por %p58, %p59
    %p61 = scmp.ne.s32.totalorder %s47, %s48
    %p62 = scmp.eq.s32.totalorder %s14, 1
    %p63 = por %p61, %p62
    %p65 = scmp.ne.s32.totalorder %s48, %s64
    %p66 = scmp.eq.s32.totalorder %s14, 0
    %p67 = por %p65, %p66
    %s68 = ssub.s32 %s8, %s15
    %p69 = scmp.eq.s32.totalorder %s68, 0
    %s71 = sadd.s32 %s70, 1
    %s72 = scalar_select %p69, %s70, %s71
    %p75 = pneg %p69
    %p76 = scmp.eq.s32.totalorder %s8, 1
    %p77 = por %p75, %p76
    %p78 = scmp.ne.s32.totalorder %s70, %s73
    %p79 = scmp.eq.s32.totalorder %s8, 0
    %p80 = por %p78, %p79
    %p81 = scmp.ne.s32.totalorder %s70, %s73
    %p82 = scmp.eq.s32.totalorder %s13, 1
    %p83 = por %p81, %p82
    %p84 = scmp.ne.s32.totalorder %s73, %s74
    %p85 = scmp.eq.s32.totalorder %s13, 0
    %p86 = por %p84, %p85
    %p87 = scmp.ne.s32.totalorder %s73, %s74
    %p88 = scmp.eq.s32.totalorder %s14, 1
    %p89 = por %p87, %p88
    %p91 = scmp.ne.s32.totalorder %s74, %s90
    %p92 = scmp.eq.s32.totalorder %s14, 0
    %p93 = por %p91, %p92
    %p94 = scmp.le.s32.totalorder 1, %s8
    %p95 = scmp.lt.s32.totalorder %s8, 3
    %p96 = pnand %p94, %p95
    %p97 = pneg %p96
    // Predicated region
    $region9: #{_lambda_.13} parent=5 // pred_check
      _
    $region10: #{_lambda_.13} parent=5 // pred_check_branch
      %99 = sbr.rel (%p96) target = $region12
    $region11: #{_lambda_.13} parent=5 // pred_region
      %s100 = ssub.s32 %s8, 1
    $region12: #{_lambda_.13} parent=5 // pred_fallthru
      _
    %p101 = scmp.lt.s32.totalorder %s8, 2
    // Predicated region
    $region13: #{_lambda_.13} parent=5 // pred_check
      %p102 = pneg %p101
    $region14: #{_lambda_.13} parent=5 // pred_check_branch
      %104 = sbr.rel (%p102) target = $region16
    $region15: #{_lambda_.13} parent=5 // pred_region
      // Predicated region
      $region17: #{_lambda_.13} parent=15 // pred_check
        %p105 = pneg %p28
      $region18: #{_lambda_.13} parent=15 // pred_check_branch
        %107 = sbr.rel (%p105) target = $region20
      $region19: #{_lambda_.13} parent=15 // pred_region
        %p108 = scmp.lt.s32.totalorder %s8, 1
        %s109 = scalar_select %p108, %s8, 1
        %s110 = smul.addr %s109, 36
        %s111 = smul.addr %s110, 4
        %s112 = scalar_lea.vmem %s0, %s111
      $region20: #{_lambda_.13} parent=15 // pred_fallthru
        _
      // Predicated region
      $region21: #{_lambda_.13} parent=15 // pred_check
        %p113 = pneg %p54
      $region22: #{_lambda_.13} parent=15 // pred_check_branch
        %115 = sbr.rel (%p113) target = $region24
      $region23: #{_lambda_.13} parent=15 // pred_region
        %p116 = scmp.lt.s32.totalorder %s8, 1
        %s117 = scalar_select %p116, %s8, 1
        %s118 = smul.addr %s117, 18
        %s119 = smul.addr %s118, 4
        %s120 = scalar_lea.vmem %s1, %s119
      $region24: #{_lambda_.13} parent=15 // pred_fallthru
        _
    $region16: #{_lambda_.13} parent=5 // pred_fallthru
      _
    %p121 = scmp.le.s32.totalorder 1, %s8
    %p122 = scmp.lt.s32.totalorder %s8, 3
    %p123 = pnand %p121, %p122
    %p124 = pneg %p123
    // Predicated region
    $region25: #{_lambda_.13} parent=5 // pred_check
      _
    $region26: #{_lambda_.13} parent=5 // pred_check_branch
      %126 = sbr.rel (%p123) target = $region28
    $region27: #{_lambda_.13} parent=5 // pred_region
      %s127 = ssub.s32 %s8, 1
      %p128 = scmp.lt.s32.totalorder %s13, 1
      %s129 = scalar_select %p128, %s13, 1
      %s130 = smul.addr %s129, 36
      %s131 = smul.addr %s130, 4
      %s132 = scalar_lea.vmem %s0, %s131
      %p133 = pneg %p34
      %p134 = pneg %p31
      %p135 = scmp.lt.s32.totalorder %s13, 1
      %s136 = scalar_select %p135, %s13, 1
      %s137 = smul.addr %s136, 18
      %s138 = smul.addr %s137, 4
      %s139 = scalar_lea.vmem %s1, %s138
      %p140 = pneg %p60
      %p141 = pneg %p57
      %p142 = pneg %p86
      %p143 = pneg %p83
      %p144 = scmp.lt.s32.totalorder %s13, 1
      %s145 = scalar_select %p144, %s13, 1
      %s146 = smul.addr %s145, 8
      %s147 = smul.addr %s146, 4
      %s148 = scalar_lea.vmem %s2, %s147
      %p149 = scmp.lt.s32.totalorder %s13, 1
      %s150 = scalar_select %p149, %s13, 1
      %s151 = smul.addr %s150, 36
      %s152 = smul.addr %s151, 4
      %s153 = scalar_lea.vmem %s0, %s152
      %p154 = scmp.lt.s32.totalorder %s13, 1
      %s155 = scalar_select %p154, %s13, 1
      %s156 = smul.addr %s155, 18
      %s157 = smul.addr %s156, 4
      %s158 = scalar_lea.vmem %s1, %s157
      %p159 = scmp.lt.s32.totalorder %s13, 1
      %s160 = scalar_select %p159, %s13, 1
      %s161 = smul.addr %s160, 8
      %s162 = smul.addr %s161, 4
      %s163 = scalar_lea.vmem %s2, %s162
      %v164 = vld [vmem:[%s153] sm:$0xf]
      %v165 = vld [vmem:[%s153 + $0x4] sm:$0x1]
      %v166 = vunpack.c.l.bf16 %v164
      %v167 = vunpack.c.l.bf16 %v165
      %v168 = vld [vmem:[%s158] sm:$0xf]
      %v169 = vunpack.c.l.bf16 %v168
      %vm172 = vcmask 1046528
      %v173 = vrot.slane %v166, 1
      %v174 = vrot.slane %v167, 1
      %v175 = vsel %vm172, %v173, %v174
      %v177 = vmax.f32 %v166, %v175
      %v178 = vmax.f32 %v177, %v169
      %s179 = scalar_lea.vmem %s153, 8
      %v180 = vld [vmem:[%s179] sm:$0xf]
      %v181 = vld [vmem:[%s179 + $0x4] sm:$0x1]
      %v182 = vunpack.c.l.bf16 %v180
      %v183 = vunpack.c.l.bf16 %v181
      %s184 = scalar_lea.vmem %s158, 4
      %v185 = vld [vmem:[%s184] sm:$0xf]
      %v186 = vunpack.c.l.bf16 %v185
      %v189 = vrot.slane %v182, 1
      %v190 = vrot.slane %v183, 1
      %v191 = vsel %vm172, %v189, %v190
      %v193 = vmax.f32 %v182, %v191
      %v194 = vmax.f32 %v193, %v186
      %v195 = vmax.f32 %v178, %v194
      %s196 = scalar_lea.vmem %s153, 16
      %v197 = vld [vmem:[%s196] sm:$0xf]
      %v198 = vld [vmem:[%s196 + $0x4] sm:$0x1]
      %v199 = vunpack.c.l.bf16 %v197
      %v200 = vunpack.c.l.bf16 %v198
      %s201 = scalar_lea.vmem %s158, 8
      %v202 = vld [vmem:[%s201] sm:$0xf]
      %v203 = vunpack.c.l.bf16 %v202
      %v206 = vrot.slane %v199, 1
      %v207 = vrot.slane %v200, 1
      %v208 = vsel %vm172, %v206, %v207
      %v210 = vmax.f32 %v199, %v208
      %v211 = vmax.f32 %v210, %v203
      %v212 = vmax.f32 %v195, %v211
      %v213 = vpack.c.bf16 %v212, %v212
      %214 = vst [vmem:[%s163] sm:$0xf] %v213
      %v215 = vld [vmem:[%s196] sm:$0xf]
      %v216 = vld [vmem:[%s196 + $0x4] sm:$0x1]
      %v217 = vunpack.c.l.bf16 %v215
      %v218 = vunpack.c.l.bf16 %v216
      %v219 = vld [vmem:[%s201] sm:$0xf]
      %v220 = vunpack.c.l.bf16 %v219
      %v223 = vrot.slane %v217, 1
      %v224 = vrot.slane %v218, 1
      %v225 = vsel %vm172, %v223, %v224
      %v227 = vmax.f32 %v217, %v225
      %v228 = vmax.f32 %v227, %v220
      %s229 = scalar_lea.vmem %s153, 24
      %v230 = vld [vmem:[%s229] sm:$0xf]
      %v231 = vld [vmem:[%s229 + $0x4] sm:$0x1]
      %v232 = vunpack.c.l.bf16 %v230
      %v233 = vunpack.c.l.bf16 %v231
      %s234 = scalar_lea.vmem %s158, 12
      %v235 = vld [vmem:[%s234] sm:$0xf]
      %v236 = vunpack.c.l.bf16 %v235
      %v239 = vrot.slane %v232, 1
      %v240 = vrot.slane %v233, 1
      %v241 = vsel %vm172, %v239, %v240
      %v243 = vmax.f32 %v232, %v241
      %v244 = vmax.f32 %v243, %v236
      %v245 = vmax.f32 %v228, %v244
      %s246 = scalar_lea.vmem %s153, 32
      %v247 = vld [vmem:[%s246] sm:$0xf]
      %v248 = vld [vmem:[%s246 + $0x4] sm:$0x1]
      %v249 = vunpack.c.l.bf16 %v247
      %v250 = vunpack.c.l.bf16 %v248
      %s251 = scalar_lea.vmem %s158, 16
      %v252 = vld [vmem:[%s251] sm:$0xf]
      %v253 = vunpack.c.l.bf16 %v252
      %v256 = vrot.slane %v249, 1
      %v257 = vrot.slane %v250, 1
      %v258 = vsel %vm172, %v256, %v257
      %v260 = vmax.f32 %v249, %v258
      %v261 = vmax.f32 %v260, %v253
      %v262 = vmax.f32 %v245, %v261
      %v263 = vpack.c.bf16 %v262, %v262
      %s264 = scalar_lea.vmem %s163, 4
      %265 = vst [vmem:[%s264] sm:$0xf] %v263
      %v266 = vld [vmem:[%s246] sm:$0xf]
      %v267 = vld [vmem:[%s246 + $0x4] sm:$0x1]
      %v268 = vunpack.c.l.bf16 %v266
      %v269 = vunpack.c.l.bf16 %v267
      %v270 = vld [vmem:[%s251] sm:$0xf]
      %v271 = vunpack.c.l.bf16 %v270
      %v274 = vrot.slane %v268, 1
      %v275 = vrot.slane %v269, 1
      %v276 = vsel %vm172, %v274, %v275
      %v278 = vmax.f32 %v268, %v276
      %v279 = vmax.f32 %v278, %v271
      %s280 = scalar_lea.vmem %s153, 40
      %v281 = vld [vmem:[%s280] sm:$0xf]
      %v282 = vld [vmem:[%s280 + $0x4] sm:$0x1]
      %v283 = vunpack.c.l.bf16 %v281
      %v284 = vunpack.c.l.bf16 %v282
      %s285 = scalar_lea.vmem %s158, 20
      %v286 = vld [vmem:[%s285] sm:$0xf]
      %v287 = vunpack.c.l.bf16 %v286
      %v290 = vrot.slane %v283, 1
      %v291 = vrot.slane %v284, 1
      %v292 = vsel %vm172, %v290, %v291
      %v294 = vmax.f32 %v283, %v292
      %v295 = vmax.f32 %v294, %v287
      %v296 = vmax.f32 %v279, %v295
      %s297 = scalar_lea.vmem %s153, 48
      %v298 = vld [vmem:[%s297] sm:$0xf]
      %v299 = vld [vmem:[%s297 + $0x4] sm:$0x1]
      %v300 = vunpack.c.l.bf16 %v298
      %v301 = vunpack.c.l.bf16 %v299
      %s302 = scalar_lea.vmem %s158, 24
      %v303 = vld [vmem:[%s302] sm:$0xf]
      %v304 = vunpack.c.l.bf16 %v303
      %v307 = vrot.slane %v300, 1
      %v308 = vrot.slane %v301, 1
      %v309 = vsel %vm172, %v307, %v308
      %v311 = vmax.f32 %v300, %v309
      %v312 = vmax.f32 %v311, %v304
      %v313 = vmax.f32 %v296, %v312
      %v314 = vpack.c.bf16 %v313, %v313
      %s315 = scalar_lea.vmem %s163, 8
      %316 = vst [vmem:[%s315] sm:$0xf] %v314
      %v317 = vld [vmem:[%s297] sm:$0xf]
      %v318 = vld [vmem:[%s297 + $0x4] sm:$0x1]
      %v319 = vunpack.c.l.bf16 %v317
      %v320 = vunpack.c.l.bf16 %v318
      %v321 = vld [vmem:[%s302] sm:$0xf]
      %v322 = vunpack.c.l.bf16 %v321
      %v325 = vrot.slane %v319, 1
      %v326 = vrot.slane %v320, 1
      %v327 = vsel %vm172, %v325, %v326
      %v329 = vmax.f32 %v319, %v327
      %v330 = vmax.f32 %v329, %v322
      %s331 = scalar_lea.vmem %s153, 56
      %v332 = vld [vmem:[%s331] sm:$0xf]
      %v333 = vld [vmem:[%s331 + $0x4] sm:$0x1]
      %v334 = vunpack.c.l.bf16 %v332
      %v335 = vunpack.c.l.bf16 %v333
      %s336 = scalar_lea.vmem %s158, 28
      %v337 = vld [vmem:[%s336] sm:$0xf]
      %v338 = vunpack.c.l.bf16 %v337
      %v341 = vrot.slane %v334, 1
      %v342 = vrot.slane %v335, 1
      %v343 = vsel %vm172, %v341, %v342
      %v345 = vmax.f32 %v334, %v343
      %v346 = vmax.f32 %v345, %v338
      %v347 = vmax.f32 %v330, %v346
      %s348 = scalar_lea.vmem %s153, 64
      %v349 = vld [vmem:[%s348] sm:$0xf]
      %v350 = vld [vmem:[%s348 + $0x4] sm:$0x1]
      %v351 = vunpack.c.l.bf16 %v349
      %v352 = vunpack.c.l.bf16 %v350
      %s353 = scalar_lea.vmem %s158, 32
      %v354 = vld [vmem:[%s353] sm:$0xf]
      %v355 = vunpack.c.l.bf16 %v354
      %v358 = vrot.slane %v351, 1
      %v359 = vrot.slane %v352, 1
      %v360 = vsel %vm172, %v358, %v359
      %v362 = vmax.f32 %v351, %v360
      %v363 = vmax.f32 %v362, %v355
      %v364 = vmax.f32 %v347, %v363
      %v365 = vpack.c.bf16 %v364, %v364
      %s366 = scalar_lea.vmem %s163, 12
      %367 = vst [vmem:[%s366] sm:$0xf] %v365
      %v368 = vld [vmem:[%s348] sm:$0xf]
      %v369 = vld [vmem:[%s348 + $0x4] sm:$0x1]
      %v370 = vunpack.c.l.bf16 %v368
      %v371 = vunpack.c.l.bf16 %v369
      %v372 = vld [vmem:[%s353] sm:$0xf]
      %v373 = vunpack.c.l.bf16 %v372
      %v376 = vrot.slane %v370, 1
      %v377 = vrot.slane %v371, 1
      %v378 = vsel %vm172, %v376, %v377
      %v380 = vmax.f32 %v370, %v378
      %v381 = vmax.f32 %v380, %v373
      %s382 = scalar_lea.vmem %s153, 72
      %v383 = vld [vmem:[%s382] sm:$0xf]
      %v384 = vld [vmem:[%s382 + $0x4] sm:$0x1]
      %v385 = vunpack.c.l.bf16 %v383
      %v386 = vunpack.c.l.bf16 %v384
      %s387 = scalar_lea.vmem %s158, 36
      %v388 = vld [vmem:[%s387] sm:$0xf]
      %v389 = vunpack.c.l.bf16 %v388
      %v392 = vrot.slane %v385, 1
      %v393 = vrot.slane %v386, 1
      %v394 = vsel %vm172, %v392, %v393
      %v396 = vmax.f32 %v385, %v394
      %v397 = vmax.f32 %v396, %v389
      %v398 = vmax.f32 %v381, %v397
      %s399 = scalar_lea.vmem %s153, 80
      %v400 = vld [vmem:[%s399] sm:$0xf]
      %v401 = vld [vmem:[%s399 + $0x4] sm:$0x1]
      %v402 = vunpack.c.l.bf16 %v400
      %v403 = vunpack.c.l.bf16 %v401
      %s404 = scalar_lea.vmem %s158, 40
      %v405 = vld [vmem:[%s404] sm:$0xf]
      %v406 = vunpack.c.l.bf16 %v405
      %v409 = vrot.slane %v402, 1
      %v410 = vrot.slane %v403, 1
      %v411 = vsel %vm172, %v409, %v410
      %v413 = vmax.f32 %v402, %v411
      %v414 = vmax.f32 %v413, %v406
      %v415 = vmax.f32 %v398, %v414
      %v416 = vpack.c.bf16 %v415, %v415
      %s417 = scalar_lea.vmem %s163, 16
      %418 = vst [vmem:[%s417] sm:$0xf] %v416
      %v419 = vld [vmem:[%s399] sm:$0xf]
      %v420 = vld [vmem:[%s399 + $0x4] sm:$0x1]
      %v421 = vunpack.c.l.bf16 %v419
      %v422 = vunpack.c.l.bf16 %v420
      %v423 = vld [vmem:[%s404] sm:$0xf]
      %v424 = vunpack.c.l.bf16 %v423
      %v427 = vrot.slane %v421, 1
      %v428 = vrot.slane %v422, 1
      %v429 = vsel %vm172, %v427, %v428
      %v431 = vmax.f32 %v421, %v429
      %v432 = vmax.f32 %v431, %v424
      %s433 = scalar_lea.vmem %s153, 88
      %v434 = vld [vmem:[%s433] sm:$0xf]
      %v435 = vld [vmem:[%s433 + $0x4] sm:$0x1]
      %v436 = vunpack.c.l.bf16 %v434
      %v437 = vunpack.c.l.bf16 %v435
      %s438 = scalar_lea.vmem %s158, 44
      %v439 = vld [vmem:[%s438] sm:$0xf]
      %v440 = vunpack.c.l.bf16 %v439
      %v443 = vrot.slane %v436, 1
      %v444 = vrot.slane %v437, 1
      %v445 = vsel %vm172, %v443, %v444
      %v447 = vmax.f32 %v436, %v445
      %v448 = vmax.f32 %v447, %v440
      %v449 = vmax.f32 %v432, %v448
      %s450 = scalar_lea.vmem %s153, 96
      %v451 = vld [vmem:[%s450] sm:$0xf]
      %v452 = vld [vmem:[%s450 + $0x4] sm:$0x1]
      %v453 = vunpack.c.l.bf16 %v451
      %v454 = vunpack.c.l.bf16 %v452
      %s455 = scalar_lea.vmem %s158, 48
      %v456 = vld [vmem:[%s455] sm:$0xf]
      %v457 = vunpack.c.l.bf16 %v456
      %v460 = vrot.slane %v453, 1
      %v461 = vrot.slane %v454, 1
      %v462 = vsel %vm172, %v460, %v461
      %v464 = vmax.f32 %v453, %v462
      %v465 = vmax.f32 %v464, %v457
      %v466 = vmax.f32 %v449, %v465
      %v467 = vpack.c.bf16 %v466, %v466
      %s468 = scalar_lea.vmem %s163, 20
      %469 = vst [vmem:[%s468] sm:$0xf] %v467
      %v470 = vld [vmem:[%s450] sm:$0xf]
      %v471 = vld [vmem:[%s450 + $0x4] sm:$0x1]
      %v472 = vunpack.c.l.bf16 %v470
      %v473 = vunpack.c.l.bf16 %v471
      %v474 = vld [vmem:[%s455] sm:$0xf]
      %v475 = vunpack.c.l.bf16 %v474
      %v478 = vrot.slane %v472, 1
      %v479 = vrot.slane %v473, 1
      %v480 = vsel %vm172, %v478, %v479
      %v482 = vmax.f32 %v472, %v480
      %v483 = vmax.f32 %v482, %v475
      %s484 = scalar_lea.vmem %s153, 104
      %v485 = vld [vmem:[%s484] sm:$0xf]
      %v486 = vld [vmem:[%s484 + $0x4] sm:$0x1]
      %v487 = vunpack.c.l.bf16 %v485
      %v488 = vunpack.c.l.bf16 %v486
      %s489 = scalar_lea.vmem %s158, 52
      %v490 = vld [vmem:[%s489] sm:$0xf]
      %v491 = vunpack.c.l.bf16 %v490
      %v494 = vrot.slane %v487, 1
      %v495 = vrot.slane %v488, 1
      %v496 = vsel %vm172, %v494, %v495
      %v498 = vmax.f32 %v487, %v496
      %v499 = vmax.f32 %v498, %v491
      %v500 = vmax.f32 %v483, %v499
      %s501 = scalar_lea.vmem %s153, 112
      %v502 = vld [vmem:[%s501] sm:$0xf]
      %v503 = vld [vmem:[%s501 + $0x4] sm:$0x1]
      %v504 = vunpack.c.l.bf16 %v502
      %v505 = vunpack.c.l.bf16 %v503
      %s506 = scalar_lea.vmem %s158, 56
      %v507 = vld [vmem:[%s506] sm:$0xf]
      %v508 = vunpack.c.l.bf16 %v507
      %v511 = vrot.slane %v504, 1
      %v512 = vrot.slane %v505, 1
      %v513 = vsel %vm172, %v511, %v512
      %v515 = vmax.f32 %v504, %v513
      %v516 = vmax.f32 %v515, %v508
      %v517 = vmax.f32 %v500, %v516
      %v518 = vpack.c.bf16 %v517, %v517
      %s519 = scalar_lea.vmem %s163, 24
      %520 = vst [vmem:[%s519] sm:$0xf] %v518
      %v521 = vld [vmem:[%s501] sm:$0xf]
      %v522 = vld [vmem:[%s501 + $0x4] sm:$0x1]
      %v523 = vunpack.c.l.bf16 %v521
      %v524 = vunpack.c.l.bf16 %v522
      %v525 = vld [vmem:[%s506] sm:$0xf]
      %v526 = vunpack.c.l.bf16 %v525
      %v529 = vrot.slane %v523, 1
      %v530 = vrot.slane %v524, 1
      %v531 = vsel %vm172, %v529, %v530
      %v533 = vmax.f32 %v523, %v531
      %v534 = vmax.f32 %v533, %v526
      %s535 = scalar_lea.vmem %s153, 120
      %v536 = vld [vmem:[%s535] sm:$0xf]
      %v537 = vld [vmem:[%s535 + $0x4] sm:$0x1]
      %v538 = vunpack.c.l.bf16 %v536
      %v539 = vunpack.c.l.bf16 %v537
      %s540 = scalar_lea.vmem %s158, 60
      %v541 = vld [vmem:[%s540] sm:$0xf]
      %v542 = vunpack.c.l.bf16 %v541
      %v545 = vrot.slane %v538, 1
      %v546 = vrot.slane %v539, 1
      %v547 = vsel %vm172, %v545, %v546
      %v549 = vmax.f32 %v538, %v547
      %v550 = vmax.f32 %v549, %v542
      %v551 = vmax.f32 %v534, %v550
      %s552 = scalar_lea.vmem %s153, 128
      %v553 = vld [vmem:[%s552] sm:$0xf]
      %v554 = vld [vmem:[%s552 + $0x4] sm:$0x1]
      %v555 = vunpack.c.l.bf16 %v553
      %v556 = vunpack.c.l.bf16 %v554
      %s557 = scalar_lea.vmem %s158, 64
      %v558 = vld [vmem:[%s557] sm:$0xf]
      %v559 = vunpack.c.l.bf16 %v558
      %v562 = vrot.slane %v555, 1
      %v563 = vrot.slane %v556, 1
      %v564 = vsel %vm172, %v562, %v563
      %v566 = vmax.f32 %v555, %v564
      %v567 = vmax.f32 %v566, %v559
      %v568 = vmax.f32 %v551, %v567
      %v569 = vpack.c.bf16 %v568, %v568
      %s570 = scalar_lea.vmem %s163, 28
      %571 = vst [vmem:[%s570] sm:$0xf] %v569
      %p572 = scmp.lt.s32.totalorder %s13, 1
      %s573 = scalar_select %p572, %s13, 1
      %s574 = smul.addr %s573, 8
      %s575 = smul.addr %s574, 4
      %s576 = scalar_lea.vmem %s2, %s575
      // Predicated region
      $region29: #{_lambda_.13} parent=27 // pred_check
        %p577 = pneg %p83
      $region30: #{_lambda_.13} parent=27 // pred_check_branch
        %579 = sbr.rel (%p577) target = $region32
      $region31: #{_lambda_.13} parent=27 // pred_region
        _
      $region32: #{_lambda_.13} parent=27 // pred_fallthru
        _
    $region28: #{_lambda_.13} parent=5 // pred_fallthru
      _
    %p580 = scmp.le.s32.totalorder 2, %s8
    // Predicated region
    $region33: #{_lambda_.13} parent=5 // pred_check
      %p581 = pneg %p580
    $region34: #{_lambda_.13} parent=5 // pred_check_branch
      %583 = sbr.rel (%p581) target = $region36
    $region35: #{_lambda_.13} parent=5 // pred_region
      %s584 = ssub.s32 %s8, 2
      // Predicated region
      $region37: #{_lambda_.13} parent=35 // pred_check
        %p585 = pneg %p89
      $region38: #{_lambda_.13} parent=35 // pred_check_branch
        %587 = sbr.rel (%p585) target = $region40
      $region39: #{_lambda_.13} parent=35 // pred_region
        %p588 = scmp.lt.s32.totalorder %s14, 1
        %s589 = scalar_select %p588, %s14, 1
        %s590 = smul.addr %s589, 8
        %s591 = smul.addr %s590, 4
        %s592 = scalar_lea.vmem %s2, %s591
      $region40: #{_lambda_.13} parent=35 // pred_fallthru
        _
    $region36: #{_lambda_.13} parent=5 // pred_fallthru
      _
  $region6: #{_lambda_.13} parent=0 // loop_footer
    %s12 = sadd.s32 1, %s8
  $region7: #{_lambda_.13} parent=0 // loop_footer_branch
    %7 = sbr.rel target = $region3
  $region8: #{_lambda_.13} parent=0 // loop_exit
    _

// kernel: _lambda_.14
$region0: #{_lambda_.14}
  #allocation0 [shape = 'u32[]', space=smem, size = 0x4, offset = 0x4, fixed_abs, tag = 'smem constant byte address 0x4 - core index']
  #allocation1 [shape = 'u32[144,128]{1,0:T(1,128)}', space=vmem, size = 0x12000, scoped, tag = 'internal scratch']
  %s0 = inlined_call_operand.vmem [shape: bf16[128,1152], index: 0, kind: input, shape index: {}]
  %s1 = inlined_call_operand.vmem [shape: bf16[1152,128], index: 1, kind: input, shape index: {}]
  %s2 = inlined_call_operand.vmem [shape: f32[1,128], index: 2, kind: input, shape index: {}]
  %s3 = inlined_call_operand.vmem [shape: bf16[128,128], index: 3, kind: output, shape index: {}]
  %s4 = sld [smem:[#allocation0]]
  $region45: #{_lambda_.14} parent=0
    _
  %s6 = ssub.s32 1, %s4
  %s7 = scalar_select 0, %s6, %s4
  loop: start=0, step=1, limit=4
  $region2: #{_lambda_.14} parent=0 // loop_pre_header
    _
  $region3: #{_lambda_.14} parent=0 // loop_header
    %s9 = sphi 0, %s13
    %p10 = scmp.ge.s32.totalorder %s9, 4
    %s19 = sphi 0, %s21
    %s22 = sphi 0, %s19
    %s23 = sphi 0, %s22
    %s39 = sphi 0, %s23
    %s43 = sphi 0, %s43
    %s45 = sphi 0, %s43
    %s46 = sphi 0, %s45
    %s60 = sphi 0, %s46
    %s64 = sphi 0, %s64
    %s66 = sphi 0, %s64
    %s67 = sphi 0, %s66
    %s81 = sphi 0, %s67
    %s87 = sphi 0, %s89
    %s90 = sphi 0, %s87
    %s91 = sphi 0, %s90
    %s107 = sphi 0, %s91
  $region4: #{_lambda_.14} parent=0 // loop_header_branch
    %12 = sbr.rel (%p10) target = $region8
  $region5: #{_lambda_.14} parent=0 // loop_body
    %s14 = ssub.s32 %s9, 1
    %s15 = ssub.s32 %s9, 2
    %s16 = sadd.s32 %s9, 1
    %s17 = ssub.s32 %s9, %s16
    %p18 = scmp.eq.s32.totalorder %s17, 0
    %s20 = sadd.s32 %s19, 1
    %s21 = scalar_select %p18, %s19, %s20
    %p24 = pneg %p18
    %p25 = scmp.eq.s32.totalorder %s9, 1
    %p26 = por %p24, %p25
    %p27 = scmp.ne.s32.totalorder %s19, %s22
    %p28 = scmp.eq.s32.totalorder %s9, 0
    %p29 = por %p27, %p28
    %p30 = scmp.ne.s32.totalorder %s19, %s22
    %p31 = scmp.eq.s32.totalorder %s14, 1
    %p32 = por %p30, %p31
    %p33 = scmp.ne.s32.totalorder %s22, %s23
    %p34 = scmp.eq.s32.totalorder %s14, 0
    %p35 = por %p33, %p34
    %p36 = scmp.ne.s32.totalorder %s22, %s23
    %p37 = scmp.eq.s32.totalorder %s15, 1
    %p38 = por %p36, %p37
    %p40 = scmp.ne.s32.totalorder %s23, %s39
    %p41 = scmp.eq.s32.totalorder %s15, 0
    %p42 = por %p40, %p41
    %s44 = sadd.s32 %s43, 1
    %p47 = scmp.eq.s32.totalorder %s9, 1
    %p48 = scmp.ne.s32.totalorder %s43, %s45
    %p49 = scmp.eq.s32.totalorder %s9, 0
    %p50 = por %p48, %p49
    %p51 = scmp.ne.s32.totalorder %s43, %s45
    %p52 = scmp.eq.s32.totalorder %s14, 1
    %p53 = por %p51, %p52
    %p54 = scmp.ne.s32.totalorder %s45, %s46
    %p55 = scmp.eq.s32.totalorder %s14, 0
    %p56 = por %p54, %p55
    %p57 = scmp.ne.s32.totalorder %s45, %s46
    %p58 = scmp.eq.s32.totalorder %s15, 1
    %p59 = por %p57, %p58
    %p61 = scmp.ne.s32.totalorder %s46, %s60
    %p62 = scmp.eq.s32.totalorder %s15, 0
    %p63 = por %p61, %p62
    %s65 = sadd.s32 %s64, 1
    %p68 = scmp.eq.s32.totalorder %s9, 1
    %p69 = scmp.ne.s32.totalorder %s64, %s66
    %p70 = scmp.eq.s32.totalorder %s9, 0
    %p71 = por %p69, %p70
    %p72 = scmp.ne.s32.totalorder %s64, %s66
    %p73 = scmp.eq.s32.totalorder %s14, 1
    %p74 = por %p72, %p73
    %p75 = scmp.ne.s32.totalorder %s66, %s67
    %p76 = scmp.eq.s32.totalorder %s14, 0
    %p77 = por %p75, %p76
    %p78 = scmp.ne.s32.totalorder %s66, %s67
    %p79 = scmp.eq.s32.totalorder %s15, 1
    %p80 = por %p78, %p79
    %p82 = scmp.ne.s32.totalorder %s67, %s81
    %p83 = scmp.eq.s32.totalorder %s15, 0
    %p84 = por %p82, %p83
    %s85 = ssub.s32 %s9, %s16
    %p86 = scmp.eq.s32.totalorder %s85, 0
    %s88 = sadd.s32 %s87, 1
    %s89 = scalar_select %p86, %s87, %s88
    %p92 = pneg %p86
    %p93 = scmp.eq.s32.totalorder %s9, 1
    %p94 = por %p92, %p93
    %p95 = scmp.ne.s32.totalorder %s87, %s90
    %p96 = scmp.eq.s32.totalorder %s9, 0
    %p97 = por %p95, %p96
    %p98 = scmp.ne.s32.totalorder %s87, %s90
    %p99 = scmp.eq.s32.totalorder %s14, 1
    %p100 = por %p98, %p99
    %p101 = scmp.ne.s32.totalorder %s90, %s91
    %p102 = scmp.eq.s32.totalorder %s14, 0
    %p103 = por %p101, %p102
    %p104 = scmp.ne.s32.totalorder %s90, %s91
    %p105 = scmp.eq.s32.totalorder %s15, 1
    %p106 = por %p104, %p105
    %p108 = scmp.ne.s32.totalorder %s91, %s107
    %p109 = scmp.eq.s32.totalorder %s15, 0
    %p110 = por %p108, %p109
    %p111 = scmp.le.s32.totalorder 1, %s9
    %p112 = scmp.lt.s32.totalorder %s9, 3
    %p113 = pnand %p111, %p112
    %p114 = pneg %p113
    // Predicated region
    $region9: #{_lambda_.14} parent=5 // pred_check
      _
    $region10: #{_lambda_.14} parent=5 // pred_check_branch
      %116 = sbr.rel (%p113) target = $region12
    $region11: #{_lambda_.14} parent=5 // pred_region
      %s117 = ssub.s32 %s9, 1
      // Predicated region
      $region13: #{_lambda_.14} parent=11 // pred_check
        %p118 = pneg %p56
      $region14: #{_lambda_.14} parent=11 // pred_check_branch
        %120 = sbr.rel (%p118) target = $region16
      $region15: #{_lambda_.14} parent=11 // pred_region
        _
      $region16: #{_lambda_.14} parent=11 // pred_fallthru
        _
      // Predicated region
      $region17: #{_lambda_.14} parent=11 // pred_check
        %p121 = pneg %p77
      $region18: #{_lambda_.14} parent=11 // pred_check_branch
        %123 = sbr.rel (%p121) target = $region20
      $region19: #{_lambda_.14} parent=11 // pred_region
        _
      $region20: #{_lambda_.14} parent=11 // pred_fallthru
        _
    $region12: #{_lambda_.14} parent=5 // pred_fallthru
      _
    %p124 = scmp.lt.s32.totalorder %s9, 2
    // Predicated region
    $region21: #{_lambda_.14} parent=5 // pred_check
      %p125 = pneg %p124
    $region22: #{_lambda_.14} parent=5 // pred_check_branch
      %127 = sbr.rel (%p125) target = $region24
    $region23: #{_lambda_.14} parent=5 // pred_region
      // Predicated region
      $region25: #{_lambda_.14} parent=23 // pred_check
        %p128 = pneg %p29
      $region26: #{_lambda_.14} parent=23 // pred_check_branch
        %130 = sbr.rel (%p128) target = $region28
      $region27: #{_lambda_.14} parent=23 // pred_region
        %s131 = smul.u32 8, %s9
        %p132 = scmp.lt.s32.totalorder %s131, 15
        %s133 = scalar_select %p132, %s131, 15
        %s134 = smul.addr %s133, 9
        %s135 = smul.addr %s134, 4
        %s136 = scalar_lea.vmem %s0, %s135
        %s137 = smul.u32 8, %s9
      $region28: #{_lambda_.14} parent=23 // pred_fallthru
        _
    $region24: #{_lambda_.14} parent=5 // pred_fallthru
      _
    %p138 = scmp.le.s32.totalorder 1, %s9
    %p139 = scmp.lt.s32.totalorder %s9, 3
    %p140 = pnand %p138, %p139
    %p141 = pneg %p140
    // Predicated region
    $region29: #{_lambda_.14} parent=5 // pred_check
      _
    $region30: #{_lambda_.14} parent=5 // pred_check_branch
      %143 = sbr.rel (%p140) target = $region32
    $region31: #{_lambda_.14} parent=5 // pred_region
      %s144 = ssub.s32 %s9, 1
      %s145 = smul.u32 8, %s14
      %p146 = scmp.lt.s32.totalorder %s145, 15
      %s147 = scalar_select %p146, %s145, 15
      %s148 = smul.addr %s147, 9
      %s149 = smul.addr %s148, 4
      %s150 = scalar_lea.vmem %s0, %s149
      %p151 = pneg %p35
      %p152 = pneg %p32
      %p153 = pneg %p56
      %p154 = pneg %p53
      %p155 = pneg %p77
      %p156 = pneg %p74
      %p157 = pneg %p103
      %p158 = pneg %p100
      %s159 = smul.u32 8, %s14
      %p160 = scmp.lt.s32.totalorder %s159, 15
      %s161 = scalar_select %p160, %s159, 15
      %s162 = smul.addr %s161, 4
      %s163 = scalar_lea.vmem %s3, %s162
      %s164 = smul.u32 8, %s14
      %p165 = scmp.lt.s32.totalorder %s164, 15
      %s166 = scalar_select %p165, %s164, 15
      %s167 = smul.addr %s166, 9
      %s168 = smul.addr %s167, 4
      %s169 = scalar_lea.vmem %s0, %s168
      %s170 = smul.u32 8, %s14
      %s171 = smul.u32 8, %s14
      %p172 = scmp.lt.s32.totalorder %s171, 15
      %s173 = scalar_select %p172, %s171, 15
      %s174 = smul.addr %s173, 4
      %s175 = scalar_lea.vmem %s3, %s174
      %s176 = smul.u32 8, %s14
      %v178 = vld [vmem:[%s169] sm:$0xff]
      %v179 = vld [vmem:[%s169 + $0x8] sm:$0xff]
      %v180 = vld [vmem:[%s169 + $0x10] sm:$0xff]
      %v181 = vld [vmem:[%s169 + $0x18] sm:$0xff]
      %v182 = vld [vmem:[%s169 + $0x20] sm:$0xf]
      %v183 = vld [vmem:[%s169 + $0x24] sm:$0xff]
      %v184 = vld [vmem:[%s169 + $0x2c] sm:$0xff]
      %v185 = vld [vmem:[%s169 + $0x34] sm:$0xff]
      %v186 = vld [vmem:[%s169 + $0x3c] sm:$0xff]
      %v187 = vld [vmem:[%s169 + $0x44] sm:$0xf]
      %v188 = vld [vmem:[%s169 + $0x48] sm:$0xff]
      %v189 = vld [vmem:[%s169 + $0x50] sm:$0xff]
      %v190 = vld [vmem:[%s169 + $0x58] sm:$0xff]
      %v191 = vld [vmem:[%s169 + $0x60] sm:$0xff]
      %v192 = vld [vmem:[%s169 + $0x68] sm:$0xf]
      %v193 = vld [vmem:[%s169 + $0x6c] sm:$0xff]
      %v194 = vld [vmem:[%s169 + $0x74] sm:$0xff]
      %v195 = vld [vmem:[%s169 + $0x7c] sm:$0xff]
      %v196 = vld [vmem:[%s169 + $0x84] sm:$0xff]
      %v197 = vld [vmem:[%s169 + $0x8c] sm:$0xf]
      %v198 = vld [vmem:[%s169 + $0x90] sm:$0xff]
      %v199 = vld [vmem:[%s169 + $0x98] sm:$0xff]
      %v200 = vld [vmem:[%s169 + $0xa0] sm:$0xff]
      %v201 = vld [vmem:[%s169 + $0xa8] sm:$0xff]
      %v202 = vld [vmem:[%s169 + $0xb0] sm:$0xf]
      %v203 = vld [vmem:[%s169 + $0xb4] sm:$0xff]
      %v204 = vld [vmem:[%s169 + $0xbc] sm:$0xff]
      %v205 = vld [vmem:[%s169 + $0xc4] sm:$0xff]
      %v206 = vld [vmem:[%s169 + $0xcc] sm:$0xff]
      %v207 = vld [vmem:[%s169 + $0xd4] sm:$0xf]
      %v208 = vld [vmem:[%s169 + $0xd8] sm:$0xff]
      %v209 = vld [vmem:[%s169 + $0xe0] sm:$0xff]
      %v210 = vld [vmem:[%s169 + $0xe8] sm:$0xff]
      %v211 = vld [vmem:[%s169 + $0xf0] sm:$0xff]
      %v212 = vld [vmem:[%s169 + $0xf8] sm:$0xf]
      %v213 = vld [vmem:[%s169 + $0xfc] sm:$0xff]
      %v214 = vld [vmem:[%s169 + $0x104] sm:$0xff]
      %v215 = vld [vmem:[%s169 + $0x10c] sm:$0xff]
      %v216 = vld [vmem:[%s169 + $0x114] sm:$0xff]
      %v217 = vld [vmem:[%s169 + $0x11c] sm:$0xf]
      %v218 = vld [vmem:[%s1] sm:$0xf]
      %v219 = vld [vmem:[%s1 + $0x4] sm:$0xf]
      %v220 = vld [vmem:[%s1 + $0x8] sm:$0xf]
      %v221 = vld [vmem:[%s1 + $0xc] sm:$0xf]
      %v222 = vld [vmem:[%s1 + $0x10] sm:$0xf]
      %v223 = vld [vmem:[%s1 + $0x14] sm:$0xf]
      %v224 = vld [vmem:[%s1 + $0x18] sm:$0xf]
      %v225 = vld [vmem:[%s1 + $0x1c] sm:$0xf]
      %v226 = vld [vmem:[%s1 + $0x20] sm:$0xf]
      %v227 = vld [vmem:[%s1 + $0x24] sm:$0xf]
      %v228 = vld [vmem:[%s1 + $0x28] sm:$0xf]
      %v229 = vld [vmem:[%s1 + $0x2c] sm:$0xf]
      %v230 = vld [vmem:[%s1 + $0x30] sm:$0xf]
      %v231 = vld [vmem:[%s1 + $0x34] sm:$0xf]
      %v232 = vld [vmem:[%s1 + $0x38] sm:$0xf]
      %v233 = vld [vmem:[%s1 + $0x3c] sm:$0xf]
      %v234 = vld [vmem:[%s1 + $0x40] sm:$0xf]
      %v235 = vld [vmem:[%s1 + $0x44] sm:$0xf]
      %v236 = vld [vmem:[%s1 + $0x48] sm:$0xf]
      %v237 = vld [vmem:[%s1 + $0x4c] sm:$0xf]
      %v238 = vld [vmem:[%s1 + $0x50] sm:$0xf]
      %v239 = vld [vmem:[%s1 + $0x54] sm:$0xf]
      %v240 = vld [vmem:[%s1 + $0x58] sm:$0xf]
      %v241 = vld [vmem:[%s1 + $0x5c] sm:$0xf]
      %v242 = vld [vmem:[%s1 + $0x60] sm:$0xf]
      %v243 = vld [vmem:[%s1 + $0x64] sm:$0xf]
      %v244 = vld [vmem:[%s1 + $0x68] sm:$0xf]
      %v245 = vld [vmem:[%s1 + $0x6c] sm:$0xf]
      %v246 = vld [vmem:[%s1 + $0x70] sm:$0xf]
      %v247 = vld [vmem:[%s1 + $0x74] sm:$0xf]
      %v248 = vld [vmem:[%s1 + $0x78] sm:$0xf]
      %v249 = vld [vmem:[%s1 + $0x7c] sm:$0xf]
      %v250 = vld [vmem:[%s1 + $0x80] sm:$0xf]
      %v251 = vld [vmem:[%s1 + $0x84] sm:$0xf]
      %v252 = vld [vmem:[%s1 + $0x88] sm:$0xf]
      %v253 = vld [vmem:[%s1 + $0x8c] sm:$0xf]
      %v254 = vld [vmem:[%s1 + $0x90] sm:$0xf]
      %v255 = vld [vmem:[%s1 + $0x94] sm:$0xf]
      %v256 = vld [vmem:[%s1 + $0x98] sm:$0xf]
      %v257 = vld [vmem:[%s1 + $0x9c] sm:$0xf]
      %v258 = vld [vmem:[%s1 + $0xa0] sm:$0xf]
      %v259 = vld [vmem:[%s1 + $0xa4] sm:$0xf]
      %v260 = vld [vmem:[%s1 + $0xa8] sm:$0xf]
      %v261 = vld [vmem:[%s1 + $0xac] sm:$0xf]
      %v262 = vld [vmem:[%s1 + $0xb0] sm:$0xf]
      %v263 = vld [vmem:[%s1 + $0xb4] sm:$0xf]
      %v264 = vld [vmem:[%s1 + $0xb8] sm:$0xf]
      %v265 = vld [vmem:[%s1 + $0xbc] sm:$0xf]
      %v266 = vld [vmem:[%s1 + $0xc0] sm:$0xf]
      %v267 = vld [vmem:[%s1 + $0xc4] sm:$0xf]
      %v268 = vld [vmem:[%s1 + $0xc8] sm:$0xf]
      %v269 = vld [vmem:[%s1 + $0xcc] sm:$0xf]
      %v270 = vld [vmem:[%s1 + $0xd0] sm:$0xf]
      %v271 = vld [vmem:[%s1 + $0xd4] sm:$0xf]
      %v272 = vld [vmem:[%s1 + $0xd8] sm:$0xf]
      %v273 = vld [vmem:[%s1 + $0xdc] sm:$0xf]
      %v274 = vld [vmem:[%s1 + $0xe0] sm:$0xf]
      %v275 = vld [vmem:[%s1 + $0xe4] sm:$0xf]
      %v276 = vld [vmem:[%s1 + $0xe8] sm:$0xf]
      %v277 = vld [vmem:[%s1 + $0xec] sm:$0xf]
      %v278 = vld [vmem:[%s1 + $0xf0] sm:$0xf]
      %v279 = vld [vmem:[%s1 + $0xf4] sm:$0xf]
      %v280 = vld [vmem:[%s1 + $0xf8] sm:$0xf]
      %v281 = vld [vmem:[%s1 + $0xfc] sm:$0xf]
      %v282 = vld [vmem:[%s1 + $0x100] sm:$0xf]
      %v283 = vld [vmem:[%s1 + $0x104] sm:$0xf]
      %v284 = vld [vmem:[%s1 + $0x108] sm:$0xf]
      %v285 = vld [vmem:[%s1 + $0x10c] sm:$0xf]
      %v286 = vld [vmem:[%s1 + $0x110] sm:$0xf]
      %v287 = vld [vmem:[%s1 + $0x114] sm:$0xf]
      %v288 = vld [vmem:[%s1 + $0x118] sm:$0xf]
      %v289 = vld [vmem:[%s1 + $0x11c] sm:$0xf]
      %v290 = vld [vmem:[%s1 + $0x120] sm:$0xf]
      %v291 = vld [vmem:[%s1 + $0x124] sm:$0xf]
      %v292 = vld [vmem:[%s1 + $0x128] sm:$0xf]
      %v293 = vld [vmem:[%s1 + $0x12c] sm:$0xf]
      %v294 = vld [vmem:[%s1 + $0x130] sm:$0xf]
      %v295 = vld [vmem:[%s1 + $0x134] sm:$0xf]
      %v296 = vld [vmem:[%s1 + $0x138] sm:$0xf]
      %v297 = vld [vmem:[%s1 + $0x13c] sm:$0xf]
      %v298 = vld [vmem:[%s1 + $0x140] sm:$0xf]
      %v299 = vld [vmem:[%s1 + $0x144] sm:$0xf]
      %v300 = vld [vmem:[%s1 + $0x148] sm:$0xf]
      %v301 = vld [vmem:[%s1 + $0x14c] sm:$0xf]
      %v302 = vld [vmem:[%s1 + $0x150] sm:$0xf]
      %v303 = vld [vmem:[%s1 + $0x154] sm:$0xf]
      %v304 = vld [vmem:[%s1 + $0x158] sm:$0xf]
      %v305 = vld [vmem:[%s1 + $0x15c] sm:$0xf]
      %v306 = vld [vmem:[%s1 + $0x160] sm:$0xf]
      %v307 = vld [vmem:[%s1 + $0x164] sm:$0xf]
      %v308 = vld [vmem:[%s1 + $0x168] sm:$0xf]
      %v309 = vld [vmem:[%s1 + $0x16c] sm:$0xf]
      %v310 = vld [vmem:[%s1 + $0x170] sm:$0xf]
      %v311 = vld [vmem:[%s1 + $0x174] sm:$0xf]
      %v312 = vld [vmem:[%s1 + $0x178] sm:$0xf]
      %v313 = vld [vmem:[%s1 + $0x17c] sm:$0xf]
      %v314 = vld [vmem:[%s1 + $0x180] sm:$0xf]
      %v315 = vld [vmem:[%s1 + $0x184] sm:$0xf]
      %v316 = vld [vmem:[%s1 + $0x188] sm:$0xf]
      %v317 = vld [vmem:[%s1 + $0x18c] sm:$0xf]
      %v318 = vld [vmem:[%s1 + $0x190] sm:$0xf]
      %v319 = vld [vmem:[%s1 + $0x194] sm:$0xf]
      %v320 = vld [vmem:[%s1 + $0x198] sm:$0xf]
      %v321 = vld [vmem:[%s1 + $0x19c] sm:$0xf]
      %v322 = vld [vmem:[%s1 + $0x1a0] sm:$0xf]
      %v323 = vld [vmem:[%s1 + $0x1a4] sm:$0xf]
      %v324 = vld [vmem:[%s1 + $0x1a8] sm:$0xf]
      %v325 = vld [vmem:[%s1 + $0x1ac] sm:$0xf]
      %v326 = vld [vmem:[%s1 + $0x1b0] sm:$0xf]
      %v327 = vld [vmem:[%s1 + $0x1b4] sm:$0xf]
      %v328 = vld [vmem:[%s1 + $0x1b8] sm:$0xf]
      %v329 = vld [vmem:[%s1 + $0x1bc] sm:$0xf]
      %v330 = vld [vmem:[%s1 + $0x1c0] sm:$0xf]
      %v331 = vld [vmem:[%s1 + $0x1c4] sm:$0xf]
      %v332 = vld [vmem:[%s1 + $0x1c8] sm:$0xf]
      %v333 = vld [vmem:[%s1 + $0x1cc] sm:$0xf]
      %v334 = vld [vmem:[%s1 + $0x1d0] sm:$0xf]
      %v335 = vld [vmem:[%s1 + $0x1d4] sm:$0xf]
      %v336 = vld [vmem:[%s1 + $0x1d8] sm:$0xf]
      %v337 = vld [vmem:[%s1 + $0x1dc] sm:$0xf]
      %v338 = vld [vmem:[%s1 + $0x1e0] sm:$0xf]
      %v339 = vld [vmem:[%s1 + $0x1e4] sm:$0xf]
      %v340 = vld [vmem:[%s1 + $0x1e8] sm:$0xf]
      %v341 = vld [vmem:[%s1 + $0x1ec] sm:$0xf]
      %v342 = vld [vmem:[%s1 + $0x1f0] sm:$0xf]
      %v343 = vld [vmem:[%s1 + $0x1f4] sm:$0xf]
      %v344 = vld [vmem:[%s1 + $0x1f8] sm:$0xf]
      %v345 = vld [vmem:[%s1 + $0x1fc] sm:$0xf]
      %v346 = vld [vmem:[%s1 + $0x200] sm:$0xf]
      %v347 = vld [vmem:[%s1 + $0x204] sm:$0xf]
      %v348 = vld [vmem:[%s1 + $0x208] sm:$0xf]
      %v349 = vld [vmem:[%s1 + $0x20c] sm:$0xf]
      %v350 = vld [vmem:[%s1 + $0x210] sm:$0xf]
      %v351 = vld [vmem:[%s1 + $0x214] sm:$0xf]
      %v352 = vld [vmem:[%s1 + $0x218] sm:$0xf]
      %v353 = vld [vmem:[%s1 + $0x21c] sm:$0xf]
      %v354 = vld [vmem:[%s1 + $0x220] sm:$0xf]
      %v355 = vld [vmem:[%s1 + $0x224] sm:$0xf]
      %v356 = vld [vmem:[%s1 + $0x228] sm:$0xf]
      %v357 = vld [vmem:[%s1 + $0x22c] sm:$0xf]
      %v358 = vld [vmem:[%s1 + $0x230] sm:$0xf]
      %v359 = vld [vmem:[%s1 + $0x234] sm:$0xf]
      %v360 = vld [vmem:[%s1 + $0x238] sm:$0xf]
      %v361 = vld [vmem:[%s1 + $0x23c] sm:$0xf]
      %v362 = vld [vmem:[%s2] sm:$0x1]
      %v364 = vlaneseq
      %v365 = vshrl.u32 %v364, 7
      %v366 = vsub.s32 0, %v365
      %v367 = vrot.slane %v362, %v366
      %v409 = vunpack.c.l.b16 %v178
      %v410 = vunpack.c.h.b16 %v178
      %v411 = vunpack.c.l.b16 %v179
      %v412 = vunpack.c.h.b16 %v179
      %v413 = vunpack.c.l.b16 %v180
      %v414 = vunpack.c.h.b16 %v180
      %v415 = vunpack.c.l.b16 %v181
      %v416 = vunpack.c.h.b16 %v181
      %v417 = vunpack.c.l.b16 %v182
      %v418 = vunpack.c.l.b16 %v183
      %v419 = vunpack.c.h.b16 %v183
      %v420 = vunpack.c.l.b16 %v184
      %v421 = vunpack.c.h.b16 %v184
      %v422 = vunpack.c.l.b16 %v185
      %v423 = vunpack.c.h.b16 %v185
      %v424 = vunpack.c.l.b16 %v186
      %v425 = vunpack.c.h.b16 %v186
      %v426 = vunpack.c.l.b16 %v187
      %v427 = vunpack.c.l.b16 %v188
      %v428 = vunpack.c.h.b16 %v188
      %v429 = vunpack.c.l.b16 %v189
      %v430 = vunpack.c.h.b16 %v189
      %v431 = vunpack.c.l.b16 %v190
      %v432 = vunpack.c.h.b16 %v190
      %v433 = vunpack.c.l.b16 %v191
      %v434 = vunpack.c.h.b16 %v191
      %v435 = vunpack.c.l.b16 %v192
      %v436 = vunpack.c.l.b16 %v193
      %v437 = vunpack.c.h.b16 %v193
      %v438 = vunpack.c.l.b16 %v194
      %v439 = vunpack.c.h.b16 %v194
      %v440 = vunpack.c.l.b16 %v195
      %v441 = vunpack.c.h.b16 %v195
      %v442 = vunpack.c.l.b16 %v196
      %v443 = vunpack.c.h.b16 %v196
      %v444 = vunpack.c.l.b16 %v197
      %v445 = vunpack.c.l.b16 %v198
      %v446 = vunpack.c.h.b16 %v198
      %v447 = vunpack.c.l.b16 %v199
      %v448 = vunpack.c.h.b16 %v199
      %v449 = vunpack.c.l.b16 %v200
      %v450 = vunpack.c.h.b16 %v200
      %v451 = vunpack.c.l.b16 %v201
      %v452 = vunpack.c.h.b16 %v201
      %v453 = vunpack.c.l.b16 %v202
      %v454 = vunpack.c.l.b16 %v203
      %v455 = vunpack.c.h.b16 %v203
      %v456 = vunpack.c.l.b16 %v204
      %v457 = vunpack.c.h.b16 %v204
      %v458 = vunpack.c.l.b16 %v205
      %v459 = vunpack.c.h.b16 %v205
      %v460 = vunpack.c.l.b16 %v206
      %v461 = vunpack.c.h.b16 %v206
      %v462 = vunpack.c.l.b16 %v207
      %v463 = vunpack.c.l.b16 %v208
      %v464 = vunpack.c.h.b16 %v208
      %v465 = vunpack.c.l.b16 %v209
      %v466 = vunpack.c.h.b16 %v209
      %v467 = vunpack.c.l.b16 %v210
      %v468 = vunpack.c.h.b16 %v210
      %v469 = vunpack.c.l.b16 %v211
      %v470 = vunpack.c.h.b16 %v211
      %v471 = vunpack.c.l.b16 %v212
      %v472 = vunpack.c.l.b16 %v213
      %v473 = vunpack.c.h.b16 %v213
      %v474 = vunpack.c.l.b16 %v214
      %v475 = vunpack.c.h.b16 %v214
      %v476 = vunpack.c.l.b16 %v215
      %v477 = vunpack.c.h.b16 %v215
      %v478 = vunpack.c.l.b16 %v216
      %v479 = vunpack.c.h.b16 %v216
      %v480 = vunpack.c.l.b16 %v217
      %v481 = vpack.c.b16 %v418, %v409
      %v482 = vpack.c.b16 %v419, %v410
      %v483 = vpack.c.b16 %v420, %v411
      %v484 = vpack.c.b16 %v421, %v412
      %v485 = vpack.c.b16 %v422, %v413
      %v486 = vpack.c.b16 %v423, %v414
      %v487 = vpack.c.b16 %v424, %v415
      %v488 = vpack.c.b16 %v425, %v416
      %v489 = vpack.c.b16 %v426, %v417
      %v490 = vpack.c.b16 %v436, %v427
      %v491 = vpack.c.b16 %v437, %v428
      %v492 = vpack.c.b16 %v438, %v429
      %v493 = vpack.c.b16 %v439, %v430
      %v494 = vpack.c.b16 %v440, %v431
      %v495 = vpack.c.b16 %v441, %v432
      %v496 = vpack.c.b16 %v442, %v433
      %v497 = vpack.c.b16 %v443, %v434
      %v498 = vpack.c.b16 %v444, %v435
      %v499 = vpack.c.b16 %v454, %v445
      %v500 = vpack.c.b16 %v455, %v446
      %v501 = vpack.c.b16 %v456, %v447
      %v502 = vpack.c.b16 %v457, %v448
      %v503 = vpack.c.b16 %v458, %v449
      %v504 = vpack.c.b16 %v459, %v450
      %v505 = vpack.c.b16 %v460, %v451
      %v506 = vpack.c.b16 %v461, %v452
      %v507 = vpack.c.b16 %v462, %v453
      %v508 = vpack.c.b16 %v472, %v463
      %v509 = vpack.c.b16 %v473, %v464
      %v510 = vpack.c.b16 %v474, %v465
      %v511 = vpack.c.b16 %v475, %v466
      %v512 = vpack.c.b16 %v476, %v467
      %v513 = vpack.c.b16 %v477, %v468
      %v514 = vpack.c.b16 %v478, %v469
      %v515 = vpack.c.b16 %v479, %v470
      %v516 = vpack.c.b16 %v480, %v471
      %v697 = vunpack.c.l.b16 %v218
      %v698 = vunpack.c.l.b16 %v219
      %v699 = vunpack.c.l.b16 %v220
      %v700 = vunpack.c.l.b16 %v221
      %v701 = vunpack.c.l.b16 %v222
      %v702 = vunpack.c.l.b16 %v223
      %v703 = vunpack.c.l.b16 %v224
      %v704 = vunpack.c.l.b16 %v225
      %v705 = vunpack.c.l.b16 %v226
      %v706 = vunpack.c.l.b16 %v227
      %v707 = vunpack.c.l.b16 %v228
      %v708 = vunpack.c.l.b16 %v229
      %v709 = vunpack.c.l.b16 %v230
      %v710 = vunpack.c.l.b16 %v231
      %v711 = vunpack.c.l.b16 %v232
      %v712 = vunpack.c.l.b16 %v233
      %v713 = vunpack.c.l.b16 %v234
      %v714 = vunpack.c.l.b16 %v235
      %v715 = vunpack.c.l.b16 %v236
      %v716 = vunpack.c.l.b16 %v237
      %v717 = vunpack.c.l.b16 %v238
      %v718 = vunpack.c.l.b16 %v239
      %v719 = vunpack.c.l.b16 %v240
      %v720 = vunpack.c.l.b16 %v241
      %v721 = vunpack.c.l.b16 %v242
      %v722 = vunpack.c.l.b16 %v243
      %v723 = vunpack.c.l.b16 %v244
      %v724 = vunpack.c.l.b16 %v245
      %v725 = vunpack.c.l.b16 %v246
      %v726 = vunpack.c.l.b16 %v247
      %v727 = vunpack.c.l.b16 %v248
      %v728 = vunpack.c.l.b16 %v249
      %v729 = vunpack.c.l.b16 %v250
      %v730 = vunpack.c.l.b16 %v251
      %v731 = vunpack.c.l.b16 %v252
      %v732 = vunpack.c.l.b16 %v253
      %v733 = vunpack.c.l.b16 %v254
      %v734 = vunpack.c.l.b16 %v255
      %v735 = vunpack.c.l.b16 %v256
      %v736 = vunpack.c.l.b16 %v257
      %v737 = vunpack.c.l.b16 %v258
      %v738 = vunpack.c.l.b16 %v259
      %v739 = vunpack.c.l.b16 %v260
      %v740 = vunpack.c.l.b16 %v261
      %v741 = vunpack.c.l.b16 %v262
      %v742 = vunpack.c.l.b16 %v263
      %v743 = vunpack.c.l.b16 %v264
      %v744 = vunpack.c.l.b16 %v265
      %v745 = vunpack.c.l.b16 %v266
      %v746 = vunpack.c.l.b16 %v267
      %v747 = vunpack.c.l.b16 %v268
      %v748 = vunpack.c.l.b16 %v269
      %v749 = vunpack.c.l.b16 %v270
      %v750 = vunpack.c.l.b16 %v271
      %v751 = vunpack.c.l.b16 %v272
      %v752 = vunpack.c.l.b16 %v273
      %v753 = vunpack.c.l.b16 %v274
      %v754 = vunpack.c.l.b16 %v275
      %v755 = vunpack.c.l.b16 %v276
      %v756 = vunpack.c.l.b16 %v277
      %v757 = vunpack.c.l.b16 %v278
      %v758 = vunpack.c.l.b16 %v279
      %v759 = vunpack.c.l.b16 %v280
      %v760 = vunpack.c.l.b16 %v281
      %v761 = vunpack.c.l.b16 %v282
      %v762 = vunpack.c.l.b16 %v283
      %v763 = vunpack.c.l.b16 %v284
      %v764 = vunpack.c.l.b16 %v285
      %v765 = vunpack.c.l.b16 %v286
      %v766 = vunpack.c.l.b16 %v287
      %v767 = vunpack.c.l.b16 %v288
      %v768 = vunpack.c.l.b16 %v289
      %v769 = vunpack.c.l.b16 %v290
      %v770 = vunpack.c.l.b16 %v291
      %v771 = vunpack.c.l.b16 %v292
      %v772 = vunpack.c.l.b16 %v293
      %v773 = vunpack.c.l.b16 %v294
      %v774 = vunpack.c.l.b16 %v295
      %v775 = vunpack.c.l.b16 %v296
      %v776 = vunpack.c.l.b16 %v297
      %v777 = vunpack.c.l.b16 %v298
      %v778 = vunpack.c.l.b16 %v299
      %v779 = vunpack.c.l.b16 %v300
      %v780 = vunpack.c.l.b16 %v301
      %v781 = vunpack.c.l.b16 %v302
      %v782 = vunpack.c.l.b16 %v303
      %v783 = vunpack.c.l.b16 %v304
      %v784 = vunpack.c.l.b16 %v305
      %v785 = vunpack.c.l.b16 %v306
      %v786 = vunpack.c.l.b16 %v307
      %v787 = vunpack.c.l.b16 %v308
      %v788 = vunpack.c.l.b16 %v309
      %v789 = vunpack.c.l.b16 %v310
      %v790 = vunpack.c.l.b16 %v311
      %v791 = vunpack.c.l.b16 %v312
      %v792 = vunpack.c.l.b16 %v313
      %v793 = vunpack.c.l.b16 %v314
      %v794 = vunpack.c.l.b16 %v315
      %v795 = vunpack.c.l.b16 %v316
      %v796 = vunpack.c.l.b16 %v317
      %v797 = vunpack.c.l.b16 %v318
      %v798 = vunpack.c.l.b16 %v319
      %v799 = vunpack.c.l.b16 %v320
      %v800 = vunpack.c.l.b16 %v321
      %v801 = vunpack.c.l.b16 %v322
      %v802 = vunpack.c.l.b16 %v323
      %v803 = vunpack.c.l.b16 %v324
      %v804 = vunpack.c.l.b16 %v325
      %v805 = vunpack.c.l.b16 %v326
      %v806 = vunpack.c.l.b16 %v327
      %v807 = vunpack.c.l.b16 %v328
      %v808 = vunpack.c.l.b16 %v329
      %v809 = vunpack.c.l.b16 %v330
      %v810 = vunpack.c.l.b16 %v331
      %v811 = vunpack.c.l.b16 %v332
      %v812 = vunpack.c.l.b16 %v333
      %v813 = vunpack.c.l.b16 %v334
      %v814 = vunpack.c.l.b16 %v335
      %v815 = vunpack.c.l.b16 %v336
      %v816 = vunpack.c.l.b16 %v337
      %v817 = vunpack.c.l.b16 %v338
      %v818 = vunpack.c.l.b16 %v339
      %v819 = vunpack.c.l.b16 %v340
      %v820 = vunpack.c.l.b16 %v341
      %v821 = vunpack.c.l.b16 %v342
      %v822 = vunpack.c.l.b16 %v343
      %v823 = vunpack.c.l.b16 %v344
      %v824 = vunpack.c.l.b16 %v345
      %v825 = vunpack.c.l.b16 %v346
      %v826 = vunpack.c.l.b16 %v347
      %v827 = vunpack.c.l.b16 %v348
      %v828 = vunpack.c.l.b16 %v349
      %v829 = vunpack.c.l.b16 %v350
      %v830 = vunpack.c.l.b16 %v351
      %v831 = vunpack.c.l.b16 %v352
      %v832 = vunpack.c.l.b16 %v353
      %v833 = vunpack.c.l.b16 %v354
      %v834 = vunpack.c.l.b16 %v355
      %v835 = vunpack.c.l.b16 %v356
      %v836 = vunpack.c.l.b16 %v357
      %v837 = vunpack.c.l.b16 %v358
      %v838 = vunpack.c.l.b16 %v359
      %v839 = vunpack.c.l.b16 %v360
      %v840 = vunpack.c.l.b16 %v361
      %v841 = vpack.c.b16 %v698, %v697
      %v842 = vpack.c.b16 %v700, %v699
      %v843 = vpack.c.b16 %v702, %v701
      %v844 = vpack.c.b16 %v704, %v703
      %v845 = vpack.c.b16 %v706, %v705
      %v846 = vpack.c.b16 %v708, %v707
      %v847 = vpack.c.b16 %v710, %v709
      %v848 = vpack.c.b16 %v712, %v711
      %v849 = vpack.c.b16 %v714, %v713
      %v850 = vpack.c.b16 %v716, %v715
      %v851 = vpack.c.b16 %v718, %v717
      %v852 = vpack.c.b16 %v720, %v719
      %v853 = vpack.c.b16 %v722, %v721
      %v854 = vpack.c.b16 %v724, %v723
      %v855 = vpack.c.b16 %v726, %v725
      %v856 = vpack.c.b16 %v728, %v727
      %v857 = vpack.c.b16 %v730, %v729
      %v858 = vpack.c.b16 %v732, %v731
      %v859 = vpack.c.b16 %v734, %v733
      %v860 = vpack.c.b16 %v736, %v735
      %v861 = vpack.c.b16 %v738, %v737
      %v862 = vpack.c.b16 %v740, %v739
      %v863 = vpack.c.b16 %v742, %v741
      %v864 = vpack.c.b16 %v744, %v743
      %v865 = vpack.c.b16 %v746, %v745
      %v866 = vpack.c.b16 %v748, %v747
      %v867 = vpack.c.b16 %v750, %v749
      %v868 = vpack.c.b16 %v752, %v751
      %v869 = vpack.c.b16 %v754, %v753
      %v870 = vpack.c.b16 %v756, %v755
      %v871 = vpack.c.b16 %v758, %v757
      %v872 = vpack.c.b16 %v760, %v759
      %v873 = vpack.c.b16 %v762, %v761
      %v874 = vpack.c.b16 %v764, %v763
      %v875 = vpack.c.b16 %v766, %v765
      %v876 = vpack.c.b16 %v768, %v767
      %v877 = vpack.c.b16 %v770, %v769
      %v878 = vpack.c.b16 %v772, %v771
      %v879 = vpack.c.b16 %v774, %v773
      %v880 = vpack.c.b16 %v776, %v775
      %v881 = vpack.c.b16 %v778, %v777
      %v882 = vpack.c.b16 %v780, %v779
      %v883 = vpack.c.b16 %v782, %v781
      %v884 = vpack.c.b16 %v784, %v783
      %v885 = vpack.c.b16 %v786, %v785
      %v886 = vpack.c.b16 %v788, %v787
      %v887 = vpack.c.b16 %v790, %v789
      %v888 = vpack.c.b16 %v792, %v791
      %v889 = vpack.c.b16 %v794, %v793
      %v890 = vpack.c.b16 %v796, %v795
      %v891 = vpack.c.b16 %v798, %v797
      %v892 = vpack.c.b16 %v800, %v799
      %v893 = vpack.c.b16 %v802, %v801
      %v894 = vpack.c.b16 %v804, %v803
      %v895 = vpack.c.b16 %v806, %v805
      %v896 = vpack.c.b16 %v808, %v807
      %v897 = vpack.c.b16 %v810, %v809
      %v898 = vpack.c.b16 %v812, %v811
      %v899 = vpack.c.b16 %v814, %v813
      %v900 = vpack.c.b16 %v816, %v815
      %v901 = vpack.c.b16 %v818, %v817
      %v902 = vpack.c.b16 %v820, %v819
      %v903 = vpack.c.b16 %v822, %v821
      %v904 = vpack.c.b16 %v824, %v823
      %v905 = vpack.c.b16 %v826, %v825
      %v906 = vpack.c.b16 %v828, %v827
      %v907 = vpack.c.b16 %v830, %v829
      %v908 = vpack.c.b16 %v832, %v831
      %v909 = vpack.c.b16 %v834, %v833
      %v910 = vpack.c.b16 %v836, %v835
      %v911 = vpack.c.b16 %v838, %v837
      %v912 = vpack.c.b16 %v840, %v839
      %985 = vmatprep.subr.bf16.mxu0 0
      %986 = vmatpush1.bf16.msra.mxu0 %v841
      %987 = vmatprep.subr.bf16.mxu0 0
      %988 = vmatpush1.bf16.msra.mxu0 %v842
      %989 = vmatprep.subr.bf16.mxu0 0
      %990 = vmatpush1.bf16.msra.mxu0 %v843
      %991 = vmatprep.subr.bf16.mxu0 0
      %992 = vmatpush1.bf16.msra.mxu0 %v844
      %993 = vmatprep.subr.bf16.mxu0 0
      %994 = vmatpush1.bf16.msra.mxu0 %v845
      %995 = vmatprep.subr.bf16.mxu0 0
      %996 = vmatpush1.bf16.msra.mxu0 %v846
      %997 = vmatprep.subr.bf16.mxu0 0
      %998 = vmatpush1.bf16.msra.mxu0 %v847
      %999 = vmatprep.subr.bf16.mxu0 0
      %1000 = vmatpush1.bf16.msra.mxu0 %v848
      %1001 = vmatprep.subr.bf16.mxu0 0
      %1002 = vmatpush1.bf16.msra.mxu0 %v849
      %1003 = vmatprep.subr.bf16.mxu0 0
      %1004 = vmatpush1.bf16.msra.mxu0 %v850
      %1005 = vmatprep.subr.bf16.mxu0 0
      %1006 = vmatpush1.bf16.msra.mxu0 %v851
      %1007 = vmatprep.subr.bf16.mxu0 0
      %1008 = vmatpush1.bf16.msra.mxu0 %v852
      %1009 = vmatprep.subr.bf16.mxu0 0
      %1010 = vmatpush1.bf16.msra.mxu0 %v853
      %1011 = vmatprep.subr.bf16.mxu0 0
      %1012 = vmatpush1.bf16.msra.mxu0 %v854
      %1013 = vmatprep.subr.bf16.mxu0 0
      %1014 = vmatpush1.bf16.msra.mxu0 %v855
      %1015 = vmatprep.subr.bf16.mxu0 0
      %1016 = vmatpush1.bf16.msra.mxu0 %v856
      %1017 = vmatprep.mubr.bf16.mxu0 %v482
      %1018 = vmatmul.mubr.bf16.gmra.mrb[0].mxu0 %v481
      %v1019 = vpop.f32.mrb[0].mxu0
      %v1020 = vadd.f32 %v367, %v1019
      %v1021 = vpop.f32.mrb[0].mxu0
      %v1022 = vpop.f32.mrb[0].mxu0
      %v1023 = vadd.f32 %v367, %v1022
      %v1024 = vpop.f32.mrb[0].mxu0
      %1025 = vmatprep.mubr.bf16.mxu0 %v491
      %1026 = vmatmul.mubr.bf16.gmra.mrb[0].mxu0 %v490
      %v1027 = vpop.f32.mrb[0].mxu0
      %v1028 = vadd.f32 %v367, %v1027
      %v1029 = vpop.f32.mrb[0].mxu0
      %v1030 = vpop.f32.mrb[0].mxu0
      %v1031 = vadd.f32 %v367, %v1030
      %v1032 = vpop.f32.mrb[0].mxu0
      %1033 = vmatprep.mubr.bf16.mxu0 %v500
      %1034 = vmatmul.mubr.bf16.gmra.mrb[0].mxu0 %v499
      %v1035 = vpop.f32.mrb[0].mxu0
      %v1036 = vadd.f32 %v367, %v1035
      %v1037 = vpop.f32.mrb[0].mxu0
      %v1038 = vpop.f32.mrb[0].mxu0
      %v1039 = vadd.f32 %v367, %v1038
      %v1040 = vpop.f32.mrb[0].mxu0
      %1041 = vmatprep.mubr.bf16.mxu0 %v509
      %1042 = vmatmul.mubr.bf16.gmra.mrb[0].mxu0 %v508
      %v1043 = vpop.f32.mrb[0].mxu0
      %v1044 = vadd.f32 %v367, %v1043
      %v1045 = vpop.f32.mrb[0].mxu0
      %v1046 = vpop.f32.mrb[0].mxu0
      %v1047 = vadd.f32 %v367, %v1046
      %v1048 = vpop.f32.mrb[0].mxu0
      %1049 = vdwg.mxu0
      %1050 = vmatprep.subr.bf16.mxu0 0
      %1051 = vmatpush1.bf16.msra.mxu0 %v857
      %1052 = vmatprep.subr.bf16.mxu0 0
      %1053 = vmatpush1.bf16.msra.mxu0 %v858
      %1054 = vmatprep.subr.bf16.mxu0 0
      %1055 = vmatpush1.bf16.msra.mxu0 %v859
      %1056 = vmatprep.subr.bf16.mxu0 0
      %1057 = vmatpush1.bf16.msra.mxu0 %v860
      %1058 = vmatprep.subr.bf16.mxu0 0
      %1059 = vmatpush1.bf16.msra.mxu0 %v861
      %1060 = vmatprep.subr.bf16.mxu0 0
      %1061 = vmatpush1.bf16.msra.mxu0 %v862
      %1062 = vmatprep.subr.bf16.mxu0 0
      %1063 = vmatpush1.bf16.msra.mxu0 %v863
      %1064 = vmatprep.subr.bf16.mxu0 0
      %1065 = vmatpush1.bf16.msra.mxu0 %v864
      %1066 = vmatprep.subr.bf16.mxu0 0
      %1067 = vmatpush1.bf16.msra.mxu0 %v865
      %1068 = vmatprep.subr.bf16.mxu0 0
      %1069 = vmatpush1.bf16.msra.mxu0 %v866
      %1070 = vmatprep.subr.bf16.mxu0 0
      %1071 = vmatpush1.bf16.msra.mxu0 %v867
      %1072 = vmatprep.subr.bf16.mxu0 0
      %1073 = vmatpush1.bf16.msra.mxu0 %v868
      %1074 = vmatprep.subr.bf16.mxu0 0
      %1075 = vmatpush1.bf16.msra.mxu0 %v869
      %1076 = vmatprep.subr.bf16.mxu0 0
      %1077 = vmatpush1.bf16.msra.mxu0 %v870
      %1078 = vmatprep.subr.bf16.mxu0 0
      %1079 = vmatpush1.bf16.msra.mxu0 %v871
      %1080 = vmatprep.subr.bf16.mxu0 0
      %1081 = vmatpush1.bf16.msra.mxu0 %v872
      %1082 = vmatprep.mubr.bf16.mxu0 %v484
      %1083 = vmatmul.mubr.bf16.gmra.mrb[0].mxu0 %v483
      %v1084 = vpop.f32.mrb[0].mxu0
      %v1085 = vadd.f32 %v1020, %v1084
      %v1086 = vpop.f32.mrb[0].mxu0
      %v1087 = vpop.f32.mrb[0].mxu0
      %v1088 = vadd.f32 %v1023, %v1087
      %v1089 = vpop.f32.mrb[0].mxu0
      %1090 = vmatprep.mubr.bf16.mxu0 %v493
      %1091 = vmatmul.mubr.bf16.gmra.mrb[0].mxu0 %v492
      %v1092 = vpop.f32.mrb[0].mxu0
      %v1093 = vadd.f32 %v1028, %v1092
      %v1094 = vpop.f32.mrb[0].mxu0
      %v1095 = vpop.f32.mrb[0].mxu0
      %v1096 = vadd.f32 %v1031, %v1095
      %v1097 = vpop.f32.mrb[0].mxu0
      %1098 = vmatprep.mubr.bf16.mxu0 %v502
      %1099 = vmatmul.mubr.bf16.gmra.mrb[0].mxu0 %v501
      %v1100 = vpop.f32.mrb[0].mxu0
      %v1101 = vadd.f32 %v1036, %v1100
      %v1102 = vpop.f32.mrb[0].mxu0
      %v1103 = vpop.f32.mrb[0].mxu0
      %v1104 = vadd.f32 %v1039, %v1103
      %v1105 = vpop.f32.mrb[0].mxu0
      %1106 = vmatprep.mubr.bf16.mxu0 %v511
      %1107 = vmatmul.mubr.bf16.gmra.mrb[0].mxu0 %v510
      %v1108 = vpop.f32.mrb[0].mxu0
      %v1109 = vadd.f32 %v1044, %v1108
      %v1110 = vpop.f32.mrb[0].mxu0
      %v1111 = vpop.f32.mrb[0].mxu0
      %v1112 = vadd.f32 %v1047, %v1111
      %v1113 = vpop.f32.mrb[0].mxu0
      %1114 = vdwg.mxu0
      %1115 = vmatprep.subr.bf16.mxu0 0
      %1116 = vmatpush1.bf16.msra.mxu0 %v873
      %1117 = vmatprep.subr.bf16.mxu0 0
      %1118 = vmatpush1.bf16.msra.mxu0 %v874
      %1119 = vmatprep.subr.bf16.mxu0 0
      %1120 = vmatpush1.bf16.msra.mxu0 %v875
      %1121 = vmatprep.subr.bf16.mxu0 0
      %1122 = vmatpush1.bf16.msra.mxu0 %v876
      %1123 = vmatprep.subr.bf16.mxu0 0
      %1124 = vmatpush1.bf16.msra.mxu0 %v877
      %1125 = vmatprep.subr.bf16.mxu0 0
      %1126 = vmatpush1.bf16.msra.mxu0 %v878
      %1127 = vmatprep.subr.bf16.mxu0 0
      %1128 = vmatpush1.bf16.msra.mxu0 %v879
      %1129 = vmatprep.subr.bf16.mxu0 0
      %1130 = vmatpush1.bf16.msra.mxu0 %v880
      %1131 = vmatprep.subr.bf16.mxu0 0
      %1132 = vmatpush1.bf16.msra.mxu0 %v881
      %1133 = vmatprep.subr.bf16.mxu0 0
      %1134 = vmatpush1.bf16.msra.mxu0 %v882
      %1135 = vmatprep.subr.bf16.mxu0 0
      %1136 = vmatpush1.bf16.msra.mxu0 %v883
      %1137 = vmatprep.subr.bf16.mxu0 0
      %1138 = vmatpush1.bf16.msra.mxu0 %v884
      %1139 = vmatprep.subr.bf16.mxu0 0
      %1140 = vmatpush1.bf16.msra.mxu0 %v885
      %1141 = vmatprep.subr.bf16.mxu0 0
      %1142 = vmatpush1.bf16.msra.mxu0 %v886
      %1143 = vmatprep.subr.bf16.mxu0 0
      %1144 = vmatpush1.bf16.msra.mxu0 %v887
      %1145 = vmatprep.subr.bf16.mxu0 0
      %1146 = vmatpush1.bf16.msra.mxu0 %v888
      %1147 = vmatprep.mubr.bf16.mxu0 %v486
      %1148 = vmatmul.mubr.bf16.gmra.mrb[0].mxu0 %v485
      %v1149 = vpop.f32.mrb[0].mxu0
      %v1150 = vadd.f32 %v1085, %v1149
      %v1151 = vpop.f32.mrb[0].mxu0
      %v1152 = vpop.f32.mrb[0].mxu0
      %v1153 = vadd.f32 %v1088, %v1152
      %v1154 = vpop.f32.mrb[0].mxu0
      %1155 = vmatprep.mubr.bf16.mxu0 %v495
      %1156 = vmatmul.mubr.bf16.gmra.mrb[0].mxu0 %v494
      %v1157 = vpop.f32.mrb[0].mxu0
      %v1158 = vadd.f32 %v1093, %v1157
      %v1159 = vpop.f32.mrb[0].mxu0
      %v1160 = vpop.f32.mrb[0].mxu0
      %v1161 = vadd.f32 %v1096, %v1160
      %v1162 = vpop.f32.mrb[0].mxu0
      %1163 = vmatprep.mubr.bf16.mxu0 %v504
      %1164 = vmatmul.mubr.bf16.gmra.mrb[0].mxu0 %v503
      %v1165 = vpop.f32.mrb[0].mxu0
      %v1166 = vadd.f32 %v1101, %v1165
      %v1167 = vpop.f32.mrb[0].mxu0
      %v1168 = vpop.f32.mrb[0].mxu0
      %v1169 = vadd.f32 %v1104, %v1168
      %v1170 = vpop.f32.mrb[0].mxu0
      %1171 = vmatprep.mubr.bf16.mxu0 %v513
      %1172 = vmatmul.mubr.bf16.gmra.mrb[0].mxu0 %v512
      %v1173 = vpop.f32.mrb[0].mxu0
      %v1174 = vadd.f32 %v1109, %v1173
      %v1175 = vpop.f32.mrb[0].mxu0
      %v1176 = vpop.f32.mrb[0].mxu0
      %v1177 = vadd.f32 %v1112, %v1176
      %v1178 = vpop.f32.mrb[0].mxu0
      %1179 = vdwg.mxu0
      %1180 = vmatprep.subr.bf16.mxu0 0
      %1181 = vmatpush1.bf16.msra.mxu0 %v889
      %1182 = vmatprep.subr.bf16.mxu0 0
      %1183 = vmatpush1.bf16.msra.mxu0 %v890
      %1184 = vmatprep.subr.bf16.mxu0 0
      %1185 = vmatpush1.bf16.msra.mxu0 %v891
      %1186 = vmatprep.subr.bf16.mxu0 0
      %1187 = vmatpush1.bf16.msra.mxu0 %v892
      %1188 = vmatprep.subr.bf16.mxu0 0
      %1189 = vmatpush1.bf16.msra.mxu0 %v893
      %1190 = vmatprep.subr.bf16.mxu0 0
      %1191 = vmatpush1.bf16.msra.mxu0 %v894
      %1192 = vmatprep.subr.bf16.mxu0 0
      %1193 = vmatpush1.bf16.msra.mxu0 %v895
      %1194 = vmatprep.subr.bf16.mxu0 0
      %1195 = vmatpush1.bf16.msra.mxu0 %v896
      %1196 = vmatprep.subr.bf16.mxu0 0
      %1197 = vmatpush1.bf16.msra.mxu0 %v897
      %1198 = vmatprep.subr.bf16.mxu0 0
      %1199 = vmatpush1.bf16.msra.mxu0 %v898
      %1200 = vmatprep.subr.bf16.mxu0 0
      %1201 = vmatpush1.bf16.msra.mxu0 %v899
      %1202 = vmatprep.subr.bf16.mxu0 0
      %1203 = vmatpush1.bf16.msra.mxu0 %v900
      %1204 = vmatprep.subr.bf16.mxu0 0
      %1205 = vmatpush1.bf16.msra.mxu0 %v901
      %1206 = vmatprep.subr.bf16.mxu0 0
      %1207 = vmatpush1.bf16.msra.mxu0 %v902
      %1208 = vmatprep.subr.bf16.mxu0 0
      %1209 = vmatpush1.bf16.msra.mxu0 %v903
      %1210 = vmatprep.subr.bf16.mxu0 0
      %1211 = vmatpush1.bf16.msra.mxu0 %v904
      %1212 = vmatprep.mubr.bf16.mxu0 %v488
      %1213 = vmatmul.mubr.bf16.gmra.mrb[0].mxu0 %v487
      %v1214 = vpop.f32.mrb[0].mxu0
      %v1215 = vadd.f32 %v1150, %v1214
      %v1216 = vpop.f32.mrb[0].mxu0
      %v1217 = vpop.f32.mrb[0].mxu0
      %v1218 = vadd.f32 %v1153, %v1217
      %v1219 = vpop.f32.mrb[0].mxu0
      %1220 = vmatprep.mubr.bf16.mxu0 %v497
      %1221 = vmatmul.mubr.bf16.gmra.mrb[0].mxu0 %v496
      %v1222 = vpop.f32.mrb[0].mxu0
      %v1223 = vadd.f32 %v1158, %v1222
      %v1224 = vpop.f32.mrb[0].mxu0
      %v1225 = vpop.f32.mrb[0].mxu0
      %v1226 = vadd.f32 %v1161, %v1225
      %v1227 = vpop.f32.mrb[0].mxu0
      %1228 = vmatprep.mubr.bf16.mxu0 %v506
      %1229 = vmatmul.mubr.bf16.gmra.mrb[0].mxu0 %v505
      %v1230 = vpop.f32.mrb[0].mxu0
      %v1231 = vadd.f32 %v1166, %v1230
      %v1232 = vpop.f32.mrb[0].mxu0
      %v1233 = vpop.f32.mrb[0].mxu0
      %v1234 = vadd.f32 %v1169, %v1233
      %v1235 = vpop.f32.mrb[0].mxu0
      %1236 = vmatprep.mubr.bf16.mxu0 %v515
      %1237 = vmatmul.mubr.bf16.gmra.mrb[0].mxu0 %v514
      %v1238 = vpop.f32.mrb[0].mxu0
      %v1239 = vadd.f32 %v1174, %v1238
      %v1240 = vpop.f32.mrb[0].mxu0
      %v1241 = vpop.f32.mrb[0].mxu0
      %v1242 = vadd.f32 %v1177, %v1241
      %v1243 = vpop.f32.mrb[0].mxu0
      %1244 = vdwg.mxu0
      %1245 = vmatprep.subr.bf16.mxu0 0
      %1246 = vmatpush1.bf16.msra.mxu0 %v905
      %1247 = vmatprep.subr.bf16.mxu0 0
      %1248 = vmatpush1.bf16.msra.mxu0 %v906
      %1249 = vmatprep.subr.bf16.mxu0 0
      %1250 = vmatpush1.bf16.msra.mxu0 %v907
      %1251 = vmatprep.subr.bf16.mxu0 0
      %1252 = vmatpush1.bf16.msra.mxu0 %v908
      %1253 = vmatprep.subr.bf16.mxu0 0
      %1254 = vmatpush1.bf16.msra.mxu0 %v909
      %1255 = vmatprep.subr.bf16.mxu0 0
      %1256 = vmatpush1.bf16.msra.mxu0 %v910
      %1257 = vmatprep.subr.bf16.mxu0 0
      %1258 = vmatpush1.bf16.msra.mxu0 %v911
      %1259 = vmatprep.subr.bf16.mxu0 0
      %1260 = vmatpush1.bf16.msra.mxu0 %v912
      %1261 = vmatprep.subr.bf16.mxu0 0
      %1262 = vmatpush1.bf16.msra.mxu0 0
      %1263 = vmatprep.subr.bf16.mxu0 0
      %1264 = vmatpush1.bf16.msra.mxu0 0
      %1265 = vmatprep.subr.bf16.mxu0 0
      %1266 = vmatpush1.bf16.msra.mxu0 0
      %1267 = vmatprep.subr.bf16.mxu0 0
      %1268 = vmatpush1.bf16.msra.mxu0 0
      %1269 = vmatprep.subr.bf16.mxu0 0
      %1270 = vmatpush1.bf16.msra.mxu0 0
      %1271 = vmatprep.subr.bf16.mxu0 0
      %1272 = vmatpush1.bf16.msra.mxu0 0
      %1273 = vmatprep.subr.bf16.mxu0 0
      %1274 = vmatpush1.bf16.msra.mxu0 0
      %1275 = vmatprep.subr.bf16.mxu0 0
      %1276 = vmatpush1.bf16.msra.mxu0 0
      %1277 = vmatprep.mubr.bf16.mxu0 0
      %1278 = vmatmul.mubr.bf16.gmra.mrb[0].mxu0 %v489
      %v1279 = vpop.f32.mrb[0].mxu0
      %v1280 = vadd.f32 %v1215, %v1279
      %v1281 = vpop.f32.mrb[0].mxu0
      %v1282 = vpop.f32.mrb[0].mxu0
      %v1283 = vadd.f32 %v1218, %v1282
      %v1284 = vpop.f32.mrb[0].mxu0
      %1285 = vmatprep.mubr.bf16.mxu0 0
      %1286 = vmatmul.mubr.bf16.gmra.mrb[0].mxu0 %v498
      %v1287 = vpop.f32.mrb[0].mxu0
      %v1288 = vadd.f32 %v1223, %v1287
      %v1289 = vpop.f32.mrb[0].mxu0
      %v1290 = vpop.f32.mrb[0].mxu0
      %v1291 = vadd.f32 %v1226, %v1290
      %v1292 = vpop.f32.mrb[0].mxu0
      %1293 = vmatprep.mubr.bf16.mxu0 0
      %1294 = vmatmul.mubr.bf16.gmra.mrb[0].mxu0 %v507
      %v1295 = vpop.f32.mrb[0].mxu0
      %v1296 = vadd.f32 %v1231, %v1295
      %v1297 = vpop.f32.mrb[0].mxu0
      %v1298 = vpop.f32.mrb[0].mxu0
      %v1299 = vadd.f32 %v1234, %v1298
      %v1300 = vpop.f32.mrb[0].mxu0
      %1301 = vmatprep.mubr.bf16.mxu0 0
      %1302 = vmatmul.mubr.bf16.gmra.mrb[0].mxu0 %v516
      %v1303 = vpop.f32.mrb[0].mxu0
      %v1304 = vadd.f32 %v1239, %v1303
      %v1305 = vpop.f32.mrb[0].mxu0
      %v1306 = vpop.f32.mrb[0].mxu0
      %v1307 = vadd.f32 %v1242, %v1306
      %v1308 = vpop.f32.mrb[0].mxu0
      %1309 = vdwg.mxu0
      %v1310 = vmax.f32 %v1280, 0.0
      %v1311 = vmax.f32 %v1283, 0.0
      %v1312 = vmax.f32 %v1288, 0.0
      %v1313 = vmax.f32 %v1291, 0.0
      %v1314 = vmax.f32 %v1296, 0.0
      %v1315 = vmax.f32 %v1299, 0.0
      %v1316 = vmax.f32 %v1304, 0.0
      %v1317 = vmax.f32 %v1307, 0.0
      %v1318 = vpack.c.bf16 %v1311, %v1310
      %v1319 = vpack.c.bf16 %v1313, %v1312
      %v1320 = vpack.c.bf16 %v1315, %v1314
      %v1321 = vpack.c.bf16 %v1317, %v1316
      %v1326 = vunpack.c.l.b16 %v1318
      %v1327 = vunpack.c.h.b16 %v1318
      %v1328 = vunpack.c.l.b16 %v1319
      %v1329 = vunpack.c.h.b16 %v1319
      %v1330 = vunpack.c.l.b16 %v1320
      %v1331 = vunpack.c.h.b16 %v1320
      %v1332 = vunpack.c.l.b16 %v1321
      %v1333 = vunpack.c.h.b16 %v1321
      %v1334 = vpack.c.b16 %v1326, %v1326
      %v1335 = vpack.c.b16 %v1327, %v1327
      %v1336 = vpack.c.b16 %v1328, %v1328
      %v1337 = vpack.c.b16 %v1329, %v1329
      %v1338 = vpack.c.b16 %v1330, %v1330
      %v1339 = vpack.c.b16 %v1331, %v1331
      %v1340 = vpack.c.b16 %v1332, %v1332
      %v1341 = vpack.c.b16 %v1333, %v1333
      %1350 = vst [vmem:[%s175] sm:$0xf] %v1334
      %1351 = vst [vmem:[%s175 + $0x4] sm:$0xf] %v1335
      %1352 = vst [vmem:[%s175 + $0x8] sm:$0xf] %v1336
      %1353 = vst [vmem:[%s175 + $0xc] sm:$0xf] %v1337
      %1354 = vst [vmem:[%s175 + $0x10] sm:$0xf] %v1338
      %1355 = vst [vmem:[%s175 + $0x14] sm:$0xf] %v1339
      %1356 = vst [vmem:[%s175 + $0x18] sm:$0xf] %v1340
      %1357 = vst [vmem:[%s175 + $0x1c] sm:$0xf] %v1341
      %s1358 = smul.u32 8, %s14
      %p1359 = scmp.lt.s32.totalorder %s1358, 15
      %s1360 = scalar_select %p1359, %s1358, 15
      %s1361 = smul.addr %s1360, 4
      %s1362 = scalar_lea.vmem %s3, %s1361
      // Predicated region
      $region33: #{_lambda_.14} parent=31 // pred_check
        %p1363 = pneg %p100
      $region34: #{_lambda_.14} parent=31 // pred_check_branch
        %1365 = sbr.rel (%p1363) target = $region36
      $region35: #{_lambda_.14} parent=31 // pred_region
        %s1366 = smul.u32 8, %s14
      $region36: #{_lambda_.14} parent=31 // pred_fallthru
        _
    $region32: #{_lambda_.14} parent=5 // pred_fallthru
      _
    %p1367 = scmp.le.s32.totalorder 2, %s9
    // Predicated region
    $region37: #{_lambda_.14} parent=5 // pred_check
      %p1368 = pneg %p1367
    $region38: #{_lambda_.14} parent=5 // pred_check_branch
      %1370 = sbr.rel (%p1368) target = $region40
    $region39: #{_lambda_.14} parent=5 // pred_region
      %s1371 = ssub.s32 %s9, 2
      // Predicated region
      $region41: #{_lambda_.14} parent=39 // pred_check
        %p1372 = pneg %p106
      $region42: #{_lambda_.14} parent=39 // pred_check_branch
        %1374 = sbr.rel (%p1372) target = $region44
      $region43: #{_lambda_.14} parent=39 // pred_region
        %s1375 = smul.u32 8, %s15
        %p1376 = scmp.lt.s32.totalorder %s1375, 15
        %s1377 = scalar_select %p1376, %s1375, 15
        %s1378 = smul.addr %s1377, 4
        %s1379 = scalar_lea.vmem %s3, %s1378
      $region44: #{_lambda_.14} parent=39 // pred_fallthru
        _
    $region40: #{_lambda_.14} parent=5 // pred_fallthru
      _
  $region6: #{_lambda_.14} parent=0 // loop_footer
    %s13 = sadd.s32 1, %s9
  $region7: #{_lambda_.14} parent=0 // loop_footer_branch
    %8 = sbr.rel target = $region3
  $region8: #{_lambda_.14} parent=0 // loop_exit
    _

// kernel: _lambda_.15
$region0: #{_lambda_.15}
  #allocation0 [shape = 'u32[]', space=smem, size = 0x4, offset = 0x4, fixed_abs, tag = 'smem constant byte address 0x4 - core index']
  #allocation1 [shape = 'u32[144,128]{1,0:T(1,128)}', space=vmem, size = 0x12000, scoped, tag = 'internal scratch']
  %s0 = inlined_call_operand.vmem [shape: bf16[128,1152], index: 0, kind: input, shape index: {}]
  %s1 = inlined_call_operand.vmem [shape: bf16[1152,128], index: 1, kind: input, shape index: {}]
  %s2 = inlined_call_operand.vmem [shape: f32[1,128], index: 2, kind: input, shape index: {}]
  %s3 = inlined_call_operand.vmem [shape: bf16[128,128], index: 3, kind: input, shape index: {}]
  %s4 = inlined_call_operand.vmem [shape: bf16[128,128], index: 4, kind: output, shape index: {}]
  %s5 = sld [smem:[#allocation0]]
  $region49: #{_lambda_.15} parent=0
    _
  %s7 = ssub.s32 1, %s5
  %s8 = scalar_select 0, %s7, %s5
  loop: start=0, step=1, limit=4
  $region2: #{_lambda_.15} parent=0 // loop_pre_header
    _
  $region3: #{_lambda_.15} parent=0 // loop_header
    %s10 = sphi 0, %s14
    %p11 = scmp.ge.s32.totalorder %s10, 4
    %s20 = sphi 0, %s22
    %s23 = sphi 0, %s20
    %s24 = sphi 0, %s23
    %s40 = sphi 0, %s24
    %s44 = sphi 0, %s44
    %s46 = sphi 0, %s44
    %s47 = sphi 0, %s46
    %s61 = sphi 0, %s47
    %s65 = sphi 0, %s65
    %s67 = sphi 0, %s65
    %s68 = sphi 0, %s67
    %s82 = sphi 0, %s68
    %s88 = sphi 0, %s90
    %s91 = sphi 0, %s88
    %s92 = sphi 0, %s91
    %s108 = sphi 0, %s92
    %s114 = sphi 0, %s116
    %s117 = sphi 0, %s114
    %s118 = sphi 0, %s117
    %s134 = sphi 0, %s118
  $region4: #{_lambda_.15} parent=0 // loop_header_branch
    %13 = sbr.rel (%p11) target = $region8
  $region5: #{_lambda_.15} parent=0 // loop_body
    %s15 = ssub.s32 %s10, 1
    %s16 = ssub.s32 %s10, 2
    %s17 = sadd.s32 %s10, 1
    %s18 = ssub.s32 %s10, %s17
    %p19 = scmp.eq.s32.totalorder %s18, 0
    %s21 = sadd.s32 %s20, 1
    %s22 = scalar_select %p19, %s20, %s21
    %p25 = pneg %p19
    %p26 = scmp.eq.s32.totalorder %s10, 1
    %p27 = por %p25, %p26
    %p28 = scmp.ne.s32.totalorder %s20, %s23
    %p29 = scmp.eq.s32.totalorder %s10, 0
    %p30 = por %p28, %p29
    %p31 = scmp.ne.s32.totalorder %s20, %s23
    %p32 = scmp.eq.s32.totalorder %s15, 1
    %p33 = por %p31, %p32
    %p34 = scmp.ne.s32.totalorder %s23, %s24
    %p35 = scmp.eq.s32.totalorder %s15, 0
    %p36 = por %p34, %p35
    %p37 = scmp.ne.s32.totalorder %s23, %s24
    %p38 = scmp.eq.s32.totalorder %s16, 1
    %p39 = por %p37, %p38
    %p41 = scmp.ne.s32.totalorder %s24, %s40
    %p42 = scmp.eq.s32.totalorder %s16, 0
    %p43 = por %p41, %p42
    %s45 = sadd.s32 %s44, 1
    %p48 = scmp.eq.s32.totalorder %s10, 1
    %p49 = scmp.ne.s32.totalorder %s44, %s46
    %p50 = scmp.eq.s32.totalorder %s10, 0
    %p51 = por %p49, %p50
    %p52 = scmp.ne.s32.totalorder %s44, %s46
    %p53 = scmp.eq.s32.totalorder %s15, 1
    %p54 = por %p52, %p53
    %p55 = scmp.ne.s32.totalorder %s46, %s47
    %p56 = scmp.eq.s32.totalorder %s15, 0
    %p57 = por %p55, %p56
    %p58 = scmp.ne.s32.totalorder %s46, %s47
    %p59 = scmp.eq.s32.totalorder %s16, 1
    %p60 = por %p58, %p59
    %p62 = scmp.ne.s32.totalorder %s47, %s61
    %p63 = scmp.eq.s32.totalorder %s16, 0
    %p64 = por %p62, %p63
    %s66 = sadd.s32 %s65, 1
    %p69 = scmp.eq.s32.totalorder %s10, 1
    %p70 = scmp.ne.s32.totalorder %s65, %s67
    %p71 = scmp.eq.s32.totalorder %s10, 0
    %p72 = por %p70, %p71
    %p73 = scmp.ne.s32.totalorder %s65, %s67
    %p74 = scmp.eq.s32.totalorder %s15, 1
    %p75 = por %p73, %p74
    %p76 = scmp.ne.s32.totalorder %s67, %s68
    %p77 = scmp.eq.s32.totalorder %s15, 0
    %p78 = por %p76, %p77
    %p79 = scmp.ne.s32.totalorder %s67, %s68
    %p80 = scmp.eq.s32.totalorder %s16, 1
    %p81 = por %p79, %p80
    %p83 = scmp.ne.s32.totalorder %s68, %s82
    %p84 = scmp.eq.s32.totalorder %s16, 0
    %p85 = por %p83, %p84
    %s86 = ssub.s32 %s10, %s17
    %p87 = scmp.eq.s32.totalorder %s86, 0
    %s89 = sadd.s32 %s88, 1
    %s90 = scalar_select %p87, %s88, %s89
    %p93 = pneg %p87
    %p94 = scmp.eq.s32.totalorder %s10, 1
    %p95 = por %p93, %p94
    %p96 = scmp.ne.s32.totalorder %s88, %s91
    %p97 = scmp.eq.s32.totalorder %s10, 0
    %p98 = por %p96, %p97
    %p99 = scmp.ne.s32.totalorder %s88, %s91
    %p100 = scmp.eq.s32.totalorder %s15, 1
    %p101 = por %p99, %p100
    %p102 = scmp.ne.s32.totalorder %s91, %s92
    %p103 = scmp.eq.s32.totalorder %s15, 0
    %p104 = por %p102, %p103
    %p105 = scmp.ne.s32.totalorder %s91, %s92
    %p106 = scmp.eq.s32.totalorder %s16, 1
    %p107 = por %p105, %p106
    %p109 = scmp.ne.s32.totalorder %s92, %s108
    %p110 = scmp.eq.s32.totalorder %s16, 0
    %p111 = por %p109, %p110
    %s112 = ssub.s32 %s10, %s17
    %p113 = scmp.eq.s32.totalorder %s112, 0
    %s115 = sadd.s32 %s114, 1
    %s116 = scalar_select %p113, %s114, %s115
    %p119 = pneg %p113
    %p120 = scmp.eq.s32.totalorder %s10, 1
    %p121 = por %p119, %p120
    %p122 = scmp.ne.s32.totalorder %s114, %s117
    %p123 = scmp.eq.s32.totalorder %s10, 0
    %p124 = por %p122, %p123
    %p125 = scmp.ne.s32.totalorder %s114, %s117
    %p126 = scmp.eq.s32.totalorder %s15, 1
    %p127 = por %p125, %p126
    %p128 = scmp.ne.s32.totalorder %s117, %s118
    %p129 = scmp.eq.s32.totalorder %s15, 0
    %p130 = por %p128, %p129
    %p131 = scmp.ne.s32.totalorder %s117, %s118
    %p132 = scmp.eq.s32.totalorder %s16, 1
    %p133 = por %p131, %p132
    %p135 = scmp.ne.s32.totalorder %s118, %s134
    %p136 = scmp.eq.s32.totalorder %s16, 0
    %p137 = por %p135, %p136
    %p138 = scmp.le.s32.totalorder 1, %s10
    %p139 = scmp.lt.s32.totalorder %s10, 3
    %p140 = pnand %p138, %p139
    %p141 = pneg %p140
    // Predicated region
    $region9: #{_lambda_.15} parent=5 // pred_check
      _
    $region10: #{_lambda_.15} parent=5 // pred_check_branch
      %143 = sbr.rel (%p140) target = $region12
    $region11: #{_lambda_.15} parent=5 // pred_region
      %s144 = ssub.s32 %s10, 1
      // Predicated region
      $region13: #{_lambda_.15} parent=11 // pred_check
        %p145 = pneg %p57
      $region14: #{_lambda_.15} parent=11 // pred_check_branch
        %147 = sbr.rel (%p145) target = $region16
      $region15: #{_lambda_.15} parent=11 // pred_region
        _
      $region16: #{_lambda_.15} parent=11 // pred_fallthru
        _
      // Predicated region
      $region17: #{_lambda_.15} parent=11 // pred_check
        %p148 = pneg %p78
      $region18: #{_lambda_.15} parent=11 // pred_check_branch
        %150 = sbr.rel (%p148) target = $region20
      $region19: #{_lambda_.15} parent=11 // pred_region
        _
      $region20: #{_lambda_.15} parent=11 // pred_fallthru
        _
    $region12: #{_lambda_.15} parent=5 // pred_fallthru
      _
    %p151 = scmp.lt.s32.totalorder %s10, 2
    // Predicated region
    $region21: #{_lambda_.15} parent=5 // pred_check
      %p152 = pneg %p151
    $region22: #{_lambda_.15} parent=5 // pred_check_branch
      %154 = sbr.rel (%p152) target = $region24
    $region23: #{_lambda_.15} parent=5 // pred_region
      // Predicated region
      $region25: #{_lambda_.15} parent=23 // pred_check
        %p155 = pneg %p30
      $region26: #{_lambda_.15} parent=23 // pred_check_branch
        %157 = sbr.rel (%p155) target = $region28
      $region27: #{_lambda_.15} parent=23 // pred_region
        %s158 = smul.u32 8, %s10
        %p159 = scmp.lt.s32.totalorder %s158, 15
        %s160 = scalar_select %p159, %s158, 15
        %s161 = smul.addr %s160, 9
        %s162 = smul.addr %s161, 4
        %s163 = scalar_lea.vmem %s0, %s162
        %s164 = smul.u32 8, %s10
      $region28: #{_lambda_.15} parent=23 // pred_fallthru
        _
      // Predicated region
      $region29: #{_lambda_.15} parent=23 // pred_check
        %p165 = pneg %p98
      $region30: #{_lambda_.15} parent=23 // pred_check_branch
        %167 = sbr.rel (%p165) target = $region32
      $region31: #{_lambda_.15} parent=23 // pred_region
        %s168 = smul.u32 8, %s10
        %p169 = scmp.lt.s32.totalorder %s168, 15
        %s170 = scalar_select %p169, %s168, 15
        %s171 = smul.addr %s170, 4
        %s172 = scalar_lea.vmem %s3, %s171
        %s173 = smul.u32 8, %s10
      $region32: #{_lambda_.15} parent=23 // pred_fallthru
        _
    $region24: #{_lambda_.15} parent=5 // pred_fallthru
      _
    %p174 = scmp.le.s32.totalorder 1, %s10
    %p175 = scmp.lt.s32.totalorder %s10, 3
    %p176 = pnand %p174, %p175
    %p177 = pneg %p176
    // Predicated region
    $region33: #{_lambda_.15} parent=5 // pred_check
      _
    $region34: #{_lambda_.15} parent=5 // pred_check_branch
      %179 = sbr.rel (%p176) target = $region36
    $region35: #{_lambda_.15} parent=5 // pred_region
      %s180 = ssub.s32 %s10, 1
      %s181 = smul.u32 8, %s15
      %p182 = scmp.lt.s32.totalorder %s181, 15
      %s183 = scalar_select %p182, %s181, 15
      %s184 = smul.addr %s183, 9
      %s185 = smul.addr %s184, 4
      %s186 = scalar_lea.vmem %s0, %s185
      %p187 = pneg %p36
      %p188 = pneg %p33
      %p189 = pneg %p57
      %p190 = pneg %p54
      %p191 = pneg %p78
      %p192 = pneg %p75
      %s193 = smul.u32 8, %s15
      %p194 = scmp.lt.s32.totalorder %s193, 15
      %s195 = scalar_select %p194, %s193, 15
      %s196 = smul.addr %s195, 4
      %s197 = scalar_lea.vmem %s3, %s196
      %p198 = pneg %p104
      %p199 = pneg %p101
      %p200 = pneg %p130
      %p201 = pneg %p127
      %s202 = smul.u32 8, %s15
      %p203 = scmp.lt.s32.totalorder %s202, 15
      %s204 = scalar_select %p203, %s202, 15
      %s205 = smul.addr %s204, 4
      %s206 = scalar_lea.vmem %s4, %s205
      %s207 = smul.u32 8, %s15
      %p208 = scmp.lt.s32.totalorder %s207, 15
      %s209 = scalar_select %p208, %s207, 15
      %s210 = smul.addr %s209, 9
      %s211 = smul.addr %s210, 4
      %s212 = scalar_lea.vmem %s0, %s211
      %s213 = smul.u32 8, %s15
      %s214 = smul.u32 8, %s15
      %p215 = scmp.lt.s32.totalorder %s214, 15
      %s216 = scalar_select %p215, %s214, 15
      %s217 = smul.addr %s216, 4
      %s218 = scalar_lea.vmem %s3, %s217
      %s219 = smul.u32 8, %s15
      %s220 = smul.u32 8, %s15
      %p221 = scmp.lt.s32.totalorder %s220, 15
      %s222 = scalar_select %p221, %s220, 15
      %s223 = smul.addr %s222, 4
      %s224 = scalar_lea.vmem %s4, %s223
      %s225 = smul.u32 8, %s15
      %v227 = vld [vmem:[%s212] sm:$0xff]
      %v228 = vld [vmem:[%s212 + $0x8] sm:$0xff]
      %v229 = vld [vmem:[%s212 + $0x10] sm:$0xff]
      %v230 = vld [vmem:[%s212 + $0x18] sm:$0xff]
      %v231 = vld [vmem:[%s212 + $0x20] sm:$0xf]
      %v232 = vld [vmem:[%s212 + $0x24] sm:$0xff]
      %v233 = vld [vmem:[%s212 + $0x2c] sm:$0xff]
      %v234 = vld [vmem:[%s212 + $0x34] sm:$0xff]
      %v235 = vld [vmem:[%s212 + $0x3c] sm:$0xff]
      %v236 = vld [vmem:[%s212 + $0x44] sm:$0xf]
      %v237 = vld [vmem:[%s212 + $0x48] sm:$0xff]
      %v238 = vld [vmem:[%s212 + $0x50] sm:$0xff]
      %v239 = vld [vmem:[%s212 + $0x58] sm:$0xff]
      %v240 = vld [vmem:[%s212 + $0x60] sm:$0xff]
      %v241 = vld [vmem:[%s212 + $0x68] sm:$0xf]
      %v242 = vld [vmem:[%s212 + $0x6c] sm:$0xff]
      %v243 = vld [vmem:[%s212 + $0x74] sm:$0xff]
      %v244 = vld [vmem:[%s212 + $0x7c] sm:$0xff]
      %v245 = vld [vmem:[%s212 + $0x84] sm:$0xff]
      %v246 = vld [vmem:[%s212 + $0x8c] sm:$0xf]
      %v247 = vld [vmem:[%s212 + $0x90] sm:$0xff]
      %v248 = vld [vmem:[%s212 + $0x98] sm:$0xff]
      %v249 = vld [vmem:[%s212 + $0xa0] sm:$0xff]
      %v250 = vld [vmem:[%s212 + $0xa8] sm:$0xff]
      %v251 = vld [vmem:[%s212 + $0xb0] sm:$0xf]
      %v252 = vld [vmem:[%s212 + $0xb4] sm:$0xff]
      %v253 = vld [vmem:[%s212 + $0xbc] sm:$0xff]
      %v254 = vld [vmem:[%s212 + $0xc4] sm:$0xff]
      %v255 = vld [vmem:[%s212 + $0xcc] sm:$0xff]
      %v256 = vld [vmem:[%s212 + $0xd4] sm:$0xf]
      %v257 = vld [vmem:[%s212 + $0xd8] sm:$0xff]
      %v258 = vld [vmem:[%s212 + $0xe0] sm:$0xff]
      %v259 = vld [vmem:[%s212 + $0xe8] sm:$0xff]
      %v260 = vld [vmem:[%s212 + $0xf0] sm:$0xff]
      %v261 = vld [vmem:[%s212 + $0xf8] sm:$0xf]
      %v262 = vld [vmem:[%s212 + $0xfc] sm:$0xff]
      %v263 = vld [vmem:[%s212 + $0x104] sm:$0xff]
      %v264 = vld [vmem:[%s212 + $0x10c] sm:$0xff]
      %v265 = vld [vmem:[%s212 + $0x114] sm:$0xff]
      %v266 = vld [vmem:[%s212 + $0x11c] sm:$0xf]
      %v267 = vld [vmem:[%s1] sm:$0xf]
      %v268 = vld [vmem:[%s1 + $0x4] sm:$0xf]
      %v269 = vld [vmem:[%s1 + $0x8] sm:$0xf]
      %v270 = vld [vmem:[%s1 + $0xc] sm:$0xf]
      %v271 = vld [vmem:[%s1 + $0x10] sm:$0xf]
      %v272 = vld [vmem:[%s1 + $0x14] sm:$0xf]
      %v273 = vld [vmem:[%s1 + $0x18] sm:$0xf]
      %v274 = vld [vmem:[%s1 + $0x1c] sm:$0xf]
      %v275 = vld [vmem:[%s1 + $0x20] sm:$0xf]
      %v276 = vld [vmem:[%s1 + $0x24] sm:$0xf]
      %v277 = vld [vmem:[%s1 + $0x28] sm:$0xf]
      %v278 = vld [vmem:[%s1 + $0x2c] sm:$0xf]
      %v279 = vld [vmem:[%s1 + $0x30] sm:$0xf]
      %v280 = vld [vmem:[%s1 + $0x34] sm:$0xf]
      %v281 = vld [vmem:[%s1 + $0x38] sm:$0xf]
      %v282 = vld [vmem:[%s1 + $0x3c] sm:$0xf]
      %v283 = vld [vmem:[%s1 + $0x40] sm:$0xf]
      %v284 = vld [vmem:[%s1 + $0x44] sm:$0xf]
      %v285 = vld [vmem:[%s1 + $0x48] sm:$0xf]
      %v286 = vld [vmem:[%s1 + $0x4c] sm:$0xf]
      %v287 = vld [vmem:[%s1 + $0x50] sm:$0xf]
      %v288 = vld [vmem:[%s1 + $0x54] sm:$0xf]
      %v289 = vld [vmem:[%s1 + $0x58] sm:$0xf]
      %v290 = vld [vmem:[%s1 + $0x5c] sm:$0xf]
      %v291 = vld [vmem:[%s1 + $0x60] sm:$0xf]
      %v292 = vld [vmem:[%s1 + $0x64] sm:$0xf]
      %v293 = vld [vmem:[%s1 + $0x68] sm:$0xf]
      %v294 = vld [vmem:[%s1 + $0x6c] sm:$0xf]
      %v295 = vld [vmem:[%s1 + $0x70] sm:$0xf]
      %v296 = vld [vmem:[%s1 + $0x74] sm:$0xf]
      %v297 = vld [vmem:[%s1 + $0x78] sm:$0xf]
      %v298 = vld [vmem:[%s1 + $0x7c] sm:$0xf]
      %v299 = vld [vmem:[%s1 + $0x80] sm:$0xf]
      %v300 = vld [vmem:[%s1 + $0x84] sm:$0xf]
      %v301 = vld [vmem:[%s1 + $0x88] sm:$0xf]
      %v302 = vld [vmem:[%s1 + $0x8c] sm:$0xf]
      %v303 = vld [vmem:[%s1 + $0x90] sm:$0xf]
      %v304 = vld [vmem:[%s1 + $0x94] sm:$0xf]
      %v305 = vld [vmem:[%s1 + $0x98] sm:$0xf]
      %v306 = vld [vmem:[%s1 + $0x9c] sm:$0xf]
      %v307 = vld [vmem:[%s1 + $0xa0] sm:$0xf]
      %v308 = vld [vmem:[%s1 + $0xa4] sm:$0xf]
      %v309 = vld [vmem:[%s1 + $0xa8] sm:$0xf]
      %v310 = vld [vmem:[%s1 + $0xac] sm:$0xf]
      %v311 = vld [vmem:[%s1 + $0xb0] sm:$0xf]
      %v312 = vld [vmem:[%s1 + $0xb4] sm:$0xf]
      %v313 = vld [vmem:[%s1 + $0xb8] sm:$0xf]
      %v314 = vld [vmem:[%s1 + $0xbc] sm:$0xf]
      %v315 = vld [vmem:[%s1 + $0xc0] sm:$0xf]
      %v316 = vld [vmem:[%s1 + $0xc4] sm:$0xf]
      %v317 = vld [vmem:[%s1 + $0xc8] sm:$0xf]
      %v318 = vld [vmem:[%s1 + $0xcc] sm:$0xf]
      %v319 = vld [vmem:[%s1 + $0xd0] sm:$0xf]
      %v320 = vld [vmem:[%s1 + $0xd4] sm:$0xf]
      %v321 = vld [vmem:[%s1 + $0xd8] sm:$0xf]
      %v322 = vld [vmem:[%s1 + $0xdc] sm:$0xf]
      %v323 = vld [vmem:[%s1 + $0xe0] sm:$0xf]
      %v324 = vld [vmem:[%s1 + $0xe4] sm:$0xf]
      %v325 = vld [vmem:[%s1 + $0xe8] sm:$0xf]
      %v326 = vld [vmem:[%s1 + $0xec] sm:$0xf]
      %v327 = vld [vmem:[%s1 + $0xf0] sm:$0xf]
      %v328 = vld [vmem:[%s1 + $0xf4] sm:$0xf]
      %v329 = vld [vmem:[%s1 + $0xf8] sm:$0xf]
      %v330 = vld [vmem:[%s1 + $0xfc] sm:$0xf]
      %v331 = vld [vmem:[%s1 + $0x100] sm:$0xf]
      %v332 = vld [vmem:[%s1 + $0x104] sm:$0xf]
      %v333 = vld [vmem:[%s1 + $0x108] sm:$0xf]
      %v334 = vld [vmem:[%s1 + $0x10c] sm:$0xf]
      %v335 = vld [vmem:[%s1 + $0x110] sm:$0xf]
      %v336 = vld [vmem:[%s1 + $0x114] sm:$0xf]
      %v337 = vld [vmem:[%s1 + $0x118] sm:$0xf]
      %v338 = vld [vmem:[%s1 + $0x11c] sm:$0xf]
      %v339 = vld [vmem:[%s1 + $0x120] sm:$0xf]
      %v340 = vld [vmem:[%s1 + $0x124] sm:$0xf]
      %v341 = vld [vmem:[%s1 + $0x128] sm:$0xf]
      %v342 = vld [vmem:[%s1 + $0x12c] sm:$0xf]
      %v343 = vld [vmem:[%s1 + $0x130] sm:$0xf]
      %v344 = vld [vmem:[%s1 + $0x134] sm:$0xf]
      %v345 = vld [vmem:[%s1 + $0x138] sm:$0xf]
      %v346 = vld [vmem:[%s1 + $0x13c] sm:$0xf]
      %v347 = vld [vmem:[%s1 + $0x140] sm:$0xf]
      %v348 = vld [vmem:[%s1 + $0x144] sm:$0xf]
      %v349 = vld [vmem:[%s1 + $0x148] sm:$0xf]
      %v350 = vld [vmem:[%s1 + $0x14c] sm:$0xf]
      %v351 = vld [vmem:[%s1 + $0x150] sm:$0xf]
      %v352 = vld [vmem:[%s1 + $0x154] sm:$0xf]
      %v353 = vld [vmem:[%s1 + $0x158] sm:$0xf]
      %v354 = vld [vmem:[%s1 + $0x15c] sm:$0xf]
      %v355 = vld [vmem:[%s1 + $0x160] sm:$0xf]
      %v356 = vld [vmem:[%s1 + $0x164] sm:$0xf]
      %v357 = vld [vmem:[%s1 + $0x168] sm:$0xf]
      %v358 = vld [vmem:[%s1 + $0x16c] sm:$0xf]
      %v359 = vld [vmem:[%s1 + $0x170] sm:$0xf]
      %v360 = vld [vmem:[%s1 + $0x174] sm:$0xf]
      %v361 = vld [vmem:[%s1 + $0x178] sm:$0xf]
      %v362 = vld [vmem:[%s1 + $0x17c] sm:$0xf]
      %v363 = vld [vmem:[%s1 + $0x180] sm:$0xf]
      %v364 = vld [vmem:[%s1 + $0x184] sm:$0xf]
      %v365 = vld [vmem:[%s1 + $0x188] sm:$0xf]
      %v366 = vld [vmem:[%s1 + $0x18c] sm:$0xf]
      %v367 = vld [vmem:[%s1 + $0x190] sm:$0xf]
      %v368 = vld [vmem:[%s1 + $0x194] sm:$0xf]
      %v369 = vld [vmem:[%s1 + $0x198] sm:$0xf]
      %v370 = vld [vmem:[%s1 + $0x19c] sm:$0xf]
      %v371 = vld [vmem:[%s1 + $0x1a0] sm:$0xf]
      %v372 = vld [vmem:[%s1 + $0x1a4] sm:$0xf]
      %v373 = vld [vmem:[%s1 + $0x1a8] sm:$0xf]
      %v374 = vld [vmem:[%s1 + $0x1ac] sm:$0xf]
      %v375 = vld [vmem:[%s1 + $0x1b0] sm:$0xf]
      %v376 = vld [vmem:[%s1 + $0x1b4] sm:$0xf]
      %v377 = vld [vmem:[%s1 + $0x1b8] sm:$0xf]
      %v378 = vld [vmem:[%s1 + $0x1bc] sm:$0xf]
      %v379 = vld [vmem:[%s1 + $0x1c0] sm:$0xf]
      %v380 = vld [vmem:[%s1 + $0x1c4] sm:$0xf]
      %v381 = vld [vmem:[%s1 + $0x1c8] sm:$0xf]
      %v382 = vld [vmem:[%s1 + $0x1cc] sm:$0xf]
      %v383 = vld [vmem:[%s1 + $0x1d0] sm:$0xf]
      %v384 = vld [vmem:[%s1 + $0x1d4] sm:$0xf]
      %v385 = vld [vmem:[%s1 + $0x1d8] sm:$0xf]
      %v386 = vld [vmem:[%s1 + $0x1dc] sm:$0xf]
      %v387 = vld [vmem:[%s1 + $0x1e0] sm:$0xf]
      %v388 = vld [vmem:[%s1 + $0x1e4] sm:$0xf]
      %v389 = vld [vmem:[%s1 + $0x1e8] sm:$0xf]
      %v390 = vld [vmem:[%s1 + $0x1ec] sm:$0xf]
      %v391 = vld [vmem:[%s1 + $0x1f0] sm:$0xf]
      %v392 = vld [vmem:[%s1 + $0x1f4] sm:$0xf]
      %v393 = vld [vmem:[%s1 + $0x1f8] sm:$0xf]
      %v394 = vld [vmem:[%s1 + $0x1fc] sm:$0xf]
      %v395 = vld [vmem:[%s1 + $0x200] sm:$0xf]
      %v396 = vld [vmem:[%s1 + $0x204] sm:$0xf]
      %v397 = vld [vmem:[%s1 + $0x208] sm:$0xf]
      %v398 = vld [vmem:[%s1 + $0x20c] sm:$0xf]
      %v399 = vld [vmem:[%s1 + $0x210] sm:$0xf]
      %v400 = vld [vmem:[%s1 + $0x214] sm:$0xf]
      %v401 = vld [vmem:[%s1 + $0x218] sm:$0xf]
      %v402 = vld [vmem:[%s1 + $0x21c] sm:$0xf]
      %v403 = vld [vmem:[%s1 + $0x220] sm:$0xf]
      %v404 = vld [vmem:[%s1 + $0x224] sm:$0xf]
      %v405 = vld [vmem:[%s1 + $0x228] sm:$0xf]
      %v406 = vld [vmem:[%s1 + $0x22c] sm:$0xf]
      %v407 = vld [vmem:[%s1 + $0x230] sm:$0xf]
      %v408 = vld [vmem:[%s1 + $0x234] sm:$0xf]
      %v409 = vld [vmem:[%s1 + $0x238] sm:$0xf]
      %v410 = vld [vmem:[%s1 + $0x23c] sm:$0xf]
      %v411 = vld [vmem:[%s2] sm:$0x1]
      %v413 = vlaneseq
      %v414 = vshrl.u32 %v413, 7
      %v415 = vsub.s32 0, %v414
      %v416 = vrot.slane %v411, %v415
      %v458 = vunpack.c.l.b16 %v227
      %v459 = vunpack.c.h.b16 %v227
      %v460 = vunpack.c.l.b16 %v228
      %v461 = vunpack.c.h.b16 %v228
      %v462 = vunpack.c.l.b16 %v229
      %v463 = vunpack.c.h.b16 %v229
      %v464 = vunpack.c.l.b16 %v230
      %v465 = vunpack.c.h.b16 %v230
      %v466 = vunpack.c.l.b16 %v231
      %v467 = vunpack.c.l.b16 %v232
      %v468 = vunpack.c.h.b16 %v232
      %v469 = vunpack.c.l.b16 %v233
      %v470 = vunpack.c.h.b16 %v233
      %v471 = vunpack.c.l.b16 %v234
      %v472 = vunpack.c.h.b16 %v234
      %v473 = vunpack.c.l.b16 %v235
      %v474 = vunpack.c.h.b16 %v235
      %v475 = vunpack.c.l.b16 %v236
      %v476 = vunpack.c.l.b16 %v237
      %v477 = vunpack.c.h.b16 %v237
      %v478 = vunpack.c.l.b16 %v238
      %v479 = vunpack.c.h.b16 %v238
      %v480 = vunpack.c.l.b16 %v239
      %v481 = vunpack.c.h.b16 %v239
      %v482 = vunpack.c.l.b16 %v240
      %v483 = vunpack.c.h.b16 %v240
      %v484 = vunpack.c.l.b16 %v241
      %v485 = vunpack.c.l.b16 %v242
      %v486 = vunpack.c.h.b16 %v242
      %v487 = vunpack.c.l.b16 %v243
      %v488 = vunpack.c.h.b16 %v243
      %v489 = vunpack.c.l.b16 %v244
      %v490 = vunpack.c.h.b16 %v244
      %v491 = vunpack.c.l.b16 %v245
      %v492 = vunpack.c.h.b16 %v245
      %v493 = vunpack.c.l.b16 %v246
      %v494 = vunpack.c.l.b16 %v247
      %v495 = vunpack.c.h.b16 %v247
      %v496 = vunpack.c.l.b16 %v248
      %v497 = vunpack.c.h.b16 %v248
      %v498 = vunpack.c.l.b16 %v249
      %v499 = vunpack.c.h.b16 %v249
      %v500 = vunpack.c.l.b16 %v250
      %v501 = vunpack.c.h.b16 %v250
      %v502 = vunpack.c.l.b16 %v251
      %v503 = vunpack.c.l.b16 %v252
      %v504 = vunpack.c.h.b16 %v252
      %v505 = vunpack.c.l.b16 %v253
      %v506 = vunpack.c.h.b16 %v253
      %v507 = vunpack.c.l.b16 %v254
      %v508 = vunpack.c.h.b16 %v254
      %v509 = vunpack.c.l.b16 %v255
      %v510 = vunpack.c.h.b16 %v255
      %v511 = vunpack.c.l.b16 %v256
      %v512 = vunpack.c.l.b16 %v257
      %v513 = vunpack.c.h.b16 %v257
      %v514 = vunpack.c.l.b16 %v258
      %v515 = vunpack.c.h.b16 %v258
      %v516 = vunpack.c.l.b16 %v259
      %v517 = vunpack.c.h.b16 %v259
      %v518 = vunpack.c.l.b16 %v260
      %v519 = vunpack.c.h.b16 %v260
      %v520 = vunpack.c.l.b16 %v261
      %v521 = vunpack.c.l.b16 %v262
      %v522 = vunpack.c.h.b16 %v262
      %v523 = vunpack.c.l.b16 %v263
      %v524 = vunpack.c.h.b16 %v263
      %v525 = vunpack.c.l.b16 %v264
      %v526 = vunpack.c.h.b16 %v264
      %v527 = vunpack.c.l.b16 %v265
      %v528 = vunpack.c.h.b16 %v265
      %v529 = vunpack.c.l.b16 %v266
      %v530 = vpack.c.b16 %v467, %v458
      %v531 = vpack.c.b16 %v468, %v459
      %v532 = vpack.c.b16 %v469, %v460
      %v533 = vpack.c.b16 %v470, %v461
      %v534 = vpack.c.b16 %v471, %v462
      %v535 = vpack.c.b16 %v472, %v463
      %v536 = vpack.c.b16 %v473, %v464
      %v537 = vpack.c.b16 %v474, %v465
      %v538 = vpack.c.b16 %v475, %v466
      %v539 = vpack.c.b16 %v485, %v476
      %v540 = vpack.c.b16 %v486, %v477
      %v541 = vpack.c.b16 %v487, %v478
      %v542 = vpack.c.b16 %v488, %v479
      %v543 = vpack.c.b16 %v489, %v480
      %v544 = vpack.c.b16 %v490, %v481
      %v545 = vpack.c.b16 %v491, %v482
      %v546 = vpack.c.b16 %v492, %v483
      %v547 = vpack.c.b16 %v493, %v484
      %v548 = vpack.c.b16 %v503, %v494
      %v549 = vpack.c.b16 %v504, %v495
      %v550 = vpack.c.b16 %v505, %v496
      %v551 = vpack.c.b16 %v506, %v497
      %v552 = vpack.c.b16 %v507, %v498
      %v553 = vpack.c.b16 %v508, %v499
      %v554 = vpack.c.b16 %v509, %v500
      %v555 = vpack.c.b16 %v510, %v501
      %v556 = vpack.c.b16 %v511, %v502
      %v557 = vpack.c.b16 %v521, %v512
      %v558 = vpack.c.b16 %v522, %v513
      %v559 = vpack.c.b16 %v523, %v514
      %v560 = vpack.c.b16 %v524, %v515
      %v561 = vpack.c.b16 %v525, %v516
      %v562 = vpack.c.b16 %v526, %v517
      %v563 = vpack.c.b16 %v527, %v518
      %v564 = vpack.c.b16 %v528, %v519
      %v565 = vpack.c.b16 %v529, %v520
      %v746 = vunpack.c.l.b16 %v267
      %v747 = vunpack.c.l.b16 %v268
      %v748 = vunpack.c.l.b16 %v269
      %v749 = vunpack.c.l.b16 %v270
      %v750 = vunpack.c.l.b16 %v271
      %v751 = vunpack.c.l.b16 %v272
      %v752 = vunpack.c.l.b16 %v273
      %v753 = vunpack.c.l.b16 %v274
      %v754 = vunpack.c.l.b16 %v275
      %v755 = vunpack.c.l.b16 %v276
      %v756 = vunpack.c.l.b16 %v277
      %v757 = vunpack.c.l.b16 %v278
      %v758 = vunpack.c.l.b16 %v279
      %v759 = vunpack.c.l.b16 %v280
      %v760 = vunpack.c.l.b16 %v281
      %v761 = vunpack.c.l.b16 %v282
      %v762 = vunpack.c.l.b16 %v283
      %v763 = vunpack.c.l.b16 %v284
      %v764 = vunpack.c.l.b16 %v285
      %v765 = vunpack.c.l.b16 %v286
      %v766 = vunpack.c.l.b16 %v287
      %v767 = vunpack.c.l.b16 %v288
      %v768 = vunpack.c.l.b16 %v289
      %v769 = vunpack.c.l.b16 %v290
      %v770 = vunpack.c.l.b16 %v291
      %v771 = vunpack.c.l.b16 %v292
      %v772 = vunpack.c.l.b16 %v293
      %v773 = vunpack.c.l.b16 %v294
      %v774 = vunpack.c.l.b16 %v295
      %v775 = vunpack.c.l.b16 %v296
      %v776 = vunpack.c.l.b16 %v297
      %v777 = vunpack.c.l.b16 %v298
      %v778 = vunpack.c.l.b16 %v299
      %v779 = vunpack.c.l.b16 %v300
      %v780 = vunpack.c.l.b16 %v301
      %v781 = vunpack.c.l.b16 %v302
      %v782 = vunpack.c.l.b16 %v303
      %v783 = vunpack.c.l.b16 %v304
      %v784 = vunpack.c.l.b16 %v305
      %v785 = vunpack.c.l.b16 %v306
      %v786 = vunpack.c.l.b16 %v307
      %v787 = vunpack.c.l.b16 %v308
      %v788 = vunpack.c.l.b16 %v309
      %v789 = vunpack.c.l.b16 %v310
      %v790 = vunpack.c.l.b16 %v311
      %v791 = vunpack.c.l.b16 %v312
      %v792 = vunpack.c.l.b16 %v313
      %v793 = vunpack.c.l.b16 %v314
      %v794 = vunpack.c.l.b16 %v315
      %v795 = vunpack.c.l.b16 %v316
      %v796 = vunpack.c.l.b16 %v317
      %v797 = vunpack.c.l.b16 %v318
      %v798 = vunpack.c.l.b16 %v319
      %v799 = vunpack.c.l.b16 %v320
      %v800 = vunpack.c.l.b16 %v321
      %v801 = vunpack.c.l.b16 %v322
      %v802 = vunpack.c.l.b16 %v323
      %v803 = vunpack.c.l.b16 %v324
      %v804 = vunpack.c.l.b16 %v325
      %v805 = vunpack.c.l.b16 %v326
      %v806 = vunpack.c.l.b16 %v327
      %v807 = vunpack.c.l.b16 %v328
      %v808 = vunpack.c.l.b16 %v329
      %v809 = vunpack.c.l.b16 %v330
      %v810 = vunpack.c.l.b16 %v331
      %v811 = vunpack.c.l.b16 %v332
      %v812 = vunpack.c.l.b16 %v333
      %v813 = vunpack.c.l.b16 %v334
      %v814 = vunpack.c.l.b16 %v335
      %v815 = vunpack.c.l.b16 %v336
      %v816 = vunpack.c.l.b16 %v337
      %v817 = vunpack.c.l.b16 %v338
      %v818 = vunpack.c.l.b16 %v339
      %v819 = vunpack.c.l.b16 %v340
      %v820 = vunpack.c.l.b16 %v341
      %v821 = vunpack.c.l.b16 %v342
      %v822 = vunpack.c.l.b16 %v343
      %v823 = vunpack.c.l.b16 %v344
      %v824 = vunpack.c.l.b16 %v345
      %v825 = vunpack.c.l.b16 %v346
      %v826 = vunpack.c.l.b16 %v347
      %v827 = vunpack.c.l.b16 %v348
      %v828 = vunpack.c.l.b16 %v349
      %v829 = vunpack.c.l.b16 %v350
      %v830 = vunpack.c.l.b16 %v351
      %v831 = vunpack.c.l.b16 %v352
      %v832 = vunpack.c.l.b16 %v353
      %v833 = vunpack.c.l.b16 %v354
      %v834 = vunpack.c.l.b16 %v355
      %v835 = vunpack.c.l.b16 %v356
      %v836 = vunpack.c.l.b16 %v357
      %v837 = vunpack.c.l.b16 %v358
      %v838 = vunpack.c.l.b16 %v359
      %v839 = vunpack.c.l.b16 %v360
      %v840 = vunpack.c.l.b16 %v361
      %v841 = vunpack.c.l.b16 %v362
      %v842 = vunpack.c.l.b16 %v363
      %v843 = vunpack.c.l.b16 %v364
      %v844 = vunpack.c.l.b16 %v365
      %v845 = vunpack.c.l.b16 %v366
      %v846 = vunpack.c.l.b16 %v367
      %v847 = vunpack.c.l.b16 %v368
      %v848 = vunpack.c.l.b16 %v369
      %v849 = vunpack.c.l.b16 %v370
      %v850 = vunpack.c.l.b16 %v371
      %v851 = vunpack.c.l.b16 %v372
      %v852 = vunpack.c.l.b16 %v373
      %v853 = vunpack.c.l.b16 %v374
      %v854 = vunpack.c.l.b16 %v375
      %v855 = vunpack.c.l.b16 %v376
      %v856 = vunpack.c.l.b16 %v377
      %v857 = vunpack.c.l.b16 %v378
      %v858 = vunpack.c.l.b16 %v379
      %v859 = vunpack.c.l.b16 %v380
      %v860 = vunpack.c.l.b16 %v381
      %v861 = vunpack.c.l.b16 %v382
      %v862 = vunpack.c.l.b16 %v383
      %v863 = vunpack.c.l.b16 %v384
      %v864 = vunpack.c.l.b16 %v385
      %v865 = vunpack.c.l.b16 %v386
      %v866 = vunpack.c.l.b16 %v387
      %v867 = vunpack.c.l.b16 %v388
      %v868 = vunpack.c.l.b16 %v389
      %v869 = vunpack.c.l.b16 %v390
      %v870 = vunpack.c.l.b16 %v391
      %v871 = vunpack.c.l.b16 %v392
      %v872 = vunpack.c.l.b16 %v393
      %v873 = vunpack.c.l.b16 %v394
      %v874 = vunpack.c.l.b16 %v395
      %v875 = vunpack.c.l.b16 %v396
      %v876 = vunpack.c.l.b16 %v397
      %v877 = vunpack.c.l.b16 %v398
      %v878 = vunpack.c.l.b16 %v399
      %v879 = vunpack.c.l.b16 %v400
      %v880 = vunpack.c.l.b16 %v401
      %v881 = vunpack.c.l.b16 %v402
      %v882 = vunpack.c.l.b16 %v403
      %v883 = vunpack.c.l.b16 %v404
      %v884 = vunpack.c.l.b16 %v405
      %v885 = vunpack.c.l.b16 %v406
      %v886 = vunpack.c.l.b16 %v407
      %v887 = vunpack.c.l.b16 %v408
      %v888 = vunpack.c.l.b16 %v409
      %v889 = vunpack.c.l.b16 %v410
      %v890 = vpack.c.b16 %v747, %v746
      %v891 = vpack.c.b16 %v749, %v748
      %v892 = vpack.c.b16 %v751, %v750
      %v893 = vpack.c.b16 %v753, %v752
      %v894 = vpack.c.b16 %v755, %v754
      %v895 = vpack.c.b16 %v757, %v756
      %v896 = vpack.c.b16 %v759, %v758
      %v897 = vpack.c.b16 %v761, %v760
      %v898 = vpack.c.b16 %v763, %v762
      %v899 = vpack.c.b16 %v765, %v764
      %v900 = vpack.c.b16 %v767, %v766
      %v901 = vpack.c.b16 %v769, %v768
      %v902 = vpack.c.b16 %v771, %v770
      %v903 = vpack.c.b16 %v773, %v772
      %v904 = vpack.c.b16 %v775, %v774
      %v905 = vpack.c.b16 %v777, %v776
      %v906 = vpack.c.b16 %v779, %v778
      %v907 = vpack.c.b16 %v781, %v780
      %v908 = vpack.c.b16 %v783, %v782
      %v909 = vpack.c.b16 %v785, %v784
      %v910 = vpack.c.b16 %v787, %v786
      %v911 = vpack.c.b16 %v789, %v788
      %v912 = vpack.c.b16 %v791, %v790
      %v913 = vpack.c.b16 %v793, %v792
      %v914 = vpack.c.b16 %v795, %v794
      %v915 = vpack.c.b16 %v797, %v796
      %v916 = vpack.c.b16 %v799, %v798
      %v917 = vpack.c.b16 %v801, %v800
      %v918 = vpack.c.b16 %v803, %v802
      %v919 = vpack.c.b16 %v805, %v804
      %v920 = vpack.c.b16 %v807, %v806
      %v921 = vpack.c.b16 %v809, %v808
      %v922 = vpack.c.b16 %v811, %v810
      %v923 = vpack.c.b16 %v813, %v812
      %v924 = vpack.c.b16 %v815, %v814
      %v925 = vpack.c.b16 %v817, %v816
      %v926 = vpack.c.b16 %v819, %v818
      %v927 = vpack.c.b16 %v821, %v820
      %v928 = vpack.c.b16 %v823, %v822
      %v929 = vpack.c.b16 %v825, %v824
      %v930 = vpack.c.b16 %v827, %v826
      %v931 = vpack.c.b16 %v829, %v828
      %v932 = vpack.c.b16 %v831, %v830
      %v933 = vpack.c.b16 %v833, %v832
      %v934 = vpack.c.b16 %v835, %v834
      %v935 = vpack.c.b16 %v837, %v836
      %v936 = vpack.c.b16 %v839, %v838
      %v937 = vpack.c.b16 %v841, %v840
      %v938 = vpack.c.b16 %v843, %v842
      %v939 = vpack.c.b16 %v845, %v844
      %v940 = vpack.c.b16 %v847, %v846
      %v941 = vpack.c.b16 %v849, %v848
      %v942 = vpack.c.b16 %v851, %v850
      %v943 = vpack.c.b16 %v853, %v852
      %v944 = vpack.c.b16 %v855, %v854
      %v945 = vpack.c.b16 %v857, %v856
      %v946 = vpack.c.b16 %v859, %v858
      %v947 = vpack.c.b16 %v861, %v860
      %v948 = vpack.c.b16 %v863, %v862
      %v949 = vpack.c.b16 %v865, %v864
      %v950 = vpack.c.b16 %v867, %v866
      %v951 = vpack.c.b16 %v869, %v868
      %v952 = vpack.c.b16 %v871, %v870
      %v953 = vpack.c.b16 %v873, %v872
      %v954 = vpack.c.b16 %v875, %v874
      %v955 = vpack.c.b16 %v877, %v876
      %v956 = vpack.c.b16 %v879, %v878
      %v957 = vpack.c.b16 %v881, %v880
      %v958 = vpack.c.b16 %v883, %v882
      %v959 = vpack.c.b16 %v885, %v884
      %v960 = vpack.c.b16 %v887, %v886
      %v961 = vpack.c.b16 %v889, %v888
      %1034 = vmatprep.subr.bf16.mxu0 0
      %1035 = vmatpush1.bf16.msra.mxu0 %v890
      %1036 = vmatprep.subr.bf16.mxu0 0
      %1037 = vmatpush1.bf16.msra.mxu0 %v891
      %1038 = vmatprep.subr.bf16.mxu0 0
      %1039 = vmatpush1.bf16.msra.mxu0 %v892
      %1040 = vmatprep.subr.bf16.mxu0 0
      %1041 = vmatpush1.bf16.msra.mxu0 %v893
      %1042 = vmatprep.subr.bf16.mxu0 0
      %1043 = vmatpush1.bf16.msra.mxu0 %v894
      %1044 = vmatprep.subr.bf16.mxu0 0
      %1045 = vmatpush1.bf16.msra.mxu0 %v895
      %1046 = vmatprep.subr.bf16.mxu0 0
      %1047 = vmatpush1.bf16.msra.mxu0 %v896
      %1048 = vmatprep.subr.bf16.mxu0 0
      %1049 = vmatpush1.bf16.msra.mxu0 %v897
      %1050 = vmatprep.subr.bf16.mxu0 0
      %1051 = vmatpush1.bf16.msra.mxu0 %v898
      %1052 = vmatprep.subr.bf16.mxu0 0
      %1053 = vmatpush1.bf16.msra.mxu0 %v899
      %1054 = vmatprep.subr.bf16.mxu0 0
      %1055 = vmatpush1.bf16.msra.mxu0 %v900
      %1056 = vmatprep.subr.bf16.mxu0 0
      %1057 = vmatpush1.bf16.msra.mxu0 %v901
      %1058 = vmatprep.subr.bf16.mxu0 0
      %1059 = vmatpush1.bf16.msra.mxu0 %v902
      %1060 = vmatprep.subr.bf16.mxu0 0
      %1061 = vmatpush1.bf16.msra.mxu0 %v903
      %1062 = vmatprep.subr.bf16.mxu0 0
      %1063 = vmatpush1.bf16.msra.mxu0 %v904
      %1064 = vmatprep.subr.bf16.mxu0 0
      %1065 = vmatpush1.bf16.msra.mxu0 %v905
      %1066 = vmatprep.mubr.bf16.mxu0 %v531
      %1067 = vmatmul.mubr.bf16.gmra.mrb[0].mxu0 %v530
      %v1068 = vpop.f32.mrb[0].mxu0
      %v1069 = vadd.f32 %v416, %v1068
      %v1070 = vpop.f32.mrb[0].mxu0
      %v1071 = vpop.f32.mrb[0].mxu0
      %v1072 = vadd.f32 %v416, %v1071
      %v1073 = vpop.f32.mrb[0].mxu0
      %1074 = vmatprep.mubr.bf16.mxu0 %v540
      %1075 = vmatmul.mubr.bf16.gmra.mrb[0].mxu0 %v539
      %v1076 = vpop.f32.mrb[0].mxu0
      %v1077 = vadd.f32 %v416, %v1076
      %v1078 = vpop.f32.mrb[0].mxu0
      %v1079 = vpop.f32.mrb[0].mxu0
      %v1080 = vadd.f32 %v416, %v1079
      %v1081 = vpop.f32.mrb[0].mxu0
      %1082 = vmatprep.mubr.bf16.mxu0 %v549
      %1083 = vmatmul.mubr.bf16.gmra.mrb[0].mxu0 %v548
      %v1084 = vpop.f32.mrb[0].mxu0
      %v1085 = vadd.f32 %v416, %v1084
      %v1086 = vpop.f32.mrb[0].mxu0
      %v1087 = vpop.f32.mrb[0].mxu0
      %v1088 = vadd.f32 %v416, %v1087
      %v1089 = vpop.f32.mrb[0].mxu0
      %1090 = vmatprep.mubr.bf16.mxu0 %v558
      %1091 = vmatmul.mubr.bf16.gmra.mrb[0].mxu0 %v557
      %v1092 = vpop.f32.mrb[0].mxu0
      %v1093 = vadd.f32 %v416, %v1092
      %v1094 = vpop.f32.mrb[0].mxu0
      %v1095 = vpop.f32.mrb[0].mxu0
      %v1096 = vadd.f32 %v416, %v1095
      %v1097 = vpop.f32.mrb[0].mxu0
      %1098 = vdwg.mxu0
      %1099 = vmatprep.subr.bf16.mxu0 0
      %1100 = vmatpush1.bf16.msra.mxu0 %v906
      %1101 = vmatprep.subr.bf16.mxu0 0
      %1102 = vmatpush1.bf16.msra.mxu0 %v907
      %1103 = vmatprep.subr.bf16.mxu0 0
      %1104 = vmatpush1.bf16.msra.mxu0 %v908
      %1105 = vmatprep.subr.bf16.mxu0 0
      %1106 = vmatpush1.bf16.msra.mxu0 %v909
      %1107 = vmatprep.subr.bf16.mxu0 0
      %1108 = vmatpush1.bf16.msra.mxu0 %v910
      %1109 = vmatprep.subr.bf16.mxu0 0
      %1110 = vmatpush1.bf16.msra.mxu0 %v911
      %1111 = vmatprep.subr.bf16.mxu0 0
      %1112 = vmatpush1.bf16.msra.mxu0 %v912
      %1113 = vmatprep.subr.bf16.mxu0 0
      %1114 = vmatpush1.bf16.msra.mxu0 %v913
      %1115 = vmatprep.subr.bf16.mxu0 0
      %1116 = vmatpush1.bf16.msra.mxu0 %v914
      %1117 = vmatprep.subr.bf16.mxu0 0
      %1118 = vmatpush1.bf16.msra.mxu0 %v915
      %1119 = vmatprep.subr.bf16.mxu0 0
      %1120 = vmatpush1.bf16.msra.mxu0 %v916
      %1121 = vmatprep.subr.bf16.mxu0 0
      %1122 = vmatpush1.bf16.msra.mxu0 %v917
      %1123 = vmatprep.subr.bf16.mxu0 0
      %1124 = vmatpush1.bf16.msra.mxu0 %v918
      %1125 = vmatprep.subr.bf16.mxu0 0
      %1126 = vmatpush1.bf16.msra.mxu0 %v919
      %1127 = vmatprep.subr.bf16.mxu0 0
      %1128 = vmatpush1.bf16.msra.mxu0 %v920
      %1129 = vmatprep.subr.bf16.mxu0 0
      %1130 = vmatpush1.bf16.msra.mxu0 %v921
      %1131 = vmatprep.mubr.bf16.mxu0 %v533
      %1132 = vmatmul.mubr.bf16.gmra.mrb[0].mxu0 %v532
      %v1133 = vpop.f32.mrb[0].mxu0
      %v1134 = vadd.f32 %v1069, %v1133
      %v1135 = vpop.f32.mrb[0].mxu0
      %v1136 = vpop.f32.mrb[0].mxu0
      %v1137 = vadd.f32 %v1072, %v1136
      %v1138 = vpop.f32.mrb[0].mxu0
      %1139 = vmatprep.mubr.bf16.mxu0 %v542
      %1140 = vmatmul.mubr.bf16.gmra.mrb[0].mxu0 %v541
      %v1141 = vpop.f32.mrb[0].mxu0
      %v1142 = vadd.f32 %v1077, %v1141
      %v1143 = vpop.f32.mrb[0].mxu0
      %v1144 = vpop.f32.mrb[0].mxu0
      %v1145 = vadd.f32 %v1080, %v1144
      %v1146 = vpop.f32.mrb[0].mxu0
      %1147 = vmatprep.mubr.bf16.mxu0 %v551
      %1148 = vmatmul.mubr.bf16.gmra.mrb[0].mxu0 %v550
      %v1149 = vpop.f32.mrb[0].mxu0
      %v1150 = vadd.f32 %v1085, %v1149
      %v1151 = vpop.f32.mrb[0].mxu0
      %v1152 = vpop.f32.mrb[0].mxu0
      %v1153 = vadd.f32 %v1088, %v1152
      %v1154 = vpop.f32.mrb[0].mxu0
      %1155 = vmatprep.mubr.bf16.mxu0 %v560
      %1156 = vmatmul.mubr.bf16.gmra.mrb[0].mxu0 %v559
      %v1157 = vpop.f32.mrb[0].mxu0
      %v1158 = vadd.f32 %v1093, %v1157
      %v1159 = vpop.f32.mrb[0].mxu0
      %v1160 = vpop.f32.mrb[0].mxu0
      %v1161 = vadd.f32 %v1096, %v1160
      %v1162 = vpop.f32.mrb[0].mxu0
      %1163 = vdwg.mxu0
      %1164 = vmatprep.subr.bf16.mxu0 0
      %1165 = vmatpush1.bf16.msra.mxu0 %v922
      %1166 = vmatprep.subr.bf16.mxu0 0
      %1167 = vmatpush1.bf16.msra.mxu0 %v923
      %1168 = vmatprep.subr.bf16.mxu0 0
      %1169 = vmatpush1.bf16.msra.mxu0 %v924
      %1170 = vmatprep.subr.bf16.mxu0 0
      %1171 = vmatpush1.bf16.msra.mxu0 %v925
      %1172 = vmatprep.subr.bf16.mxu0 0
      %1173 = vmatpush1.bf16.msra.mxu0 %v926
      %1174 = vmatprep.subr.bf16.mxu0 0
      %1175 = vmatpush1.bf16.msra.mxu0 %v927
      %1176 = vmatprep.subr.bf16.mxu0 0
      %1177 = vmatpush1.bf16.msra.mxu0 %v928
      %1178 = vmatprep.subr.bf16.mxu0 0
      %1179 = vmatpush1.bf16.msra.mxu0 %v929
      %1180 = vmatprep.subr.bf16.mxu0 0
      %1181 = vmatpush1.bf16.msra.mxu0 %v930
      %1182 = vmatprep.subr.bf16.mxu0 0
      %1183 = vmatpush1.bf16.msra.mxu0 %v931
      %1184 = vmatprep.subr.bf16.mxu0 0
      %1185 = vmatpush1.bf16.msra.mxu0 %v932
      %1186 = vmatprep.subr.bf16.mxu0 0
      %1187 = vmatpush1.bf16.msra.mxu0 %v933
      %1188 = vmatprep.subr.bf16.mxu0 0
      %1189 = vmatpush1.bf16.msra.mxu0 %v934
      %1190 = vmatprep.subr.bf16.mxu0 0
      %1191 = vmatpush1.bf16.msra.mxu0 %v935
      %1192 = vmatprep.subr.bf16.mxu0 0
      %1193 = vmatpush1.bf16.msra.mxu0 %v936
      %1194 = vmatprep.subr.bf16.mxu0 0
      %1195 = vmatpush1.bf16.msra.mxu0 %v937
      %1196 = vmatprep.mubr.bf16.mxu0 %v535
      %1197 = vmatmul.mubr.bf16.gmra.mrb[0].mxu0 %v534
      %v1198 = vpop.f32.mrb[0].mxu0
      %v1199 = vadd.f32 %v1134, %v1198
      %v1200 = vpop.f32.mrb[0].mxu0
      %v1201 = vpop.f32.mrb[0].mxu0
      %v1202 = vadd.f32 %v1137, %v1201
      %v1203 = vpop.f32.mrb[0].mxu0
      %1204 = vmatprep.mubr.bf16.mxu0 %v544
      %1205 = vmatmul.mubr.bf16.gmra.mrb[0].mxu0 %v543
      %v1206 = vpop.f32.mrb[0].mxu0
      %v1207 = vadd.f32 %v1142, %v1206
      %v1208 = vpop.f32.mrb[0].mxu0
      %v1209 = vpop.f32.mrb[0].mxu0
      %v1210 = vadd.f32 %v1145, %v1209
      %v1211 = vpop.f32.mrb[0].mxu0
      %1212 = vmatprep.mubr.bf16.mxu0 %v553
      %1213 = vmatmul.mubr.bf16.gmra.mrb[0].mxu0 %v552
      %v1214 = vpop.f32.mrb[0].mxu0
      %v1215 = vadd.f32 %v1150, %v1214
      %v1216 = vpop.f32.mrb[0].mxu0
      %v1217 = vpop.f32.mrb[0].mxu0
      %v1218 = vadd.f32 %v1153, %v1217
      %v1219 = vpop.f32.mrb[0].mxu0
      %1220 = vmatprep.mubr.bf16.mxu0 %v562
      %1221 = vmatmul.mubr.bf16.gmra.mrb[0].mxu0 %v561
      %v1222 = vpop.f32.mrb[0].mxu0
      %v1223 = vadd.f32 %v1158, %v1222
      %v1224 = vpop.f32.mrb[0].mxu0
      %v1225 = vpop.f32.mrb[0].mxu0
      %v1226 = vadd.f32 %v1161, %v1225
      %v1227 = vpop.f32.mrb[0].mxu0
      %1228 = vdwg.mxu0
      %1229 = vmatprep.subr.bf16.mxu0 0
      %1230 = vmatpush1.bf16.msra.mxu0 %v938
      %1231 = vmatprep.subr.bf16.mxu0 0
      %1232 = vmatpush1.bf16.msra.mxu0 %v939
      %1233 = vmatprep.subr.bf16.mxu0 0
      %1234 = vmatpush1.bf16.msra.mxu0 %v940
      %1235 = vmatprep.subr.bf16.mxu0 0
      %1236 = vmatpush1.bf16.msra.mxu0 %v941
      %1237 = vmatprep.subr.bf16.mxu0 0
      %1238 = vmatpush1.bf16.msra.mxu0 %v942
      %1239 = vmatprep.subr.bf16.mxu0 0
      %1240 = vmatpush1.bf16.msra.mxu0 %v943
      %1241 = vmatprep.subr.bf16.mxu0 0
      %1242 = vmatpush1.bf16.msra.mxu0 %v944
      %1243 = vmatprep.subr.bf16.mxu0 0
      %1244 = vmatpush1.bf16.msra.mxu0 %v945
      %1245 = vmatprep.subr.bf16.mxu0 0
      %1246 = vmatpush1.bf16.msra.mxu0 %v946
      %1247 = vmatprep.subr.bf16.mxu0 0
      %1248 = vmatpush1.bf16.msra.mxu0 %v947
      %1249 = vmatprep.subr.bf16.mxu0 0
      %1250 = vmatpush1.bf16.msra.mxu0 %v948
      %1251 = vmatprep.subr.bf16.mxu0 0
      %1252 = vmatpush1.bf16.msra.mxu0 %v949
      %1253 = vmatprep.subr.bf16.mxu0 0
      %1254 = vmatpush1.bf16.msra.mxu0 %v950
      %1255 = vmatprep.subr.bf16.mxu0 0
      %1256 = vmatpush1.bf16.msra.mxu0 %v951
      %1257 = vmatprep.subr.bf16.mxu0 0
      %1258 = vmatpush1.bf16.msra.mxu0 %v952
      %1259 = vmatprep.subr.bf16.mxu0 0
      %1260 = vmatpush1.bf16.msra.mxu0 %v953
      %1261 = vmatprep.mubr.bf16.mxu0 %v537
      %1262 = vmatmul.mubr.bf16.gmra.mrb[0].mxu0 %v536
      %v1263 = vpop.f32.mrb[0].mxu0
      %v1264 = vadd.f32 %v1199, %v1263
      %v1265 = vpop.f32.mrb[0].mxu0
      %v1266 = vpop.f32.mrb[0].mxu0
      %v1267 = vadd.f32 %v1202, %v1266
      %v1268 = vpop.f32.mrb[0].mxu0
      %1269 = vmatprep.mubr.bf16.mxu0 %v546
      %1270 = vmatmul.mubr.bf16.gmra.mrb[0].mxu0 %v545
      %v1271 = vpop.f32.mrb[0].mxu0
      %v1272 = vadd.f32 %v1207, %v1271
      %v1273 = vpop.f32.mrb[0].mxu0
      %v1274 = vpop.f32.mrb[0].mxu0
      %v1275 = vadd.f32 %v1210, %v1274
      %v1276 = vpop.f32.mrb[0].mxu0
      %1277 = vmatprep.mubr.bf16.mxu0 %v555
      %1278 = vmatmul.mubr.bf16.gmra.mrb[0].mxu0 %v554
      %v1279 = vpop.f32.mrb[0].mxu0
      %v1280 = vadd.f32 %v1215, %v1279
      %v1281 = vpop.f32.mrb[0].mxu0
      %v1282 = vpop.f32.mrb[0].mxu0
      %v1283 = vadd.f32 %v1218, %v1282
      %v1284 = vpop.f32.mrb[0].mxu0
      %1285 = vmatprep.mubr.bf16.mxu0 %v564
      %1286 = vmatmul.mubr.bf16.gmra.mrb[0].mxu0 %v563
      %v1287 = vpop.f32.mrb[0].mxu0
      %v1288 = vadd.f32 %v1223, %v1287
      %v1289 = vpop.f32.mrb[0].mxu0
      %v1290 = vpop.f32.mrb[0].mxu0
      %v1291 = vadd.f32 %v1226, %v1290
      %v1292 = vpop.f32.mrb[0].mxu0
      %1293 = vdwg.mxu0
      %1294 = vmatprep.subr.bf16.mxu0 0
      %1295 = vmatpush1.bf16.msra.mxu0 %v954
      %1296 = vmatprep.subr.bf16.mxu0 0
      %1297 = vmatpush1.bf16.msra.mxu0 %v955
      %1298 = vmatprep.subr.bf16.mxu0 0
      %1299 = vmatpush1.bf16.msra.mxu0 %v956
      %1300 = vmatprep.subr.bf16.mxu0 0
      %1301 = vmatpush1.bf16.msra.mxu0 %v957
      %1302 = vmatprep.subr.bf16.mxu0 0
      %1303 = vmatpush1.bf16.msra.mxu0 %v958
      %1304 = vmatprep.subr.bf16.mxu0 0
      %1305 = vmatpush1.bf16.msra.mxu0 %v959
      %1306 = vmatprep.subr.bf16.mxu0 0
      %1307 = vmatpush1.bf16.msra.mxu0 %v960
      %1308 = vmatprep.subr.bf16.mxu0 0
      %1309 = vmatpush1.bf16.msra.mxu0 %v961
      %1310 = vmatprep.subr.bf16.mxu0 0
      %1311 = vmatpush1.bf16.msra.mxu0 0
      %1312 = vmatprep.subr.bf16.mxu0 0
      %1313 = vmatpush1.bf16.msra.mxu0 0
      %1314 = vmatprep.subr.bf16.mxu0 0
      %1315 = vmatpush1.bf16.msra.mxu0 0
      %1316 = vmatprep.subr.bf16.mxu0 0
      %1317 = vmatpush1.bf16.msra.mxu0 0
      %1318 = vmatprep.subr.bf16.mxu0 0
      %1319 = vmatpush1.bf16.msra.mxu0 0
      %1320 = vmatprep.subr.bf16.mxu0 0
      %1321 = vmatpush1.bf16.msra.mxu0 0
      %1322 = vmatprep.subr.bf16.mxu0 0
      %1323 = vmatpush1.bf16.msra.mxu0 0
      %1324 = vmatprep.subr.bf16.mxu0 0
      %1325 = vmatpush1.bf16.msra.mxu0 0
      %1326 = vmatprep.mubr.bf16.mxu0 0
      %1327 = vmatmul.mubr.bf16.gmra.mrb[0].mxu0 %v538
      %v1328 = vpop.f32.mrb[0].mxu0
      %v1329 = vadd.f32 %v1264, %v1328
      %v1330 = vpop.f32.mrb[0].mxu0
      %v1331 = vpop.f32.mrb[0].mxu0
      %v1332 = vadd.f32 %v1267, %v1331
      %v1333 = vpop.f32.mrb[0].mxu0
      %1334 = vmatprep.mubr.bf16.mxu0 0
      %1335 = vmatmul.mubr.bf16.gmra.mrb[0].mxu0 %v547
      %v1336 = vpop.f32.mrb[0].mxu0
      %v1337 = vadd.f32 %v1272, %v1336
      %v1338 = vpop.f32.mrb[0].mxu0
      %v1339 = vpop.f32.mrb[0].mxu0
      %v1340 = vadd.f32 %v1275, %v1339
      %v1341 = vpop.f32.mrb[0].mxu0
      %1342 = vmatprep.mubr.bf16.mxu0 0
      %1343 = vmatmul.mubr.bf16.gmra.mrb[0].mxu0 %v556
      %v1344 = vpop.f32.mrb[0].mxu0
      %v1345 = vadd.f32 %v1280, %v1344
      %v1346 = vpop.f32.mrb[0].mxu0
      %v1347 = vpop.f32.mrb[0].mxu0
      %v1348 = vadd.f32 %v1283, %v1347
      %v1349 = vpop.f32.mrb[0].mxu0
      %1350 = vmatprep.mubr.bf16.mxu0 0
      %1351 = vmatmul.mubr.bf16.gmra.mrb[0].mxu0 %v565
      %v1352 = vpop.f32.mrb[0].mxu0
      %v1353 = vadd.f32 %v1288, %v1352
      %v1354 = vpop.f32.mrb[0].mxu0
      %v1355 = vpop.f32.mrb[0].mxu0
      %v1356 = vadd.f32 %v1291, %v1355
      %v1357 = vpop.f32.mrb[0].mxu0
      %1358 = vdwg.mxu0
      %v1359 = vld [vmem:[%s218] sm:$0xf]
      %v1360 = vld [vmem:[%s218 + $0x4] sm:$0xf]
      %v1361 = vld [vmem:[%s218 + $0x8] sm:$0xf]
      %v1362 = vld [vmem:[%s218 + $0xc] sm:$0xf]
      %v1363 = vld [vmem:[%s218 + $0x10] sm:$0xf]
      %v1364 = vld [vmem:[%s218 + $0x14] sm:$0xf]
      %v1365 = vld [vmem:[%s218 + $0x18] sm:$0xf]
      %v1366 = vld [vmem:[%s218 + $0x1c] sm:$0xf]
      %v1367 = vunpack.c.l.bf16 %v1359
      %v1368 = vunpack.c.l.bf16 %v1360
      %v1369 = vunpack.c.l.bf16 %v1361
      %v1370 = vunpack.c.l.bf16 %v1362
      %v1371 = vunpack.c.l.bf16 %v1363
      %v1372 = vunpack.c.l.bf16 %v1364
      %v1373 = vunpack.c.l.bf16 %v1365
      %v1374 = vunpack.c.l.bf16 %v1366
      %v1375 = vadd.f32 %v1329, %v1367
      %v1376 = vadd.f32 %v1332, %v1368
      %v1377 = vadd.f32 %v1337, %v1369
      %v1378 = vadd.f32 %v1340, %v1370
      %v1379 = vadd.f32 %v1345, %v1371
      %v1380 = vadd.f32 %v1348, %v1372
      %v1381 = vadd.f32 %v1353, %v1373
      %v1382 = vadd.f32 %v1356, %v1374
      %v1383 = vmax.f32 %v1375, 0.0
      %v1384 = vmax.f32 %v1376, 0.0
      %v1385 = vmax.f32 %v1377, 0.0
      %v1386 = vmax.f32 %v1378, 0.0
      %v1387 = vmax.f32 %v1379, 0.0
      %v1388 = vmax.f32 %v1380, 0.0
      %v1389 = vmax.f32 %v1381, 0.0
      %v1390 = vmax.f32 %v1382, 0.0
      %v1391 = vpack.c.bf16 %v1384, %v1383
      %v1392 = vpack.c.bf16 %v1386, %v1385
      %v1393 = vpack.c.bf16 %v1388, %v1387
      %v1394 = vpack.c.bf16 %v1390, %v1389
      %v1399 = vunpack.c.l.b16 %v1391
      %v1400 = vunpack.c.h.b16 %v1391
      %v1401 = vunpack.c.l.b16 %v1392
      %v1402 = vunpack.c.h.b16 %v1392
      %v1403 = vunpack.c.l.b16 %v1393
      %v1404 = vunpack.c.h.b16 %v1393
      %v1405 = vunpack.c.l.b16 %v1394
      %v1406 = vunpack.c.h.b16 %v1394
      %v1407 = vpack.c.b16 %v1399, %v1399
      %v1408 = vpack.c.b16 %v1400, %v1400
      %v1409 = vpack.c.b16 %v1401, %v1401
      %v1410 = vpack.c.b16 %v1402, %v1402
      %v1411 = vpack.c.b16 %v1403, %v1403
      %v1412 = vpack.c.b16 %v1404, %v1404
      %v1413 = vpack.c.b16 %v1405, %v1405
      %v1414 = vpack.c.b16 %v1406, %v1406
      %1423 = vst [vmem:[%s224] sm:$0xf] %v1407
      %1424 = vst [vmem:[%s224 + $0x4] sm:$0xf] %v1408
      %1425 = vst [vmem:[%s224 + $0x8] sm:$0xf] %v1409
      %1426 = vst [vmem:[%s224 + $0xc] sm:$0xf] %v1410
      %1427 = vst [vmem:[%s224 + $0x10] sm:$0xf] %v1411
      %1428 = vst [vmem:[%s224 + $0x14] sm:$0xf] %v1412
      %1429 = vst [vmem:[%s224 + $0x18] sm:$0xf] %v1413
      %1430 = vst [vmem:[%s224 + $0x1c] sm:$0xf] %v1414
      %s1431 = smul.u32 8, %s15
      %p1432 = scmp.lt.s32.totalorder %s1431, 15
      %s1433 = scalar_select %p1432, %s1431, 15
      %s1434 = smul.addr %s1433, 4
      %s1435 = scalar_lea.vmem %s4, %s1434
      // Predicated region
      $region37: #{_lambda_.15} parent=35 // pred_check
        %p1436 = pneg %p127
      $region38: #{_lambda_.15} parent=35 // pred_check_branch
        %1438 = sbr.rel (%p1436) target = $region40
      $region39: #{_lambda_.15} parent=35 // pred_region
        %s1439 = smul.u32 8, %s15
      $region40: #{_lambda_.15} parent=35 // pred_fallthru
        _
    $region36: #{_lambda_.15} parent=5 // pred_fallthru
      _
    %p1440 = scmp.le.s32.totalorder 2, %s10
    // Predicated region
    $region41: #{_lambda_.15} parent=5 // pred_check
      %p1441 = pneg %p1440
    $region42: #{_lambda_.15} parent=5 // pred_check_branch
      %1443 = sbr.rel (%p1441) target = $region44
    $region43: #{_lambda_.15} parent=5 // pred_region
      %s1444 = ssub.s32 %s10, 2
      // Predicated region
      $region45: #{_lambda_.15} parent=43 // pred_check
        %p1445 = pneg %p133
      $region46: #{_lambda_.15} parent=43 // pred_check_branch
        %1447 = sbr.rel (%p1445) target = $region48
      $region47: #{_lambda_.15} parent=43 // pred_region
        %s1448 = smul.u32 8, %s16
        %p1449 = scmp.lt.s32.totalorder %s1448, 15
        %s1450 = scalar_select %p1449, %s1448, 15
        %s1451 = smul.addr %s1450, 4
        %s1452 = scalar_lea.vmem %s4, %s1451
      $region48: #{_lambda_.15} parent=43 // pred_fallthru
        _
    $region44: #{_lambda_.15} parent=5 // pred_fallthru
      _
  $region6: #{_lambda_.15} parent=0 // loop_footer
    %s14 = sadd.s32 1, %s10
  $region7: #{_lambda_.15} parent=0 // loop_footer_branch
    %9 = sbr.rel target = $region3
  $region8: #{_lambda_.15} parent=0 // loop_exit
    _

// kernel: _lambda_.16
$region0: #{_lambda_.16}
  #allocation0 [shape = 'u32[]', space=smem, size = 0x4, offset = 0x4, fixed_abs, tag = 'smem constant byte address 0x4 - core index']
  #allocation1 [shape = 'u32[144,128]{1,0:T(1,128)}', space=vmem, size = 0x12000, scoped, tag = 'internal scratch']
  %s0 = inlined_call_operand.vmem [shape: bf16[32,1152], index: 0, kind: input, shape index: {}]
  %s1 = inlined_call_operand.vmem [shape: bf16[1152,128], index: 1, kind: input, shape index: {}]
  %s2 = inlined_call_operand.vmem [shape: f32[1,128], index: 2, kind: input, shape index: {}, may-alias: {2,4}]
  %s3 = inlined_call_operand.vmem [shape: bf16[128,128], index: 3, kind: input, shape index: {}]
  %s4 = inlined_call_operand.vmem [shape: f32[1,128], index: 4, kind: input, shape index: {}, may-alias: {2,4}]
  %s5 = inlined_call_operand.vmem [shape: bf16[32,128], index: 5, kind: output, shape index: {0}]
  %s6 = inlined_call_operand.vmem [shape: bf16[32,128], index: 6, kind: output, shape index: {1}]
  %7 = xla_tuple %s5, %s6
  %s8 = sld [smem:[#allocation0]]
  $region38: #{_lambda_.16} parent=0
    _
  %s10 = ssub.s32 1, %s8
  %s11 = scalar_select 0, %s10, %s8
  // Predicated region
  $region2: #{_lambda_.16} parent=0 // pred_check
    _
  $region3: #{_lambda_.16} parent=0 // pred_check_branch
    %13 = sbr.rel (0) target = $region5
  $region4: #{_lambda_.16} parent=0 // pred_region
    _
  $region5: #{_lambda_.16} parent=0 // pred_fallthru
    _
  // Predicated region
  $region6: #{_lambda_.16} parent=0 // pred_check
    _
  $region7: #{_lambda_.16} parent=0 // pred_check_branch
    %15 = sbr.rel (0) target = $region9
  $region8: #{_lambda_.16} parent=0 // pred_region
    _
  $region9: #{_lambda_.16} parent=0 // pred_fallthru
    _
  // Predicated region
  $region10: #{_lambda_.16} parent=0 // pred_check
    _
  $region11: #{_lambda_.16} parent=0 // pred_check_branch
    %17 = sbr.rel (0) target = $region13
  $region12: #{_lambda_.16} parent=0 // pred_region
    _
  $region13: #{_lambda_.16} parent=0 // pred_fallthru
    _
  // Predicated region
  $region14: #{_lambda_.16} parent=0 // pred_check
    _
  $region15: #{_lambda_.16} parent=0 // pred_check_branch
    %19 = sbr.rel (0) target = $region17
  $region16: #{_lambda_.16} parent=0 // pred_region
    _
  $region17: #{_lambda_.16} parent=0 // pred_fallthru
    _
  // Predicated region
  $region18: #{_lambda_.16} parent=0 // pred_check
    _
  $region19: #{_lambda_.16} parent=0 // pred_check_branch
    %21 = sbr.rel (0) target = $region21
  $region20: #{_lambda_.16} parent=0 // pred_region
    _
  $region21: #{_lambda_.16} parent=0 // pred_fallthru
    _
  %v23 = vld [vmem:[%s0] sm:$0xff]
  %v24 = vld [vmem:[%s0 + $0x8] sm:$0xff]
  %v25 = vld [vmem:[%s0 + $0x10] sm:$0xff]
  %v26 = vld [vmem:[%s0 + $0x18] sm:$0xff]
  %v27 = vld [vmem:[%s0 + $0x20] sm:$0xf]
  %v28 = vld [vmem:[%s0 + $0x24] sm:$0xff]
  %v29 = vld [vmem:[%s0 + $0x2c] sm:$0xff]
  %v30 = vld [vmem:[%s0 + $0x34] sm:$0xff]
  %v31 = vld [vmem:[%s0 + $0x3c] sm:$0xff]
  %v32 = vld [vmem:[%s0 + $0x44] sm:$0xf]
  %v33 = vld [vmem:[%s0 + $0x48] sm:$0xff]
  %v34 = vld [vmem:[%s0 + $0x50] sm:$0xff]
  %v35 = vld [vmem:[%s0 + $0x58] sm:$0xff]
  %v36 = vld [vmem:[%s0 + $0x60] sm:$0xff]
  %v37 = vld [vmem:[%s0 + $0x68] sm:$0xf]
  %v38 = vld [vmem:[%s0 + $0x6c] sm:$0xff]
  %v39 = vld [vmem:[%s0 + $0x74] sm:$0xff]
  %v40 = vld [vmem:[%s0 + $0x7c] sm:$0xff]
  %v41 = vld [vmem:[%s0 + $0x84] sm:$0xff]
  %v42 = vld [vmem:[%s0 + $0x8c] sm:$0xf]
  %v43 = vld [vmem:[%s1] sm:$0xf]
  %v44 = vld [vmem:[%s1 + $0x4] sm:$0xf]
  %v45 = vld [vmem:[%s1 + $0x8] sm:$0xf]
  %v46 = vld [vmem:[%s1 + $0xc] sm:$0xf]
  %v47 = vld [vmem:[%s1 + $0x10] sm:$0xf]
  %v48 = vld [vmem:[%s1 + $0x14] sm:$0xf]
  %v49 = vld [vmem:[%s1 + $0x18] sm:$0xf]
  %v50 = vld [vmem:[%s1 + $0x1c] sm:$0xf]
  %v51 = vld [vmem:[%s1 + $0x20] sm:$0xf]
  %v52 = vld [vmem:[%s1 + $0x24] sm:$0xf]
  %v53 = vld [vmem:[%s1 + $0x28] sm:$0xf]
  %v54 = vld [vmem:[%s1 + $0x2c] sm:$0xf]
  %v55 = vld [vmem:[%s1 + $0x30] sm:$0xf]
  %v56 = vld [vmem:[%s1 + $0x34] sm:$0xf]
  %v57 = vld [vmem:[%s1 + $0x38] sm:$0xf]
  %v58 = vld [vmem:[%s1 + $0x3c] sm:$0xf]
  %v59 = vld [vmem:[%s1 + $0x40] sm:$0xf]
  %v60 = vld [vmem:[%s1 + $0x44] sm:$0xf]
  %v61 = vld [vmem:[%s1 + $0x48] sm:$0xf]
  %v62 = vld [vmem:[%s1 + $0x4c] sm:$0xf]
  %v63 = vld [vmem:[%s1 + $0x50] sm:$0xf]
  %v64 = vld [vmem:[%s1 + $0x54] sm:$0xf]
  %v65 = vld [vmem:[%s1 + $0x58] sm:$0xf]
  %v66 = vld [vmem:[%s1 + $0x5c] sm:$0xf]
  %v67 = vld [vmem:[%s1 + $0x60] sm:$0xf]
  %v68 = vld [vmem:[%s1 + $0x64] sm:$0xf]
  %v69 = vld [vmem:[%s1 + $0x68] sm:$0xf]
  %v70 = vld [vmem:[%s1 + $0x6c] sm:$0xf]
  %v71 = vld [vmem:[%s1 + $0x70] sm:$0xf]
  %v72 = vld [vmem:[%s1 + $0x74] sm:$0xf]
  %v73 = vld [vmem:[%s1 + $0x78] sm:$0xf]
  %v74 = vld [vmem:[%s1 + $0x7c] sm:$0xf]
  %v75 = vld [vmem:[%s1 + $0x80] sm:$0xf]
  %v76 = vld [vmem:[%s1 + $0x84] sm:$0xf]
  %v77 = vld [vmem:[%s1 + $0x88] sm:$0xf]
  %v78 = vld [vmem:[%s1 + $0x8c] sm:$0xf]
  %v79 = vld [vmem:[%s1 + $0x90] sm:$0xf]
  %v80 = vld [vmem:[%s1 + $0x94] sm:$0xf]
  %v81 = vld [vmem:[%s1 + $0x98] sm:$0xf]
  %v82 = vld [vmem:[%s1 + $0x9c] sm:$0xf]
  %v83 = vld [vmem:[%s1 + $0xa0] sm:$0xf]
  %v84 = vld [vmem:[%s1 + $0xa4] sm:$0xf]
  %v85 = vld [vmem:[%s1 + $0xa8] sm:$0xf]
  %v86 = vld [vmem:[%s1 + $0xac] sm:$0xf]
  %v87 = vld [vmem:[%s1 + $0xb0] sm:$0xf]
  %v88 = vld [vmem:[%s1 + $0xb4] sm:$0xf]
  %v89 = vld [vmem:[%s1 + $0xb8] sm:$0xf]
  %v90 = vld [vmem:[%s1 + $0xbc] sm:$0xf]
  %v91 = vld [vmem:[%s1 + $0xc0] sm:$0xf]
  %v92 = vld [vmem:[%s1 + $0xc4] sm:$0xf]
  %v93 = vld [vmem:[%s1 + $0xc8] sm:$0xf]
  %v94 = vld [vmem:[%s1 + $0xcc] sm:$0xf]
  %v95 = vld [vmem:[%s1 + $0xd0] sm:$0xf]
  %v96 = vld [vmem:[%s1 + $0xd4] sm:$0xf]
  %v97 = vld [vmem:[%s1 + $0xd8] sm:$0xf]
  %v98 = vld [vmem:[%s1 + $0xdc] sm:$0xf]
  %v99 = vld [vmem:[%s1 + $0xe0] sm:$0xf]
  %v100 = vld [vmem:[%s1 + $0xe4] sm:$0xf]
  %v101 = vld [vmem:[%s1 + $0xe8] sm:$0xf]
  %v102 = vld [vmem:[%s1 + $0xec] sm:$0xf]
  %v103 = vld [vmem:[%s1 + $0xf0] sm:$0xf]
  %v104 = vld [vmem:[%s1 + $0xf4] sm:$0xf]
  %v105 = vld [vmem:[%s1 + $0xf8] sm:$0xf]
  %v106 = vld [vmem:[%s1 + $0xfc] sm:$0xf]
  %v107 = vld [vmem:[%s1 + $0x100] sm:$0xf]
  %v108 = vld [vmem:[%s1 + $0x104] sm:$0xf]
  %v109 = vld [vmem:[%s1 + $0x108] sm:$0xf]
  %v110 = vld [vmem:[%s1 + $0x10c] sm:$0xf]
  %v111 = vld [vmem:[%s1 + $0x110] sm:$0xf]
  %v112 = vld [vmem:[%s1 + $0x114] sm:$0xf]
  %v113 = vld [vmem:[%s1 + $0x118] sm:$0xf]
  %v114 = vld [vmem:[%s1 + $0x11c] sm:$0xf]
  %v115 = vld [vmem:[%s1 + $0x120] sm:$0xf]
  %v116 = vld [vmem:[%s1 + $0x124] sm:$0xf]
  %v117 = vld [vmem:[%s1 + $0x128] sm:$0xf]
  %v118 = vld [vmem:[%s1 + $0x12c] sm:$0xf]
  %v119 = vld [vmem:[%s1 + $0x130] sm:$0xf]
  %v120 = vld [vmem:[%s1 + $0x134] sm:$0xf]
  %v121 = vld [vmem:[%s1 + $0x138] sm:$0xf]
  %v122 = vld [vmem:[%s1 + $0x13c] sm:$0xf]
  %v123 = vld [vmem:[%s1 + $0x140] sm:$0xf]
  %v124 = vld [vmem:[%s1 + $0x144] sm:$0xf]
  %v125 = vld [vmem:[%s1 + $0x148] sm:$0xf]
  %v126 = vld [vmem:[%s1 + $0x14c] sm:$0xf]
  %v127 = vld [vmem:[%s1 + $0x150] sm:$0xf]
  %v128 = vld [vmem:[%s1 + $0x154] sm:$0xf]
  %v129 = vld [vmem:[%s1 + $0x158] sm:$0xf]
  %v130 = vld [vmem:[%s1 + $0x15c] sm:$0xf]
  %v131 = vld [vmem:[%s1 + $0x160] sm:$0xf]
  %v132 = vld [vmem:[%s1 + $0x164] sm:$0xf]
  %v133 = vld [vmem:[%s1 + $0x168] sm:$0xf]
  %v134 = vld [vmem:[%s1 + $0x16c] sm:$0xf]
  %v135 = vld [vmem:[%s1 + $0x170] sm:$0xf]
  %v136 = vld [vmem:[%s1 + $0x174] sm:$0xf]
  %v137 = vld [vmem:[%s1 + $0x178] sm:$0xf]
  %v138 = vld [vmem:[%s1 + $0x17c] sm:$0xf]
  %v139 = vld [vmem:[%s1 + $0x180] sm:$0xf]
  %v140 = vld [vmem:[%s1 + $0x184] sm:$0xf]
  %v141 = vld [vmem:[%s1 + $0x188] sm:$0xf]
  %v142 = vld [vmem:[%s1 + $0x18c] sm:$0xf]
  %v143 = vld [vmem:[%s1 + $0x190] sm:$0xf]
  %v144 = vld [vmem:[%s1 + $0x194] sm:$0xf]
  %v145 = vld [vmem:[%s1 + $0x198] sm:$0xf]
  %v146 = vld [vmem:[%s1 + $0x19c] sm:$0xf]
  %v147 = vld [vmem:[%s1 + $0x1a0] sm:$0xf]
  %v148 = vld [vmem:[%s1 + $0x1a4] sm:$0xf]
  %v149 = vld [vmem:[%s1 + $0x1a8] sm:$0xf]
  %v150 = vld [vmem:[%s1 + $0x1ac] sm:$0xf]
  %v151 = vld [vmem:[%s1 + $0x1b0] sm:$0xf]
  %v152 = vld [vmem:[%s1 + $0x1b4] sm:$0xf]
  %v153 = vld [vmem:[%s1 + $0x1b8] sm:$0xf]
  %v154 = vld [vmem:[%s1 + $0x1bc] sm:$0xf]
  %v155 = vld [vmem:[%s1 + $0x1c0] sm:$0xf]
  %v156 = vld [vmem:[%s1 + $0x1c4] sm:$0xf]
  %v157 = vld [vmem:[%s1 + $0x1c8] sm:$0xf]
  %v158 = vld [vmem:[%s1 + $0x1cc] sm:$0xf]
  %v159 = vld [vmem:[%s1 + $0x1d0] sm:$0xf]
  %v160 = vld [vmem:[%s1 + $0x1d4] sm:$0xf]
  %v161 = vld [vmem:[%s1 + $0x1d8] sm:$0xf]
  %v162 = vld [vmem:[%s1 + $0x1dc] sm:$0xf]
  %v163 = vld [vmem:[%s1 + $0x1e0] sm:$0xf]
  %v164 = vld [vmem:[%s1 + $0x1e4] sm:$0xf]
  %v165 = vld [vmem:[%s1 + $0x1e8] sm:$0xf]
  %v166 = vld [vmem:[%s1 + $0x1ec] sm:$0xf]
  %v167 = vld [vmem:[%s1 + $0x1f0] sm:$0xf]
  %v168 = vld [vmem:[%s1 + $0x1f4] sm:$0xf]
  %v169 = vld [vmem:[%s1 + $0x1f8] sm:$0xf]
  %v170 = vld [vmem:[%s1 + $0x1fc] sm:$0xf]
  %v171 = vld [vmem:[%s1 + $0x200] sm:$0xf]
  %v172 = vld [vmem:[%s1 + $0x204] sm:$0xf]
  %v173 = vld [vmem:[%s1 + $0x208] sm:$0xf]
  %v174 = vld [vmem:[%s1 + $0x20c] sm:$0xf]
  %v175 = vld [vmem:[%s1 + $0x210] sm:$0xf]
  %v176 = vld [vmem:[%s1 + $0x214] sm:$0xf]
  %v177 = vld [vmem:[%s1 + $0x218] sm:$0xf]
  %v178 = vld [vmem:[%s1 + $0x21c] sm:$0xf]
  %v179 = vld [vmem:[%s1 + $0x220] sm:$0xf]
  %v180 = vld [vmem:[%s1 + $0x224] sm:$0xf]
  %v181 = vld [vmem:[%s1 + $0x228] sm:$0xf]
  %v182 = vld [vmem:[%s1 + $0x22c] sm:$0xf]
  %v183 = vld [vmem:[%s1 + $0x230] sm:$0xf]
  %v184 = vld [vmem:[%s1 + $0x234] sm:$0xf]
  %v185 = vld [vmem:[%s1 + $0x238] sm:$0xf]
  %v186 = vld [vmem:[%s1 + $0x23c] sm:$0xf]
  %v187 = vld [vmem:[%s2] sm:$0x1]
  %v189 = vlaneseq
  %v190 = vshrl.u32 %v189, 7
  %v191 = vsub.s32 0, %v190
  %v192 = vrot.slane %v187, %v191
  %v214 = vunpack.c.l.b16 %v23
  %v215 = vunpack.c.h.b16 %v23
  %v216 = vunpack.c.l.b16 %v24
  %v217 = vunpack.c.h.b16 %v24
  %v218 = vunpack.c.l.b16 %v25
  %v219 = vunpack.c.h.b16 %v25
  %v220 = vunpack.c.l.b16 %v26
  %v221 = vunpack.c.h.b16 %v26
  %v222 = vunpack.c.l.b16 %v27
  %v223 = vunpack.c.l.b16 %v28
  %v224 = vunpack.c.h.b16 %v28
  %v225 = vunpack.c.l.b16 %v29
  %v226 = vunpack.c.h.b16 %v29
  %v227 = vunpack.c.l.b16 %v30
  %v228 = vunpack.c.h.b16 %v30
  %v229 = vunpack.c.l.b16 %v31
  %v230 = vunpack.c.h.b16 %v31
  %v231 = vunpack.c.l.b16 %v32
  %v232 = vunpack.c.l.b16 %v33
  %v233 = vunpack.c.h.b16 %v33
  %v234 = vunpack.c.l.b16 %v34
  %v235 = vunpack.c.h.b16 %v34
  %v236 = vunpack.c.l.b16 %v35
  %v237 = vunpack.c.h.b16 %v35
  %v238 = vunpack.c.l.b16 %v36
  %v239 = vunpack.c.h.b16 %v36
  %v240 = vunpack.c.l.b16 %v37
  %v241 = vunpack.c.l.b16 %v38
  %v242 = vunpack.c.h.b16 %v38
  %v243 = vunpack.c.l.b16 %v39
  %v244 = vunpack.c.h.b16 %v39
  %v245 = vunpack.c.l.b16 %v40
  %v246 = vunpack.c.h.b16 %v40
  %v247 = vunpack.c.l.b16 %v41
  %v248 = vunpack.c.h.b16 %v41
  %v249 = vunpack.c.l.b16 %v42
  %v250 = vpack.c.b16 %v223, %v214
  %v251 = vpack.c.b16 %v224, %v215
  %v252 = vpack.c.b16 %v225, %v216
  %v253 = vpack.c.b16 %v226, %v217
  %v254 = vpack.c.b16 %v227, %v218
  %v255 = vpack.c.b16 %v228, %v219
  %v256 = vpack.c.b16 %v229, %v220
  %v257 = vpack.c.b16 %v230, %v221
  %v258 = vpack.c.b16 %v231, %v222
  %v259 = vpack.c.b16 %v241, %v232
  %v260 = vpack.c.b16 %v242, %v233
  %v261 = vpack.c.b16 %v243, %v234
  %v262 = vpack.c.b16 %v244, %v235
  %v263 = vpack.c.b16 %v245, %v236
  %v264 = vpack.c.b16 %v246, %v237
  %v265 = vpack.c.b16 %v247, %v238
  %v266 = vpack.c.b16 %v248, %v239
  %v267 = vpack.c.b16 %v249, %v240
  %v430 = vunpack.c.l.b16 %v43
  %v431 = vunpack.c.l.b16 %v44
  %v432 = vunpack.c.l.b16 %v45
  %v433 = vunpack.c.l.b16 %v46
  %v434 = vunpack.c.l.b16 %v47
  %v435 = vunpack.c.l.b16 %v48
  %v436 = vunpack.c.l.b16 %v49
  %v437 = vunpack.c.l.b16 %v50
  %v438 = vunpack.c.l.b16 %v51
  %v439 = vunpack.c.l.b16 %v52
  %v440 = vunpack.c.l.b16 %v53
  %v441 = vunpack.c.l.b16 %v54
  %v442 = vunpack.c.l.b16 %v55
  %v443 = vunpack.c.l.b16 %v56
  %v444 = vunpack.c.l.b16 %v57
  %v445 = vunpack.c.l.b16 %v58
  %v446 = vunpack.c.l.b16 %v59
  %v447 = vunpack.c.l.b16 %v60
  %v448 = vunpack.c.l.b16 %v61
  %v449 = vunpack.c.l.b16 %v62
  %v450 = vunpack.c.l.b16 %v63
  %v451 = vunpack.c.l.b16 %v64
  %v452 = vunpack.c.l.b16 %v65
  %v453 = vunpack.c.l.b16 %v66
  %v454 = vunpack.c.l.b16 %v67
  %v455 = vunpack.c.l.b16 %v68
  %v456 = vunpack.c.l.b16 %v69
  %v457 = vunpack.c.l.b16 %v70
  %v458 = vunpack.c.l.b16 %v71
  %v459 = vunpack.c.l.b16 %v72
  %v460 = vunpack.c.l.b16 %v73
  %v461 = vunpack.c.l.b16 %v74
  %v462 = vunpack.c.l.b16 %v75
  %v463 = vunpack.c.l.b16 %v76
  %v464 = vunpack.c.l.b16 %v77
  %v465 = vunpack.c.l.b16 %v78
  %v466 = vunpack.c.l.b16 %v79
  %v467 = vunpack.c.l.b16 %v80
  %v468 = vunpack.c.l.b16 %v81
  %v469 = vunpack.c.l.b16 %v82
  %v470 = vunpack.c.l.b16 %v83
  %v471 = vunpack.c.l.b16 %v84
  %v472 = vunpack.c.l.b16 %v85
  %v473 = vunpack.c.l.b16 %v86
  %v474 = vunpack.c.l.b16 %v87
  %v475 = vunpack.c.l.b16 %v88
  %v476 = vunpack.c.l.b16 %v89
  %v477 = vunpack.c.l.b16 %v90
  %v478 = vunpack.c.l.b16 %v91
  %v479 = vunpack.c.l.b16 %v92
  %v480 = vunpack.c.l.b16 %v93
  %v481 = vunpack.c.l.b16 %v94
  %v482 = vunpack.c.l.b16 %v95
  %v483 = vunpack.c.l.b16 %v96
  %v484 = vunpack.c.l.b16 %v97
  %v485 = vunpack.c.l.b16 %v98
  %v486 = vunpack.c.l.b16 %v99
  %v487 = vunpack.c.l.b16 %v100
  %v488 = vunpack.c.l.b16 %v101
  %v489 = vunpack.c.l.b16 %v102
  %v490 = vunpack.c.l.b16 %v103
  %v491 = vunpack.c.l.b16 %v104
  %v492 = vunpack.c.l.b16 %v105
  %v493 = vunpack.c.l.b16 %v106
  %v494 = vunpack.c.l.b16 %v107
  %v495 = vunpack.c.l.b16 %v108
  %v496 = vunpack.c.l.b16 %v109
  %v497 = vunpack.c.l.b16 %v110
  %v498 = vunpack.c.l.b16 %v111
  %v499 = vunpack.c.l.b16 %v112
  %v500 = vunpack.c.l.b16 %v113
  %v501 = vunpack.c.l.b16 %v114
  %v502 = vunpack.c.l.b16 %v115
  %v503 = vunpack.c.l.b16 %v116
  %v504 = vunpack.c.l.b16 %v117
  %v505 = vunpack.c.l.b16 %v118
  %v506 = vunpack.c.l.b16 %v119
  %v507 = vunpack.c.l.b16 %v120
  %v508 = vunpack.c.l.b16 %v121
  %v509 = vunpack.c.l.b16 %v122
  %v510 = vunpack.c.l.b16 %v123
  %v511 = vunpack.c.l.b16 %v124
  %v512 = vunpack.c.l.b16 %v125
  %v513 = vunpack.c.l.b16 %v126
  %v514 = vunpack.c.l.b16 %v127
  %v515 = vunpack.c.l.b16 %v128
  %v516 = vunpack.c.l.b16 %v129
  %v517 = vunpack.c.l.b16 %v130
  %v518 = vunpack.c.l.b16 %v131
  %v519 = vunpack.c.l.b16 %v132
  %v520 = vunpack.c.l.b16 %v133
  %v521 = vunpack.c.l.b16 %v134
  %v522 = vunpack.c.l.b16 %v135
  %v523 = vunpack.c.l.b16 %v136
  %v524 = vunpack.c.l.b16 %v137
  %v525 = vunpack.c.l.b16 %v138
  %v526 = vunpack.c.l.b16 %v139
  %v527 = vunpack.c.l.b16 %v140
  %v528 = vunpack.c.l.b16 %v141
  %v529 = vunpack.c.l.b16 %v142
  %v530 = vunpack.c.l.b16 %v143
  %v531 = vunpack.c.l.b16 %v144
  %v532 = vunpack.c.l.b16 %v145
  %v533 = vunpack.c.l.b16 %v146
  %v534 = vunpack.c.l.b16 %v147
  %v535 = vunpack.c.l.b16 %v148
  %v536 = vunpack.c.l.b16 %v149
  %v537 = vunpack.c.l.b16 %v150
  %v538 = vunpack.c.l.b16 %v151
  %v539 = vunpack.c.l.b16 %v152
  %v540 = vunpack.c.l.b16 %v153
  %v541 = vunpack.c.l.b16 %v154
  %v542 = vunpack.c.l.b16 %v155
  %v543 = vunpack.c.l.b16 %v156
  %v544 = vunpack.c.l.b16 %v157
  %v545 = vunpack.c.l.b16 %v158
  %v546 = vunpack.c.l.b16 %v159
  %v547 = vunpack.c.l.b16 %v160
  %v548 = vunpack.c.l.b16 %v161
  %v549 = vunpack.c.l.b16 %v162
  %v550 = vunpack.c.l.b16 %v163
  %v551 = vunpack.c.l.b16 %v164
  %v552 = vunpack.c.l.b16 %v165
  %v553 = vunpack.c.l.b16 %v166
  %v554 = vunpack.c.l.b16 %v167
  %v555 = vunpack.c.l.b16 %v168
  %v556 = vunpack.c.l.b16 %v169
  %v557 = vunpack.c.l.b16 %v170
  %v558 = vunpack.c.l.b16 %v171
  %v559 = vunpack.c.l.b16 %v172
  %v560 = vunpack.c.l.b16 %v173
  %v561 = vunpack.c.l.b16 %v174
  %v562 = vunpack.c.l.b16 %v175
  %v563 = vunpack.c.l.b16 %v176
  %v564 = vunpack.c.l.b16 %v177
  %v565 = vunpack.c.l.b16 %v178
  %v566 = vunpack.c.l.b16 %v179
  %v567 = vunpack.c.l.b16 %v180
  %v568 = vunpack.c.l.b16 %v181
  %v569 = vunpack.c.l.b16 %v182
  %v570 = vunpack.c.l.b16 %v183
  %v571 = vunpack.c.l.b16 %v184
  %v572 = vunpack.c.l.b16 %v185
  %v573 = vunpack.c.l.b16 %v186
  %v574 = vpack.c.b16 %v431, %v430
  %v575 = vpack.c.b16 %v433, %v432
  %v576 = vpack.c.b16 %v435, %v434
  %v577 = vpack.c.b16 %v437, %v436
  %v578 = vpack.c.b16 %v439, %v438
  %v579 = vpack.c.b16 %v441, %v440
  %v580 = vpack.c.b16 %v443, %v442
  %v581 = vpack.c.b16 %v445, %v444
  %v582 = vpack.c.b16 %v447, %v446
  %v583 = vpack.c.b16 %v449, %v448
  %v584 = vpack.c.b16 %v451, %v450
  %v585 = vpack.c.b16 %v453, %v452
  %v586 = vpack.c.b16 %v455, %v454
  %v587 = vpack.c.b16 %v457, %v456
  %v588 = vpack.c.b16 %v459, %v458
  %v589 = vpack.c.b16 %v461, %v460
  %v590 = vpack.c.b16 %v463, %v462
  %v591 = vpack.c.b16 %v465, %v464
  %v592 = vpack.c.b16 %v467, %v466
  %v593 = vpack.c.b16 %v469, %v468
  %v594 = vpack.c.b16 %v471, %v470
  %v595 = vpack.c.b16 %v473, %v472
  %v596 = vpack.c.b16 %v475, %v474
  %v597 = vpack.c.b16 %v477, %v476
  %v598 = vpack.c.b16 %v479, %v478
  %v599 = vpack.c.b16 %v481, %v480
  %v600 = vpack.c.b16 %v483, %v482
  %v601 = vpack.c.b16 %v485, %v484
  %v602 = vpack.c.b16 %v487, %v486
  %v603 = vpack.c.b16 %v489, %v488
  %v604 = vpack.c.b16 %v491, %v490
  %v605 = vpack.c.b16 %v493, %v492
  %v606 = vpack.c.b16 %v495, %v494
  %v607 = vpack.c.b16 %v497, %v496
  %v608 = vpack.c.b16 %v499, %v498
  %v609 = vpack.c.b16 %v501, %v500
  %v610 = vpack.c.b16 %v503, %v502
  %v611 = vpack.c.b16 %v505, %v504
  %v612 = vpack.c.b16 %v507, %v506
  %v613 = vpack.c.b16 %v509, %v508
  %v614 = vpack.c.b16 %v511, %v510
  %v615 = vpack.c.b16 %v513, %v512
  %v616 = vpack.c.b16 %v515, %v514
  %v617 = vpack.c.b16 %v517, %v516
  %v618 = vpack.c.b16 %v519, %v518
  %v619 = vpack.c.b16 %v521, %v520
  %v620 = vpack.c.b16 %v523, %v522
  %v621 = vpack.c.b16 %v525, %v524
  %v622 = vpack.c.b16 %v527, %v526
  %v623 = vpack.c.b16 %v529, %v528
  %v624 = vpack.c.b16 %v531, %v530
  %v625 = vpack.c.b16 %v533, %v532
  %v626 = vpack.c.b16 %v535, %v534
  %v627 = vpack.c.b16 %v537, %v536
  %v628 = vpack.c.b16 %v539, %v538
  %v629 = vpack.c.b16 %v541, %v540
  %v630 = vpack.c.b16 %v543, %v542
  %v631 = vpack.c.b16 %v545, %v544
  %v632 = vpack.c.b16 %v547, %v546
  %v633 = vpack.c.b16 %v549, %v548
  %v634 = vpack.c.b16 %v551, %v550
  %v635 = vpack.c.b16 %v553, %v552
  %v636 = vpack.c.b16 %v555, %v554
  %v637 = vpack.c.b16 %v557, %v556
  %v638 = vpack.c.b16 %v559, %v558
  %v639 = vpack.c.b16 %v561, %v560
  %v640 = vpack.c.b16 %v563, %v562
  %v641 = vpack.c.b16 %v565, %v564
  %v642 = vpack.c.b16 %v567, %v566
  %v643 = vpack.c.b16 %v569, %v568
  %v644 = vpack.c.b16 %v571, %v570
  %v645 = vpack.c.b16 %v573, %v572
  %718 = vmatprep.subr.bf16.mxu0 0
  %719 = vmatpush1.bf16.msra.mxu0 %v574
  %720 = vmatprep.subr.bf16.mxu0 0
  %721 = vmatpush1.bf16.msra.mxu0 %v575
  %722 = vmatprep.subr.bf16.mxu0 0
  %723 = vmatpush1.bf16.msra.mxu0 %v576
  %724 = vmatprep.subr.bf16.mxu0 0
  %725 = vmatpush1.bf16.msra.mxu0 %v577
  %726 = vmatprep.subr.bf16.mxu0 0
  %727 = vmatpush1.bf16.msra.mxu0 %v578
  %728 = vmatprep.subr.bf16.mxu0 0
  %729 = vmatpush1.bf16.msra.mxu0 %v579
  %730 = vmatprep.subr.bf16.mxu0 0
  %731 = vmatpush1.bf16.msra.mxu0 %v580
  %732 = vmatprep.subr.bf16.mxu0 0
  %733 = vmatpush1.bf16.msra.mxu0 %v581
  %734 = vmatprep.subr.bf16.mxu0 0
  %735 = vmatpush1.bf16.msra.mxu0 %v582
  %736 = vmatprep.subr.bf16.mxu0 0
  %737 = vmatpush1.bf16.msra.mxu0 %v583
  %738 = vmatprep.subr.bf16.mxu0 0
  %739 = vmatpush1.bf16.msra.mxu0 %v584
  %740 = vmatprep.subr.bf16.mxu0 0
  %741 = vmatpush1.bf16.msra.mxu0 %v585
  %742 = vmatprep.subr.bf16.mxu0 0
  %743 = vmatpush1.bf16.msra.mxu0 %v586
  %744 = vmatprep.subr.bf16.mxu0 0
  %745 = vmatpush1.bf16.msra.mxu0 %v587
  %746 = vmatprep.subr.bf16.mxu0 0
  %747 = vmatpush1.bf16.msra.mxu0 %v588
  %748 = vmatprep.subr.bf16.mxu0 0
  %749 = vmatpush1.bf16.msra.mxu0 %v589
  %750 = vmatprep.mubr.bf16.mxu0 %v251
  %751 = vmatmul.mubr.bf16.gmra.mrb[0].mxu0 %v250
  %v752 = vpop.f32.mrb[0].mxu0
  %v753 = vadd.f32 %v192, %v752
  %v754 = vpop.f32.mrb[0].mxu0
  %v755 = vpop.f32.mrb[0].mxu0
  %v756 = vadd.f32 %v192, %v755
  %v757 = vpop.f32.mrb[0].mxu0
  %758 = vmatprep.mubr.bf16.mxu0 %v260
  %759 = vmatmul.mubr.bf16.gmra.mrb[0].mxu0 %v259
  %v760 = vpop.f32.mrb[0].mxu0
  %v761 = vadd.f32 %v192, %v760
  %v762 = vpop.f32.mrb[0].mxu0
  %v763 = vpop.f32.mrb[0].mxu0
  %v764 = vadd.f32 %v192, %v763
  %v765 = vpop.f32.mrb[0].mxu0
  %766 = vdwg.mxu0
  %767 = vmatprep.subr.bf16.mxu0 0
  %768 = vmatpush1.bf16.msra.mxu0 %v590
  %769 = vmatprep.subr.bf16.mxu0 0
  %770 = vmatpush1.bf16.msra.mxu0 %v591
  %771 = vmatprep.subr.bf16.mxu0 0
  %772 = vmatpush1.bf16.msra.mxu0 %v592
  %773 = vmatprep.subr.bf16.mxu0 0
  %774 = vmatpush1.bf16.msra.mxu0 %v593
  %775 = vmatprep.subr.bf16.mxu0 0
  %776 = vmatpush1.bf16.msra.mxu0 %v594
  %777 = vmatprep.subr.bf16.mxu0 0
  %778 = vmatpush1.bf16.msra.mxu0 %v595
  %779 = vmatprep.subr.bf16.mxu0 0
  %780 = vmatpush1.bf16.msra.mxu0 %v596
  %781 = vmatprep.subr.bf16.mxu0 0
  %782 = vmatpush1.bf16.msra.mxu0 %v597
  %783 = vmatprep.subr.bf16.mxu0 0
  %784 = vmatpush1.bf16.msra.mxu0 %v598
  %785 = vmatprep.subr.bf16.mxu0 0
  %786 = vmatpush1.bf16.msra.mxu0 %v599
  %787 = vmatprep.subr.bf16.mxu0 0
  %788 = vmatpush1.bf16.msra.mxu0 %v600
  %789 = vmatprep.subr.bf16.mxu0 0
  %790 = vmatpush1.bf16.msra.mxu0 %v601
  %791 = vmatprep.subr.bf16.mxu0 0
  %792 = vmatpush1.bf16.msra.mxu0 %v602
  %793 = vmatprep.subr.bf16.mxu0 0
  %794 = vmatpush1.bf16.msra.mxu0 %v603
  %795 = vmatprep.subr.bf16.mxu0 0
  %796 = vmatpush1.bf16.msra.mxu0 %v604
  %797 = vmatprep.subr.bf16.mxu0 0
  %798 = vmatpush1.bf16.msra.mxu0 %v605
  %799 = vmatprep.mubr.bf16.mxu0 %v253
  %800 = vmatmul.mubr.bf16.gmra.mrb[0].mxu0 %v252
  %v801 = vpop.f32.mrb[0].mxu0
  %v802 = vadd.f32 %v753, %v801
  %v803 = vpop.f32.mrb[0].mxu0
  %v804 = vpop.f32.mrb[0].mxu0
  %v805 = vadd.f32 %v756, %v804
  %v806 = vpop.f32.mrb[0].mxu0
  %807 = vmatprep.mubr.bf16.mxu0 %v262
  %808 = vmatmul.mubr.bf16.gmra.mrb[0].mxu0 %v261
  %v809 = vpop.f32.mrb[0].mxu0
  %v810 = vadd.f32 %v761, %v809
  %v811 = vpop.f32.mrb[0].mxu0
  %v812 = vpop.f32.mrb[0].mxu0
  %v813 = vadd.f32 %v764, %v812
  %v814 = vpop.f32.mrb[0].mxu0
  %815 = vdwg.mxu0
  %816 = vmatprep.subr.bf16.mxu0 0
  %817 = vmatpush1.bf16.msra.mxu0 %v606
  %818 = vmatprep.subr.bf16.mxu0 0
  %819 = vmatpush1.bf16.msra.mxu0 %v607
  %820 = vmatprep.subr.bf16.mxu0 0
  %821 = vmatpush1.bf16.msra.mxu0 %v608
  %822 = vmatprep.subr.bf16.mxu0 0
  %823 = vmatpush1.bf16.msra.mxu0 %v609
  %824 = vmatprep.subr.bf16.mxu0 0
  %825 = vmatpush1.bf16.msra.mxu0 %v610
  %826 = vmatprep.subr.bf16.mxu0 0
  %827 = vmatpush1.bf16.msra.mxu0 %v611
  %828 = vmatprep.subr.bf16.mxu0 0
  %829 = vmatpush1.bf16.msra.mxu0 %v612
  %830 = vmatprep.subr.bf16.mxu0 0
  %831 = vmatpush1.bf16.msra.mxu0 %v613
  %832 = vmatprep.subr.bf16.mxu0 0
  %833 = vmatpush1.bf16.msra.mxu0 %v614
  %834 = vmatprep.subr.bf16.mxu0 0
  %835 = vmatpush1.bf16.msra.mxu0 %v615
  %836 = vmatprep.subr.bf16.mxu0 0
  %837 = vmatpush1.bf16.msra.mxu0 %v616
  %838 = vmatprep.subr.bf16.mxu0 0
  %839 = vmatpush1.bf16.msra.mxu0 %v617
  %840 = vmatprep.subr.bf16.mxu0 0
  %841 = vmatpush1.bf16.msra.mxu0 %v618
  %842 = vmatprep.subr.bf16.mxu0 0
  %843 = vmatpush1.bf16.msra.mxu0 %v619
  %844 = vmatprep.subr.bf16.mxu0 0
  %845 = vmatpush1.bf16.msra.mxu0 %v620
  %846 = vmatprep.subr.bf16.mxu0 0
  %847 = vmatpush1.bf16.msra.mxu0 %v621
  %848 = vmatprep.mubr.bf16.mxu0 %v255
  %849 = vmatmul.mubr.bf16.gmra.mrb[0].mxu0 %v254
  %v850 = vpop.f32.mrb[0].mxu0
  %v851 = vadd.f32 %v802, %v850
  %v852 = vpop.f32.mrb[0].mxu0
  %v853 = vpop.f32.mrb[0].mxu0
  %v854 = vadd.f32 %v805, %v853
  %v855 = vpop.f32.mrb[0].mxu0
  %856 = vmatprep.mubr.bf16.mxu0 %v264
  %857 = vmatmul.mubr.bf16.gmra.mrb[0].mxu0 %v263
  %v858 = vpop.f32.mrb[0].mxu0
  %v859 = vadd.f32 %v810, %v858
  %v860 = vpop.f32.mrb[0].mxu0
  %v861 = vpop.f32.mrb[0].mxu0
  %v862 = vadd.f32 %v813, %v861
  %v863 = vpop.f32.mrb[0].mxu0
  %864 = vdwg.mxu0
  %865 = vmatprep.subr.bf16.mxu0 0
  %866 = vmatpush1.bf16.msra.mxu0 %v622
  %867 = vmatprep.subr.bf16.mxu0 0
  %868 = vmatpush1.bf16.msra.mxu0 %v623
  %869 = vmatprep.subr.bf16.mxu0 0
  %870 = vmatpush1.bf16.msra.mxu0 %v624
  %871 = vmatprep.subr.bf16.mxu0 0
  %872 = vmatpush1.bf16.msra.mxu0 %v625
  %873 = vmatprep.subr.bf16.mxu0 0
  %874 = vmatpush1.bf16.msra.mxu0 %v626
  %875 = vmatprep.subr.bf16.mxu0 0
  %876 = vmatpush1.bf16.msra.mxu0 %v627
  %877 = vmatprep.subr.bf16.mxu0 0
  %878 = vmatpush1.bf16.msra.mxu0 %v628
  %879 = vmatprep.subr.bf16.mxu0 0
  %880 = vmatpush1.bf16.msra.mxu0 %v629
  %881 = vmatprep.subr.bf16.mxu0 0
  %882 = vmatpush1.bf16.msra.mxu0 %v630
  %883 = vmatprep.subr.bf16.mxu0 0
  %884 = vmatpush1.bf16.msra.mxu0 %v631
  %885 = vmatprep.subr.bf16.mxu0 0
  %886 = vmatpush1.bf16.msra.mxu0 %v632
  %887 = vmatprep.subr.bf16.mxu0 0
  %888 = vmatpush1.bf16.msra.mxu0 %v633
  %889 = vmatprep.subr.bf16.mxu0 0
  %890 = vmatpush1.bf16.msra.mxu0 %v634
  %891 = vmatprep.subr.bf16.mxu0 0
  %892 = vmatpush1.bf16.msra.mxu0 %v635
  %893 = vmatprep.subr.bf16.mxu0 0
  %894 = vmatpush1.bf16.msra.mxu0 %v636
  %895 = vmatprep.subr.bf16.mxu0 0
  %896 = vmatpush1.bf16.msra.mxu0 %v637
  %897 = vmatprep.mubr.bf16.mxu0 %v257
  %898 = vmatmul.mubr.bf16.gmra.mrb[0].mxu0 %v256
  %v899 = vpop.f32.mrb[0].mxu0
  %v900 = vadd.f32 %v851, %v899
  %v901 = vpop.f32.mrb[0].mxu0
  %v902 = vpop.f32.mrb[0].mxu0
  %v903 = vadd.f32 %v854, %v902
  %v904 = vpop.f32.mrb[0].mxu0
  %905 = vmatprep.mubr.bf16.mxu0 %v266
  %906 = vmatmul.mubr.bf16.gmra.mrb[0].mxu0 %v265
  %v907 = vpop.f32.mrb[0].mxu0
  %v908 = vadd.f32 %v859, %v907
  %v909 = vpop.f32.mrb[0].mxu0
  %v910 = vpop.f32.mrb[0].mxu0
  %v911 = vadd.f32 %v862, %v910
  %v912 = vpop.f32.mrb[0].mxu0
  %913 = vdwg.mxu0
  %914 = vmatprep.subr.bf16.mxu0 0
  %915 = vmatpush1.bf16.msra.mxu0 %v638
  %916 = vmatprep.subr.bf16.mxu0 0
  %917 = vmatpush1.bf16.msra.mxu0 %v639
  %918 = vmatprep.subr.bf16.mxu0 0
  %919 = vmatpush1.bf16.msra.mxu0 %v640
  %920 = vmatprep.subr.bf16.mxu0 0
  %921 = vmatpush1.bf16.msra.mxu0 %v641
  %922 = vmatprep.subr.bf16.mxu0 0
  %923 = vmatpush1.bf16.msra.mxu0 %v642
  %924 = vmatprep.subr.bf16.mxu0 0
  %925 = vmatpush1.bf16.msra.mxu0 %v643
  %926 = vmatprep.subr.bf16.mxu0 0
  %927 = vmatpush1.bf16.msra.mxu0 %v644
  %928 = vmatprep.subr.bf16.mxu0 0
  %929 = vmatpush1.bf16.msra.mxu0 %v645
  %930 = vmatprep.subr.bf16.mxu0 0
  %931 = vmatpush1.bf16.msra.mxu0 0
  %932 = vmatprep.subr.bf16.mxu0 0
  %933 = vmatpush1.bf16.msra.mxu0 0
  %934 = vmatprep.subr.bf16.mxu0 0
  %935 = vmatpush1.bf16.msra.mxu0 0
  %936 = vmatprep.subr.bf16.mxu0 0
  %937 = vmatpush1.bf16.msra.mxu0 0
  %938 = vmatprep.subr.bf16.mxu0 0
  %939 = vmatpush1.bf16.msra.mxu0 0
  %940 = vmatprep.subr.bf16.mxu0 0
  %941 = vmatpush1.bf16.msra.mxu0 0
  %942 = vmatprep.subr.bf16.mxu0 0
  %943 = vmatpush1.bf16.msra.mxu0 0
  %944 = vmatprep.subr.bf16.mxu0 0
  %945 = vmatpush1.bf16.msra.mxu0 0
  %946 = vmatprep.mubr.bf16.mxu0 0
  %947 = vmatmul.mubr.bf16.gmra.mrb[0].mxu0 %v258
  %v948 = vpop.f32.mrb[0].mxu0
  %v949 = vadd.f32 %v900, %v948
  %v950 = vpop.f32.mrb[0].mxu0
  %v951 = vpop.f32.mrb[0].mxu0
  %v952 = vadd.f32 %v903, %v951
  %v953 = vpop.f32.mrb[0].mxu0
  %954 = vmatprep.mubr.bf16.mxu0 0
  %955 = vmatmul.mubr.bf16.gmra.mrb[0].mxu0 %v267
  %v956 = vpop.f32.mrb[0].mxu0
  %v957 = vadd.f32 %v908, %v956
  %v958 = vpop.f32.mrb[0].mxu0
  %v959 = vpop.f32.mrb[0].mxu0
  %v960 = vadd.f32 %v911, %v959
  %v961 = vpop.f32.mrb[0].mxu0
  %962 = vdwg.mxu0
  %v963 = vmax.f32 %v949, 0.0
  %v964 = vmax.f32 %v952, 0.0
  %v965 = vmax.f32 %v957, 0.0
  %v966 = vmax.f32 %v960, 0.0
  %v967 = vpack.c.bf16 %v964, %v963
  %v968 = vpack.c.bf16 %v966, %v965
  %v971 = vunpack.c.l.b16 %v967
  %v972 = vunpack.c.h.b16 %v967
  %v973 = vunpack.c.l.b16 %v968
  %v974 = vunpack.c.h.b16 %v968
  %v975 = vpack.c.b16 %v971, %v971
  %v976 = vpack.c.b16 %v972, %v972
  %v977 = vpack.c.b16 %v973, %v973
  %v978 = vpack.c.b16 %v974, %v974
  %983 = vst [vmem:[%s5] sm:$0xf] %v975
  %984 = vst [vmem:[%s5 + $0x4] sm:$0xf] %v976
  %985 = vst [vmem:[%s5 + $0x8] sm:$0xf] %v977
  %986 = vst [vmem:[%s5 + $0xc] sm:$0xf] %v978
  %v987 = vld [vmem:[%s3] sm:$0xf]
  %v988 = vld [vmem:[%s3 + $0x4] sm:$0xf]
  %v989 = vld [vmem:[%s3 + $0x8] sm:$0xf]
  %v990 = vld [vmem:[%s3 + $0xc] sm:$0xf]
  %v991 = vld [vmem:[%s3 + $0x10] sm:$0xf]
  %v992 = vld [vmem:[%s3 + $0x14] sm:$0xf]
  %v993 = vld [vmem:[%s3 + $0x18] sm:$0xf]
  %v994 = vld [vmem:[%s3 + $0x1c] sm:$0xf]
  %v995 = vld [vmem:[%s3 + $0x20] sm:$0xf]
  %v996 = vld [vmem:[%s3 + $0x24] sm:$0xf]
  %v997 = vld [vmem:[%s3 + $0x28] sm:$0xf]
  %v998 = vld [vmem:[%s3 + $0x2c] sm:$0xf]
  %v999 = vld [vmem:[%s3 + $0x30] sm:$0xf]
  %v1000 = vld [vmem:[%s3 + $0x34] sm:$0xf]
  %v1001 = vld [vmem:[%s3 + $0x38] sm:$0xf]
  %v1002 = vld [vmem:[%s3 + $0x3c] sm:$0xf]
  %v1003 = vld [vmem:[%s4] sm:$0x1]
  %v1005 = vlaneseq
  %v1006 = vshrl.u32 %v1005, 7
  %v1007 = vsub.s32 0, %v1006
  %v1008 = vrot.slane %v1003, %v1007
  %v1026 = vunpack.c.l.b16 %v987
  %v1027 = vunpack.c.l.b16 %v988
  %v1028 = vunpack.c.l.b16 %v989
  %v1029 = vunpack.c.l.b16 %v990
  %v1030 = vunpack.c.l.b16 %v991
  %v1031 = vunpack.c.l.b16 %v992
  %v1032 = vunpack.c.l.b16 %v993
  %v1033 = vunpack.c.l.b16 %v994
  %v1034 = vunpack.c.l.b16 %v995
  %v1035 = vunpack.c.l.b16 %v996
  %v1036 = vunpack.c.l.b16 %v997
  %v1037 = vunpack.c.l.b16 %v998
  %v1038 = vunpack.c.l.b16 %v999
  %v1039 = vunpack.c.l.b16 %v1000
  %v1040 = vunpack.c.l.b16 %v1001
  %v1041 = vunpack.c.l.b16 %v1002
  %v1042 = vpack.c.b16 %v1027, %v1026
  %v1043 = vpack.c.b16 %v1029, %v1028
  %v1044 = vpack.c.b16 %v1031, %v1030
  %v1045 = vpack.c.b16 %v1033, %v1032
  %v1046 = vpack.c.b16 %v1035, %v1034
  %v1047 = vpack.c.b16 %v1037, %v1036
  %v1048 = vpack.c.b16 %v1039, %v1038
  %v1049 = vpack.c.b16 %v1041, %v1040
  %1058 = vmatprep.subr.bf16.mxu0 0
  %1059 = vmatpush1.bf16.msra.mxu0 %v1042
  %1060 = vmatprep.subr.bf16.mxu0 0
  %1061 = vmatpush1.bf16.msra.mxu0 %v1043
  %1062 = vmatprep.subr.bf16.mxu0 0
  %1063 = vmatpush1.bf16.msra.mxu0 %v1044
  %1064 = vmatprep.subr.bf16.mxu0 0
  %1065 = vmatpush1.bf16.msra.mxu0 %v1045
  %1066 = vmatprep.subr.bf16.mxu0 0
  %1067 = vmatpush1.bf16.msra.mxu0 %v1046
  %1068 = vmatprep.subr.bf16.mxu0 0
  %1069 = vmatpush1.bf16.msra.mxu0 %v1047
  %1070 = vmatprep.subr.bf16.mxu0 0
  %1071 = vmatpush1.bf16.msra.mxu0 %v1048
  %1072 = vmatprep.subr.bf16.mxu0 0
  %1073 = vmatpush1.bf16.msra.mxu0 %v1049
  %1074 = vmatprep.subr.bf16.mxu0 0
  %1075 = vmatpush1.bf16.msra.mxu0 0
  %1076 = vmatprep.subr.bf16.mxu0 0
  %1077 = vmatpush1.bf16.msra.mxu0 0
  %1078 = vmatprep.subr.bf16.mxu0 0
  %1079 = vmatpush1.bf16.msra.mxu0 0
  %1080 = vmatprep.subr.bf16.mxu0 0
  %1081 = vmatpush1.bf16.msra.mxu0 0
  %1082 = vmatprep.subr.bf16.mxu0 0
  %1083 = vmatpush1.bf16.msra.mxu0 0
  %1084 = vmatprep.subr.bf16.mxu0 0
  %1085 = vmatpush1.bf16.msra.mxu0 0
  %1086 = vmatprep.subr.bf16.mxu0 0
  %1087 = vmatpush1.bf16.msra.mxu0 0
  %1088 = vmatprep.subr.bf16.mxu0 0
  %1089 = vmatpush1.bf16.msra.mxu0 0
  %1090 = vmatprep.mubr.bf16.mxu0 0
  %1091 = vmatmul.mubr.bf16.gmra.mrb[0].mxu0 %v254
  %v1092 = vpop.f32.mrb[0].mxu0
  %v1093 = vadd.f32 %v1008, %v1092
  %v1094 = vpop.f32.mrb[0].mxu0
  %v1095 = vpop.f32.mrb[0].mxu0
  %v1096 = vadd.f32 %v1008, %v1095
  %v1097 = vpop.f32.mrb[0].mxu0
  %1098 = vmatprep.mubr.bf16.mxu0 0
  %1099 = vmatmul.mubr.bf16.gmra.mrb[0].mxu0 %v263
  %v1100 = vpop.f32.mrb[0].mxu0
  %v1101 = vadd.f32 %v1008, %v1100
  %v1102 = vpop.f32.mrb[0].mxu0
  %v1103 = vpop.f32.mrb[0].mxu0
  %v1104 = vadd.f32 %v1008, %v1103
  %v1105 = vpop.f32.mrb[0].mxu0
  %1106 = vdwg.mxu0
  %v1107 = vpack.c.bf16 %v1096, %v1093
  %v1108 = vpack.c.bf16 %v1104, %v1101
  %v1111 = vunpack.c.l.b16 %v1107
  %v1112 = vunpack.c.h.b16 %v1107
  %v1113 = vunpack.c.l.b16 %v1108
  %v1114 = vunpack.c.h.b16 %v1108
  %v1115 = vpack.c.b16 %v1111, %v1111
  %v1116 = vpack.c.b16 %v1112, %v1112
  %v1117 = vpack.c.b16 %v1113, %v1113
  %v1118 = vpack.c.b16 %v1114, %v1114
  %1123 = vst [vmem:[%s6] sm:$0xf] %v1115
  %1124 = vst [vmem:[%s6 + $0x4] sm:$0xf] %v1116
  %1125 = vst [vmem:[%s6 + $0x8] sm:$0xf] %v1117
  %1126 = vst [vmem:[%s6 + $0xc] sm:$0xf] %v1118
  // Predicated region
  $region22: #{_lambda_.16} parent=0 // pred_check
    _
  $region23: #{_lambda_.16} parent=0 // pred_check_branch
    %1128 = sbr.rel (0) target = $region25
  $region24: #{_lambda_.16} parent=0 // pred_region
    _
  $region25: #{_lambda_.16} parent=0 // pred_fallthru
    _
  // Predicated region
  $region26: #{_lambda_.16} parent=0 // pred_check
    _
  $region27: #{_lambda_.16} parent=0 // pred_check_branch
    %1130 = sbr.rel (0) target = $region29
  $region28: #{_lambda_.16} parent=0 // pred_region
    _
  $region29: #{_lambda_.16} parent=0 // pred_fallthru
    _
  // Predicated region
  $region30: #{_lambda_.16} parent=0 // pred_check
    _
  $region31: #{_lambda_.16} parent=0 // pred_check_branch
    %1132 = sbr.rel (0) target = $region33
  $region32: #{_lambda_.16} parent=0 // pred_region
    _
  $region33: #{_lambda_.16} parent=0 // pred_fallthru
    _
  // Predicated region
  $region34: #{_lambda_.16} parent=0 // pred_check
    _
  $region35: #{_lambda_.16} parent=0 // pred_check_branch
    %1134 = sbr.rel (0) target = $region37
  $region36: #{_lambda_.16} parent=0 // pred_region
    _
  $region37: #{_lambda_.16} parent=0 // pred_fallthru
    _

// kernel: _lambda_.17
$region0: #{_lambda_.17}
  #allocation0 [shape = 'u32[]', space=smem, size = 0x4, offset = 0x4, fixed_abs, tag = 'smem constant byte address 0x4 - core index']
  #allocation1 [shape = 'u32[144,128]{1,0:T(1,128)}', space=vmem, size = 0x12000, scoped, tag = 'internal scratch']
  %s0 = inlined_call_operand.vmem [shape: bf16[32,1152], index: 0, kind: input, shape index: {}]
  %s1 = inlined_call_operand.vmem [shape: bf16[1152,128], index: 1, kind: input, shape index: {}]
  %s2 = inlined_call_operand.vmem [shape: f32[1,128], index: 2, kind: input, shape index: {}]
  %s3 = inlined_call_operand.vmem [shape: bf16[32,128], index: 3, kind: input, shape index: {}]
  %s4 = inlined_call_operand.vmem [shape: bf16[32,128], index: 4, kind: output, shape index: {}]
  %s5 = sld [smem:[#allocation0]]
  $region26: #{_lambda_.17} parent=0
    _
  %s7 = ssub.s32 1, %s5
  %s8 = scalar_select 0, %s7, %s5
  // Predicated region
  $region2: #{_lambda_.17} parent=0 // pred_check
    _
  $region3: #{_lambda_.17} parent=0 // pred_check_branch
    %10 = sbr.rel (0) target = $region5
  $region4: #{_lambda_.17} parent=0 // pred_region
    _
  $region5: #{_lambda_.17} parent=0 // pred_fallthru
    _
  // Predicated region
  $region6: #{_lambda_.17} parent=0 // pred_check
    _
  $region7: #{_lambda_.17} parent=0 // pred_check_branch
    %12 = sbr.rel (0) target = $region9
  $region8: #{_lambda_.17} parent=0 // pred_region
    _
  $region9: #{_lambda_.17} parent=0 // pred_fallthru
    _
  // Predicated region
  $region10: #{_lambda_.17} parent=0 // pred_check
    _
  $region11: #{_lambda_.17} parent=0 // pred_check_branch
    %14 = sbr.rel (0) target = $region13
  $region12: #{_lambda_.17} parent=0 // pred_region
    _
  $region13: #{_lambda_.17} parent=0 // pred_fallthru
    _
  // Predicated region
  $region14: #{_lambda_.17} parent=0 // pred_check
    _
  $region15: #{_lambda_.17} parent=0 // pred_check_branch
    %16 = sbr.rel (0) target = $region17
  $region16: #{_lambda_.17} parent=0 // pred_region
    _
  $region17: #{_lambda_.17} parent=0 // pred_fallthru
    _
  %v18 = vld [vmem:[%s0] sm:$0xff]
  %v19 = vld [vmem:[%s0 + $0x8] sm:$0xff]
  %v20 = vld [vmem:[%s0 + $0x10] sm:$0xff]
  %v21 = vld [vmem:[%s0 + $0x18] sm:$0xff]
  %v22 = vld [vmem:[%s0 + $0x20] sm:$0xf]
  %v23 = vld [vmem:[%s0 + $0x24] sm:$0xff]
  %v24 = vld [vmem:[%s0 + $0x2c] sm:$0xff]
  %v25 = vld [vmem:[%s0 + $0x34] sm:$0xff]
  %v26 = vld [vmem:[%s0 + $0x3c] sm:$0xff]
  %v27 = vld [vmem:[%s0 + $0x44] sm:$0xf]
  %v28 = vld [vmem:[%s0 + $0x48] sm:$0xff]
  %v29 = vld [vmem:[%s0 + $0x50] sm:$0xff]
  %v30 = vld [vmem:[%s0 + $0x58] sm:$0xff]
  %v31 = vld [vmem:[%s0 + $0x60] sm:$0xff]
  %v32 = vld [vmem:[%s0 + $0x68] sm:$0xf]
  %v33 = vld [vmem:[%s0 + $0x6c] sm:$0xff]
  %v34 = vld [vmem:[%s0 + $0x74] sm:$0xff]
  %v35 = vld [vmem:[%s0 + $0x7c] sm:$0xff]
  %v36 = vld [vmem:[%s0 + $0x84] sm:$0xff]
  %v37 = vld [vmem:[%s0 + $0x8c] sm:$0xf]
  %v38 = vld [vmem:[%s1] sm:$0xf]
  %v39 = vld [vmem:[%s1 + $0x4] sm:$0xf]
  %v40 = vld [vmem:[%s1 + $0x8] sm:$0xf]
  %v41 = vld [vmem:[%s1 + $0xc] sm:$0xf]
  %v42 = vld [vmem:[%s1 + $0x10] sm:$0xf]
  %v43 = vld [vmem:[%s1 + $0x14] sm:$0xf]
  %v44 = vld [vmem:[%s1 + $0x18] sm:$0xf]
  %v45 = vld [vmem:[%s1 + $0x1c] sm:$0xf]
  %v46 = vld [vmem:[%s1 + $0x20] sm:$0xf]
  %v47 = vld [vmem:[%s1 + $0x24] sm:$0xf]
  %v48 = vld [vmem:[%s1 + $0x28] sm:$0xf]
  %v49 = vld [vmem:[%s1 + $0x2c] sm:$0xf]
  %v50 = vld [vmem:[%s1 + $0x30] sm:$0xf]
  %v51 = vld [vmem:[%s1 + $0x34] sm:$0xf]
  %v52 = vld [vmem:[%s1 + $0x38] sm:$0xf]
  %v53 = vld [vmem:[%s1 + $0x3c] sm:$0xf]
  %v54 = vld [vmem:[%s1 + $0x40] sm:$0xf]
  %v55 = vld [vmem:[%s1 + $0x44] sm:$0xf]
  %v56 = vld [vmem:[%s1 + $0x48] sm:$0xf]
  %v57 = vld [vmem:[%s1 + $0x4c] sm:$0xf]
  %v58 = vld [vmem:[%s1 + $0x50] sm:$0xf]
  %v59 = vld [vmem:[%s1 + $0x54] sm:$0xf]
  %v60 = vld [vmem:[%s1 + $0x58] sm:$0xf]
  %v61 = vld [vmem:[%s1 + $0x5c] sm:$0xf]
  %v62 = vld [vmem:[%s1 + $0x60] sm:$0xf]
  %v63 = vld [vmem:[%s1 + $0x64] sm:$0xf]
  %v64 = vld [vmem:[%s1 + $0x68] sm:$0xf]
  %v65 = vld [vmem:[%s1 + $0x6c] sm:$0xf]
  %v66 = vld [vmem:[%s1 + $0x70] sm:$0xf]
  %v67 = vld [vmem:[%s1 + $0x74] sm:$0xf]
  %v68 = vld [vmem:[%s1 + $0x78] sm:$0xf]
  %v69 = vld [vmem:[%s1 + $0x7c] sm:$0xf]
  %v70 = vld [vmem:[%s1 + $0x80] sm:$0xf]
  %v71 = vld [vmem:[%s1 + $0x84] sm:$0xf]
  %v72 = vld [vmem:[%s1 + $0x88] sm:$0xf]
  %v73 = vld [vmem:[%s1 + $0x8c] sm:$0xf]
  %v74 = vld [vmem:[%s1 + $0x90] sm:$0xf]
  %v75 = vld [vmem:[%s1 + $0x94] sm:$0xf]
  %v76 = vld [vmem:[%s1 + $0x98] sm:$0xf]
  %v77 = vld [vmem:[%s1 + $0x9c] sm:$0xf]
  %v78 = vld [vmem:[%s1 + $0xa0] sm:$0xf]
  %v79 = vld [vmem:[%s1 + $0xa4] sm:$0xf]
  %v80 = vld [vmem:[%s1 + $0xa8] sm:$0xf]
  %v81 = vld [vmem:[%s1 + $0xac] sm:$0xf]
  %v82 = vld [vmem:[%s1 + $0xb0] sm:$0xf]
  %v83 = vld [vmem:[%s1 + $0xb4] sm:$0xf]
  %v84 = vld [vmem:[%s1 + $0xb8] sm:$0xf]
  %v85 = vld [vmem:[%s1 + $0xbc] sm:$0xf]
  %v86 = vld [vmem:[%s1 + $0xc0] sm:$0xf]
  %v87 = vld [vmem:[%s1 + $0xc4] sm:$0xf]
  %v88 = vld [vmem:[%s1 + $0xc8] sm:$0xf]
  %v89 = vld [vmem:[%s1 + $0xcc] sm:$0xf]
  %v90 = vld [vmem:[%s1 + $0xd0] sm:$0xf]
  %v91 = vld [vmem:[%s1 + $0xd4] sm:$0xf]
  %v92 = vld [vmem:[%s1 + $0xd8] sm:$0xf]
  %v93 = vld [vmem:[%s1 + $0xdc] sm:$0xf]
  %v94 = vld [vmem:[%s1 + $0xe0] sm:$0xf]
  %v95 = vld [vmem:[%s1 + $0xe4] sm:$0xf]
  %v96 = vld [vmem:[%s1 + $0xe8] sm:$0xf]
  %v97 = vld [vmem:[%s1 + $0xec] sm:$0xf]
  %v98 = vld [vmem:[%s1 + $0xf0] sm:$0xf]
  %v99 = vld [vmem:[%s1 + $0xf4] sm:$0xf]
  %v100 = vld [vmem:[%s1 + $0xf8] sm:$0xf]
  %v101 = vld [vmem:[%s1 + $0xfc] sm:$0xf]
  %v102 = vld [vmem:[%s1 + $0x100] sm:$0xf]
  %v103 = vld [vmem:[%s1 + $0x104] sm:$0xf]
  %v104 = vld [vmem:[%s1 + $0x108] sm:$0xf]
  %v105 = vld [vmem:[%s1 + $0x10c] sm:$0xf]
  %v106 = vld [vmem:[%s1 + $0x110] sm:$0xf]
  %v107 = vld [vmem:[%s1 + $0x114] sm:$0xf]
  %v108 = vld [vmem:[%s1 + $0x118] sm:$0xf]
  %v109 = vld [vmem:[%s1 + $0x11c] sm:$0xf]
  %v110 = vld [vmem:[%s1 + $0x120] sm:$0xf]
  %v111 = vld [vmem:[%s1 + $0x124] sm:$0xf]
  %v112 = vld [vmem:[%s1 + $0x128] sm:$0xf]
  %v113 = vld [vmem:[%s1 + $0x12c] sm:$0xf]
  %v114 = vld [vmem:[%s1 + $0x130] sm:$0xf]
  %v115 = vld [vmem:[%s1 + $0x134] sm:$0xf]
  %v116 = vld [vmem:[%s1 + $0x138] sm:$0xf]
  %v117 = vld [vmem:[%s1 + $0x13c] sm:$0xf]
  %v118 = vld [vmem:[%s1 + $0x140] sm:$0xf]
  %v119 = vld [vmem:[%s1 + $0x144] sm:$0xf]
  %v120 = vld [vmem:[%s1 + $0x148] sm:$0xf]
  %v121 = vld [vmem:[%s1 + $0x14c] sm:$0xf]
  %v122 = vld [vmem:[%s1 + $0x150] sm:$0xf]
  %v123 = vld [vmem:[%s1 + $0x154] sm:$0xf]
  %v124 = vld [vmem:[%s1 + $0x158] sm:$0xf]
  %v125 = vld [vmem:[%s1 + $0x15c] sm:$0xf]
  %v126 = vld [vmem:[%s1 + $0x160] sm:$0xf]
  %v127 = vld [vmem:[%s1 + $0x164] sm:$0xf]
  %v128 = vld [vmem:[%s1 + $0x168] sm:$0xf]
  %v129 = vld [vmem:[%s1 + $0x16c] sm:$0xf]
  %v130 = vld [vmem:[%s1 + $0x170] sm:$0xf]
  %v131 = vld [vmem:[%s1 + $0x174] sm:$0xf]
  %v132 = vld [vmem:[%s1 + $0x178] sm:$0xf]
  %v133 = vld [vmem:[%s1 + $0x17c] sm:$0xf]
  %v134 = vld [vmem:[%s1 + $0x180] sm:$0xf]
  %v135 = vld [vmem:[%s1 + $0x184] sm:$0xf]
  %v136 = vld [vmem:[%s1 + $0x188] sm:$0xf]
  %v137 = vld [vmem:[%s1 + $0x18c] sm:$0xf]
  %v138 = vld [vmem:[%s1 + $0x190] sm:$0xf]
  %v139 = vld [vmem:[%s1 + $0x194] sm:$0xf]
  %v140 = vld [vmem:[%s1 + $0x198] sm:$0xf]
  %v141 = vld [vmem:[%s1 + $0x19c] sm:$0xf]
  %v142 = vld [vmem:[%s1 + $0x1a0] sm:$0xf]
  %v143 = vld [vmem:[%s1 + $0x1a4] sm:$0xf]
  %v144 = vld [vmem:[%s1 + $0x1a8] sm:$0xf]
  %v145 = vld [vmem:[%s1 + $0x1ac] sm:$0xf]
  %v146 = vld [vmem:[%s1 + $0x1b0] sm:$0xf]
  %v147 = vld [vmem:[%s1 + $0x1b4] sm:$0xf]
  %v148 = vld [vmem:[%s1 + $0x1b8] sm:$0xf]
  %v149 = vld [vmem:[%s1 + $0x1bc] sm:$0xf]
  %v150 = vld [vmem:[%s1 + $0x1c0] sm:$0xf]
  %v151 = vld [vmem:[%s1 + $0x1c4] sm:$0xf]
  %v152 = vld [vmem:[%s1 + $0x1c8] sm:$0xf]
  %v153 = vld [vmem:[%s1 + $0x1cc] sm:$0xf]
  %v154 = vld [vmem:[%s1 + $0x1d0] sm:$0xf]
  %v155 = vld [vmem:[%s1 + $0x1d4] sm:$0xf]
  %v156 = vld [vmem:[%s1 + $0x1d8] sm:$0xf]
  %v157 = vld [vmem:[%s1 + $0x1dc] sm:$0xf]
  %v158 = vld [vmem:[%s1 + $0x1e0] sm:$0xf]
  %v159 = vld [vmem:[%s1 + $0x1e4] sm:$0xf]
  %v160 = vld [vmem:[%s1 + $0x1e8] sm:$0xf]
  %v161 = vld [vmem:[%s1 + $0x1ec] sm:$0xf]
  %v162 = vld [vmem:[%s1 + $0x1f0] sm:$0xf]
  %v163 = vld [vmem:[%s1 + $0x1f4] sm:$0xf]
  %v164 = vld [vmem:[%s1 + $0x1f8] sm:$0xf]
  %v165 = vld [vmem:[%s1 + $0x1fc] sm:$0xf]
  %v166 = vld [vmem:[%s1 + $0x200] sm:$0xf]
  %v167 = vld [vmem:[%s1 + $0x204] sm:$0xf]
  %v168 = vld [vmem:[%s1 + $0x208] sm:$0xf]
  %v169 = vld [vmem:[%s1 + $0x20c] sm:$0xf]
  %v170 = vld [vmem:[%s1 + $0x210] sm:$0xf]
  %v171 = vld [vmem:[%s1 + $0x214] sm:$0xf]
  %v172 = vld [vmem:[%s1 + $0x218] sm:$0xf]
  %v173 = vld [vmem:[%s1 + $0x21c] sm:$0xf]
  %v174 = vld [vmem:[%s1 + $0x220] sm:$0xf]
  %v175 = vld [vmem:[%s1 + $0x224] sm:$0xf]
  %v176 = vld [vmem:[%s1 + $0x228] sm:$0xf]
  %v177 = vld [vmem:[%s1 + $0x22c] sm:$0xf]
  %v178 = vld [vmem:[%s1 + $0x230] sm:$0xf]
  %v179 = vld [vmem:[%s1 + $0x234] sm:$0xf]
  %v180 = vld [vmem:[%s1 + $0x238] sm:$0xf]
  %v181 = vld [vmem:[%s1 + $0x23c] sm:$0xf]
  %v182 = vld [vmem:[%s2] sm:$0x1]
  %v184 = vlaneseq
  %v185 = vshrl.u32 %v184, 7
  %v186 = vsub.s32 0, %v185
  %v187 = vrot.slane %v182, %v186
  %v209 = vunpack.c.l.b16 %v18
  %v210 = vunpack.c.h.b16 %v18
  %v211 = vunpack.c.l.b16 %v19
  %v212 = vunpack.c.h.b16 %v19
  %v213 = vunpack.c.l.b16 %v20
  %v214 = vunpack.c.h.b16 %v20
  %v215 = vunpack.c.l.b16 %v21
  %v216 = vunpack.c.h.b16 %v21
  %v217 = vunpack.c.l.b16 %v22
  %v218 = vunpack.c.l.b16 %v23
  %v219 = vunpack.c.h.b16 %v23
  %v220 = vunpack.c.l.b16 %v24
  %v221 = vunpack.c.h.b16 %v24
  %v222 = vunpack.c.l.b16 %v25
  %v223 = vunpack.c.h.b16 %v25
  %v224 = vunpack.c.l.b16 %v26
  %v225 = vunpack.c.h.b16 %v26
  %v226 = vunpack.c.l.b16 %v27
  %v227 = vunpack.c.l.b16 %v28
  %v228 = vunpack.c.h.b16 %v28
  %v229 = vunpack.c.l.b16 %v29
  %v230 = vunpack.c.h.b16 %v29
  %v231 = vunpack.c.l.b16 %v30
  %v232 = vunpack.c.h.b16 %v30
  %v233 = vunpack.c.l.b16 %v31
  %v234 = vunpack.c.h.b16 %v31
  %v235 = vunpack.c.l.b16 %v32
  %v236 = vunpack.c.l.b16 %v33
  %v237 = vunpack.c.h.b16 %v33
  %v238 = vunpack.c.l.b16 %v34
  %v239 = vunpack.c.h.b16 %v34
  %v240 = vunpack.c.l.b16 %v35
  %v241 = vunpack.c.h.b16 %v35
  %v242 = vunpack.c.l.b16 %v36
  %v243 = vunpack.c.h.b16 %v36
  %v244 = vunpack.c.l.b16 %v37
  %v245 = vpack.c.b16 %v218, %v209
  %v246 = vpack.c.b16 %v219, %v210
  %v247 = vpack.c.b16 %v220, %v211
  %v248 = vpack.c.b16 %v221, %v212
  %v249 = vpack.c.b16 %v222, %v213
  %v250 = vpack.c.b16 %v223, %v214
  %v251 = vpack.c.b16 %v224, %v215
  %v252 = vpack.c.b16 %v225, %v216
  %v253 = vpack.c.b16 %v226, %v217
  %v254 = vpack.c.b16 %v236, %v227
  %v255 = vpack.c.b16 %v237, %v228
  %v256 = vpack.c.b16 %v238, %v229
  %v257 = vpack.c.b16 %v239, %v230
  %v258 = vpack.c.b16 %v240, %v231
  %v259 = vpack.c.b16 %v241, %v232
  %v260 = vpack.c.b16 %v242, %v233
  %v261 = vpack.c.b16 %v243, %v234
  %v262 = vpack.c.b16 %v244, %v235
  %v425 = vunpack.c.l.b16 %v38
  %v426 = vunpack.c.l.b16 %v39
  %v427 = vunpack.c.l.b16 %v40
  %v428 = vunpack.c.l.b16 %v41
  %v429 = vunpack.c.l.b16 %v42
  %v430 = vunpack.c.l.b16 %v43
  %v431 = vunpack.c.l.b16 %v44
  %v432 = vunpack.c.l.b16 %v45
  %v433 = vunpack.c.l.b16 %v46
  %v434 = vunpack.c.l.b16 %v47
  %v435 = vunpack.c.l.b16 %v48
  %v436 = vunpack.c.l.b16 %v49
  %v437 = vunpack.c.l.b16 %v50
  %v438 = vunpack.c.l.b16 %v51
  %v439 = vunpack.c.l.b16 %v52
  %v440 = vunpack.c.l.b16 %v53
  %v441 = vunpack.c.l.b16 %v54
  %v442 = vunpack.c.l.b16 %v55
  %v443 = vunpack.c.l.b16 %v56
  %v444 = vunpack.c.l.b16 %v57
  %v445 = vunpack.c.l.b16 %v58
  %v446 = vunpack.c.l.b16 %v59
  %v447 = vunpack.c.l.b16 %v60
  %v448 = vunpack.c.l.b16 %v61
  %v449 = vunpack.c.l.b16 %v62
  %v450 = vunpack.c.l.b16 %v63
  %v451 = vunpack.c.l.b16 %v64
  %v452 = vunpack.c.l.b16 %v65
  %v453 = vunpack.c.l.b16 %v66
  %v454 = vunpack.c.l.b16 %v67
  %v455 = vunpack.c.l.b16 %v68
  %v456 = vunpack.c.l.b16 %v69
  %v457 = vunpack.c.l.b16 %v70
  %v458 = vunpack.c.l.b16 %v71
  %v459 = vunpack.c.l.b16 %v72
  %v460 = vunpack.c.l.b16 %v73
  %v461 = vunpack.c.l.b16 %v74
  %v462 = vunpack.c.l.b16 %v75
  %v463 = vunpack.c.l.b16 %v76
  %v464 = vunpack.c.l.b16 %v77
  %v465 = vunpack.c.l.b16 %v78
  %v466 = vunpack.c.l.b16 %v79
  %v467 = vunpack.c.l.b16 %v80
  %v468 = vunpack.c.l.b16 %v81
  %v469 = vunpack.c.l.b16 %v82
  %v470 = vunpack.c.l.b16 %v83
  %v471 = vunpack.c.l.b16 %v84
  %v472 = vunpack.c.l.b16 %v85
  %v473 = vunpack.c.l.b16 %v86
  %v474 = vunpack.c.l.b16 %v87
  %v475 = vunpack.c.l.b16 %v88
  %v476 = vunpack.c.l.b16 %v89
  %v477 = vunpack.c.l.b16 %v90
  %v478 = vunpack.c.l.b16 %v91
  %v479 = vunpack.c.l.b16 %v92
  %v480 = vunpack.c.l.b16 %v93
  %v481 = vunpack.c.l.b16 %v94
  %v482 = vunpack.c.l.b16 %v95
  %v483 = vunpack.c.l.b16 %v96
  %v484 = vunpack.c.l.b16 %v97
  %v485 = vunpack.c.l.b16 %v98
  %v486 = vunpack.c.l.b16 %v99
  %v487 = vunpack.c.l.b16 %v100
  %v488 = vunpack.c.l.b16 %v101
  %v489 = vunpack.c.l.b16 %v102
  %v490 = vunpack.c.l.b16 %v103
  %v491 = vunpack.c.l.b16 %v104
  %v492 = vunpack.c.l.b16 %v105
  %v493 = vunpack.c.l.b16 %v106
  %v494 = vunpack.c.l.b16 %v107
  %v495 = vunpack.c.l.b16 %v108
  %v496 = vunpack.c.l.b16 %v109
  %v497 = vunpack.c.l.b16 %v110
  %v498 = vunpack.c.l.b16 %v111
  %v499 = vunpack.c.l.b16 %v112
  %v500 = vunpack.c.l.b16 %v113
  %v501 = vunpack.c.l.b16 %v114
  %v502 = vunpack.c.l.b16 %v115
  %v503 = vunpack.c.l.b16 %v116
  %v504 = vunpack.c.l.b16 %v117
  %v505 = vunpack.c.l.b16 %v118
  %v506 = vunpack.c.l.b16 %v119
  %v507 = vunpack.c.l.b16 %v120
  %v508 = vunpack.c.l.b16 %v121
  %v509 = vunpack.c.l.b16 %v122
  %v510 = vunpack.c.l.b16 %v123
  %v511 = vunpack.c.l.b16 %v124
  %v512 = vunpack.c.l.b16 %v125
  %v513 = vunpack.c.l.b16 %v126
  %v514 = vunpack.c.l.b16 %v127
  %v515 = vunpack.c.l.b16 %v128
  %v516 = vunpack.c.l.b16 %v129
  %v517 = vunpack.c.l.b16 %v130
  %v518 = vunpack.c.l.b16 %v131
  %v519 = vunpack.c.l.b16 %v132
  %v520 = vunpack.c.l.b16 %v133
  %v521 = vunpack.c.l.b16 %v134
  %v522 = vunpack.c.l.b16 %v135
  %v523 = vunpack.c.l.b16 %v136
  %v524 = vunpack.c.l.b16 %v137
  %v525 = vunpack.c.l.b16 %v138
  %v526 = vunpack.c.l.b16 %v139
  %v527 = vunpack.c.l.b16 %v140
  %v528 = vunpack.c.l.b16 %v141
  %v529 = vunpack.c.l.b16 %v142
  %v530 = vunpack.c.l.b16 %v143
  %v531 = vunpack.c.l.b16 %v144
  %v532 = vunpack.c.l.b16 %v145
  %v533 = vunpack.c.l.b16 %v146
  %v534 = vunpack.c.l.b16 %v147
  %v535 = vunpack.c.l.b16 %v148
  %v536 = vunpack.c.l.b16 %v149
  %v537 = vunpack.c.l.b16 %v150
  %v538 = vunpack.c.l.b16 %v151
  %v539 = vunpack.c.l.b16 %v152
  %v540 = vunpack.c.l.b16 %v153
  %v541 = vunpack.c.l.b16 %v154
  %v542 = vunpack.c.l.b16 %v155
  %v543 = vunpack.c.l.b16 %v156
  %v544 = vunpack.c.l.b16 %v157
  %v545 = vunpack.c.l.b16 %v158
  %v546 = vunpack.c.l.b16 %v159
  %v547 = vunpack.c.l.b16 %v160
  %v548 = vunpack.c.l.b16 %v161
  %v549 = vunpack.c.l.b16 %v162
  %v550 = vunpack.c.l.b16 %v163
  %v551 = vunpack.c.l.b16 %v164
  %v552 = vunpack.c.l.b16 %v165
  %v553 = vunpack.c.l.b16 %v166
  %v554 = vunpack.c.l.b16 %v167
  %v555 = vunpack.c.l.b16 %v168
  %v556 = vunpack.c.l.b16 %v169
  %v557 = vunpack.c.l.b16 %v170
  %v558 = vunpack.c.l.b16 %v171
  %v559 = vunpack.c.l.b16 %v172
  %v560 = vunpack.c.l.b16 %v173
  %v561 = vunpack.c.l.b16 %v174
  %v562 = vunpack.c.l.b16 %v175
  %v563 = vunpack.c.l.b16 %v176
  %v564 = vunpack.c.l.b16 %v177
  %v565 = vunpack.c.l.b16 %v178
  %v566 = vunpack.c.l.b16 %v179
  %v567 = vunpack.c.l.b16 %v180
  %v568 = vunpack.c.l.b16 %v181
  %v569 = vpack.c.b16 %v426, %v425
  %v570 = vpack.c.b16 %v428, %v427
  %v571 = vpack.c.b16 %v430, %v429
  %v572 = vpack.c.b16 %v432, %v431
  %v573 = vpack.c.b16 %v434, %v433
  %v574 = vpack.c.b16 %v436, %v435
  %v575 = vpack.c.b16 %v438, %v437
  %v576 = vpack.c.b16 %v440, %v439
  %v577 = vpack.c.b16 %v442, %v441
  %v578 = vpack.c.b16 %v444, %v443
  %v579 = vpack.c.b16 %v446, %v445
  %v580 = vpack.c.b16 %v448, %v447
  %v581 = vpack.c.b16 %v450, %v449
  %v582 = vpack.c.b16 %v452, %v451
  %v583 = vpack.c.b16 %v454, %v453
  %v584 = vpack.c.b16 %v456, %v455
  %v585 = vpack.c.b16 %v458, %v457
  %v586 = vpack.c.b16 %v460, %v459
  %v587 = vpack.c.b16 %v462, %v461
  %v588 = vpack.c.b16 %v464, %v463
  %v589 = vpack.c.b16 %v466, %v465
  %v590 = vpack.c.b16 %v468, %v467
  %v591 = vpack.c.b16 %v470, %v469
  %v592 = vpack.c.b16 %v472, %v471
  %v593 = vpack.c.b16 %v474, %v473
  %v594 = vpack.c.b16 %v476, %v475
  %v595 = vpack.c.b16 %v478, %v477
  %v596 = vpack.c.b16 %v480, %v479
  %v597 = vpack.c.b16 %v482, %v481
  %v598 = vpack.c.b16 %v484, %v483
  %v599 = vpack.c.b16 %v486, %v485
  %v600 = vpack.c.b16 %v488, %v487
  %v601 = vpack.c.b16 %v490, %v489
  %v602 = vpack.c.b16 %v492, %v491
  %v603 = vpack.c.b16 %v494, %v493
  %v604 = vpack.c.b16 %v496, %v495
  %v605 = vpack.c.b16 %v498, %v497
  %v606 = vpack.c.b16 %v500, %v499
  %v607 = vpack.c.b16 %v502, %v501
  %v608 = vpack.c.b16 %v504, %v503
  %v609 = vpack.c.b16 %v506, %v505
  %v610 = vpack.c.b16 %v508, %v507
  %v611 = vpack.c.b16 %v510, %v509
  %v612 = vpack.c.b16 %v512, %v511
  %v613 = vpack.c.b16 %v514, %v513
  %v614 = vpack.c.b16 %v516, %v515
  %v615 = vpack.c.b16 %v518, %v517
  %v616 = vpack.c.b16 %v520, %v519
  %v617 = vpack.c.b16 %v522, %v521
  %v618 = vpack.c.b16 %v524, %v523
  %v619 = vpack.c.b16 %v526, %v525
  %v620 = vpack.c.b16 %v528, %v527
  %v621 = vpack.c.b16 %v530, %v529
  %v622 = vpack.c.b16 %v532, %v531
  %v623 = vpack.c.b16 %v534, %v533
  %v624 = vpack.c.b16 %v536, %v535
  %v625 = vpack.c.b16 %v538, %v537
  %v626 = vpack.c.b16 %v540, %v539
  %v627 = vpack.c.b16 %v542, %v541
  %v628 = vpack.c.b16 %v544, %v543
  %v629 = vpack.c.b16 %v546, %v545
  %v630 = vpack.c.b16 %v548, %v547
  %v631 = vpack.c.b16 %v550, %v549
  %v632 = vpack.c.b16 %v552, %v551
  %v633 = vpack.c.b16 %v554, %v553
  %v634 = vpack.c.b16 %v556, %v555
  %v635 = vpack.c.b16 %v558, %v557
  %v636 = vpack.c.b16 %v560, %v559
  %v637 = vpack.c.b16 %v562, %v561
  %v638 = vpack.c.b16 %v564, %v563
  %v639 = vpack.c.b16 %v566, %v565
  %v640 = vpack.c.b16 %v568, %v567
  %713 = vmatprep.subr.bf16.mxu0 0
  %714 = vmatpush1.bf16.msra.mxu0 %v569
  %715 = vmatprep.subr.bf16.mxu0 0
  %716 = vmatpush1.bf16.msra.mxu0 %v570
  %717 = vmatprep.subr.bf16.mxu0 0
  %718 = vmatpush1.bf16.msra.mxu0 %v571
  %719 = vmatprep.subr.bf16.mxu0 0
  %720 = vmatpush1.bf16.msra.mxu0 %v572
  %721 = vmatprep.subr.bf16.mxu0 0
  %722 = vmatpush1.bf16.msra.mxu0 %v573
  %723 = vmatprep.subr.bf16.mxu0 0
  %724 = vmatpush1.bf16.msra.mxu0 %v574
  %725 = vmatprep.subr.bf16.mxu0 0
  %726 = vmatpush1.bf16.msra.mxu0 %v575
  %727 = vmatprep.subr.bf16.mxu0 0
  %728 = vmatpush1.bf16.msra.mxu0 %v576
  %729 = vmatprep.subr.bf16.mxu0 0
  %730 = vmatpush1.bf16.msra.mxu0 %v577
  %731 = vmatprep.subr.bf16.mxu0 0
  %732 = vmatpush1.bf16.msra.mxu0 %v578
  %733 = vmatprep.subr.bf16.mxu0 0
  %734 = vmatpush1.bf16.msra.mxu0 %v579
  %735 = vmatprep.subr.bf16.mxu0 0
  %736 = vmatpush1.bf16.msra.mxu0 %v580
  %737 = vmatprep.subr.bf16.mxu0 0
  %738 = vmatpush1.bf16.msra.mxu0 %v581
  %739 = vmatprep.subr.bf16.mxu0 0
  %740 = vmatpush1.bf16.msra.mxu0 %v582
  %741 = vmatprep.subr.bf16.mxu0 0
  %742 = vmatpush1.bf16.msra.mxu0 %v583
  %743 = vmatprep.subr.bf16.mxu0 0
  %744 = vmatpush1.bf16.msra.mxu0 %v584
  %745 = vmatprep.mubr.bf16.mxu0 %v246
  %746 = vmatmul.mubr.bf16.gmra.mrb[0].mxu0 %v245
  %v747 = vpop.f32.mrb[0].mxu0
  %v748 = vadd.f32 %v187, %v747
  %v749 = vpop.f32.mrb[0].mxu0
  %v750 = vpop.f32.mrb[0].mxu0
  %v751 = vadd.f32 %v187, %v750
  %v752 = vpop.f32.mrb[0].mxu0
  %753 = vmatprep.mubr.bf16.mxu0 %v255
  %754 = vmatmul.mubr.bf16.gmra.mrb[0].mxu0 %v254
  %v755 = vpop.f32.mrb[0].mxu0
  %v756 = vadd.f32 %v187, %v755
  %v757 = vpop.f32.mrb[0].mxu0
  %v758 = vpop.f32.mrb[0].mxu0
  %v759 = vadd.f32 %v187, %v758
  %v760 = vpop.f32.mrb[0].mxu0
  %761 = vdwg.mxu0
  %762 = vmatprep.subr.bf16.mxu0 0
  %763 = vmatpush1.bf16.msra.mxu0 %v585
  %764 = vmatprep.subr.bf16.mxu0 0
  %765 = vmatpush1.bf16.msra.mxu0 %v586
  %766 = vmatprep.subr.bf16.mxu0 0
  %767 = vmatpush1.bf16.msra.mxu0 %v587
  %768 = vmatprep.subr.bf16.mxu0 0
  %769 = vmatpush1.bf16.msra.mxu0 %v588
  %770 = vmatprep.subr.bf16.mxu0 0
  %771 = vmatpush1.bf16.msra.mxu0 %v589
  %772 = vmatprep.subr.bf16.mxu0 0
  %773 = vmatpush1.bf16.msra.mxu0 %v590
  %774 = vmatprep.subr.bf16.mxu0 0
  %775 = vmatpush1.bf16.msra.mxu0 %v591
  %776 = vmatprep.subr.bf16.mxu0 0
  %777 = vmatpush1.bf16.msra.mxu0 %v592
  %778 = vmatprep.subr.bf16.mxu0 0
  %779 = vmatpush1.bf16.msra.mxu0 %v593
  %780 = vmatprep.subr.bf16.mxu0 0
  %781 = vmatpush1.bf16.msra.mxu0 %v594
  %782 = vmatprep.subr.bf16.mxu0 0
  %783 = vmatpush1.bf16.msra.mxu0 %v595
  %784 = vmatprep.subr.bf16.mxu0 0
  %785 = vmatpush1.bf16.msra.mxu0 %v596
  %786 = vmatprep.subr.bf16.mxu0 0
  %787 = vmatpush1.bf16.msra.mxu0 %v597
  %788 = vmatprep.subr.bf16.mxu0 0
  %789 = vmatpush1.bf16.msra.mxu0 %v598
  %790 = vmatprep.subr.bf16.mxu0 0
  %791 = vmatpush1.bf16.msra.mxu0 %v599
  %792 = vmatprep.subr.bf16.mxu0 0
  %793 = vmatpush1.bf16.msra.mxu0 %v600
  %794 = vmatprep.mubr.bf16.mxu0 %v248
  %795 = vmatmul.mubr.bf16.gmra.mrb[0].mxu0 %v247
  %v796 = vpop.f32.mrb[0].mxu0
  %v797 = vadd.f32 %v748, %v796
  %v798 = vpop.f32.mrb[0].mxu0
  %v799 = vpop.f32.mrb[0].mxu0
  %v800 = vadd.f32 %v751, %v799
  %v801 = vpop.f32.mrb[0].mxu0
  %802 = vmatprep.mubr.bf16.mxu0 %v257
  %803 = vmatmul.mubr.bf16.gmra.mrb[0].mxu0 %v256
  %v804 = vpop.f32.mrb[0].mxu0
  %v805 = vadd.f32 %v756, %v804
  %v806 = vpop.f32.mrb[0].mxu0
  %v807 = vpop.f32.mrb[0].mxu0
  %v808 = vadd.f32 %v759, %v807
  %v809 = vpop.f32.mrb[0].mxu0
  %810 = vdwg.mxu0
  %811 = vmatprep.subr.bf16.mxu0 0
  %812 = vmatpush1.bf16.msra.mxu0 %v601
  %813 = vmatprep.subr.bf16.mxu0 0
  %814 = vmatpush1.bf16.msra.mxu0 %v602
  %815 = vmatprep.subr.bf16.mxu0 0
  %816 = vmatpush1.bf16.msra.mxu0 %v603
  %817 = vmatprep.subr.bf16.mxu0 0
  %818 = vmatpush1.bf16.msra.mxu0 %v604
  %819 = vmatprep.subr.bf16.mxu0 0
  %820 = vmatpush1.bf16.msra.mxu0 %v605
  %821 = vmatprep.subr.bf16.mxu0 0
  %822 = vmatpush1.bf16.msra.mxu0 %v606
  %823 = vmatprep.subr.bf16.mxu0 0
  %824 = vmatpush1.bf16.msra.mxu0 %v607
  %825 = vmatprep.subr.bf16.mxu0 0
  %826 = vmatpush1.bf16.msra.mxu0 %v608
  %827 = vmatprep.subr.bf16.mxu0 0
  %828 = vmatpush1.bf16.msra.mxu0 %v609
  %829 = vmatprep.subr.bf16.mxu0 0
  %830 = vmatpush1.bf16.msra.mxu0 %v610
  %831 = vmatprep.subr.bf16.mxu0 0
  %832 = vmatpush1.bf16.msra.mxu0 %v611
  %833 = vmatprep.subr.bf16.mxu0 0
  %834 = vmatpush1.bf16.msra.mxu0 %v612
  %835 = vmatprep.subr.bf16.mxu0 0
  %836 = vmatpush1.bf16.msra.mxu0 %v613
  %837 = vmatprep.subr.bf16.mxu0 0
  %838 = vmatpush1.bf16.msra.mxu0 %v614
  %839 = vmatprep.subr.bf16.mxu0 0
  %840 = vmatpush1.bf16.msra.mxu0 %v615
  %841 = vmatprep.subr.bf16.mxu0 0
  %842 = vmatpush1.bf16.msra.mxu0 %v616
  %843 = vmatprep.mubr.bf16.mxu0 %v250
  %844 = vmatmul.mubr.bf16.gmra.mrb[0].mxu0 %v249
  %v845 = vpop.f32.mrb[0].mxu0
  %v846 = vadd.f32 %v797, %v845
  %v847 = vpop.f32.mrb[0].mxu0
  %v848 = vpop.f32.mrb[0].mxu0
  %v849 = vadd.f32 %v800, %v848
  %v850 = vpop.f32.mrb[0].mxu0
  %851 = vmatprep.mubr.bf16.mxu0 %v259
  %852 = vmatmul.mubr.bf16.gmra.mrb[0].mxu0 %v258
  %v853 = vpop.f32.mrb[0].mxu0
  %v854 = vadd.f32 %v805, %v853
  %v855 = vpop.f32.mrb[0].mxu0
  %v856 = vpop.f32.mrb[0].mxu0
  %v857 = vadd.f32 %v808, %v856
  %v858 = vpop.f32.mrb[0].mxu0
  %859 = vdwg.mxu0
  %860 = vmatprep.subr.bf16.mxu0 0
  %861 = vmatpush1.bf16.msra.mxu0 %v617
  %862 = vmatprep.subr.bf16.mxu0 0
  %863 = vmatpush1.bf16.msra.mxu0 %v618
  %864 = vmatprep.subr.bf16.mxu0 0
  %865 = vmatpush1.bf16.msra.mxu0 %v619
  %866 = vmatprep.subr.bf16.mxu0 0
  %867 = vmatpush1.bf16.msra.mxu0 %v620
  %868 = vmatprep.subr.bf16.mxu0 0
  %869 = vmatpush1.bf16.msra.mxu0 %v621
  %870 = vmatprep.subr.bf16.mxu0 0
  %871 = vmatpush1.bf16.msra.mxu0 %v622
  %872 = vmatprep.subr.bf16.mxu0 0
  %873 = vmatpush1.bf16.msra.mxu0 %v623
  %874 = vmatprep.subr.bf16.mxu0 0
  %875 = vmatpush1.bf16.msra.mxu0 %v624
  %876 = vmatprep.subr.bf16.mxu0 0
  %877 = vmatpush1.bf16.msra.mxu0 %v625
  %878 = vmatprep.subr.bf16.mxu0 0
  %879 = vmatpush1.bf16.msra.mxu0 %v626
  %880 = vmatprep.subr.bf16.mxu0 0
  %881 = vmatpush1.bf16.msra.mxu0 %v627
  %882 = vmatprep.subr.bf16.mxu0 0
  %883 = vmatpush1.bf16.msra.mxu0 %v628
  %884 = vmatprep.subr.bf16.mxu0 0
  %885 = vmatpush1.bf16.msra.mxu0 %v629
  %886 = vmatprep.subr.bf16.mxu0 0
  %887 = vmatpush1.bf16.msra.mxu0 %v630
  %888 = vmatprep.subr.bf16.mxu0 0
  %889 = vmatpush1.bf16.msra.mxu0 %v631
  %890 = vmatprep.subr.bf16.mxu0 0
  %891 = vmatpush1.bf16.msra.mxu0 %v632
  %892 = vmatprep.mubr.bf16.mxu0 %v252
  %893 = vmatmul.mubr.bf16.gmra.mrb[0].mxu0 %v251
  %v894 = vpop.f32.mrb[0].mxu0
  %v895 = vadd.f32 %v846, %v894
  %v896 = vpop.f32.mrb[0].mxu0
  %v897 = vpop.f32.mrb[0].mxu0
  %v898 = vadd.f32 %v849, %v897
  %v899 = vpop.f32.mrb[0].mxu0
  %900 = vmatprep.mubr.bf16.mxu0 %v261
  %901 = vmatmul.mubr.bf16.gmra.mrb[0].mxu0 %v260
  %v902 = vpop.f32.mrb[0].mxu0
  %v903 = vadd.f32 %v854, %v902
  %v904 = vpop.f32.mrb[0].mxu0
  %v905 = vpop.f32.mrb[0].mxu0
  %v906 = vadd.f32 %v857, %v905
  %v907 = vpop.f32.mrb[0].mxu0
  %908 = vdwg.mxu0
  %909 = vmatprep.subr.bf16.mxu0 0
  %910 = vmatpush1.bf16.msra.mxu0 %v633
  %911 = vmatprep.subr.bf16.mxu0 0
  %912 = vmatpush1.bf16.msra.mxu0 %v634
  %913 = vmatprep.subr.bf16.mxu0 0
  %914 = vmatpush1.bf16.msra.mxu0 %v635
  %915 = vmatprep.subr.bf16.mxu0 0
  %916 = vmatpush1.bf16.msra.mxu0 %v636
  %917 = vmatprep.subr.bf16.mxu0 0
  %918 = vmatpush1.bf16.msra.mxu0 %v637
  %919 = vmatprep.subr.bf16.mxu0 0
  %920 = vmatpush1.bf16.msra.mxu0 %v638
  %921 = vmatprep.subr.bf16.mxu0 0
  %922 = vmatpush1.bf16.msra.mxu0 %v639
  %923 = vmatprep.subr.bf16.mxu0 0
  %924 = vmatpush1.bf16.msra.mxu0 %v640
  %925 = vmatprep.subr.bf16.mxu0 0
  %926 = vmatpush1.bf16.msra.mxu0 0
  %927 = vmatprep.subr.bf16.mxu0 0
  %928 = vmatpush1.bf16.msra.mxu0 0
  %929 = vmatprep.subr.bf16.mxu0 0
  %930 = vmatpush1.bf16.msra.mxu0 0
  %931 = vmatprep.subr.bf16.mxu0 0
  %932 = vmatpush1.bf16.msra.mxu0 0
  %933 = vmatprep.subr.bf16.mxu0 0
  %934 = vmatpush1.bf16.msra.mxu0 0
  %935 = vmatprep.subr.bf16.mxu0 0
  %936 = vmatpush1.bf16.msra.mxu0 0
  %937 = vmatprep.subr.bf16.mxu0 0
  %938 = vmatpush1.bf16.msra.mxu0 0
  %939 = vmatprep.subr.bf16.mxu0 0
  %940 = vmatpush1.bf16.msra.mxu0 0
  %941 = vmatprep.mubr.bf16.mxu0 0
  %942 = vmatmul.mubr.bf16.gmra.mrb[0].mxu0 %v253
  %v943 = vpop.f32.mrb[0].mxu0
  %v944 = vadd.f32 %v895, %v943
  %v945 = vpop.f32.mrb[0].mxu0
  %v946 = vpop.f32.mrb[0].mxu0
  %v947 = vadd.f32 %v898, %v946
  %v948 = vpop.f32.mrb[0].mxu0
  %949 = vmatprep.mubr.bf16.mxu0 0
  %950 = vmatmul.mubr.bf16.gmra.mrb[0].mxu0 %v262
  %v951 = vpop.f32.mrb[0].mxu0
  %v952 = vadd.f32 %v903, %v951
  %v953 = vpop.f32.mrb[0].mxu0
  %v954 = vpop.f32.mrb[0].mxu0
  %v955 = vadd.f32 %v906, %v954
  %v956 = vpop.f32.mrb[0].mxu0
  %957 = vdwg.mxu0
  %v958 = vld [vmem:[%s3] sm:$0xf]
  %v959 = vld [vmem:[%s3 + $0x4] sm:$0xf]
  %v960 = vld [vmem:[%s3 + $0x8] sm:$0xf]
  %v961 = vld [vmem:[%s3 + $0xc] sm:$0xf]
  %v962 = vunpack.c.l.bf16 %v958
  %v963 = vunpack.c.l.bf16 %v959
  %v964 = vunpack.c.l.bf16 %v960
  %v965 = vunpack.c.l.bf16 %v961
  %v966 = vadd.f32 %v944, %v962
  %v967 = vadd.f32 %v947, %v963
  %v968 = vadd.f32 %v952, %v964
  %v969 = vadd.f32 %v955, %v965
  %v970 = vmax.f32 %v966, 0.0
  %v971 = vmax.f32 %v967, 0.0
  %v972 = vmax.f32 %v968, 0.0
  %v973 = vmax.f32 %v969, 0.0
  %v974 = vpack.c.bf16 %v971, %v970
  %v975 = vpack.c.bf16 %v973, %v972
  %v978 = vunpack.c.l.b16 %v974
  %v979 = vunpack.c.h.b16 %v974
  %v980 = vunpack.c.l.b16 %v975
  %v981 = vunpack.c.h.b16 %v975
  %v982 = vpack.c.b16 %v978, %v978
  %v983 = vpack.c.b16 %v979, %v979
  %v984 = vpack.c.b16 %v980, %v980
  %v985 = vpack.c.b16 %v981, %v981
  %990 = vst [vmem:[%s4] sm:$0xf] %v982
  %991 = vst [vmem:[%s4 + $0x4] sm:$0xf] %v983
  %992 = vst [vmem:[%s4 + $0x8] sm:$0xf] %v984
  %993 = vst [vmem:[%s4 + $0xc] sm:$0xf] %v985
  // Predicated region
  $region18: #{_lambda_.17} parent=0 // pred_check
    _
  $region19: #{_lambda_.17} parent=0 // pred_check_branch
    %995 = sbr.rel (0) target = $region21
  $region20: #{_lambda_.17} parent=0 // pred_region
    _
  $region21: #{_lambda_.17} parent=0 // pred_fallthru
    _
  // Predicated region
  $region22: #{_lambda_.17} parent=0 // pred_check
    _
  $region23: #{_lambda_.17} parent=0 // pred_check_branch
    %997 = sbr.rel (0) target = $region25
  $region24: #{_lambda_.17} parent=0 // pred_region
    _
  $region25: #{_lambda_.17} parent=0 // pred_fallthru
    _

// kernel: _lambda_.18
$region0: #{_lambda_.18}
  #allocation0 [shape = 'u32[]', space=smem, size = 0x4, offset = 0x4, fixed_abs, tag = 'smem constant byte address 0x4 - core index']
  #allocation1 [shape = 'u32[144,128]{1,0:T(1,128)}', space=vmem, size = 0x12000, scoped, tag = 'internal scratch']
  %s0 = inlined_call_operand.vmem [shape: bf16[8,1152], index: 0, kind: input, shape index: {}]
  %s1 = inlined_call_operand.vmem [shape: bf16[1152,128], index: 1, kind: input, shape index: {}]
  %s2 = inlined_call_operand.vmem [shape: f32[1,128], index: 2, kind: input, shape index: {}, may-alias: {2,4}]
  %s3 = inlined_call_operand.vmem [shape: bf16[128,128], index: 3, kind: input, shape index: {}]
  %s4 = inlined_call_operand.vmem [shape: f32[1,128], index: 4, kind: input, shape index: {}, may-alias: {2,4}]
  %s5 = inlined_call_operand.vmem [shape: bf16[8,128], index: 5, kind: output, shape index: {0}]
  %s6 = inlined_call_operand.vmem [shape: bf16[8,128], index: 6, kind: output, shape index: {1}]
  %7 = xla_tuple %s5, %s6
  %s8 = sld [smem:[#allocation0]]
  $region38: #{_lambda_.18} parent=0
    _
  %s10 = ssub.s32 1, %s8
  %s11 = scalar_select 0, %s10, %s8
  // Predicated region
  $region2: #{_lambda_.18} parent=0 // pred_check
    _
  $region3: #{_lambda_.18} parent=0 // pred_check_branch
    %13 = sbr.rel (0) target = $region5
  $region4: #{_lambda_.18} parent=0 // pred_region
    _
  $region5: #{_lambda_.18} parent=0 // pred_fallthru
    _
  // Predicated region
  $region6: #{_lambda_.18} parent=0 // pred_check
    _
  $region7: #{_lambda_.18} parent=0 // pred_check_branch
    %15 = sbr.rel (0) target = $region9
  $region8: #{_lambda_.18} parent=0 // pred_region
    _
  $region9: #{_lambda_.18} parent=0 // pred_fallthru
    _
  // Predicated region
  $region10: #{_lambda_.18} parent=0 // pred_check
    _
  $region11: #{_lambda_.18} parent=0 // pred_check_branch
    %17 = sbr.rel (0) target = $region13
  $region12: #{_lambda_.18} parent=0 // pred_region
    _
  $region13: #{_lambda_.18} parent=0 // pred_fallthru
    _
  // Predicated region
  $region14: #{_lambda_.18} parent=0 // pred_check
    _
  $region15: #{_lambda_.18} parent=0 // pred_check_branch
    %19 = sbr.rel (0) target = $region17
  $region16: #{_lambda_.18} parent=0 // pred_region
    _
  $region17: #{_lambda_.18} parent=0 // pred_fallthru
    _
  // Predicated region
  $region18: #{_lambda_.18} parent=0 // pred_check
    _
  $region19: #{_lambda_.18} parent=0 // pred_check_branch
    %21 = sbr.rel (0) target = $region21
  $region20: #{_lambda_.18} parent=0 // pred_region
    _
  $region21: #{_lambda_.18} parent=0 // pred_fallthru
    _
  %v23 = vld [vmem:[%s0] sm:$0xff]
  %v24 = vld [vmem:[%s0 + $0x8] sm:$0xff]
  %v25 = vld [vmem:[%s0 + $0x10] sm:$0xff]
  %v26 = vld [vmem:[%s0 + $0x18] sm:$0xff]
  %v27 = vld [vmem:[%s0 + $0x20] sm:$0xf]
  %v28 = vld [vmem:[%s1] sm:$0xf]
  %v29 = vld [vmem:[%s1 + $0x4] sm:$0xf]
  %v30 = vld [vmem:[%s1 + $0x8] sm:$0xf]
  %v31 = vld [vmem:[%s1 + $0xc] sm:$0xf]
  %v32 = vld [vmem:[%s1 + $0x10] sm:$0xf]
  %v33 = vld [vmem:[%s1 + $0x14] sm:$0xf]
  %v34 = vld [vmem:[%s1 + $0x18] sm:$0xf]
  %v35 = vld [vmem:[%s1 + $0x1c] sm:$0xf]
  %v36 = vld [vmem:[%s1 + $0x20] sm:$0xf]
  %v37 = vld [vmem:[%s1 + $0x24] sm:$0xf]
  %v38 = vld [vmem:[%s1 + $0x28] sm:$0xf]
  %v39 = vld [vmem:[%s1 + $0x2c] sm:$0xf]
  %v40 = vld [vmem:[%s1 + $0x30] sm:$0xf]
  %v41 = vld [vmem:[%s1 + $0x34] sm:$0xf]
  %v42 = vld [vmem:[%s1 + $0x38] sm:$0xf]
  %v43 = vld [vmem:[%s1 + $0x3c] sm:$0xf]
  %v44 = vld [vmem:[%s1 + $0x40] sm:$0xf]
  %v45 = vld [vmem:[%s1 + $0x44] sm:$0xf]
  %v46 = vld [vmem:[%s1 + $0x48] sm:$0xf]
  %v47 = vld [vmem:[%s1 + $0x4c] sm:$0xf]
  %v48 = vld [vmem:[%s1 + $0x50] sm:$0xf]
  %v49 = vld [vmem:[%s1 + $0x54] sm:$0xf]
  %v50 = vld [vmem:[%s1 + $0x58] sm:$0xf]
  %v51 = vld [vmem:[%s1 + $0x5c] sm:$0xf]
  %v52 = vld [vmem:[%s1 + $0x60] sm:$0xf]
  %v53 = vld [vmem:[%s1 + $0x64] sm:$0xf]
  %v54 = vld [vmem:[%s1 + $0x68] sm:$0xf]
  %v55 = vld [vmem:[%s1 + $0x6c] sm:$0xf]
  %v56 = vld [vmem:[%s1 + $0x70] sm:$0xf]
  %v57 = vld [vmem:[%s1 + $0x74] sm:$0xf]
  %v58 = vld [vmem:[%s1 + $0x78] sm:$0xf]
  %v59 = vld [vmem:[%s1 + $0x7c] sm:$0xf]
  %v60 = vld [vmem:[%s1 + $0x80] sm:$0xf]
  %v61 = vld [vmem:[%s1 + $0x84] sm:$0xf]
  %v62 = vld [vmem:[%s1 + $0x88] sm:$0xf]
  %v63 = vld [vmem:[%s1 + $0x8c] sm:$0xf]
  %v64 = vld [vmem:[%s1 + $0x90] sm:$0xf]
  %v65 = vld [vmem:[%s1 + $0x94] sm:$0xf]
  %v66 = vld [vmem:[%s1 + $0x98] sm:$0xf]
  %v67 = vld [vmem:[%s1 + $0x9c] sm:$0xf]
  %v68 = vld [vmem:[%s1 + $0xa0] sm:$0xf]
  %v69 = vld [vmem:[%s1 + $0xa4] sm:$0xf]
  %v70 = vld [vmem:[%s1 + $0xa8] sm:$0xf]
  %v71 = vld [vmem:[%s1 + $0xac] sm:$0xf]
  %v72 = vld [vmem:[%s1 + $0xb0] sm:$0xf]
  %v73 = vld [vmem:[%s1 + $0xb4] sm:$0xf]
  %v74 = vld [vmem:[%s1 + $0xb8] sm:$0xf]
  %v75 = vld [vmem:[%s1 + $0xbc] sm:$0xf]
  %v76 = vld [vmem:[%s1 + $0xc0] sm:$0xf]
  %v77 = vld [vmem:[%s1 + $0xc4] sm:$0xf]
  %v78 = vld [vmem:[%s1 + $0xc8] sm:$0xf]
  %v79 = vld [vmem:[%s1 + $0xcc] sm:$0xf]
  %v80 = vld [vmem:[%s1 + $0xd0] sm:$0xf]
  %v81 = vld [vmem:[%s1 + $0xd4] sm:$0xf]
  %v82 = vld [vmem:[%s1 + $0xd8] sm:$0xf]
  %v83 = vld [vmem:[%s1 + $0xdc] sm:$0xf]
  %v84 = vld [vmem:[%s1 + $0xe0] sm:$0xf]
  %v85 = vld [vmem:[%s1 + $0xe4] sm:$0xf]
  %v86 = vld [vmem:[%s1 + $0xe8] sm:$0xf]
  %v87 = vld [vmem:[%s1 + $0xec] sm:$0xf]
  %v88 = vld [vmem:[%s1 + $0xf0] sm:$0xf]
  %v89 = vld [vmem:[%s1 + $0xf4] sm:$0xf]
  %v90 = vld [vmem:[%s1 + $0xf8] sm:$0xf]
  %v91 = vld [vmem:[%s1 + $0xfc] sm:$0xf]
  %v92 = vld [vmem:[%s1 + $0x100] sm:$0xf]
  %v93 = vld [vmem:[%s1 + $0x104] sm:$0xf]
  %v94 = vld [vmem:[%s1 + $0x108] sm:$0xf]
  %v95 = vld [vmem:[%s1 + $0x10c] sm:$0xf]
  %v96 = vld [vmem:[%s1 + $0x110] sm:$0xf]
  %v97 = vld [vmem:[%s1 + $0x114] sm:$0xf]
  %v98 = vld [vmem:[%s1 + $0x118] sm:$0xf]
  %v99 = vld [vmem:[%s1 + $0x11c] sm:$0xf]
  %v100 = vld [vmem:[%s1 + $0x120] sm:$0xf]
  %v101 = vld [vmem:[%s1 + $0x124] sm:$0xf]
  %v102 = vld [vmem:[%s1 + $0x128] sm:$0xf]
  %v103 = vld [vmem:[%s1 + $0x12c] sm:$0xf]
  %v104 = vld [vmem:[%s1 + $0x130] sm:$0xf]
  %v105 = vld [vmem:[%s1 + $0x134] sm:$0xf]
  %v106 = vld [vmem:[%s1 + $0x138] sm:$0xf]
  %v107 = vld [vmem:[%s1 + $0x13c] sm:$0xf]
  %v108 = vld [vmem:[%s1 + $0x140] sm:$0xf]
  %v109 = vld [vmem:[%s1 + $0x144] sm:$0xf]
  %v110 = vld [vmem:[%s1 + $0x148] sm:$0xf]
  %v111 = vld [vmem:[%s1 + $0x14c] sm:$0xf]
  %v112 = vld [vmem:[%s1 + $0x150] sm:$0xf]
  %v113 = vld [vmem:[%s1 + $0x154] sm:$0xf]
  %v114 = vld [vmem:[%s1 + $0x158] sm:$0xf]
  %v115 = vld [vmem:[%s1 + $0x15c] sm:$0xf]
  %v116 = vld [vmem:[%s1 + $0x160] sm:$0xf]
  %v117 = vld [vmem:[%s1 + $0x164] sm:$0xf]
  %v118 = vld [vmem:[%s1 + $0x168] sm:$0xf]
  %v119 = vld [vmem:[%s1 + $0x16c] sm:$0xf]
  %v120 = vld [vmem:[%s1 + $0x170] sm:$0xf]
  %v121 = vld [vmem:[%s1 + $0x174] sm:$0xf]
  %v122 = vld [vmem:[%s1 + $0x178] sm:$0xf]
  %v123 = vld [vmem:[%s1 + $0x17c] sm:$0xf]
  %v124 = vld [vmem:[%s1 + $0x180] sm:$0xf]
  %v125 = vld [vmem:[%s1 + $0x184] sm:$0xf]
  %v126 = vld [vmem:[%s1 + $0x188] sm:$0xf]
  %v127 = vld [vmem:[%s1 + $0x18c] sm:$0xf]
  %v128 = vld [vmem:[%s1 + $0x190] sm:$0xf]
  %v129 = vld [vmem:[%s1 + $0x194] sm:$0xf]
  %v130 = vld [vmem:[%s1 + $0x198] sm:$0xf]
  %v131 = vld [vmem:[%s1 + $0x19c] sm:$0xf]
  %v132 = vld [vmem:[%s1 + $0x1a0] sm:$0xf]
  %v133 = vld [vmem:[%s1 + $0x1a4] sm:$0xf]
  %v134 = vld [vmem:[%s1 + $0x1a8] sm:$0xf]
  %v135 = vld [vmem:[%s1 + $0x1ac] sm:$0xf]
  %v136 = vld [vmem:[%s1 + $0x1b0] sm:$0xf]
  %v137 = vld [vmem:[%s1 + $0x1b4] sm:$0xf]
  %v138 = vld [vmem:[%s1 + $0x1b8] sm:$0xf]
  %v139 = vld [vmem:[%s1 + $0x1bc] sm:$0xf]
  %v140 = vld [vmem:[%s1 + $0x1c0] sm:$0xf]
  %v141 = vld [vmem:[%s1 + $0x1c4] sm:$0xf]
  %v142 = vld [vmem:[%s1 + $0x1c8] sm:$0xf]
  %v143 = vld [vmem:[%s1 + $0x1cc] sm:$0xf]
  %v144 = vld [vmem:[%s1 + $0x1d0] sm:$0xf]
  %v145 = vld [vmem:[%s1 + $0x1d4] sm:$0xf]
  %v146 = vld [vmem:[%s1 + $0x1d8] sm:$0xf]
  %v147 = vld [vmem:[%s1 + $0x1dc] sm:$0xf]
  %v148 = vld [vmem:[%s1 + $0x1e0] sm:$0xf]
  %v149 = vld [vmem:[%s1 + $0x1e4] sm:$0xf]
  %v150 = vld [vmem:[%s1 + $0x1e8] sm:$0xf]
  %v151 = vld [vmem:[%s1 + $0x1ec] sm:$0xf]
  %v152 = vld [vmem:[%s1 + $0x1f0] sm:$0xf]
  %v153 = vld [vmem:[%s1 + $0x1f4] sm:$0xf]
  %v154 = vld [vmem:[%s1 + $0x1f8] sm:$0xf]
  %v155 = vld [vmem:[%s1 + $0x1fc] sm:$0xf]
  %v156 = vld [vmem:[%s1 + $0x200] sm:$0xf]
  %v157 = vld [vmem:[%s1 + $0x204] sm:$0xf]
  %v158 = vld [vmem:[%s1 + $0x208] sm:$0xf]
  %v159 = vld [vmem:[%s1 + $0x20c] sm:$0xf]
  %v160 = vld [vmem:[%s1 + $0x210] sm:$0xf]
  %v161 = vld [vmem:[%s1 + $0x214] sm:$0xf]
  %v162 = vld [vmem:[%s1 + $0x218] sm:$0xf]
  %v163 = vld [vmem:[%s1 + $0x21c] sm:$0xf]
  %v164 = vld [vmem:[%s1 + $0x220] sm:$0xf]
  %v165 = vld [vmem:[%s1 + $0x224] sm:$0xf]
  %v166 = vld [vmem:[%s1 + $0x228] sm:$0xf]
  %v167 = vld [vmem:[%s1 + $0x22c] sm:$0xf]
  %v168 = vld [vmem:[%s1 + $0x230] sm:$0xf]
  %v169 = vld [vmem:[%s1 + $0x234] sm:$0xf]
  %v170 = vld [vmem:[%s1 + $0x238] sm:$0xf]
  %v171 = vld [vmem:[%s1 + $0x23c] sm:$0xf]
  %v172 = vld [vmem:[%s2] sm:$0x1]
  %v174 = vlaneseq
  %v175 = vshrl.u32 %v174, 7
  %v176 = vsub.s32 0, %v175
  %v177 = vrot.slane %v172, %v176
  %v184 = vunpack.c.l.b16 %v23
  %v185 = vunpack.c.h.b16 %v23
  %v186 = vunpack.c.l.b16 %v24
  %v187 = vunpack.c.h.b16 %v24
  %v188 = vunpack.c.l.b16 %v25
  %v189 = vunpack.c.h.b16 %v25
  %v190 = vunpack.c.l.b16 %v26
  %v191 = vunpack.c.h.b16 %v26
  %v192 = vunpack.c.l.b16 %v27
  %v193 = vpack.c.b16 %v184, %v184
  %v194 = vpack.c.b16 %v185, %v185
  %v195 = vpack.c.b16 %v186, %v186
  %v196 = vpack.c.b16 %v187, %v187
  %v197 = vpack.c.b16 %v188, %v188
  %v198 = vpack.c.b16 %v189, %v189
  %v199 = vpack.c.b16 %v190, %v190
  %v200 = vpack.c.b16 %v191, %v191
  %v201 = vpack.c.b16 %v192, %v192
  %v355 = vunpack.c.l.b16 %v28
  %v356 = vunpack.c.l.b16 %v29
  %v357 = vunpack.c.l.b16 %v30
  %v358 = vunpack.c.l.b16 %v31
  %v359 = vunpack.c.l.b16 %v32
  %v360 = vunpack.c.l.b16 %v33
  %v361 = vunpack.c.l.b16 %v34
  %v362 = vunpack.c.l.b16 %v35
  %v363 = vunpack.c.l.b16 %v36
  %v364 = vunpack.c.l.b16 %v37
  %v365 = vunpack.c.l.b16 %v38
  %v366 = vunpack.c.l.b16 %v39
  %v367 = vunpack.c.l.b16 %v40
  %v368 = vunpack.c.l.b16 %v41
  %v369 = vunpack.c.l.b16 %v42
  %v370 = vunpack.c.l.b16 %v43
  %v371 = vunpack.c.l.b16 %v44
  %v372 = vunpack.c.l.b16 %v45
  %v373 = vunpack.c.l.b16 %v46
  %v374 = vunpack.c.l.b16 %v47
  %v375 = vunpack.c.l.b16 %v48
  %v376 = vunpack.c.l.b16 %v49
  %v377 = vunpack.c.l.b16 %v50
  %v378 = vunpack.c.l.b16 %v51
  %v379 = vunpack.c.l.b16 %v52
  %v380 = vunpack.c.l.b16 %v53
  %v381 = vunpack.c.l.b16 %v54
  %v382 = vunpack.c.l.b16 %v55
  %v383 = vunpack.c.l.b16 %v56
  %v384 = vunpack.c.l.b16 %v57
  %v385 = vunpack.c.l.b16 %v58
  %v386 = vunpack.c.l.b16 %v59
  %v387 = vunpack.c.l.b16 %v60
  %v388 = vunpack.c.l.b16 %v61
  %v389 = vunpack.c.l.b16 %v62
  %v390 = vunpack.c.l.b16 %v63
  %v391 = vunpack.c.l.b16 %v64
  %v392 = vunpack.c.l.b16 %v65
  %v393 = vunpack.c.l.b16 %v66
  %v394 = vunpack.c.l.b16 %v67
  %v395 = vunpack.c.l.b16 %v68
  %v396 = vunpack.c.l.b16 %v69
  %v397 = vunpack.c.l.b16 %v70
  %v398 = vunpack.c.l.b16 %v71
  %v399 = vunpack.c.l.b16 %v72
  %v400 = vunpack.c.l.b16 %v73
  %v401 = vunpack.c.l.b16 %v74
  %v402 = vunpack.c.l.b16 %v75
  %v403 = vunpack.c.l.b16 %v76
  %v404 = vunpack.c.l.b16 %v77
  %v405 = vunpack.c.l.b16 %v78
  %v406 = vunpack.c.l.b16 %v79
  %v407 = vunpack.c.l.b16 %v80
  %v408 = vunpack.c.l.b16 %v81
  %v409 = vunpack.c.l.b16 %v82
  %v410 = vunpack.c.l.b16 %v83
  %v411 = vunpack.c.l.b16 %v84
  %v412 = vunpack.c.l.b16 %v85
  %v413 = vunpack.c.l.b16 %v86
  %v414 = vunpack.c.l.b16 %v87
  %v415 = vunpack.c.l.b16 %v88
  %v416 = vunpack.c.l.b16 %v89
  %v417 = vunpack.c.l.b16 %v90
  %v418 = vunpack.c.l.b16 %v91
  %v419 = vunpack.c.l.b16 %v92
  %v420 = vunpack.c.l.b16 %v93
  %v421 = vunpack.c.l.b16 %v94
  %v422 = vunpack.c.l.b16 %v95
  %v423 = vunpack.c.l.b16 %v96
  %v424 = vunpack.c.l.b16 %v97
  %v425 = vunpack.c.l.b16 %v98
  %v426 = vunpack.c.l.b16 %v99
  %v427 = vunpack.c.l.b16 %v100
  %v428 = vunpack.c.l.b16 %v101
  %v429 = vunpack.c.l.b16 %v102
  %v430 = vunpack.c.l.b16 %v103
  %v431 = vunpack.c.l.b16 %v104
  %v432 = vunpack.c.l.b16 %v105
  %v433 = vunpack.c.l.b16 %v106
  %v434 = vunpack.c.l.b16 %v107
  %v435 = vunpack.c.l.b16 %v108
  %v436 = vunpack.c.l.b16 %v109
  %v437 = vunpack.c.l.b16 %v110
  %v438 = vunpack.c.l.b16 %v111
  %v439 = vunpack.c.l.b16 %v112
  %v440 = vunpack.c.l.b16 %v113
  %v441 = vunpack.c.l.b16 %v114
  %v442 = vunpack.c.l.b16 %v115
  %v443 = vunpack.c.l.b16 %v116
  %v444 = vunpack.c.l.b16 %v117
  %v445 = vunpack.c.l.b16 %v118
  %v446 = vunpack.c.l.b16 %v119
  %v447 = vunpack.c.l.b16 %v120
  %v448 = vunpack.c.l.b16 %v121
  %v449 = vunpack.c.l.b16 %v122
  %v450 = vunpack.c.l.b16 %v123
  %v451 = vunpack.c.l.b16 %v124
  %v452 = vunpack.c.l.b16 %v125
  %v453 = vunpack.c.l.b16 %v126
  %v454 = vunpack.c.l.b16 %v127
  %v455 = vunpack.c.l.b16 %v128
  %v456 = vunpack.c.l.b16 %v129
  %v457 = vunpack.c.l.b16 %v130
  %v458 = vunpack.c.l.b16 %v131
  %v459 = vunpack.c.l.b16 %v132
  %v460 = vunpack.c.l.b16 %v133
  %v461 = vunpack.c.l.b16 %v134
  %v462 = vunpack.c.l.b16 %v135
  %v463 = vunpack.c.l.b16 %v136
  %v464 = vunpack.c.l.b16 %v137
  %v465 = vunpack.c.l.b16 %v138
  %v466 = vunpack.c.l.b16 %v139
  %v467 = vunpack.c.l.b16 %v140
  %v468 = vunpack.c.l.b16 %v141
  %v469 = vunpack.c.l.b16 %v142
  %v470 = vunpack.c.l.b16 %v143
  %v471 = vunpack.c.l.b16 %v144
  %v472 = vunpack.c.l.b16 %v145
  %v473 = vunpack.c.l.b16 %v146
  %v474 = vunpack.c.l.b16 %v147
  %v475 = vunpack.c.l.b16 %v148
  %v476 = vunpack.c.l.b16 %v149
  %v477 = vunpack.c.l.b16 %v150
  %v478 = vunpack.c.l.b16 %v151
  %v479 = vunpack.c.l.b16 %v152
  %v480 = vunpack.c.l.b16 %v153
  %v481 = vunpack.c.l.b16 %v154
  %v482 = vunpack.c.l.b16 %v155
  %v483 = vunpack.c.l.b16 %v156
  %v484 = vunpack.c.l.b16 %v157
  %v485 = vunpack.c.l.b16 %v158
  %v486 = vunpack.c.l.b16 %v159
  %v487 = vunpack.c.l.b16 %v160
  %v488 = vunpack.c.l.b16 %v161
  %v489 = vunpack.c.l.b16 %v162
  %v490 = vunpack.c.l.b16 %v163
  %v491 = vunpack.c.l.b16 %v164
  %v492 = vunpack.c.l.b16 %v165
  %v493 = vunpack.c.l.b16 %v166
  %v494 = vunpack.c.l.b16 %v167
  %v495 = vunpack.c.l.b16 %v168
  %v496 = vunpack.c.l.b16 %v169
  %v497 = vunpack.c.l.b16 %v170
  %v498 = vunpack.c.l.b16 %v171
  %v499 = vpack.c.b16 %v356, %v355
  %v500 = vpack.c.b16 %v358, %v357
  %v501 = vpack.c.b16 %v360, %v359
  %v502 = vpack.c.b16 %v362, %v361
  %v503 = vpack.c.b16 %v364, %v363
  %v504 = vpack.c.b16 %v366, %v365
  %v505 = vpack.c.b16 %v368, %v367
  %v506 = vpack.c.b16 %v370, %v369
  %v507 = vpack.c.b16 %v372, %v371
  %v508 = vpack.c.b16 %v374, %v373
  %v509 = vpack.c.b16 %v376, %v375
  %v510 = vpack.c.b16 %v378, %v377
  %v511 = vpack.c.b16 %v380, %v379
  %v512 = vpack.c.b16 %v382, %v381
  %v513 = vpack.c.b16 %v384, %v383
  %v514 = vpack.c.b16 %v386, %v385
  %v515 = vpack.c.b16 %v388, %v387
  %v516 = vpack.c.b16 %v390, %v389
  %v517 = vpack.c.b16 %v392, %v391
  %v518 = vpack.c.b16 %v394, %v393
  %v519 = vpack.c.b16 %v396, %v395
  %v520 = vpack.c.b16 %v398, %v397
  %v521 = vpack.c.b16 %v400, %v399
  %v522 = vpack.c.b16 %v402, %v401
  %v523 = vpack.c.b16 %v404, %v403
  %v524 = vpack.c.b16 %v406, %v405
  %v525 = vpack.c.b16 %v408, %v407
  %v526 = vpack.c.b16 %v410, %v409
  %v527 = vpack.c.b16 %v412, %v411
  %v528 = vpack.c.b16 %v414, %v413
  %v529 = vpack.c.b16 %v416, %v415
  %v530 = vpack.c.b16 %v418, %v417
  %v531 = vpack.c.b16 %v420, %v419
  %v532 = vpack.c.b16 %v422, %v421
  %v533 = vpack.c.b16 %v424, %v423
  %v534 = vpack.c.b16 %v426, %v425
  %v535 = vpack.c.b16 %v428, %v427
  %v536 = vpack.c.b16 %v430, %v429
  %v537 = vpack.c.b16 %v432, %v431
  %v538 = vpack.c.b16 %v434, %v433
  %v539 = vpack.c.b16 %v436, %v435
  %v540 = vpack.c.b16 %v438, %v437
  %v541 = vpack.c.b16 %v440, %v439
  %v542 = vpack.c.b16 %v442, %v441
  %v543 = vpack.c.b16 %v444, %v443
  %v544 = vpack.c.b16 %v446, %v445
  %v545 = vpack.c.b16 %v448, %v447
  %v546 = vpack.c.b16 %v450, %v449
  %v547 = vpack.c.b16 %v452, %v451
  %v548 = vpack.c.b16 %v454, %v453
  %v549 = vpack.c.b16 %v456, %v455
  %v550 = vpack.c.b16 %v458, %v457
  %v551 = vpack.c.b16 %v460, %v459
  %v552 = vpack.c.b16 %v462, %v461
  %v553 = vpack.c.b16 %v464, %v463
  %v554 = vpack.c.b16 %v466, %v465
  %v555 = vpack.c.b16 %v468, %v467
  %v556 = vpack.c.b16 %v470, %v469
  %v557 = vpack.c.b16 %v472, %v471
  %v558 = vpack.c.b16 %v474, %v473
  %v559 = vpack.c.b16 %v476, %v475
  %v560 = vpack.c.b16 %v478, %v477
  %v561 = vpack.c.b16 %v480, %v479
  %v562 = vpack.c.b16 %v482, %v481
  %v563 = vpack.c.b16 %v484, %v483
  %v564 = vpack.c.b16 %v486, %v485
  %v565 = vpack.c.b16 %v488, %v487
  %v566 = vpack.c.b16 %v490, %v489
  %v567 = vpack.c.b16 %v492, %v491
  %v568 = vpack.c.b16 %v494, %v493
  %v569 = vpack.c.b16 %v496, %v495
  %v570 = vpack.c.b16 %v498, %v497
  %643 = vmatprep.subr.bf16.mxu0 0
  %644 = vmatpush1.bf16.msra.mxu0 %v499
  %645 = vmatprep.subr.bf16.mxu0 0
  %646 = vmatpush1.bf16.msra.mxu0 %v500
  %647 = vmatprep.subr.bf16.mxu0 0
  %648 = vmatpush1.bf16.msra.mxu0 %v501
  %649 = vmatprep.subr.bf16.mxu0 0
  %650 = vmatpush1.bf16.msra.mxu0 %v502
  %651 = vmatprep.subr.bf16.mxu0 0
  %652 = vmatpush1.bf16.msra.mxu0 %v503
  %653 = vmatprep.subr.bf16.mxu0 0
  %654 = vmatpush1.bf16.msra.mxu0 %v504
  %655 = vmatprep.subr.bf16.mxu0 0
  %656 = vmatpush1.bf16.msra.mxu0 %v505
  %657 = vmatprep.subr.bf16.mxu0 0
  %658 = vmatpush1.bf16.msra.mxu0 %v506
  %659 = vmatprep.subr.bf16.mxu0 0
  %660 = vmatpush1.bf16.msra.mxu0 %v507
  %661 = vmatprep.subr.bf16.mxu0 0
  %662 = vmatpush1.bf16.msra.mxu0 %v508
  %663 = vmatprep.subr.bf16.mxu0 0
  %664 = vmatpush1.bf16.msra.mxu0 %v509
  %665 = vmatprep.subr.bf16.mxu0 0
  %666 = vmatpush1.bf16.msra.mxu0 %v510
  %667 = vmatprep.subr.bf16.mxu0 0
  %668 = vmatpush1.bf16.msra.mxu0 %v511
  %669 = vmatprep.subr.bf16.mxu0 0
  %670 = vmatpush1.bf16.msra.mxu0 %v512
  %671 = vmatprep.subr.bf16.mxu0 0
  %672 = vmatpush1.bf16.msra.mxu0 %v513
  %673 = vmatprep.subr.bf16.mxu0 0
  %674 = vmatpush1.bf16.msra.mxu0 %v514
  %675 = vmatprep.mubr.bf16.mxu0 %v194
  %676 = vmatmul.mubr.bf16.gmra.mrb[0].mxu0 %v193
  %v677 = vpop.f32.mrb[0].mxu0
  %v678 = vadd.f32 %v177, %v677
  %v679 = vpop.f32.mrb[0].mxu0
  %v680 = vpop.f32.mrb[0].mxu0
  %v681 = vpop.f32.mrb[0].mxu0
  %682 = vdwg.mxu0
  %683 = vmatprep.subr.bf16.mxu0 0
  %684 = vmatpush1.bf16.msra.mxu0 %v515
  %685 = vmatprep.subr.bf16.mxu0 0
  %686 = vmatpush1.bf16.msra.mxu0 %v516
  %687 = vmatprep.subr.bf16.mxu0 0
  %688 = vmatpush1.bf16.msra.mxu0 %v517
  %689 = vmatprep.subr.bf16.mxu0 0
  %690 = vmatpush1.bf16.msra.mxu0 %v518
  %691 = vmatprep.subr.bf16.mxu0 0
  %692 = vmatpush1.bf16.msra.mxu0 %v519
  %693 = vmatprep.subr.bf16.mxu0 0
  %694 = vmatpush1.bf16.msra.mxu0 %v520
  %695 = vmatprep.subr.bf16.mxu0 0
  %696 = vmatpush1.bf16.msra.mxu0 %v521
  %697 = vmatprep.subr.bf16.mxu0 0
  %698 = vmatpush1.bf16.msra.mxu0 %v522
  %699 = vmatprep.subr.bf16.mxu0 0
  %700 = vmatpush1.bf16.msra.mxu0 %v523
  %701 = vmatprep.subr.bf16.mxu0 0
  %702 = vmatpush1.bf16.msra.mxu0 %v524
  %703 = vmatprep.subr.bf16.mxu0 0
  %704 = vmatpush1.bf16.msra.mxu0 %v525
  %705 = vmatprep.subr.bf16.mxu0 0
  %706 = vmatpush1.bf16.msra.mxu0 %v526
  %707 = vmatprep.subr.bf16.mxu0 0
  %708 = vmatpush1.bf16.msra.mxu0 %v527
  %709 = vmatprep.subr.bf16.mxu0 0
  %710 = vmatpush1.bf16.msra.mxu0 %v528
  %711 = vmatprep.subr.bf16.mxu0 0
  %712 = vmatpush1.bf16.msra.mxu0 %v529
  %713 = vmatprep.subr.bf16.mxu0 0
  %714 = vmatpush1.bf16.msra.mxu0 %v530
  %715 = vmatprep.mubr.bf16.mxu0 %v196
  %716 = vmatmul.mubr.bf16.gmra.mrb[0].mxu0 %v195
  %v717 = vpop.f32.mrb[0].mxu0
  %v718 = vadd.f32 %v678, %v717
  %v719 = vpop.f32.mrb[0].mxu0
  %v720 = vpop.f32.mrb[0].mxu0
  %v721 = vpop.f32.mrb[0].mxu0
  %722 = vdwg.mxu0
  %723 = vmatprep.subr.bf16.mxu0 0
  %724 = vmatpush1.bf16.msra.mxu0 %v531
  %725 = vmatprep.subr.bf16.mxu0 0
  %726 = vmatpush1.bf16.msra.mxu0 %v532
  %727 = vmatprep.subr.bf16.mxu0 0
  %728 = vmatpush1.bf16.msra.mxu0 %v533
  %729 = vmatprep.subr.bf16.mxu0 0
  %730 = vmatpush1.bf16.msra.mxu0 %v534
  %731 = vmatprep.subr.bf16.mxu0 0
  %732 = vmatpush1.bf16.msra.mxu0 %v535
  %733 = vmatprep.subr.bf16.mxu0 0
  %734 = vmatpush1.bf16.msra.mxu0 %v536
  %735 = vmatprep.subr.bf16.mxu0 0
  %736 = vmatpush1.bf16.msra.mxu0 %v537
  %737 = vmatprep.subr.bf16.mxu0 0
  %738 = vmatpush1.bf16.msra.mxu0 %v538
  %739 = vmatprep.subr.bf16.mxu0 0
  %740 = vmatpush1.bf16.msra.mxu0 %v539
  %741 = vmatprep.subr.bf16.mxu0 0
  %742 = vmatpush1.bf16.msra.mxu0 %v540
  %743 = vmatprep.subr.bf16.mxu0 0
  %744 = vmatpush1.bf16.msra.mxu0 %v541
  %745 = vmatprep.subr.bf16.mxu0 0
  %746 = vmatpush1.bf16.msra.mxu0 %v542
  %747 = vmatprep.subr.bf16.mxu0 0
  %748 = vmatpush1.bf16.msra.mxu0 %v543
  %749 = vmatprep.subr.bf16.mxu0 0
  %750 = vmatpush1.bf16.msra.mxu0 %v544
  %751 = vmatprep.subr.bf16.mxu0 0
  %752 = vmatpush1.bf16.msra.mxu0 %v545
  %753 = vmatprep.subr.bf16.mxu0 0
  %754 = vmatpush1.bf16.msra.mxu0 %v546
  %755 = vmatprep.mubr.bf16.mxu0 %v198
  %756 = vmatmul.mubr.bf16.gmra.mrb[0].mxu0 %v197
  %v757 = vpop.f32.mrb[0].mxu0
  %v758 = vadd.f32 %v718, %v757
  %v759 = vpop.f32.mrb[0].mxu0
  %v760 = vpop.f32.mrb[0].mxu0
  %v761 = vpop.f32.mrb[0].mxu0
  %762 = vdwg.mxu0
  %763 = vmatprep.subr.bf16.mxu0 0
  %764 = vmatpush1.bf16.msra.mxu0 %v547
  %765 = vmatprep.subr.bf16.mxu0 0
  %766 = vmatpush1.bf16.msra.mxu0 %v548
  %767 = vmatprep.subr.bf16.mxu0 0
  %768 = vmatpush1.bf16.msra.mxu0 %v549
  %769 = vmatprep.subr.bf16.mxu0 0
  %770 = vmatpush1.bf16.msra.mxu0 %v550
  %771 = vmatprep.subr.bf16.mxu0 0
  %772 = vmatpush1.bf16.msra.mxu0 %v551
  %773 = vmatprep.subr.bf16.mxu0 0
  %774 = vmatpush1.bf16.msra.mxu0 %v552
  %775 = vmatprep.subr.bf16.mxu0 0
  %776 = vmatpush1.bf16.msra.mxu0 %v553
  %777 = vmatprep.subr.bf16.mxu0 0
  %778 = vmatpush1.bf16.msra.mxu0 %v554
  %779 = vmatprep.subr.bf16.mxu0 0
  %780 = vmatpush1.bf16.msra.mxu0 %v555
  %781 = vmatprep.subr.bf16.mxu0 0
  %782 = vmatpush1.bf16.msra.mxu0 %v556
  %783 = vmatprep.subr.bf16.mxu0 0
  %784 = vmatpush1.bf16.msra.mxu0 %v557
  %785 = vmatprep.subr.bf16.mxu0 0
  %786 = vmatpush1.bf16.msra.mxu0 %v558
  %787 = vmatprep.subr.bf16.mxu0 0
  %788 = vmatpush1.bf16.msra.mxu0 %v559
  %789 = vmatprep.subr.bf16.mxu0 0
  %790 = vmatpush1.bf16.msra.mxu0 %v560
  %791 = vmatprep.subr.bf16.mxu0 0
  %792 = vmatpush1.bf16.msra.mxu0 %v561
  %793 = vmatprep.subr.bf16.mxu0 0
  %794 = vmatpush1.bf16.msra.mxu0 %v562
  %795 = vmatprep.mubr.bf16.mxu0 %v200
  %796 = vmatmul.mubr.bf16.gmra.mrb[0].mxu0 %v199
  %v797 = vpop.f32.mrb[0].mxu0
  %v798 = vadd.f32 %v758, %v797
  %v799 = vpop.f32.mrb[0].mxu0
  %v800 = vpop.f32.mrb[0].mxu0
  %v801 = vpop.f32.mrb[0].mxu0
  %802 = vdwg.mxu0
  %803 = vmatprep.subr.bf16.mxu0 0
  %804 = vmatpush1.bf16.msra.mxu0 %v563
  %805 = vmatprep.subr.bf16.mxu0 0
  %806 = vmatpush1.bf16.msra.mxu0 %v564
  %807 = vmatprep.subr.bf16.mxu0 0
  %808 = vmatpush1.bf16.msra.mxu0 %v565
  %809 = vmatprep.subr.bf16.mxu0 0
  %810 = vmatpush1.bf16.msra.mxu0 %v566
  %811 = vmatprep.subr.bf16.mxu0 0
  %812 = vmatpush1.bf16.msra.mxu0 %v567
  %813 = vmatprep.subr.bf16.mxu0 0
  %814 = vmatpush1.bf16.msra.mxu0 %v568
  %815 = vmatprep.subr.bf16.mxu0 0
  %816 = vmatpush1.bf16.msra.mxu0 %v569
  %817 = vmatprep.subr.bf16.mxu0 0
  %818 = vmatpush1.bf16.msra.mxu0 %v570
  %819 = vmatprep.subr.bf16.mxu0 0
  %820 = vmatpush1.bf16.msra.mxu0 0
  %821 = vmatprep.subr.bf16.mxu0 0
  %822 = vmatpush1.bf16.msra.mxu0 0
  %823 = vmatprep.subr.bf16.mxu0 0
  %824 = vmatpush1.bf16.msra.mxu0 0
  %825 = vmatprep.subr.bf16.mxu0 0
  %826 = vmatpush1.bf16.msra.mxu0 0
  %827 = vmatprep.subr.bf16.mxu0 0
  %828 = vmatpush1.bf16.msra.mxu0 0
  %829 = vmatprep.subr.bf16.mxu0 0
  %830 = vmatpush1.bf16.msra.mxu0 0
  %831 = vmatprep.subr.bf16.mxu0 0
  %832 = vmatpush1.bf16.msra.mxu0 0
  %833 = vmatprep.subr.bf16.mxu0 0
  %834 = vmatpush1.bf16.msra.mxu0 0
  %835 = vmatprep.mubr.bf16.mxu0 0
  %836 = vmatmul.mubr.bf16.gmra.mrb[0].mxu0 %v201
  %v837 = vpop.f32.mrb[0].mxu0
  %v838 = vadd.f32 %v798, %v837
  %v839 = vpop.f32.mrb[0].mxu0
  %v840 = vpop.f32.mrb[0].mxu0
  %v841 = vpop.f32.mrb[0].mxu0
  %842 = vdwg.mxu0
  %v843 = vmax.f32 %v838, 0.0
  %v844 = vpack.c.bf16 %v843, %v843
  %845 = vst [vmem:[%s5] sm:$0xf] %v844
  %v846 = vld [vmem:[%s3] sm:$0xf]
  %v847 = vld [vmem:[%s3 + $0x4] sm:$0xf]
  %v848 = vld [vmem:[%s3 + $0x8] sm:$0xf]
  %v849 = vld [vmem:[%s3 + $0xc] sm:$0xf]
  %v850 = vld [vmem:[%s3 + $0x10] sm:$0xf]
  %v851 = vld [vmem:[%s3 + $0x14] sm:$0xf]
  %v852 = vld [vmem:[%s3 + $0x18] sm:$0xf]
  %v853 = vld [vmem:[%s3 + $0x1c] sm:$0xf]
  %v854 = vld [vmem:[%s3 + $0x20] sm:$0xf]
  %v855 = vld [vmem:[%s3 + $0x24] sm:$0xf]
  %v856 = vld [vmem:[%s3 + $0x28] sm:$0xf]
  %v857 = vld [vmem:[%s3 + $0x2c] sm:$0xf]
  %v858 = vld [vmem:[%s3 + $0x30] sm:$0xf]
  %v859 = vld [vmem:[%s3 + $0x34] sm:$0xf]
  %v860 = vld [vmem:[%s3 + $0x38] sm:$0xf]
  %v861 = vld [vmem:[%s3 + $0x3c] sm:$0xf]
  %v862 = vld [vmem:[%s4] sm:$0x1]
  %v864 = vlaneseq
  %v865 = vshrl.u32 %v864, 7
  %v866 = vsub.s32 0, %v865
  %v867 = vrot.slane %v862, %v866
  %v885 = vunpack.c.l.b16 %v846
  %v886 = vunpack.c.l.b16 %v847
  %v887 = vunpack.c.l.b16 %v848
  %v888 = vunpack.c.l.b16 %v849
  %v889 = vunpack.c.l.b16 %v850
  %v890 = vunpack.c.l.b16 %v851
  %v891 = vunpack.c.l.b16 %v852
  %v892 = vunpack.c.l.b16 %v853
  %v893 = vunpack.c.l.b16 %v854
  %v894 = vunpack.c.l.b16 %v855
  %v895 = vunpack.c.l.b16 %v856
  %v896 = vunpack.c.l.b16 %v857
  %v897 = vunpack.c.l.b16 %v858
  %v898 = vunpack.c.l.b16 %v859
  %v899 = vunpack.c.l.b16 %v860
  %v900 = vunpack.c.l.b16 %v861
  %v901 = vpack.c.b16 %v886, %v885
  %v902 = vpack.c.b16 %v888, %v887
  %v903 = vpack.c.b16 %v890, %v889
  %v904 = vpack.c.b16 %v892, %v891
  %v905 = vpack.c.b16 %v894, %v893
  %v906 = vpack.c.b16 %v896, %v895
  %v907 = vpack.c.b16 %v898, %v897
  %v908 = vpack.c.b16 %v900, %v899
  %917 = vmatprep.subr.bf16.mxu0 0
  %918 = vmatpush1.bf16.msra.mxu0 %v901
  %919 = vmatprep.subr.bf16.mxu0 0
  %920 = vmatpush1.bf16.msra.mxu0 %v902
  %921 = vmatprep.subr.bf16.mxu0 0
  %922 = vmatpush1.bf16.msra.mxu0 %v903
  %923 = vmatprep.subr.bf16.mxu0 0
  %924 = vmatpush1.bf16.msra.mxu0 %v904
  %925 = vmatprep.subr.bf16.mxu0 0
  %926 = vmatpush1.bf16.msra.mxu0 %v905
  %927 = vmatprep.subr.bf16.mxu0 0
  %928 = vmatpush1.bf16.msra.mxu0 %v906
  %929 = vmatprep.subr.bf16.mxu0 0
  %930 = vmatpush1.bf16.msra.mxu0 %v907
  %931 = vmatprep.subr.bf16.mxu0 0
  %932 = vmatpush1.bf16.msra.mxu0 %v908
  %933 = vmatprep.subr.bf16.mxu0 0
  %934 = vmatpush1.bf16.msra.mxu0 0
  %935 = vmatprep.subr.bf16.mxu0 0
  %936 = vmatpush1.bf16.msra.mxu0 0
  %937 = vmatprep.subr.bf16.mxu0 0
  %938 = vmatpush1.bf16.msra.mxu0 0
  %939 = vmatprep.subr.bf16.mxu0 0
  %940 = vmatpush1.bf16.msra.mxu0 0
  %941 = vmatprep.subr.bf16.mxu0 0
  %942 = vmatpush1.bf16.msra.mxu0 0
  %943 = vmatprep.subr.bf16.mxu0 0
  %944 = vmatpush1.bf16.msra.mxu0 0
  %945 = vmatprep.subr.bf16.mxu0 0
  %946 = vmatpush1.bf16.msra.mxu0 0
  %947 = vmatprep.subr.bf16.mxu0 0
  %948 = vmatpush1.bf16.msra.mxu0 0
  %949 = vmatprep.mubr.bf16.mxu0 0
  %950 = vmatmul.mubr.bf16.gmra.mrb[0].mxu0 %v25
  %v951 = vpop.f32.mrb[0].mxu0
  %v952 = vadd.f32 %v867, %v951
  %v953 = vpop.f32.mrb[0].mxu0
  %v954 = vpop.f32.mrb[0].mxu0
  %v955 = vpop.f32.mrb[0].mxu0
  %956 = vdwg.mxu0
  %v957 = vpack.c.bf16 %v952, %v952
  %958 = vst [vmem:[%s6] sm:$0xf] %v957
  // Predicated region
  $region22: #{_lambda_.18} parent=0 // pred_check
    _
  $region23: #{_lambda_.18} parent=0 // pred_check_branch
    %960 = sbr.rel (0) target = $region25
  $region24: #{_lambda_.18} parent=0 // pred_region
    _
  $region25: #{_lambda_.18} parent=0 // pred_fallthru
    _
  // Predicated region
  $region26: #{_lambda_.18} parent=0 // pred_check
    _
  $region27: #{_lambda_.18} parent=0 // pred_check_branch
    %962 = sbr.rel (0) target = $region29
  $region28: #{_lambda_.18} parent=0 // pred_region
    _
  $region29: #{_lambda_.18} parent=0 // pred_fallthru
    _
  // Predicated region
  $region30: #{_lambda_.18} parent=0 // pred_check
    _
  $region31: #{_lambda_.18} parent=0 // pred_check_branch
    %964 = sbr.rel (0) target = $region33
  $region32: #{_lambda_.18} parent=0 // pred_region
    _
  $region33: #{_lambda_.18} parent=0 // pred_fallthru
    _
  // Predicated region
  $region34: #{_lambda_.18} parent=0 // pred_check
    _
  $region35: #{_lambda_.18} parent=0 // pred_check_branch
    %966 = sbr.rel (0) target = $region37
  $region36: #{_lambda_.18} parent=0 // pred_region
    _
  $region37: #{_lambda_.18} parent=0 // pred_fallthru
    _

// kernel: _lambda_.22
$region0: #{_lambda_.22}
  #allocation0 [shape = 'u32[]', space=smem, size = 0x4, offset = 0x4, fixed_abs, tag = 'smem constant byte address 0x4 - core index']
  #allocation1 [shape = 'u32[144,128]{1,0:T(1,128)}', space=vmem, size = 0x12000, scoped, tag = 'internal scratch']
  %s0 = inlined_call_operand.vmem [shape: bf16[2,1,1,9,128], index: 0, kind: input, shape index: {}, may-alias: {0,5}]
  %s1 = inlined_call_operand.vmem [shape: bf16[2,1152], index: 1, kind: input, shape index: {}]
  %s2 = inlined_call_operand.vmem [shape: bf16[1152,128], index: 2, kind: input, shape index: {}]
  %s3 = inlined_call_operand.vmem [shape: f32[1,128], index: 3, kind: input, shape index: {}]
  %s4 = inlined_call_operand.vmem [shape: bf16[128,128], index: 4, kind: input, shape index: {}]
  %s5 = inlined_call_operand.vmem [shape: bf16[2,1,1,9,128], index: 5, kind: output, shape index: {0}, may-alias: {0,5}]
  %s6 = inlined_call_operand.vmem [shape: bf16[2,128], index: 6, kind: output, shape index: {1}]
  %7 = xla_tuple %s5, %s6
  %s8 = scalar_lea.vmem %s5, 4
  %s9 = sld [smem:[#allocation0]]
  $region68: #{_lambda_.22} parent=0
    _
  %s11 = ssub.s32 1, %s9
  %s12 = scalar_select 0, %s11, %s9
  $region1: #{_lambda_.22} parent=0
    #allocation2 [shape = 'u8[512]{0}', space=vmem, size = 0x400, scoped, tag = 'output window, operand 0, single buffered']
    // Predicated region
    $region2: #{_lambda_.22} parent=1 // pred_check
      _
    $region3: #{_lambda_.22} parent=1 // pred_check_branch
      %14 = sbr.rel (0) target = $region5
    $region4: #{_lambda_.22} parent=1 // pred_region
      _
    $region5: #{_lambda_.22} parent=1 // pred_fallthru
      _
    // Predicated region
    $region6: #{_lambda_.22} parent=1 // pred_check
      _
    $region7: #{_lambda_.22} parent=1 // pred_check_branch
      %16 = sbr.rel (0) target = $region9
    $region8: #{_lambda_.22} parent=1 // pred_region
      _
    $region9: #{_lambda_.22} parent=1 // pred_fallthru
      _
    // Predicated region
    $region10: #{_lambda_.22} parent=1 // pred_check
      _
    $region11: #{_lambda_.22} parent=1 // pred_check_branch
      %18 = sbr.rel (0) target = $region13
    $region12: #{_lambda_.22} parent=1 // pred_region
      _
    $region13: #{_lambda_.22} parent=1 // pred_fallthru
      _
    // Predicated region
    $region14: #{_lambda_.22} parent=1 // pred_check
      _
    $region15: #{_lambda_.22} parent=1 // pred_check_branch
      %20 = sbr.rel (0) target = $region17
    $region16: #{_lambda_.22} parent=1 // pred_region
      _
    $region17: #{_lambda_.22} parent=1 // pred_fallthru
      _
    // Predicated region
    $region18: #{_lambda_.22} parent=1 // pred_check
      _
    $region19: #{_lambda_.22} parent=1 // pred_check_branch
      %22 = sbr.rel (0) target = $region21
    $region20: #{_lambda_.22} parent=1 // pred_region
      _
    $region21: #{_lambda_.22} parent=1 // pred_fallthru
      _
    %v24 = vld [vmem:[%s1] sm:$0xff]
    %v25 = vld [vmem:[%s1 + $0x8] sm:$0x1]
    %v26 = vld [vmem:[%s2] sm:$0xff]
    %v27 = vld [vmem:[%s2 + $0x8] sm:$0xff]
    %v28 = vld [vmem:[%s2 + $0x10] sm:$0xff]
    %v29 = vld [vmem:[%s2 + $0x18] sm:$0xff]
    %v30 = vld [vmem:[%s2 + $0x20] sm:$0xff]
    %v31 = vld [vmem:[%s2 + $0x28] sm:$0xff]
    %v32 = vld [vmem:[%s2 + $0x30] sm:$0xff]
    %v33 = vld [vmem:[%s2 + $0x38] sm:$0xff]
    %v34 = vld [vmem:[%s2 + $0x40] sm:$0xff]
    %v35 = vld [vmem:[%s2 + $0x48] sm:$0xff]
    %v36 = vld [vmem:[%s2 + $0x50] sm:$0xff]
    %v37 = vld [vmem:[%s2 + $0x58] sm:$0xff]
    %v38 = vld [vmem:[%s2 + $0x60] sm:$0xff]
    %v39 = vld [vmem:[%s2 + $0x68] sm:$0xff]
    %v40 = vld [vmem:[%s2 + $0x70] sm:$0xff]
    %v41 = vld [vmem:[%s2 + $0x78] sm:$0xff]
    %v42 = vld [vmem:[%s2 + $0x80] sm:$0xff]
    %v43 = vld [vmem:[%s2 + $0x88] sm:$0xff]
    %v44 = vld [vmem:[%s2 + $0x90] sm:$0xff]
    %v45 = vld [vmem:[%s2 + $0x98] sm:$0xff]
    %v46 = vld [vmem:[%s2 + $0xa0] sm:$0xff]
    %v47 = vld [vmem:[%s2 + $0xa8] sm:$0xff]
    %v48 = vld [vmem:[%s2 + $0xb0] sm:$0xff]
    %v49 = vld [vmem:[%s2 + $0xb8] sm:$0xff]
    %v50 = vld [vmem:[%s2 + $0xc0] sm:$0xff]
    %v51 = vld [vmem:[%s2 + $0xc8] sm:$0xff]
    %v52 = vld [vmem:[%s2 + $0xd0] sm:$0xff]
    %v53 = vld [vmem:[%s2 + $0xd8] sm:$0xff]
    %v54 = vld [vmem:[%s2 + $0xe0] sm:$0xff]
    %v55 = vld [vmem:[%s2 + $0xe8] sm:$0xff]
    %v56 = vld [vmem:[%s2 + $0xf0] sm:$0xff]
    %v57 = vld [vmem:[%s2 + $0xf8] sm:$0xff]
    %v58 = vld [vmem:[%s2 + $0x100] sm:$0xff]
    %v59 = vld [vmem:[%s2 + $0x108] sm:$0xff]
    %v60 = vld [vmem:[%s2 + $0x110] sm:$0xff]
    %v61 = vld [vmem:[%s2 + $0x118] sm:$0xff]
    %v62 = vld [vmem:[%s2 + $0x120] sm:$0xff]
    %v63 = vld [vmem:[%s2 + $0x128] sm:$0xff]
    %v64 = vld [vmem:[%s2 + $0x130] sm:$0xff]
    %v65 = vld [vmem:[%s2 + $0x138] sm:$0xff]
    %v66 = vld [vmem:[%s2 + $0x140] sm:$0xff]
    %v67 = vld [vmem:[%s2 + $0x148] sm:$0xff]
    %v68 = vld [vmem:[%s2 + $0x150] sm:$0xff]
    %v69 = vld [vmem:[%s2 + $0x158] sm:$0xff]
    %v70 = vld [vmem:[%s2 + $0x160] sm:$0xff]
    %v71 = vld [vmem:[%s2 + $0x168] sm:$0xff]
    %v72 = vld [vmem:[%s2 + $0x170] sm:$0xff]
    %v73 = vld [vmem:[%s2 + $0x178] sm:$0xff]
    %v74 = vld [vmem:[%s2 + $0x180] sm:$0xff]
    %v75 = vld [vmem:[%s2 + $0x188] sm:$0xff]
    %v76 = vld [vmem:[%s2 + $0x190] sm:$0xff]
    %v77 = vld [vmem:[%s2 + $0x198] sm:$0xff]
    %v78 = vld [vmem:[%s2 + $0x1a0] sm:$0xff]
    %v79 = vld [vmem:[%s2 + $0x1a8] sm:$0xff]
    %v80 = vld [vmem:[%s2 + $0x1b0] sm:$0xff]
    %v81 = vld [vmem:[%s2 + $0x1b8] sm:$0xff]
    %v82 = vld [vmem:[%s2 + $0x1c0] sm:$0xff]
    %v83 = vld [vmem:[%s2 + $0x1c8] sm:$0xff]
    %v84 = vld [vmem:[%s2 + $0x1d0] sm:$0xff]
    %v85 = vld [vmem:[%s2 + $0x1d8] sm:$0xff]
    %v86 = vld [vmem:[%s2 + $0x1e0] sm:$0xff]
    %v87 = vld [vmem:[%s2 + $0x1e8] sm:$0xff]
    %v88 = vld [vmem:[%s2 + $0x1f0] sm:$0xff]
    %v89 = vld [vmem:[%s2 + $0x1f8] sm:$0xff]
    %v90 = vld [vmem:[%s2 + $0x200] sm:$0xff]
    %v91 = vld [vmem:[%s2 + $0x208] sm:$0xff]
    %v92 = vld [vmem:[%s2 + $0x210] sm:$0xff]
    %v93 = vld [vmem:[%s2 + $0x218] sm:$0xff]
    %v94 = vld [vmem:[%s2 + $0x220] sm:$0xff]
    %v95 = vld [vmem:[%s2 + $0x228] sm:$0xff]
    %v96 = vld [vmem:[%s2 + $0x230] sm:$0xff]
    %v97 = vld [vmem:[%s2 + $0x238] sm:$0xff]
    %v98 = vld [vmem:[%s3] sm:$0x1]
    %v100 = vlaneseq
    %v101 = vshrl.u32 %v100, 7
    %v102 = vsub.s32 0, %v101
    %v103 = vrot.slane %v98, %v102
    %v107 = vcombine.high %v24, %v24
    %v109 = vunpack.c.l.s4 1966171168
    %v110 = vunpack.c.0.s8 %v109
    %v111 = vlaneseq
    %v112 = vshrl.u32 %v111, 7
    %v113 = vsub.s32 %v110, %v112
    %v114 = vrot.slane %v24, %v113
    %v116 = vunpack.c.l.s4 1966171168
    %v117 = vunpack.c.0.s8 %v116
    %v118 = vlaneseq
    %v119 = vshrl.u32 %v118, 7
    %v120 = vsub.s32 %v117, %v119
    %v121 = vrot.slane %v107, %v120
    %v122 = vcombine.high %v114, %v114
    %v123 = vcombine.high %v121, %v121
    %v125 = vunpack.c.l.s4 1966171168
    %v126 = vunpack.c.0.s8 %v125
    %v127 = vlaneseq
    %v128 = vshrl.u32 %v127, 7
    %v129 = vsub.s32 %v126, %v128
    %v130 = vrot.slane %v114, %v129
    %v132 = vunpack.c.l.s4 1966171168
    %v133 = vunpack.c.0.s8 %v132
    %v134 = vlaneseq
    %v135 = vshrl.u32 %v134, 7
    %v136 = vsub.s32 %v133, %v135
    %v137 = vrot.slane %v121, %v136
    %v139 = vunpack.c.l.s4 1966171168
    %v140 = vunpack.c.0.s8 %v139
    %v141 = vlaneseq
    %v142 = vshrl.u32 %v141, 7
    %v143 = vsub.s32 %v140, %v142
    %v144 = vrot.slane %v122, %v143
    %v146 = vunpack.c.l.s4 1966171168
    %v147 = vunpack.c.0.s8 %v146
    %v148 = vlaneseq
    %v149 = vshrl.u32 %v148, 7
    %v150 = vsub.s32 %v147, %v149
    %v151 = vrot.slane %v123, %v150
    %v152 = vcombine.high %v130, %v130
    %v153 = vcombine.high %v137, %v137
    %v154 = vcombine.high %v144, %v144
    %v155 = vcombine.high %v151, %v151
    %v157 = vunpack.c.l.s4 1966171168
    %v158 = vunpack.c.0.s8 %v157
    %v159 = vlaneseq
    %v160 = vshrl.u32 %v159, 7
    %v161 = vsub.s32 %v158, %v160
    %v162 = vrot.slane %v25, %v161
    %v164 = vunpack.c.l.s4 1966171168
    %v165 = vunpack.c.0.s8 %v164
    %v166 = vlaneseq
    %v167 = vshrl.u32 %v166, 7
    %v168 = vsub.s32 %v165, %v167
    %v169 = vrot.slane %v162, %v168
    %179 = vmatprep.subr.bf16.mxu0 0
    %180 = vmatpush1.bf16.msra.mxu0 %v26
    %181 = vmatprep.subr.bf16.mxu0 0
    %182 = vmatpush1.bf16.msra.mxu0 %v27
    %183 = vmatprep.subr.bf16.mxu0 0
    %184 = vmatpush1.bf16.msra.mxu0 %v28
    %185 = vmatprep.subr.bf16.mxu0 0
    %186 = vmatpush1.bf16.msra.mxu0 %v29
    %187 = vmatprep.subr.bf16.mxu0 0
    %188 = vmatpush1.bf16.msra.mxu0 %v30
    %189 = vmatprep.subr.bf16.mxu0 0
    %190 = vmatpush1.bf16.msra.mxu0 %v31
    %191 = vmatprep.subr.bf16.mxu0 0
    %192 = vmatpush1.bf16.msra.mxu0 %v32
    %193 = vmatprep.subr.bf16.mxu0 0
    %194 = vmatpush1.bf16.msra.mxu0 %v33
    %195 = vmatprep.subr.bf16.mxu0 0
    %196 = vmatpush1.bf16.msra.mxu0 %v34
    %197 = vmatprep.subr.bf16.mxu0 0
    %198 = vmatpush1.bf16.msra.mxu0 %v35
    %199 = vmatprep.subr.bf16.mxu0 0
    %200 = vmatpush1.bf16.msra.mxu0 %v36
    %201 = vmatprep.subr.bf16.mxu0 0
    %202 = vmatpush1.bf16.msra.mxu0 %v37
    %203 = vmatprep.subr.bf16.mxu0 0
    %204 = vmatpush1.bf16.msra.mxu0 %v38
    %205 = vmatprep.subr.bf16.mxu0 0
    %206 = vmatpush1.bf16.msra.mxu0 %v39
    %207 = vmatprep.subr.bf16.mxu0 0
    %208 = vmatpush1.bf16.msra.mxu0 %v40
    %209 = vmatprep.subr.bf16.mxu0 0
    %210 = vmatpush1.bf16.msra.mxu0 %v41
    %211 = vmatprep.mubr.bf16.mxu0 %v144
    %212 = vmatmul.mubr.bf16.gmra.mrb[0].mxu0 %v130
    %v213 = vpop.f32.mrb[0].mxu0
    %v214 = vadd.f32 %v103, %v213
    %v215 = vpop.f32.mrb[0].mxu0
    %v216 = vpop.f32.mrb[0].mxu0
    %v217 = vpop.f32.mrb[0].mxu0
    %218 = vdwg.mxu0
    %219 = vmatprep.subr.bf16.mxu0 0
    %220 = vmatpush1.bf16.msra.mxu0 %v42
    %221 = vmatprep.subr.bf16.mxu0 0
    %222 = vmatpush1.bf16.msra.mxu0 %v43
    %223 = vmatprep.subr.bf16.mxu0 0
    %224 = vmatpush1.bf16.msra.mxu0 %v44
    %225 = vmatprep.subr.bf16.mxu0 0
    %226 = vmatpush1.bf16.msra.mxu0 %v45
    %227 = vmatprep.subr.bf16.mxu0 0
    %228 = vmatpush1.bf16.msra.mxu0 %v46
    %229 = vmatprep.subr.bf16.mxu0 0
    %230 = vmatpush1.bf16.msra.mxu0 %v47
    %231 = vmatprep.subr.bf16.mxu0 0
    %232 = vmatpush1.bf16.msra.mxu0 %v48
    %233 = vmatprep.subr.bf16.mxu0 0
    %234 = vmatpush1.bf16.msra.mxu0 %v49
    %235 = vmatprep.subr.bf16.mxu0 0
    %236 = vmatpush1.bf16.msra.mxu0 %v50
    %237 = vmatprep.subr.bf16.mxu0 0
    %238 = vmatpush1.bf16.msra.mxu0 %v51
    %239 = vmatprep.subr.bf16.mxu0 0
    %240 = vmatpush1.bf16.msra.mxu0 %v52
    %241 = vmatprep.subr.bf16.mxu0 0
    %242 = vmatpush1.bf16.msra.mxu0 %v53
    %243 = vmatprep.subr.bf16.mxu0 0
    %244 = vmatpush1.bf16.msra.mxu0 %v54
    %245 = vmatprep.subr.bf16.mxu0 0
    %246 = vmatpush1.bf16.msra.mxu0 %v55
    %247 = vmatprep.subr.bf16.mxu0 0
    %248 = vmatpush1.bf16.msra.mxu0 %v56
    %249 = vmatprep.subr.bf16.mxu0 0
    %250 = vmatpush1.bf16.msra.mxu0 %v57
    %251 = vmatprep.mubr.bf16.mxu0 %v154
    %252 = vmatmul.mubr.bf16.gmra.mrb[0].mxu0 %v152
    %v253 = vpop.f32.mrb[0].mxu0
    %v254 = vadd.f32 %v214, %v253
    %v255 = vpop.f32.mrb[0].mxu0
    %v256 = vpop.f32.mrb[0].mxu0
    %v257 = vpop.f32.mrb[0].mxu0
    %258 = vdwg.mxu0
    %259 = vmatprep.subr.bf16.mxu0 0
    %260 = vmatpush1.bf16.msra.mxu0 %v58
    %261 = vmatprep.subr.bf16.mxu0 0
    %262 = vmatpush1.bf16.msra.mxu0 %v59
    %263 = vmatprep.subr.bf16.mxu0 0
    %264 = vmatpush1.bf16.msra.mxu0 %v60
    %265 = vmatprep.subr.bf16.mxu0 0
    %266 = vmatpush1.bf16.msra.mxu0 %v61
    %267 = vmatprep.subr.bf16.mxu0 0
    %268 = vmatpush1.bf16.msra.mxu0 %v62
    %269 = vmatprep.subr.bf16.mxu0 0
    %270 = vmatpush1.bf16.msra.mxu0 %v63
    %271 = vmatprep.subr.bf16.mxu0 0
    %272 = vmatpush1.bf16.msra.mxu0 %v64
    %273 = vmatprep.subr.bf16.mxu0 0
    %274 = vmatpush1.bf16.msra.mxu0 %v65
    %275 = vmatprep.subr.bf16.mxu0 0
    %276 = vmatpush1.bf16.msra.mxu0 %v66
    %277 = vmatprep.subr.bf16.mxu0 0
    %278 = vmatpush1.bf16.msra.mxu0 %v67
    %279 = vmatprep.subr.bf16.mxu0 0
    %280 = vmatpush1.bf16.msra.mxu0 %v68
    %281 = vmatprep.subr.bf16.mxu0 0
    %282 = vmatpush1.bf16.msra.mxu0 %v69
    %283 = vmatprep.subr.bf16.mxu0 0
    %284 = vmatpush1.bf16.msra.mxu0 %v70
    %285 = vmatprep.subr.bf16.mxu0 0
    %286 = vmatpush1.bf16.msra.mxu0 %v71
    %287 = vmatprep.subr.bf16.mxu0 0
    %288 = vmatpush1.bf16.msra.mxu0 %v72
    %289 = vmatprep.subr.bf16.mxu0 0
    %290 = vmatpush1.bf16.msra.mxu0 %v73
    %291 = vmatprep.mubr.bf16.mxu0 %v151
    %292 = vmatmul.mubr.bf16.gmra.mrb[0].mxu0 %v137
    %v293 = vpop.f32.mrb[0].mxu0
    %v294 = vadd.f32 %v254, %v293
    %v295 = vpop.f32.mrb[0].mxu0
    %v296 = vpop.f32.mrb[0].mxu0
    %v297 = vpop.f32.mrb[0].mxu0
    %298 = vdwg.mxu0
    %299 = vmatprep.subr.bf16.mxu0 0
    %300 = vmatpush1.bf16.msra.mxu0 %v74
    %301 = vmatprep.subr.bf16.mxu0 0
    %302 = vmatpush1.bf16.msra.mxu0 %v75
    %303 = vmatprep.subr.bf16.mxu0 0
    %304 = vmatpush1.bf16.msra.mxu0 %v76
    %305 = vmatprep.subr.bf16.mxu0 0
    %306 = vmatpush1.bf16.msra.mxu0 %v77
    %307 = vmatprep.subr.bf16.mxu0 0
    %308 = vmatpush1.bf16.msra.mxu0 %v78
    %309 = vmatprep.subr.bf16.mxu0 0
    %310 = vmatpush1.bf16.msra.mxu0 %v79
    %311 = vmatprep.subr.bf16.mxu0 0
    %312 = vmatpush1.bf16.msra.mxu0 %v80
    %313 = vmatprep.subr.bf16.mxu0 0
    %314 = vmatpush1.bf16.msra.mxu0 %v81
    %315 = vmatprep.subr.bf16.mxu0 0
    %316 = vmatpush1.bf16.msra.mxu0 %v82
    %317 = vmatprep.subr.bf16.mxu0 0
    %318 = vmatpush1.bf16.msra.mxu0 %v83
    %319 = vmatprep.subr.bf16.mxu0 0
    %320 = vmatpush1.bf16.msra.mxu0 %v84
    %321 = vmatprep.subr.bf16.mxu0 0
    %322 = vmatpush1.bf16.msra.mxu0 %v85
    %323 = vmatprep.subr.bf16.mxu0 0
    %324 = vmatpush1.bf16.msra.mxu0 %v86
    %325 = vmatprep.subr.bf16.mxu0 0
    %326 = vmatpush1.bf16.msra.mxu0 %v87
    %327 = vmatprep.subr.bf16.mxu0 0
    %328 = vmatpush1.bf16.msra.mxu0 %v88
    %329 = vmatprep.subr.bf16.mxu0 0
    %330 = vmatpush1.bf16.msra.mxu0 %v89
    %331 = vmatprep.mubr.bf16.mxu0 %v155
    %332 = vmatmul.mubr.bf16.gmra.mrb[0].mxu0 %v153
    %v333 = vpop.f32.mrb[0].mxu0
    %v334 = vadd.f32 %v294, %v333
    %v335 = vpop.f32.mrb[0].mxu0
    %v336 = vpop.f32.mrb[0].mxu0
    %v337 = vpop.f32.mrb[0].mxu0
    %338 = vdwg.mxu0
    %339 = vmatprep.subr.bf16.mxu0 0
    %340 = vmatpush1.bf16.msra.mxu0 %v90
    %341 = vmatprep.subr.bf16.mxu0 0
    %342 = vmatpush1.bf16.msra.mxu0 %v91
    %343 = vmatprep.subr.bf16.mxu0 0
    %344 = vmatpush1.bf16.msra.mxu0 %v92
    %345 = vmatprep.subr.bf16.mxu0 0
    %346 = vmatpush1.bf16.msra.mxu0 %v93
    %347 = vmatprep.subr.bf16.mxu0 0
    %348 = vmatpush1.bf16.msra.mxu0 %v94
    %349 = vmatprep.subr.bf16.mxu0 0
    %350 = vmatpush1.bf16.msra.mxu0 %v95
    %351 = vmatprep.subr.bf16.mxu0 0
    %352 = vmatpush1.bf16.msra.mxu0 %v96
    %353 = vmatprep.subr.bf16.mxu0 0
    %354 = vmatpush1.bf16.msra.mxu0 %v97
    %355 = vmatprep.subr.bf16.mxu0 0
    %356 = vmatpush1.bf16.msra.mxu0 0
    %357 = vmatprep.subr.bf16.mxu0 0
    %358 = vmatpush1.bf16.msra.mxu0 0
    %359 = vmatprep.subr.bf16.mxu0 0
    %360 = vmatpush1.bf16.msra.mxu0 0
    %361 = vmatprep.subr.bf16.mxu0 0
    %362 = vmatpush1.bf16.msra.mxu0 0
    %363 = vmatprep.subr.bf16.mxu0 0
    %364 = vmatpush1.bf16.msra.mxu0 0
    %365 = vmatprep.subr.bf16.mxu0 0
    %366 = vmatpush1.bf16.msra.mxu0 0
    %367 = vmatprep.subr.bf16.mxu0 0
    %368 = vmatpush1.bf16.msra.mxu0 0
    %369 = vmatprep.subr.bf16.mxu0 0
    %370 = vmatpush1.bf16.msra.mxu0 0
    %371 = vmatprep.mubr.bf16.mxu0 0
    %372 = vmatmul.mubr.bf16.gmra.mrb[0].mxu0 %v169
    %v373 = vpop.f32.mrb[0].mxu0
    %v374 = vadd.f32 %v334, %v373
    %v375 = vpop.f32.mrb[0].mxu0
    %v376 = vpop.f32.mrb[0].mxu0
    %v377 = vpop.f32.mrb[0].mxu0
    %378 = vdwg.mxu0
    %v379 = vmax.f32 %v374, 0.0
    %v380 = vpack.c.bf16 %v379, %v379
    %381 = vst [vmem:[#allocation2] sm:$0x1] %v380
    %v382 = vld [vmem:[%s4] sm:$0xff]
    %v383 = vld [vmem:[%s4 + $0x8] sm:$0xff]
    %v384 = vld [vmem:[%s4 + $0x10] sm:$0xff]
    %v385 = vld [vmem:[%s4 + $0x18] sm:$0xff]
    %v386 = vld [vmem:[%s4 + $0x20] sm:$0xff]
    %v387 = vld [vmem:[%s4 + $0x28] sm:$0xff]
    %v388 = vld [vmem:[%s4 + $0x30] sm:$0xff]
    %v389 = vld [vmem:[%s4 + $0x38] sm:$0xff]
    %v390 = vld [vmem:[%s3] sm:$0x1]
    %v392 = vlaneseq
    %v393 = vshrl.u32 %v392, 7
    %v394 = vsub.s32 0, %v393
    %v395 = vrot.slane %v390, %v394
    %397 = vmatprep.subr.bf16.mxu0 0
    %398 = vmatpush1.bf16.msra.mxu0 %v382
    %399 = vmatprep.subr.bf16.mxu0 0
    %400 = vmatpush1.bf16.msra.mxu0 %v383
    %401 = vmatprep.subr.bf16.mxu0 0
    %402 = vmatpush1.bf16.msra.mxu0 %v384
    %403 = vmatprep.subr.bf16.mxu0 0
    %404 = vmatpush1.bf16.msra.mxu0 %v385
    %405 = vmatprep.subr.bf16.mxu0 0
    %406 = vmatpush1.bf16.msra.mxu0 %v386
    %407 = vmatprep.subr.bf16.mxu0 0
    %408 = vmatpush1.bf16.msra.mxu0 %v387
    %409 = vmatprep.subr.bf16.mxu0 0
    %410 = vmatpush1.bf16.msra.mxu0 %v388
    %411 = vmatprep.subr.bf16.mxu0 0
    %412 = vmatpush1.bf16.msra.mxu0 %v389
    %413 = vmatprep.subr.bf16.mxu0 0
    %414 = vmatpush1.bf16.msra.mxu0 0
    %415 = vmatprep.subr.bf16.mxu0 0
    %416 = vmatpush1.bf16.msra.mxu0 0
    %417 = vmatprep.subr.bf16.mxu0 0
    %418 = vmatpush1.bf16.msra.mxu0 0
    %419 = vmatprep.subr.bf16.mxu0 0
    %420 = vmatpush1.bf16.msra.mxu0 0
    %421 = vmatprep.subr.bf16.mxu0 0
    %422 = vmatpush1.bf16.msra.mxu0 0
    %423 = vmatprep.subr.bf16.mxu0 0
    %424 = vmatpush1.bf16.msra.mxu0 0
    %425 = vmatprep.subr.bf16.mxu0 0
    %426 = vmatpush1.bf16.msra.mxu0 0
    %427 = vmatprep.subr.bf16.mxu0 0
    %428 = vmatpush1.bf16.msra.mxu0 0
    %429 = vmatprep.mubr.bf16.mxu0 0
    %430 = vmatmul.mubr.bf16.gmra.mrb[0].mxu0 %v137
    %v431 = vpop.f32.mrb[0].mxu0
    %v432 = vadd.f32 %v395, %v431
    %v433 = vpop.f32.mrb[0].mxu0
    %v434 = vpop.f32.mrb[0].mxu0
    %v435 = vpop.f32.mrb[0].mxu0
    %436 = vdwg.mxu0
    %v437 = vpack.c.bf16 %v432, %v432
    %438 = vst [vmem:[%s6] sm:$0x1] %v437
    // Predicated region
    $region22: #{_lambda_.22} parent=1 // pred_check
      _
    $region23: #{_lambda_.22} parent=1 // pred_check_branch
      %440 = sbr.rel (0) target = $region25
    $region24: #{_lambda_.22} parent=1 // pred_region
      // Predicated region
      $region26: #{_lambda_.22} parent=24 // pred_check
        _
      $region27: #{_lambda_.22} parent=24 // pred_check_branch
        %442 = sbr.rel (0) target = $region29
      $region28: #{_lambda_.22} parent=24 // pred_region
        // Predicated region
        $region30: #{_lambda_.22} parent=28 // pred_check
          _
        $region31: #{_lambda_.22} parent=28 // pred_check_branch
          %444 = sbr.rel target = $region33
        $region32: #{_lambda_.22} parent=28 // pred_region
          // Predicated region
          $region45: #{_lambda_.22} parent=32 // pred_check
            _
          $region46: #{_lambda_.22} parent=32 // pred_check_branch
            %459 = sbr.rel (0) target = $region48
          $region47: #{_lambda_.22} parent=32 // pred_region
            loop: start=0, step=1, limit=1
            $region49: #{_lambda_.22} parent=47 // loop_pre_header
              _
            $region50: #{_lambda_.22} parent=47 // loop_header
              %s462 = sphi 0, %s466
              %p463 = scmp.ge.s32.totalorder %s462, 1
              %s467 = sphi [#allocation2], [#allocation2]
              %s468 = sphi %s8, %s8
            $region51: #{_lambda_.22} parent=47 // loop_header_branch
              %465 = sbr.rel (%p463) target = $region55
            $region52: #{_lambda_.22} parent=47 // loop_body
              %v469 = vld [vmem:[%s467] sm:$0x1]
              %470 = vst [vmem:[%s468] sm:$0x1] %v469
            $region53: #{_lambda_.22} parent=47 // loop_footer
              %s466 = sadd.s32 1, %s462
            $region54: #{_lambda_.22} parent=47 // loop_footer_branch
              %461 = sbr.rel target = $region50
            $region55: #{_lambda_.22} parent=47 // loop_exit
              _
          $region48: #{_lambda_.22} parent=32 // pred_fallthru
            _
        $region33: #{_lambda_.22} parent=28 // pred_fallthru
          _
        // Predicated region
        $region34: #{_lambda_.22} parent=28 // pred_check
          _
        $region35: #{_lambda_.22} parent=28 // pred_check_branch
          %446 = sbr.rel (0) target = $region37
        $region36: #{_lambda_.22} parent=28 // pred_region
          loop: start=0, step=1, limit=1
          $region38: #{_lambda_.22} parent=36 // loop_pre_header
            _
          $region39: #{_lambda_.22} parent=36 // loop_header
            %s449 = sphi 0, %s453
            %p450 = scmp.ge.s32.totalorder %s449, 1
            %s454 = sphi [#allocation2], [#allocation2]
            %s455 = sphi %s8, %s8
          $region40: #{_lambda_.22} parent=36 // loop_header_branch
            %452 = sbr.rel (%p450) target = $region44
          $region41: #{_lambda_.22} parent=36 // loop_body
            %v456 = vld [vmem:[%s454] sm:$0x1]
            %457 = vst [vmem:[%s455] sm:$0x1] %v456
          $region42: #{_lambda_.22} parent=36 // loop_footer
            %s453 = sadd.s32 1, %s449
          $region43: #{_lambda_.22} parent=36 // loop_footer_branch
            %448 = sbr.rel target = $region39
          $region44: #{_lambda_.22} parent=36 // loop_exit
            _
        $region37: #{_lambda_.22} parent=28 // pred_fallthru
          _
      $region29: #{_lambda_.22} parent=24 // pred_fallthru
        _
      %471 = vnop
    $region25: #{_lambda_.22} parent=1 // pred_fallthru
      _
    // Predicated region
    $region56: #{_lambda_.22} parent=1 // pred_check
      _
    $region57: #{_lambda_.22} parent=1 // pred_check_branch
      %473 = sbr.rel (0) target = $region59
    $region58: #{_lambda_.22} parent=1 // pred_region
      _
    $region59: #{_lambda_.22} parent=1 // pred_fallthru
      _
    // Predicated region
    $region60: #{_lambda_.22} parent=1 // pred_check
      _
    $region61: #{_lambda_.22} parent=1 // pred_check_branch
      %475 = sbr.rel (0) target = $region63
    $region62: #{_lambda_.22} parent=1 // pred_region
      _
    $region63: #{_lambda_.22} parent=1 // pred_fallthru
      _
    // Predicated region
    $region64: #{_lambda_.22} parent=1 // pred_check
      _
    $region65: #{_lambda_.22} parent=1 // pred_check_branch
      %477 = sbr.rel (0) target = $region67
    $region66: #{_lambda_.22} parent=1 // pred_region
      _
    $region67: #{_lambda_.22} parent=1 // pred_fallthru
      _

// kernel: _lambda_.19
$region0: #{_lambda_.19}
  #allocation0 [shape = 'u32[]', space=smem, size = 0x4, offset = 0x4, fixed_abs, tag = 'smem constant byte address 0x4 - core index']
  #allocation1 [shape = 'u32[144,128]{1,0:T(1,128)}', space=vmem, size = 0x12000, scoped, tag = 'internal scratch']
  %s0 = inlined_call_operand.vmem [shape: bf16[8,1152], index: 0, kind: input, shape index: {}]
  %s1 = inlined_call_operand.vmem [shape: bf16[1152,128], index: 1, kind: input, shape index: {}]
  %s2 = inlined_call_operand.vmem [shape: f32[1,128], index: 2, kind: input, shape index: {}]
  %s3 = inlined_call_operand.vmem [shape: bf16[8,128], index: 3, kind: input, shape index: {}]
  %s4 = inlined_call_operand.vmem [shape: bf16[8,128], index: 4, kind: output, shape index: {}]
  %s5 = sld [smem:[#allocation0]]
  $region26: #{_lambda_.19} parent=0
    _
  %s7 = ssub.s32 1, %s5
  %s8 = scalar_select 0, %s7, %s5
  // Predicated region
  $region2: #{_lambda_.19} parent=0 // pred_check
    _
  $region3: #{_lambda_.19} parent=0 // pred_check_branch
    %10 = sbr.rel (0) target = $region5
  $region4: #{_lambda_.19} parent=0 // pred_region
    _
  $region5: #{_lambda_.19} parent=0 // pred_fallthru
    _
  // Predicated region
  $region6: #{_lambda_.19} parent=0 // pred_check
    _
  $region7: #{_lambda_.19} parent=0 // pred_check_branch
    %12 = sbr.rel (0) target = $region9
  $region8: #{_lambda_.19} parent=0 // pred_region
    _
  $region9: #{_lambda_.19} parent=0 // pred_fallthru
    _
  // Predicated region
  $region10: #{_lambda_.19} parent=0 // pred_check
    _
  $region11: #{_lambda_.19} parent=0 // pred_check_branch
    %14 = sbr.rel (0) target = $region13
  $region12: #{_lambda_.19} parent=0 // pred_region
    _
  $region13: #{_lambda_.19} parent=0 // pred_fallthru
    _
  // Predicated region
  $region14: #{_lambda_.19} parent=0 // pred_check
    _
  $region15: #{_lambda_.19} parent=0 // pred_check_branch
    %16 = sbr.rel (0) target = $region17
  $region16: #{_lambda_.19} parent=0 // pred_region
    _
  $region17: #{_lambda_.19} parent=0 // pred_fallthru
    _
  %v18 = vld [vmem:[%s0] sm:$0xff]
  %v19 = vld [vmem:[%s0 + $0x8] sm:$0xff]
  %v20 = vld [vmem:[%s0 + $0x10] sm:$0xff]
  %v21 = vld [vmem:[%s0 + $0x18] sm:$0xff]
  %v22 = vld [vmem:[%s0 + $0x20] sm:$0xf]
  %v23 = vld [vmem:[%s1] sm:$0xf]
  %v24 = vld [vmem:[%s1 + $0x4] sm:$0xf]
  %v25 = vld [vmem:[%s1 + $0x8] sm:$0xf]
  %v26 = vld [vmem:[%s1 + $0xc] sm:$0xf]
  %v27 = vld [vmem:[%s1 + $0x10] sm:$0xf]
  %v28 = vld [vmem:[%s1 + $0x14] sm:$0xf]
  %v29 = vld [vmem:[%s1 + $0x18] sm:$0xf]
  %v30 = vld [vmem:[%s1 + $0x1c] sm:$0xf]
  %v31 = vld [vmem:[%s1 + $0x20] sm:$0xf]
  %v32 = vld [vmem:[%s1 + $0x24] sm:$0xf]
  %v33 = vld [vmem:[%s1 + $0x28] sm:$0xf]
  %v34 = vld [vmem:[%s1 + $0x2c] sm:$0xf]
  %v35 = vld [vmem:[%s1 + $0x30] sm:$0xf]
  %v36 = vld [vmem:[%s1 + $0x34] sm:$0xf]
  %v37 = vld [vmem:[%s1 + $0x38] sm:$0xf]
  %v38 = vld [vmem:[%s1 + $0x3c] sm:$0xf]
  %v39 = vld [vmem:[%s1 + $0x40] sm:$0xf]
  %v40 = vld [vmem:[%s1 + $0x44] sm:$0xf]
  %v41 = vld [vmem:[%s1 + $0x48] sm:$0xf]
  %v42 = vld [vmem:[%s1 + $0x4c] sm:$0xf]
  %v43 = vld [vmem:[%s1 + $0x50] sm:$0xf]
  %v44 = vld [vmem:[%s1 + $0x54] sm:$0xf]
  %v45 = vld [vmem:[%s1 + $0x58] sm:$0xf]
  %v46 = vld [vmem:[%s1 + $0x5c] sm:$0xf]
  %v47 = vld [vmem:[%s1 + $0x60] sm:$0xf]
  %v48 = vld [vmem:[%s1 + $0x64] sm:$0xf]
  %v49 = vld [vmem:[%s1 + $0x68] sm:$0xf]
  %v50 = vld [vmem:[%s1 + $0x6c] sm:$0xf]
  %v51 = vld [vmem:[%s1 + $0x70] sm:$0xf]
  %v52 = vld [vmem:[%s1 + $0x74] sm:$0xf]
  %v53 = vld [vmem:[%s1 + $0x78] sm:$0xf]
  %v54 = vld [vmem:[%s1 + $0x7c] sm:$0xf]
  %v55 = vld [vmem:[%s1 + $0x80] sm:$0xf]
  %v56 = vld [vmem:[%s1 + $0x84] sm:$0xf]
  %v57 = vld [vmem:[%s1 + $0x88] sm:$0xf]
  %v58 = vld [vmem:[%s1 + $0x8c] sm:$0xf]
  %v59 = vld [vmem:[%s1 + $0x90] sm:$0xf]
  %v60 = vld [vmem:[%s1 + $0x94] sm:$0xf]
  %v61 = vld [vmem:[%s1 + $0x98] sm:$0xf]
  %v62 = vld [vmem:[%s1 + $0x9c] sm:$0xf]
  %v63 = vld [vmem:[%s1 + $0xa0] sm:$0xf]
  %v64 = vld [vmem:[%s1 + $0xa4] sm:$0xf]
  %v65 = vld [vmem:[%s1 + $0xa8] sm:$0xf]
  %v66 = vld [vmem:[%s1 + $0xac] sm:$0xf]
  %v67 = vld [vmem:[%s1 + $0xb0] sm:$0xf]
  %v68 = vld [vmem:[%s1 + $0xb4] sm:$0xf]
  %v69 = vld [vmem:[%s1 + $0xb8] sm:$0xf]
  %v70 = vld [vmem:[%s1 + $0xbc] sm:$0xf]
  %v71 = vld [vmem:[%s1 + $0xc0] sm:$0xf]
  %v72 = vld [vmem:[%s1 + $0xc4] sm:$0xf]
  %v73 = vld [vmem:[%s1 + $0xc8] sm:$0xf]
  %v74 = vld [vmem:[%s1 + $0xcc] sm:$0xf]
  %v75 = vld [vmem:[%s1 + $0xd0] sm:$0xf]
  %v76 = vld [vmem:[%s1 + $0xd4] sm:$0xf]
  %v77 = vld [vmem:[%s1 + $0xd8] sm:$0xf]
  %v78 = vld [vmem:[%s1 + $0xdc] sm:$0xf]
  %v79 = vld [vmem:[%s1 + $0xe0] sm:$0xf]
  %v80 = vld [vmem:[%s1 + $0xe4] sm:$0xf]
  %v81 = vld [vmem:[%s1 + $0xe8] sm:$0xf]
  %v82 = vld [vmem:[%s1 + $0xec] sm:$0xf]
  %v83 = vld [vmem:[%s1 + $0xf0] sm:$0xf]
  %v84 = vld [vmem:[%s1 + $0xf4] sm:$0xf]
  %v85 = vld [vmem:[%s1 + $0xf8] sm:$0xf]
  %v86 = vld [vmem:[%s1 + $0xfc] sm:$0xf]
  %v87 = vld [vmem:[%s1 + $0x100] sm:$0xf]
  %v88 = vld [vmem:[%s1 + $0x104] sm:$0xf]
  %v89 = vld [vmem:[%s1 + $0x108] sm:$0xf]
  %v90 = vld [vmem:[%s1 + $0x10c] sm:$0xf]
  %v91 = vld [vmem:[%s1 + $0x110] sm:$0xf]
  %v92 = vld [vmem:[%s1 + $0x114] sm:$0xf]
  %v93 = vld [vmem:[%s1 + $0x118] sm:$0xf]
  %v94 = vld [vmem:[%s1 + $0x11c] sm:$0xf]
  %v95 = vld [vmem:[%s1 + $0x120] sm:$0xf]
  %v96 = vld [vmem:[%s1 + $0x124] sm:$0xf]
  %v97 = vld [vmem:[%s1 + $0x128] sm:$0xf]
  %v98 = vld [vmem:[%s1 + $0x12c] sm:$0xf]
  %v99 = vld [vmem:[%s1 + $0x130] sm:$0xf]
  %v100 = vld [vmem:[%s1 + $0x134] sm:$0xf]
  %v101 = vld [vmem:[%s1 + $0x138] sm:$0xf]
  %v102 = vld [vmem:[%s1 + $0x13c] sm:$0xf]
  %v103 = vld [vmem:[%s1 + $0x140] sm:$0xf]
  %v104 = vld [vmem:[%s1 + $0x144] sm:$0xf]
  %v105 = vld [vmem:[%s1 + $0x148] sm:$0xf]
  %v106 = vld [vmem:[%s1 + $0x14c] sm:$0xf]
  %v107 = vld [vmem:[%s1 + $0x150] sm:$0xf]
  %v108 = vld [vmem:[%s1 + $0x154] sm:$0xf]
  %v109 = vld [vmem:[%s1 + $0x158] sm:$0xf]
  %v110 = vld [vmem:[%s1 + $0x15c] sm:$0xf]
  %v111 = vld [vmem:[%s1 + $0x160] sm:$0xf]
  %v112 = vld [vmem:[%s1 + $0x164] sm:$0xf]
  %v113 = vld [vmem:[%s1 + $0x168] sm:$0xf]
  %v114 = vld [vmem:[%s1 + $0x16c] sm:$0xf]
  %v115 = vld [vmem:[%s1 + $0x170] sm:$0xf]
  %v116 = vld [vmem:[%s1 + $0x174] sm:$0xf]
  %v117 = vld [vmem:[%s1 + $0x178] sm:$0xf]
  %v118 = vld [vmem:[%s1 + $0x17c] sm:$0xf]
  %v119 = vld [vmem:[%s1 + $0x180] sm:$0xf]
  %v120 = vld [vmem:[%s1 + $0x184] sm:$0xf]
  %v121 = vld [vmem:[%s1 + $0x188] sm:$0xf]
  %v122 = vld [vmem:[%s1 + $0x18c] sm:$0xf]
  %v123 = vld [vmem:[%s1 + $0x190] sm:$0xf]
  %v124 = vld [vmem:[%s1 + $0x194] sm:$0xf]
  %v125 = vld [vmem:[%s1 + $0x198] sm:$0xf]
  %v126 = vld [vmem:[%s1 + $0x19c] sm:$0xf]
  %v127 = vld [vmem:[%s1 + $0x1a0] sm:$0xf]
  %v128 = vld [vmem:[%s1 + $0x1a4] sm:$0xf]
  %v129 = vld [vmem:[%s1 + $0x1a8] sm:$0xf]
  %v130 = vld [vmem:[%s1 + $0x1ac] sm:$0xf]
  %v131 = vld [vmem:[%s1 + $0x1b0] sm:$0xf]
  %v132 = vld [vmem:[%s1 + $0x1b4] sm:$0xf]
  %v133 = vld [vmem:[%s1 + $0x1b8] sm:$0xf]
  %v134 = vld [vmem:[%s1 + $0x1bc] sm:$0xf]
  %v135 = vld [vmem:[%s1 + $0x1c0] sm:$0xf]
  %v136 = vld [vmem:[%s1 + $0x1c4] sm:$0xf]
  %v137 = vld [vmem:[%s1 + $0x1c8] sm:$0xf]
  %v138 = vld [vmem:[%s1 + $0x1cc] sm:$0xf]
  %v139 = vld [vmem:[%s1 + $0x1d0] sm:$0xf]
  %v140 = vld [vmem:[%s1 + $0x1d4] sm:$0xf]
  %v141 = vld [vmem:[%s1 + $0x1d8] sm:$0xf]
  %v142 = vld [vmem:[%s1 + $0x1dc] sm:$0xf]
  %v143 = vld [vmem:[%s1 + $0x1e0] sm:$0xf]
  %v144 = vld [vmem:[%s1 + $0x1e4] sm:$0xf]
  %v145 = vld [vmem:[%s1 + $0x1e8] sm:$0xf]
  %v146 = vld [vmem:[%s1 + $0x1ec] sm:$0xf]
  %v147 = vld [vmem:[%s1 + $0x1f0] sm:$0xf]
  %v148 = vld [vmem:[%s1 + $0x1f4] sm:$0xf]
  %v149 = vld [vmem:[%s1 + $0x1f8] sm:$0xf]
  %v150 = vld [vmem:[%s1 + $0x1fc] sm:$0xf]
  %v151 = vld [vmem:[%s1 + $0x200] sm:$0xf]
  %v152 = vld [vmem:[%s1 + $0x204] sm:$0xf]
  %v153 = vld [vmem:[%s1 + $0x208] sm:$0xf]
  %v154 = vld [vmem:[%s1 + $0x20c] sm:$0xf]
  %v155 = vld [vmem:[%s1 + $0x210] sm:$0xf]
  %v156 = vld [vmem:[%s1 + $0x214] sm:$0xf]
  %v157 = vld [vmem:[%s1 + $0x218] sm:$0xf]
  %v158 = vld [vmem:[%s1 + $0x21c] sm:$0xf]
  %v159 = vld [vmem:[%s1 + $0x220] sm:$0xf]
  %v160 = vld [vmem:[%s1 + $0x224] sm:$0xf]
  %v161 = vld [vmem:[%s1 + $0x228] sm:$0xf]
  %v162 = vld [vmem:[%s1 + $0x22c] sm:$0xf]
  %v163 = vld [vmem:[%s1 + $0x230] sm:$0xf]
  %v164 = vld [vmem:[%s1 + $0x234] sm:$0xf]
  %v165 = vld [vmem:[%s1 + $0x238] sm:$0xf]
  %v166 = vld [vmem:[%s1 + $0x23c] sm:$0xf]
  %v167 = vld [vmem:[%s2] sm:$0x1]
  %v169 = vlaneseq
  %v170 = vshrl.u32 %v169, 7
  %v171 = vsub.s32 0, %v170
  %v172 = vrot.slane %v167, %v171
  %v179 = vunpack.c.l.b16 %v18
  %v180 = vunpack.c.h.b16 %v18
  %v181 = vunpack.c.l.b16 %v19
  %v182 = vunpack.c.h.b16 %v19
  %v183 = vunpack.c.l.b16 %v20
  %v184 = vunpack.c.h.b16 %v20
  %v185 = vunpack.c.l.b16 %v21
  %v186 = vunpack.c.h.b16 %v21
  %v187 = vunpack.c.l.b16 %v22
  %v188 = vpack.c.b16 %v179, %v179
  %v189 = vpack.c.b16 %v180, %v180
  %v190 = vpack.c.b16 %v181, %v181
  %v191 = vpack.c.b16 %v182, %v182
  %v192 = vpack.c.b16 %v183, %v183
  %v193 = vpack.c.b16 %v184, %v184
  %v194 = vpack.c.b16 %v185, %v185
  %v195 = vpack.c.b16 %v186, %v186
  %v196 = vpack.c.b16 %v187, %v187
  %v350 = vunpack.c.l.b16 %v23
  %v351 = vunpack.c.l.b16 %v24
  %v352 = vunpack.c.l.b16 %v25
  %v353 = vunpack.c.l.b16 %v26
  %v354 = vunpack.c.l.b16 %v27
  %v355 = vunpack.c.l.b16 %v28
  %v356 = vunpack.c.l.b16 %v29
  %v357 = vunpack.c.l.b16 %v30
  %v358 = vunpack.c.l.b16 %v31
  %v359 = vunpack.c.l.b16 %v32
  %v360 = vunpack.c.l.b16 %v33
  %v361 = vunpack.c.l.b16 %v34
  %v362 = vunpack.c.l.b16 %v35
  %v363 = vunpack.c.l.b16 %v36
  %v364 = vunpack.c.l.b16 %v37
  %v365 = vunpack.c.l.b16 %v38
  %v366 = vunpack.c.l.b16 %v39
  %v367 = vunpack.c.l.b16 %v40
  %v368 = vunpack.c.l.b16 %v41
  %v369 = vunpack.c.l.b16 %v42
  %v370 = vunpack.c.l.b16 %v43
  %v371 = vunpack.c.l.b16 %v44
  %v372 = vunpack.c.l.b16 %v45
  %v373 = vunpack.c.l.b16 %v46
  %v374 = vunpack.c.l.b16 %v47
  %v375 = vunpack.c.l.b16 %v48
  %v376 = vunpack.c.l.b16 %v49
  %v377 = vunpack.c.l.b16 %v50
  %v378 = vunpack.c.l.b16 %v51
  %v379 = vunpack.c.l.b16 %v52
  %v380 = vunpack.c.l.b16 %v53
  %v381 = vunpack.c.l.b16 %v54
  %v382 = vunpack.c.l.b16 %v55
  %v383 = vunpack.c.l.b16 %v56
  %v384 = vunpack.c.l.b16 %v57
  %v385 = vunpack.c.l.b16 %v58
  %v386 = vunpack.c.l.b16 %v59
  %v387 = vunpack.c.l.b16 %v60
  %v388 = vunpack.c.l.b16 %v61
  %v389 = vunpack.c.l.b16 %v62
  %v390 = vunpack.c.l.b16 %v63
  %v391 = vunpack.c.l.b16 %v64
  %v392 = vunpack.c.l.b16 %v65
  %v393 = vunpack.c.l.b16 %v66
  %v394 = vunpack.c.l.b16 %v67
  %v395 = vunpack.c.l.b16 %v68
  %v396 = vunpack.c.l.b16 %v69
  %v397 = vunpack.c.l.b16 %v70
  %v398 = vunpack.c.l.b16 %v71
  %v399 = vunpack.c.l.b16 %v72
  %v400 = vunpack.c.l.b16 %v73
  %v401 = vunpack.c.l.b16 %v74
  %v402 = vunpack.c.l.b16 %v75
  %v403 = vunpack.c.l.b16 %v76
  %v404 = vunpack.c.l.b16 %v77
  %v405 = vunpack.c.l.b16 %v78
  %v406 = vunpack.c.l.b16 %v79
  %v407 = vunpack.c.l.b16 %v80
  %v408 = vunpack.c.l.b16 %v81
  %v409 = vunpack.c.l.b16 %v82
  %v410 = vunpack.c.l.b16 %v83
  %v411 = vunpack.c.l.b16 %v84
  %v412 = vunpack.c.l.b16 %v85
  %v413 = vunpack.c.l.b16 %v86
  %v414 = vunpack.c.l.b16 %v87
  %v415 = vunpack.c.l.b16 %v88
  %v416 = vunpack.c.l.b16 %v89
  %v417 = vunpack.c.l.b16 %v90
  %v418 = vunpack.c.l.b16 %v91
  %v419 = vunpack.c.l.b16 %v92
  %v420 = vunpack.c.l.b16 %v93
  %v421 = vunpack.c.l.b16 %v94
  %v422 = vunpack.c.l.b16 %v95
  %v423 = vunpack.c.l.b16 %v96
  %v424 = vunpack.c.l.b16 %v97
  %v425 = vunpack.c.l.b16 %v98
  %v426 = vunpack.c.l.b16 %v99
  %v427 = vunpack.c.l.b16 %v100
  %v428 = vunpack.c.l.b16 %v101
  %v429 = vunpack.c.l.b16 %v102
  %v430 = vunpack.c.l.b16 %v103
  %v431 = vunpack.c.l.b16 %v104
  %v432 = vunpack.c.l.b16 %v105
  %v433 = vunpack.c.l.b16 %v106
  %v434 = vunpack.c.l.b16 %v107
  %v435 = vunpack.c.l.b16 %v108
  %v436 = vunpack.c.l.b16 %v109
  %v437 = vunpack.c.l.b16 %v110
  %v438 = vunpack.c.l.b16 %v111
  %v439 = vunpack.c.l.b16 %v112
  %v440 = vunpack.c.l.b16 %v113
  %v441 = vunpack.c.l.b16 %v114
  %v442 = vunpack.c.l.b16 %v115
  %v443 = vunpack.c.l.b16 %v116
  %v444 = vunpack.c.l.b16 %v117
  %v445 = vunpack.c.l.b16 %v118
  %v446 = vunpack.c.l.b16 %v119
  %v447 = vunpack.c.l.b16 %v120
  %v448 = vunpack.c.l.b16 %v121
  %v449 = vunpack.c.l.b16 %v122
  %v450 = vunpack.c.l.b16 %v123
  %v451 = vunpack.c.l.b16 %v124
  %v452 = vunpack.c.l.b16 %v125
  %v453 = vunpack.c.l.b16 %v126
  %v454 = vunpack.c.l.b16 %v127
  %v455 = vunpack.c.l.b16 %v128
  %v456 = vunpack.c.l.b16 %v129
  %v457 = vunpack.c.l.b16 %v130
  %v458 = vunpack.c.l.b16 %v131
  %v459 = vunpack.c.l.b16 %v132
  %v460 = vunpack.c.l.b16 %v133
  %v461 = vunpack.c.l.b16 %v134
  %v462 = vunpack.c.l.b16 %v135
  %v463 = vunpack.c.l.b16 %v136
  %v464 = vunpack.c.l.b16 %v137
  %v465 = vunpack.c.l.b16 %v138
  %v466 = vunpack.c.l.b16 %v139
  %v467 = vunpack.c.l.b16 %v140
  %v468 = vunpack.c.l.b16 %v141
  %v469 = vunpack.c.l.b16 %v142
  %v470 = vunpack.c.l.b16 %v143
  %v471 = vunpack.c.l.b16 %v144
  %v472 = vunpack.c.l.b16 %v145
  %v473 = vunpack.c.l.b16 %v146
  %v474 = vunpack.c.l.b16 %v147
  %v475 = vunpack.c.l.b16 %v148
  %v476 = vunpack.c.l.b16 %v149
  %v477 = vunpack.c.l.b16 %v150
  %v478 = vunpack.c.l.b16 %v151
  %v479 = vunpack.c.l.b16 %v152
  %v480 = vunpack.c.l.b16 %v153
  %v481 = vunpack.c.l.b16 %v154
  %v482 = vunpack.c.l.b16 %v155
  %v483 = vunpack.c.l.b16 %v156
  %v484 = vunpack.c.l.b16 %v157
  %v485 = vunpack.c.l.b16 %v158
  %v486 = vunpack.c.l.b16 %v159
  %v487 = vunpack.c.l.b16 %v160
  %v488 = vunpack.c.l.b16 %v161
  %v489 = vunpack.c.l.b16 %v162
  %v490 = vunpack.c.l.b16 %v163
  %v491 = vunpack.c.l.b16 %v164
  %v492 = vunpack.c.l.b16 %v165
  %v493 = vunpack.c.l.b16 %v166
  %v494 = vpack.c.b16 %v351, %v350
  %v495 = vpack.c.b16 %v353, %v352
  %v496 = vpack.c.b16 %v355, %v354
  %v497 = vpack.c.b16 %v357, %v356
  %v498 = vpack.c.b16 %v359, %v358
  %v499 = vpack.c.b16 %v361, %v360
  %v500 = vpack.c.b16 %v363, %v362
  %v501 = vpack.c.b16 %v365, %v364
  %v502 = vpack.c.b16 %v367, %v366
  %v503 = vpack.c.b16 %v369, %v368
  %v504 = vpack.c.b16 %v371, %v370
  %v505 = vpack.c.b16 %v373, %v372
  %v506 = vpack.c.b16 %v375, %v374
  %v507 = vpack.c.b16 %v377, %v376
  %v508 = vpack.c.b16 %v379, %v378
  %v509 = vpack.c.b16 %v381, %v380
  %v510 = vpack.c.b16 %v383, %v382
  %v511 = vpack.c.b16 %v385, %v384
  %v512 = vpack.c.b16 %v387, %v386
  %v513 = vpack.c.b16 %v389, %v388
  %v514 = vpack.c.b16 %v391, %v390
  %v515 = vpack.c.b16 %v393, %v392
  %v516 = vpack.c.b16 %v395, %v394
  %v517 = vpack.c.b16 %v397, %v396
  %v518 = vpack.c.b16 %v399, %v398
  %v519 = vpack.c.b16 %v401, %v400
  %v520 = vpack.c.b16 %v403, %v402
  %v521 = vpack.c.b16 %v405, %v404
  %v522 = vpack.c.b16 %v407, %v406
  %v523 = vpack.c.b16 %v409, %v408
  %v524 = vpack.c.b16 %v411, %v410
  %v525 = vpack.c.b16 %v413, %v412
  %v526 = vpack.c.b16 %v415, %v414
  %v527 = vpack.c.b16 %v417, %v416
  %v528 = vpack.c.b16 %v419, %v418
  %v529 = vpack.c.b16 %v421, %v420
  %v530 = vpack.c.b16 %v423, %v422
  %v531 = vpack.c.b16 %v425, %v424
  %v532 = vpack.c.b16 %v427, %v426
  %v533 = vpack.c.b16 %v429, %v428
  %v534 = vpack.c.b16 %v431, %v430
  %v535 = vpack.c.b16 %v433, %v432
  %v536 = vpack.c.b16 %v435, %v434
  %v537 = vpack.c.b16 %v437, %v436
  %v538 = vpack.c.b16 %v439, %v438
  %v539 = vpack.c.b16 %v441, %v440
  %v540 = vpack.c.b16 %v443, %v442
  %v541 = vpack.c.b16 %v445, %v444
  %v542 = vpack.c.b16 %v447, %v446
  %v543 = vpack.c.b16 %v449, %v448
  %v544 = vpack.c.b16 %v451, %v450
  %v545 = vpack.c.b16 %v453, %v452
  %v546 = vpack.c.b16 %v455, %v454
  %v547 = vpack.c.b16 %v457, %v456
  %v548 = vpack.c.b16 %v459, %v458
  %v549 = vpack.c.b16 %v461, %v460
  %v550 = vpack.c.b16 %v463, %v462
  %v551 = vpack.c.b16 %v465, %v464
  %v552 = vpack.c.b16 %v467, %v466
  %v553 = vpack.c.b16 %v469, %v468
  %v554 = vpack.c.b16 %v471, %v470
  %v555 = vpack.c.b16 %v473, %v472
  %v556 = vpack.c.b16 %v475, %v474
  %v557 = vpack.c.b16 %v477, %v476
  %v558 = vpack.c.b16 %v479, %v478
  %v559 = vpack.c.b16 %v481, %v480
  %v560 = vpack.c.b16 %v483, %v482
  %v561 = vpack.c.b16 %v485, %v484
  %v562 = vpack.c.b16 %v487, %v486
  %v563 = vpack.c.b16 %v489, %v488
  %v564 = vpack.c.b16 %v491, %v490
  %v565 = vpack.c.b16 %v493, %v492
  %638 = vmatprep.subr.bf16.mxu0 0
  %639 = vmatpush1.bf16.msra.mxu0 %v494
  %640 = vmatprep.subr.bf16.mxu0 0
  %641 = vmatpush1.bf16.msra.mxu0 %v495
  %642 = vmatprep.subr.bf16.mxu0 0
  %643 = vmatpush1.bf16.msra.mxu0 %v496
  %644 = vmatprep.subr.bf16.mxu0 0
  %645 = vmatpush1.bf16.msra.mxu0 %v497
  %646 = vmatprep.subr.bf16.mxu0 0
  %647 = vmatpush1.bf16.msra.mxu0 %v498
  %648 = vmatprep.subr.bf16.mxu0 0
  %649 = vmatpush1.bf16.msra.mxu0 %v499
  %650 = vmatprep.subr.bf16.mxu0 0
  %651 = vmatpush1.bf16.msra.mxu0 %v500
  %652 = vmatprep.subr.bf16.mxu0 0
  %653 = vmatpush1.bf16.msra.mxu0 %v501
  %654 = vmatprep.subr.bf16.mxu0 0
  %655 = vmatpush1.bf16.msra.mxu0 %v502
  %656 = vmatprep.subr.bf16.mxu0 0
  %657 = vmatpush1.bf16.msra.mxu0 %v503
  %658 = vmatprep.subr.bf16.mxu0 0
  %659 = vmatpush1.bf16.msra.mxu0 %v504
  %660 = vmatprep.subr.bf16.mxu0 0
  %661 = vmatpush1.bf16.msra.mxu0 %v505
  %662 = vmatprep.subr.bf16.mxu0 0
  %663 = vmatpush1.bf16.msra.mxu0 %v506
  %664 = vmatprep.subr.bf16.mxu0 0
  %665 = vmatpush1.bf16.msra.mxu0 %v507
  %666 = vmatprep.subr.bf16.mxu0 0
  %667 = vmatpush1.bf16.msra.mxu0 %v508
  %668 = vmatprep.subr.bf16.mxu0 0
  %669 = vmatpush1.bf16.msra.mxu0 %v509
  %670 = vmatprep.mubr.bf16.mxu0 %v189
  %671 = vmatmul.mubr.bf16.gmra.mrb[0].mxu0 %v188
  %v672 = vpop.f32.mrb[0].mxu0
  %v673 = vadd.f32 %v172, %v672
  %v674 = vpop.f32.mrb[0].mxu0
  %v675 = vpop.f32.mrb[0].mxu0
  %v676 = vpop.f32.mrb[0].mxu0
  %677 = vdwg.mxu0
  %678 = vmatprep.subr.bf16.mxu0 0
  %679 = vmatpush1.bf16.msra.mxu0 %v510
  %680 = vmatprep.subr.bf16.mxu0 0
  %681 = vmatpush1.bf16.msra.mxu0 %v511
  %682 = vmatprep.subr.bf16.mxu0 0
  %683 = vmatpush1.bf16.msra.mxu0 %v512
  %684 = vmatprep.subr.bf16.mxu0 0
  %685 = vmatpush1.bf16.msra.mxu0 %v513
  %686 = vmatprep.subr.bf16.mxu0 0
  %687 = vmatpush1.bf16.msra.mxu0 %v514
  %688 = vmatprep.subr.bf16.mxu0 0
  %689 = vmatpush1.bf16.msra.mxu0 %v515
  %690 = vmatprep.subr.bf16.mxu0 0
  %691 = vmatpush1.bf16.msra.mxu0 %v516
  %692 = vmatprep.subr.bf16.mxu0 0
  %693 = vmatpush1.bf16.msra.mxu0 %v517
  %694 = vmatprep.subr.bf16.mxu0 0
  %695 = vmatpush1.bf16.msra.mxu0 %v518
  %696 = vmatprep.subr.bf16.mxu0 0
  %697 = vmatpush1.bf16.msra.mxu0 %v519
  %698 = vmatprep.subr.bf16.mxu0 0
  %699 = vmatpush1.bf16.msra.mxu0 %v520
  %700 = vmatprep.subr.bf16.mxu0 0
  %701 = vmatpush1.bf16.msra.mxu0 %v521
  %702 = vmatprep.subr.bf16.mxu0 0
  %703 = vmatpush1.bf16.msra.mxu0 %v522
  %704 = vmatprep.subr.bf16.mxu0 0
  %705 = vmatpush1.bf16.msra.mxu0 %v523
  %706 = vmatprep.subr.bf16.mxu0 0
  %707 = vmatpush1.bf16.msra.mxu0 %v524
  %708 = vmatprep.subr.bf16.mxu0 0
  %709 = vmatpush1.bf16.msra.mxu0 %v525
  %710 = vmatprep.mubr.bf16.mxu0 %v191
  %711 = vmatmul.mubr.bf16.gmra.mrb[0].mxu0 %v190
  %v712 = vpop.f32.mrb[0].mxu0
  %v713 = vadd.f32 %v673, %v712
  %v714 = vpop.f32.mrb[0].mxu0
  %v715 = vpop.f32.mrb[0].mxu0
  %v716 = vpop.f32.mrb[0].mxu0
  %717 = vdwg.mxu0
  %718 = vmatprep.subr.bf16.mxu0 0
  %719 = vmatpush1.bf16.msra.mxu0 %v526
  %720 = vmatprep.subr.bf16.mxu0 0
  %721 = vmatpush1.bf16.msra.mxu0 %v527
  %722 = vmatprep.subr.bf16.mxu0 0
  %723 = vmatpush1.bf16.msra.mxu0 %v528
  %724 = vmatprep.subr.bf16.mxu0 0
  %725 = vmatpush1.bf16.msra.mxu0 %v529
  %726 = vmatprep.subr.bf16.mxu0 0
  %727 = vmatpush1.bf16.msra.mxu0 %v530
  %728 = vmatprep.subr.bf16.mxu0 0
  %729 = vmatpush1.bf16.msra.mxu0 %v531
  %730 = vmatprep.subr.bf16.mxu0 0
  %731 = vmatpush1.bf16.msra.mxu0 %v532
  %732 = vmatprep.subr.bf16.mxu0 0
  %733 = vmatpush1.bf16.msra.mxu0 %v533
  %734 = vmatprep.subr.bf16.mxu0 0
  %735 = vmatpush1.bf16.msra.mxu0 %v534
  %736 = vmatprep.subr.bf16.mxu0 0
  %737 = vmatpush1.bf16.msra.mxu0 %v535
  %738 = vmatprep.subr.bf16.mxu0 0
  %739 = vmatpush1.bf16.msra.mxu0 %v536
  %740 = vmatprep.subr.bf16.mxu0 0
  %741 = vmatpush1.bf16.msra.mxu0 %v537
  %742 = vmatprep.subr.bf16.mxu0 0
  %743 = vmatpush1.bf16.msra.mxu0 %v538
  %744 = vmatprep.subr.bf16.mxu0 0
  %745 = vmatpush1.bf16.msra.mxu0 %v539
  %746 = vmatprep.subr.bf16.mxu0 0
  %747 = vmatpush1.bf16.msra.mxu0 %v540
  %748 = vmatprep.subr.bf16.mxu0 0
  %749 = vmatpush1.bf16.msra.mxu0 %v541
  %750 = vmatprep.mubr.bf16.mxu0 %v193
  %751 = vmatmul.mubr.bf16.gmra.mrb[0].mxu0 %v192
  %v752 = vpop.f32.mrb[0].mxu0
  %v753 = vadd.f32 %v713, %v752
  %v754 = vpop.f32.mrb[0].mxu0
  %v755 = vpop.f32.mrb[0].mxu0
  %v756 = vpop.f32.mrb[0].mxu0
  %757 = vdwg.mxu0
  %758 = vmatprep.subr.bf16.mxu0 0
  %759 = vmatpush1.bf16.msra.mxu0 %v542
  %760 = vmatprep.subr.bf16.mxu0 0
  %761 = vmatpush1.bf16.msra.mxu0 %v543
  %762 = vmatprep.subr.bf16.mxu0 0
  %763 = vmatpush1.bf16.msra.mxu0 %v544
  %764 = vmatprep.subr.bf16.mxu0 0
  %765 = vmatpush1.bf16.msra.mxu0 %v545
  %766 = vmatprep.subr.bf16.mxu0 0
  %767 = vmatpush1.bf16.msra.mxu0 %v546
  %768 = vmatprep.subr.bf16.mxu0 0
  %769 = vmatpush1.bf16.msra.mxu0 %v547
  %770 = vmatprep.subr.bf16.mxu0 0
  %771 = vmatpush1.bf16.msra.mxu0 %v548
  %772 = vmatprep.subr.bf16.mxu0 0
  %773 = vmatpush1.bf16.msra.mxu0 %v549
  %774 = vmatprep.subr.bf16.mxu0 0
  %775 = vmatpush1.bf16.msra.mxu0 %v550
  %776 = vmatprep.subr.bf16.mxu0 0
  %777 = vmatpush1.bf16.msra.mxu0 %v551
  %778 = vmatprep.subr.bf16.mxu0 0
  %779 = vmatpush1.bf16.msra.mxu0 %v552
  %780 = vmatprep.subr.bf16.mxu0 0
  %781 = vmatpush1.bf16.msra.mxu0 %v553
  %782 = vmatprep.subr.bf16.mxu0 0
  %783 = vmatpush1.bf16.msra.mxu0 %v554
  %784 = vmatprep.subr.bf16.mxu0 0
  %785 = vmatpush1.bf16.msra.mxu0 %v555
  %786 = vmatprep.subr.bf16.mxu0 0
  %787 = vmatpush1.bf16.msra.mxu0 %v556
  %788 = vmatprep.subr.bf16.mxu0 0
  %789 = vmatpush1.bf16.msra.mxu0 %v557
  %790 = vmatprep.mubr.bf16.mxu0 %v195
  %791 = vmatmul.mubr.bf16.gmra.mrb[0].mxu0 %v194
  %v792 = vpop.f32.mrb[0].mxu0
  %v793 = vadd.f32 %v753, %v792
  %v794 = vpop.f32.mrb[0].mxu0
  %v795 = vpop.f32.mrb[0].mxu0
  %v796 = vpop.f32.mrb[0].mxu0
  %797 = vdwg.mxu0
  %798 = vmatprep.subr.bf16.mxu0 0
  %799 = vmatpush1.bf16.msra.mxu0 %v558
  %800 = vmatprep.subr.bf16.mxu0 0
  %801 = vmatpush1.bf16.msra.mxu0 %v559
  %802 = vmatprep.subr.bf16.mxu0 0
  %803 = vmatpush1.bf16.msra.mxu0 %v560
  %804 = vmatprep.subr.bf16.mxu0 0
  %805 = vmatpush1.bf16.msra.mxu0 %v561
  %806 = vmatprep.subr.bf16.mxu0 0
  %807 = vmatpush1.bf16.msra.mxu0 %v562
  %808 = vmatprep.subr.bf16.mxu0 0
  %809 = vmatpush1.bf16.msra.mxu0 %v563
  %810 = vmatprep.subr.bf16.mxu0 0
  %811 = vmatpush1.bf16.msra.mxu0 %v564
  %812 = vmatprep.subr.bf16.mxu0 0
  %813 = vmatpush1.bf16.msra.mxu0 %v565
  %814 = vmatprep.subr.bf16.mxu0 0
  %815 = vmatpush1.bf16.msra.mxu0 0
  %816 = vmatprep.subr.bf16.mxu0 0
  %817 = vmatpush1.bf16.msra.mxu0 0
  %818 = vmatprep.subr.bf16.mxu0 0
  %819 = vmatpush1.bf16.msra.mxu0 0
  %820 = vmatprep.subr.bf16.mxu0 0
  %821 = vmatpush1.bf16.msra.mxu0 0
  %822 = vmatprep.subr.bf16.mxu0 0
  %823 = vmatpush1.bf16.msra.mxu0 0
  %824 = vmatprep.subr.bf16.mxu0 0
  %825 = vmatpush1.bf16.msra.mxu0 0
  %826 = vmatprep.subr.bf16.mxu0 0
  %827 = vmatpush1.bf16.msra.mxu0 0
  %828 = vmatprep.subr.bf16.mxu0 0
  %829 = vmatpush1.bf16.msra.mxu0 0
  %830 = vmatprep.mubr.bf16.mxu0 0
  %831 = vmatmul.mubr.bf16.gmra.mrb[0].mxu0 %v196
  %v832 = vpop.f32.mrb[0].mxu0
  %v833 = vadd.f32 %v793, %v832
  %v834 = vpop.f32.mrb[0].mxu0
  %v835 = vpop.f32.mrb[0].mxu0
  %v836 = vpop.f32.mrb[0].mxu0
  %837 = vdwg.mxu0
  %v838 = vld [vmem:[%s3] sm:$0xf]
  %v839 = vunpack.c.l.bf16 %v838
  %v840 = vadd.f32 %v833, %v839
  %v841 = vmax.f32 %v840, 0.0
  %v842 = vpack.c.bf16 %v841, %v841
  %843 = vst [vmem:[%s4] sm:$0xf] %v842
  // Predicated region
  $region18: #{_lambda_.19} parent=0 // pred_check
    _
  $region19: #{_lambda_.19} parent=0 // pred_check_branch
    %845 = sbr.rel (0) target = $region21
  $region20: #{_lambda_.19} parent=0 // pred_region
    _
  $region21: #{_lambda_.19} parent=0 // pred_fallthru
    _
  // Predicated region
  $region22: #{_lambda_.19} parent=0 // pred_check
    _
  $region23: #{_lambda_.19} parent=0 // pred_check_branch
    %847 = sbr.rel (0) target = $region25
  $region24: #{_lambda_.19} parent=0 // pred_region
    _
  $region25: #{_lambda_.19} parent=0 // pred_fallthru
    _

// kernel: _lambda_.21
$region0: #{_lambda_.21}
  #allocation0 [shape = 'u32[]', space=smem, size = 0x4, offset = 0x4, fixed_abs, tag = 'smem constant byte address 0x4 - core index']
  #allocation1 [shape = 'u32[144,128]{1,0:T(1,128)}', space=vmem, size = 0x12000, scoped, tag = 'internal scratch']
  %s0 = inlined_call_operand.vmem [shape: bf16[2,1,128], index: 0, kind: input, shape index: {}]
  %s1 = inlined_call_operand.vmem [shape: f32[128,128], index: 1, kind: input, shape index: {}]
  %s2 = inlined_call_operand.vmem [shape: f32[1,128], index: 2, kind: input, shape index: {}]
  %s3 = inlined_call_operand.hbm [shape: f32[2,128], index: 3, kind: output, shape index: {}]
  %s4 = sld [smem:[#allocation0]]
  $region22: #{_lambda_.21} parent=0
    _
  %s6 = ssub.s32 1, %s4
  %s7 = scalar_select 0, %s6, %s4
  $region1: #{_lambda_.21} parent=0
    #allocation2 [shape = 'u8[1024]{0}', space=vmem, size = 0x400, scoped, tag = 'output window, operand 0, single buffered']
    #allocation3 [shape = 's32[1]{0}', space=sflag, size = 0x4, scoped, tag = 'scoped memory for _lambda_.21']
    %8 = vsyncpa [#allocation3], 0
    // Predicated region
    $region2: #{_lambda_.21} parent=1 // pred_check
      _
    $region3: #{_lambda_.21} parent=1 // pred_check_branch
      %10 = sbr.rel (0) target = $region5
    $region4: #{_lambda_.21} parent=1 // pred_region
      _
    $region5: #{_lambda_.21} parent=1 // pred_fallthru
      _
    // Predicated region
    $region6: #{_lambda_.21} parent=1 // pred_check
      _
    $region7: #{_lambda_.21} parent=1 // pred_check_branch
      %12 = sbr.rel (0) target = $region9
    $region8: #{_lambda_.21} parent=1 // pred_region
      _
    $region9: #{_lambda_.21} parent=1 // pred_fallthru
      _
    // Predicated region
    $region10: #{_lambda_.21} parent=1 // pred_check
      _
    $region11: #{_lambda_.21} parent=1 // pred_check_branch
      %14 = sbr.rel (0) target = $region13
    $region12: #{_lambda_.21} parent=1 // pred_region
      _
    $region13: #{_lambda_.21} parent=1 // pred_fallthru
      _
    %v15 = vld [vmem:[%s0] sm:$0x1]
    %v16 = vld [vmem:[%s0 + $0x1] sm:$0x1]
    %v17 = vunpack.c.l.bf16 %v15
    %v18 = vunpack.c.l.bf16 %v16
    %v19 = vadd.f32 %v17, 0.0
    %v20 = vadd.f32 %v18, 0.0
    %v21 = vld [vmem:[%s1] sm:$0xff]
    %v22 = vld [vmem:[%s1 + $0x8] sm:$0xff]
    %v23 = vld [vmem:[%s1 + $0x10] sm:$0xff]
    %v24 = vld [vmem:[%s1 + $0x18] sm:$0xff]
    %v25 = vld [vmem:[%s1 + $0x20] sm:$0xff]
    %v26 = vld [vmem:[%s1 + $0x28] sm:$0xff]
    %v27 = vld [vmem:[%s1 + $0x30] sm:$0xff]
    %v28 = vld [vmem:[%s1 + $0x38] sm:$0xff]
    %v29 = vld [vmem:[%s1 + $0x40] sm:$0xff]
    %v30 = vld [vmem:[%s1 + $0x48] sm:$0xff]
    %v31 = vld [vmem:[%s1 + $0x50] sm:$0xff]
    %v32 = vld [vmem:[%s1 + $0x58] sm:$0xff]
    %v33 = vld [vmem:[%s1 + $0x60] sm:$0xff]
    %v34 = vld [vmem:[%s1 + $0x68] sm:$0xff]
    %v35 = vld [vmem:[%s1 + $0x70] sm:$0xff]
    %v36 = vld [vmem:[%s1 + $0x78] sm:$0xff]
    %v37 = vld [vmem:[%s2] sm:$0x1]
    %v39 = vlaneseq
    %v40 = vshrl.u32 %v39, 7
    %v41 = vsub.s32 0, %v40
    %v42 = vrot.slane %v37, %v41
    %v46 = vlaneseq
    %v47 = vshrl.u32 %v46, 7
    %v48 = vsub.s32 0, %v47
    %v49 = vrot.slane %v19, %v48
    %v50 = vlaneseq
    %v51 = vshrl.u32 %v50, 7
    %v52 = vsub.s32 0, %v51
    %v53 = vrot.slane %v20, %v52
    %vm54 = vcmask 1041409
    %v55 = vsel %vm54, %v53, %v49
    %57 = vmatprep.subr.mxu0 0.0
    %58 = vmatpush1.msra.mxu0 %v21
    %59 = vmatprep.subr.mxu0 0.0
    %60 = vmatpush1.msra.mxu0 %v22
    %61 = vmatprep.subr.mxu0 0.0
    %62 = vmatpush1.msra.mxu0 %v23
    %63 = vmatprep.subr.mxu0 0.0
    %64 = vmatpush1.msra.mxu0 %v24
    %65 = vmatprep.subr.mxu0 0.0
    %66 = vmatpush1.msra.mxu0 %v25
    %67 = vmatprep.subr.mxu0 0.0
    %68 = vmatpush1.msra.mxu0 %v26
    %69 = vmatprep.subr.mxu0 0.0
    %70 = vmatpush1.msra.mxu0 %v27
    %71 = vmatprep.subr.mxu0 0.0
    %72 = vmatpush1.msra.mxu0 %v28
    %73 = vmatprep.subr.mxu0 0.0
    %74 = vmatpush1.msra.mxu0 %v29
    %75 = vmatprep.subr.mxu0 0.0
    %76 = vmatpush1.msra.mxu0 %v30
    %77 = vmatprep.subr.mxu0 0.0
    %78 = vmatpush1.msra.mxu0 %v31
    %79 = vmatprep.subr.mxu0 0.0
    %80 = vmatpush1.msra.mxu0 %v32
    %81 = vmatprep.subr.mxu0 0.0
    %82 = vmatpush1.msra.mxu0 %v33
    %83 = vmatprep.subr.mxu0 0.0
    %84 = vmatpush1.msra.mxu0 %v34
    %85 = vmatprep.subr.mxu0 0.0
    %86 = vmatpush1.msra.mxu0 %v35
    %87 = vmatprep.subr.mxu0 0.0
    %88 = vmatpush1.msra.mxu0 %v36
    %89 = vmatprep.subr.mxu0 0.0
    %90 = vmatpush1.msra.mxu0 0.0
    %91 = vmatprep.subr.mxu0 0.0
    %92 = vmatpush1.msra.mxu0 0.0
    %93 = vmatprep.subr.mxu0 0.0
    %94 = vmatpush1.msra.mxu0 0.0
    %95 = vmatprep.subr.mxu0 0.0
    %96 = vmatpush1.msra.mxu0 0.0
    %97 = vmatprep.subr.mxu0 0.0
    %98 = vmatpush1.msra.mxu0 0.0
    %99 = vmatprep.subr.mxu0 0.0
    %100 = vmatpush1.msra.mxu0 0.0
    %101 = vmatprep.subr.mxu0 0.0
    %102 = vmatpush1.msra.mxu0 0.0
    %103 = vmatprep.subr.mxu0 0.0
    %104 = vmatpush1.msra.mxu0 0.0
    %105 = vmatprep.subr.mxu0 0.0
    %106 = vmatpush1.msra.mxu0 0.0
    %107 = vmatprep.subr.mxu0 0.0
    %108 = vmatpush1.msra.mxu0 0.0
    %109 = vmatprep.subr.mxu0 0.0
    %110 = vmatpush1.msra.mxu0 0.0
    %111 = vmatprep.subr.mxu0 0.0
    %112 = vmatpush1.msra.mxu0 0.0
    %113 = vmatprep.subr.mxu0 0.0
    %114 = vmatpush1.msra.mxu0 0.0
    %115 = vmatprep.subr.mxu0 0.0
    %116 = vmatpush1.msra.mxu0 0.0
    %117 = vmatprep.subr.mxu0 0.0
    %118 = vmatpush1.msra.mxu0 0.0
    %119 = vmatprep.subr.mxu0 0.0
    %120 = vmatpush1.msra.mxu0 0.0
    %121 = vmatprep.mubr.f32.mxu0 0.0
    %122 = vmatmul.mubr.f32.gmra.mrb[0].mxu0 %v55
    %v123 = vpop.f32.mrb[0].mxu0
    %v124 = vadd.f32 %v42, %v123
    %v125 = vpop.f32.mrb[0].mxu0
    %126 = vdwg.mxu0
    %127 = vst [vmem:[#allocation2] sm:$0x3] %v124
    // Predicated region
    $region14: #{_lambda_.21} parent=1 // pred_check
      _
    $region15: #{_lambda_.21} parent=1 // pred_check_branch
      %129 = sbr.rel (0) target = $region17
    $region16: #{_lambda_.21} parent=1 // pred_region
      %s131 = ssub.s32 32, 32
      %132 = vsyncadd [#allocation3], %s131
      %s134 = sshll.u32 [#allocation2], 4
      %s135 = int_to_ptr.vmem [resolvable:$true] %s134
      %137 = dma.vmem_to_hbm [thread:$0]  %s135, 32, %s3, [#allocation3]
    $region17: #{_lambda_.21} parent=1 // pred_fallthru
      _
    // Predicated region
    $region18: #{_lambda_.21} parent=1 // pred_check
      _
    $region19: #{_lambda_.21} parent=1 // pred_check_branch
      %139 = sbr.rel (0) target = $region21
    $region20: #{_lambda_.21} parent=1 // pred_region
      %140 = dma.done [#allocation3], 32
    $region21: #{_lambda_.21} parent=1 // pred_fallthru
      _
    %141 = vsyncpa [#allocation3], 1

// kernel: _lambda_.20
$region0: #{_lambda_.20}
  #allocation0 [shape = 'u32[]', space=smem, size = 0x4, offset = 0x4, fixed_abs, tag = 'smem constant byte address 0x4 - core index']
  #allocation1 [shape = 'u32[144,128]{1,0:T(1,128)}', space=vmem, size = 0x12000, scoped, tag = 'internal scratch']
  %s0 = inlined_call_operand.vmem [shape: bf16[2,1152], index: 0, kind: input, shape index: {}]
  %s1 = inlined_call_operand.vmem [shape: bf16[1152,128], index: 1, kind: input, shape index: {}]
  %s2 = inlined_call_operand.vmem [shape: f32[1,128], index: 2, kind: input, shape index: {}]
  %s3 = inlined_call_operand.vmem [shape: bf16[2,128], index: 3, kind: input, shape index: {}]
  %s4 = inlined_call_operand.vmem [shape: bf16[2,128], index: 4, kind: output, shape index: {}]
  %s5 = sld [smem:[#allocation0]]
  $region26: #{_lambda_.20} parent=0
    _
  %s7 = ssub.s32 1, %s5
  %s8 = scalar_select 0, %s7, %s5
  // Predicated region
  $region2: #{_lambda_.20} parent=0 // pred_check
    _
  $region3: #{_lambda_.20} parent=0 // pred_check_branch
    %10 = sbr.rel (0) target = $region5
  $region4: #{_lambda_.20} parent=0 // pred_region
    _
  $region5: #{_lambda_.20} parent=0 // pred_fallthru
    _
  // Predicated region
  $region6: #{_lambda_.20} parent=0 // pred_check
    _
  $region7: #{_lambda_.20} parent=0 // pred_check_branch
    %12 = sbr.rel (0) target = $region9
  $region8: #{_lambda_.20} parent=0 // pred_region
    _
  $region9: #{_lambda_.20} parent=0 // pred_fallthru
    _
  // Predicated region
  $region10: #{_lambda_.20} parent=0 // pred_check
    _
  $region11: #{_lambda_.20} parent=0 // pred_check_branch
    %14 = sbr.rel (0) target = $region13
  $region12: #{_lambda_.20} parent=0 // pred_region
    _
  $region13: #{_lambda_.20} parent=0 // pred_fallthru
    _
  // Predicated region
  $region14: #{_lambda_.20} parent=0 // pred_check
    _
  $region15: #{_lambda_.20} parent=0 // pred_check_branch
    %16 = sbr.rel (0) target = $region17
  $region16: #{_lambda_.20} parent=0 // pred_region
    _
  $region17: #{_lambda_.20} parent=0 // pred_fallthru
    _
  %v18 = vld [vmem:[%s0] sm:$0xff]
  %v19 = vld [vmem:[%s0 + $0x8] sm:$0x1]
  %v20 = vld [vmem:[%s1] sm:$0xf]
  %v21 = vld [vmem:[%s1 + $0x4] sm:$0xf]
  %v22 = vld [vmem:[%s1 + $0x8] sm:$0xf]
  %v23 = vld [vmem:[%s1 + $0xc] sm:$0xf]
  %v24 = vld [vmem:[%s1 + $0x10] sm:$0xf]
  %v25 = vld [vmem:[%s1 + $0x14] sm:$0xf]
  %v26 = vld [vmem:[%s1 + $0x18] sm:$0xf]
  %v27 = vld [vmem:[%s1 + $0x1c] sm:$0xf]
  %v28 = vld [vmem:[%s1 + $0x20] sm:$0xf]
  %v29 = vld [vmem:[%s1 + $0x24] sm:$0xf]
  %v30 = vld [vmem:[%s1 + $0x28] sm:$0xf]
  %v31 = vld [vmem:[%s1 + $0x2c] sm:$0xf]
  %v32 = vld [vmem:[%s1 + $0x30] sm:$0xf]
  %v33 = vld [vmem:[%s1 + $0x34] sm:$0xf]
  %v34 = vld [vmem:[%s1 + $0x38] sm:$0xf]
  %v35 = vld [vmem:[%s1 + $0x3c] sm:$0xf]
  %v36 = vld [vmem:[%s1 + $0x40] sm:$0xf]
  %v37 = vld [vmem:[%s1 + $0x44] sm:$0xf]
  %v38 = vld [vmem:[%s1 + $0x48] sm:$0xf]
  %v39 = vld [vmem:[%s1 + $0x4c] sm:$0xf]
  %v40 = vld [vmem:[%s1 + $0x50] sm:$0xf]
  %v41 = vld [vmem:[%s1 + $0x54] sm:$0xf]
  %v42 = vld [vmem:[%s1 + $0x58] sm:$0xf]
  %v43 = vld [vmem:[%s1 + $0x5c] sm:$0xf]
  %v44 = vld [vmem:[%s1 + $0x60] sm:$0xf]
  %v45 = vld [vmem:[%s1 + $0x64] sm:$0xf]
  %v46 = vld [vmem:[%s1 + $0x68] sm:$0xf]
  %v47 = vld [vmem:[%s1 + $0x6c] sm:$0xf]
  %v48 = vld [vmem:[%s1 + $0x70] sm:$0xf]
  %v49 = vld [vmem:[%s1 + $0x74] sm:$0xf]
  %v50 = vld [vmem:[%s1 + $0x78] sm:$0xf]
  %v51 = vld [vmem:[%s1 + $0x7c] sm:$0xf]
  %v52 = vld [vmem:[%s1 + $0x80] sm:$0xf]
  %v53 = vld [vmem:[%s1 + $0x84] sm:$0xf]
  %v54 = vld [vmem:[%s1 + $0x88] sm:$0xf]
  %v55 = vld [vmem:[%s1 + $0x8c] sm:$0xf]
  %v56 = vld [vmem:[%s1 + $0x90] sm:$0xf]
  %v57 = vld [vmem:[%s1 + $0x94] sm:$0xf]
  %v58 = vld [vmem:[%s1 + $0x98] sm:$0xf]
  %v59 = vld [vmem:[%s1 + $0x9c] sm:$0xf]
  %v60 = vld [vmem:[%s1 + $0xa0] sm:$0xf]
  %v61 = vld [vmem:[%s1 + $0xa4] sm:$0xf]
  %v62 = vld [vmem:[%s1 + $0xa8] sm:$0xf]
  %v63 = vld [vmem:[%s1 + $0xac] sm:$0xf]
  %v64 = vld [vmem:[%s1 + $0xb0] sm:$0xf]
  %v65 = vld [vmem:[%s1 + $0xb4] sm:$0xf]
  %v66 = vld [vmem:[%s1 + $0xb8] sm:$0xf]
  %v67 = vld [vmem:[%s1 + $0xbc] sm:$0xf]
  %v68 = vld [vmem:[%s1 + $0xc0] sm:$0xf]
  %v69 = vld [vmem:[%s1 + $0xc4] sm:$0xf]
  %v70 = vld [vmem:[%s1 + $0xc8] sm:$0xf]
  %v71 = vld [vmem:[%s1 + $0xcc] sm:$0xf]
  %v72 = vld [vmem:[%s1 + $0xd0] sm:$0xf]
  %v73 = vld [vmem:[%s1 + $0xd4] sm:$0xf]
  %v74 = vld [vmem:[%s1 + $0xd8] sm:$0xf]
  %v75 = vld [vmem:[%s1 + $0xdc] sm:$0xf]
  %v76 = vld [vmem:[%s1 + $0xe0] sm:$0xf]
  %v77 = vld [vmem:[%s1 + $0xe4] sm:$0xf]
  %v78 = vld [vmem:[%s1 + $0xe8] sm:$0xf]
  %v79 = vld [vmem:[%s1 + $0xec] sm:$0xf]
  %v80 = vld [vmem:[%s1 + $0xf0] sm:$0xf]
  %v81 = vld [vmem:[%s1 + $0xf4] sm:$0xf]
  %v82 = vld [vmem:[%s1 + $0xf8] sm:$0xf]
  %v83 = vld [vmem:[%s1 + $0xfc] sm:$0xf]
  %v84 = vld [vmem:[%s1 + $0x100] sm:$0xf]
  %v85 = vld [vmem:[%s1 + $0x104] sm:$0xf]
  %v86 = vld [vmem:[%s1 + $0x108] sm:$0xf]
  %v87 = vld [vmem:[%s1 + $0x10c] sm:$0xf]
  %v88 = vld [vmem:[%s1 + $0x110] sm:$0xf]
  %v89 = vld [vmem:[%s1 + $0x114] sm:$0xf]
  %v90 = vld [vmem:[%s1 + $0x118] sm:$0xf]
  %v91 = vld [vmem:[%s1 + $0x11c] sm:$0xf]
  %v92 = vld [vmem:[%s1 + $0x120] sm:$0xf]
  %v93 = vld [vmem:[%s1 + $0x124] sm:$0xf]
  %v94 = vld [vmem:[%s1 + $0x128] sm:$0xf]
  %v95 = vld [vmem:[%s1 + $0x12c] sm:$0xf]
  %v96 = vld [vmem:[%s1 + $0x130] sm:$0xf]
  %v97 = vld [vmem:[%s1 + $0x134] sm:$0xf]
  %v98 = vld [vmem:[%s1 + $0x138] sm:$0xf]
  %v99 = vld [vmem:[%s1 + $0x13c] sm:$0xf]
  %v100 = vld [vmem:[%s1 + $0x140] sm:$0xf]
  %v101 = vld [vmem:[%s1 + $0x144] sm:$0xf]
  %v102 = vld [vmem:[%s1 + $0x148] sm:$0xf]
  %v103 = vld [vmem:[%s1 + $0x14c] sm:$0xf]
  %v104 = vld [vmem:[%s1 + $0x150] sm:$0xf]
  %v105 = vld [vmem:[%s1 + $0x154] sm:$0xf]
  %v106 = vld [vmem:[%s1 + $0x158] sm:$0xf]
  %v107 = vld [vmem:[%s1 + $0x15c] sm:$0xf]
  %v108 = vld [vmem:[%s1 + $0x160] sm:$0xf]
  %v109 = vld [vmem:[%s1 + $0x164] sm:$0xf]
  %v110 = vld [vmem:[%s1 + $0x168] sm:$0xf]
  %v111 = vld [vmem:[%s1 + $0x16c] sm:$0xf]
  %v112 = vld [vmem:[%s1 + $0x170] sm:$0xf]
  %v113 = vld [vmem:[%s1 + $0x174] sm:$0xf]
  %v114 = vld [vmem:[%s1 + $0x178] sm:$0xf]
  %v115 = vld [vmem:[%s1 + $0x17c] sm:$0xf]
  %v116 = vld [vmem:[%s1 + $0x180] sm:$0xf]
  %v117 = vld [vmem:[%s1 + $0x184] sm:$0xf]
  %v118 = vld [vmem:[%s1 + $0x188] sm:$0xf]
  %v119 = vld [vmem:[%s1 + $0x18c] sm:$0xf]
  %v120 = vld [vmem:[%s1 + $0x190] sm:$0xf]
  %v121 = vld [vmem:[%s1 + $0x194] sm:$0xf]
  %v122 = vld [vmem:[%s1 + $0x198] sm:$0xf]
  %v123 = vld [vmem:[%s1 + $0x19c] sm:$0xf]
  %v124 = vld [vmem:[%s1 + $0x1a0] sm:$0xf]
  %v125 = vld [vmem:[%s1 + $0x1a4] sm:$0xf]
  %v126 = vld [vmem:[%s1 + $0x1a8] sm:$0xf]
  %v127 = vld [vmem:[%s1 + $0x1ac] sm:$0xf]
  %v128 = vld [vmem:[%s1 + $0x1b0] sm:$0xf]
  %v129 = vld [vmem:[%s1 + $0x1b4] sm:$0xf]
  %v130 = vld [vmem:[%s1 + $0x1b8] sm:$0xf]
  %v131 = vld [vmem:[%s1 + $0x1bc] sm:$0xf]
  %v132 = vld [vmem:[%s1 + $0x1c0] sm:$0xf]
  %v133 = vld [vmem:[%s1 + $0x1c4] sm:$0xf]
  %v134 = vld [vmem:[%s1 + $0x1c8] sm:$0xf]
  %v135 = vld [vmem:[%s1 + $0x1cc] sm:$0xf]
  %v136 = vld [vmem:[%s1 + $0x1d0] sm:$0xf]
  %v137 = vld [vmem:[%s1 + $0x1d4] sm:$0xf]
  %v138 = vld [vmem:[%s1 + $0x1d8] sm:$0xf]
  %v139 = vld [vmem:[%s1 + $0x1dc] sm:$0xf]
  %v140 = vld [vmem:[%s1 + $0x1e0] sm:$0xf]
  %v141 = vld [vmem:[%s1 + $0x1e4] sm:$0xf]
  %v142 = vld [vmem:[%s1 + $0x1e8] sm:$0xf]
  %v143 = vld [vmem:[%s1 + $0x1ec] sm:$0xf]
  %v144 = vld [vmem:[%s1 + $0x1f0] sm:$0xf]
  %v145 = vld [vmem:[%s1 + $0x1f4] sm:$0xf]
  %v146 = vld [vmem:[%s1 + $0x1f8] sm:$0xf]
  %v147 = vld [vmem:[%s1 + $0x1fc] sm:$0xf]
  %v148 = vld [vmem:[%s1 + $0x200] sm:$0xf]
  %v149 = vld [vmem:[%s1 + $0x204] sm:$0xf]
  %v150 = vld [vmem:[%s1 + $0x208] sm:$0xf]
  %v151 = vld [vmem:[%s1 + $0x20c] sm:$0xf]
  %v152 = vld [vmem:[%s1 + $0x210] sm:$0xf]
  %v153 = vld [vmem:[%s1 + $0x214] sm:$0xf]
  %v154 = vld [vmem:[%s1 + $0x218] sm:$0xf]
  %v155 = vld [vmem:[%s1 + $0x21c] sm:$0xf]
  %v156 = vld [vmem:[%s1 + $0x220] sm:$0xf]
  %v157 = vld [vmem:[%s1 + $0x224] sm:$0xf]
  %v158 = vld [vmem:[%s1 + $0x228] sm:$0xf]
  %v159 = vld [vmem:[%s1 + $0x22c] sm:$0xf]
  %v160 = vld [vmem:[%s1 + $0x230] sm:$0xf]
  %v161 = vld [vmem:[%s1 + $0x234] sm:$0xf]
  %v162 = vld [vmem:[%s1 + $0x238] sm:$0xf]
  %v163 = vld [vmem:[%s1 + $0x23c] sm:$0xf]
  %v164 = vld [vmem:[%s2] sm:$0x1]
  %v166 = vlaneseq
  %v167 = vshrl.u32 %v166, 7
  %v168 = vsub.s32 0, %v167
  %v169 = vrot.slane %v164, %v168
  %v173 = vcombine.high %v18, %v18
  %v175 = vunpack.c.l.s4 1966171168
  %v176 = vunpack.c.0.s8 %v175
  %v177 = vlaneseq
  %v178 = vshrl.u32 %v177, 7
  %v179 = vsub.s32 %v176, %v178
  %v180 = vrot.slane %v18, %v179
  %v182 = vunpack.c.l.s4 1966171168
  %v183 = vunpack.c.0.s8 %v182
  %v184 = vlaneseq
  %v185 = vshrl.u32 %v184, 7
  %v186 = vsub.s32 %v183, %v185
  %v187 = vrot.slane %v173, %v186
  %v188 = vcombine.high %v180, %v180
  %v189 = vcombine.high %v187, %v187
  %v191 = vunpack.c.l.s4 1966171168
  %v192 = vunpack.c.0.s8 %v191
  %v193 = vlaneseq
  %v194 = vshrl.u32 %v193, 7
  %v195 = vsub.s32 %v192, %v194
  %v196 = vrot.slane %v180, %v195
  %v198 = vunpack.c.l.s4 1966171168
  %v199 = vunpack.c.0.s8 %v198
  %v200 = vlaneseq
  %v201 = vshrl.u32 %v200, 7
  %v202 = vsub.s32 %v199, %v201
  %v203 = vrot.slane %v187, %v202
  %v205 = vunpack.c.l.s4 1966171168
  %v206 = vunpack.c.0.s8 %v205
  %v207 = vlaneseq
  %v208 = vshrl.u32 %v207, 7
  %v209 = vsub.s32 %v206, %v208
  %v210 = vrot.slane %v188, %v209
  %v212 = vunpack.c.l.s4 1966171168
  %v213 = vunpack.c.0.s8 %v212
  %v214 = vlaneseq
  %v215 = vshrl.u32 %v214, 7
  %v216 = vsub.s32 %v213, %v215
  %v217 = vrot.slane %v189, %v216
  %v218 = vcombine.high %v196, %v196
  %v219 = vcombine.high %v203, %v203
  %v220 = vcombine.high %v210, %v210
  %v221 = vcombine.high %v217, %v217
  %v223 = vunpack.c.l.s4 1966171168
  %v224 = vunpack.c.0.s8 %v223
  %v225 = vlaneseq
  %v226 = vshrl.u32 %v225, 7
  %v227 = vsub.s32 %v224, %v226
  %v228 = vrot.slane %v19, %v227
  %v230 = vunpack.c.l.s4 1966171168
  %v231 = vunpack.c.0.s8 %v230
  %v232 = vlaneseq
  %v233 = vshrl.u32 %v232, 7
  %v234 = vsub.s32 %v231, %v233
  %v235 = vrot.slane %v228, %v234
  %v389 = vunpack.c.l.b16 %v20
  %v390 = vunpack.c.l.b16 %v21
  %v391 = vunpack.c.l.b16 %v22
  %v392 = vunpack.c.l.b16 %v23
  %v393 = vunpack.c.l.b16 %v24
  %v394 = vunpack.c.l.b16 %v25
  %v395 = vunpack.c.l.b16 %v26
  %v396 = vunpack.c.l.b16 %v27
  %v397 = vunpack.c.l.b16 %v28
  %v398 = vunpack.c.l.b16 %v29
  %v399 = vunpack.c.l.b16 %v30
  %v400 = vunpack.c.l.b16 %v31
  %v401 = vunpack.c.l.b16 %v32
  %v402 = vunpack.c.l.b16 %v33
  %v403 = vunpack.c.l.b16 %v34
  %v404 = vunpack.c.l.b16 %v35
  %v405 = vunpack.c.l.b16 %v36
  %v406 = vunpack.c.l.b16 %v37
  %v407 = vunpack.c.l.b16 %v38
  %v408 = vunpack.c.l.b16 %v39
  %v409 = vunpack.c.l.b16 %v40
  %v410 = vunpack.c.l.b16 %v41
  %v411 = vunpack.c.l.b16 %v42
  %v412 = vunpack.c.l.b16 %v43
  %v413 = vunpack.c.l.b16 %v44
  %v414 = vunpack.c.l.b16 %v45
  %v415 = vunpack.c.l.b16 %v46
  %v416 = vunpack.c.l.b16 %v47
  %v417 = vunpack.c.l.b16 %v48
  %v418 = vunpack.c.l.b16 %v49
  %v419 = vunpack.c.l.b16 %v50
  %v420 = vunpack.c.l.b16 %v51
  %v421 = vunpack.c.l.b16 %v52
  %v422 = vunpack.c.l.b16 %v53
  %v423 = vunpack.c.l.b16 %v54
  %v424 = vunpack.c.l.b16 %v55
  %v425 = vunpack.c.l.b16 %v56
  %v426 = vunpack.c.l.b16 %v57
  %v427 = vunpack.c.l.b16 %v58
  %v428 = vunpack.c.l.b16 %v59
  %v429 = vunpack.c.l.b16 %v60
  %v430 = vunpack.c.l.b16 %v61
  %v431 = vunpack.c.l.b16 %v62
  %v432 = vunpack.c.l.b16 %v63
  %v433 = vunpack.c.l.b16 %v64
  %v434 = vunpack.c.l.b16 %v65
  %v435 = vunpack.c.l.b16 %v66
  %v436 = vunpack.c.l.b16 %v67
  %v437 = vunpack.c.l.b16 %v68
  %v438 = vunpack.c.l.b16 %v69
  %v439 = vunpack.c.l.b16 %v70
  %v440 = vunpack.c.l.b16 %v71
  %v441 = vunpack.c.l.b16 %v72
  %v442 = vunpack.c.l.b16 %v73
  %v443 = vunpack.c.l.b16 %v74
  %v444 = vunpack.c.l.b16 %v75
  %v445 = vunpack.c.l.b16 %v76
  %v446 = vunpack.c.l.b16 %v77
  %v447 = vunpack.c.l.b16 %v78
  %v448 = vunpack.c.l.b16 %v79
  %v449 = vunpack.c.l.b16 %v80
  %v450 = vunpack.c.l.b16 %v81
  %v451 = vunpack.c.l.b16 %v82
  %v452 = vunpack.c.l.b16 %v83
  %v453 = vunpack.c.l.b16 %v84
  %v454 = vunpack.c.l.b16 %v85
  %v455 = vunpack.c.l.b16 %v86
  %v456 = vunpack.c.l.b16 %v87
  %v457 = vunpack.c.l.b16 %v88
  %v458 = vunpack.c.l.b16 %v89
  %v459 = vunpack.c.l.b16 %v90
  %v460 = vunpack.c.l.b16 %v91
  %v461 = vunpack.c.l.b16 %v92
  %v462 = vunpack.c.l.b16 %v93
  %v463 = vunpack.c.l.b16 %v94
  %v464 = vunpack.c.l.b16 %v95
  %v465 = vunpack.c.l.b16 %v96
  %v466 = vunpack.c.l.b16 %v97
  %v467 = vunpack.c.l.b16 %v98
  %v468 = vunpack.c.l.b16 %v99
  %v469 = vunpack.c.l.b16 %v100
  %v470 = vunpack.c.l.b16 %v101
  %v471 = vunpack.c.l.b16 %v102
  %v472 = vunpack.c.l.b16 %v103
  %v473 = vunpack.c.l.b16 %v104
  %v474 = vunpack.c.l.b16 %v105
  %v475 = vunpack.c.l.b16 %v106
  %v476 = vunpack.c.l.b16 %v107
  %v477 = vunpack.c.l.b16 %v108
  %v478 = vunpack.c.l.b16 %v109
  %v479 = vunpack.c.l.b16 %v110
  %v480 = vunpack.c.l.b16 %v111
  %v481 = vunpack.c.l.b16 %v112
  %v482 = vunpack.c.l.b16 %v113
  %v483 = vunpack.c.l.b16 %v114
  %v484 = vunpack.c.l.b16 %v115
  %v485 = vunpack.c.l.b16 %v116
  %v486 = vunpack.c.l.b16 %v117
  %v487 = vunpack.c.l.b16 %v118
  %v488 = vunpack.c.l.b16 %v119
  %v489 = vunpack.c.l.b16 %v120
  %v490 = vunpack.c.l.b16 %v121
  %v491 = vunpack.c.l.b16 %v122
  %v492 = vunpack.c.l.b16 %v123
  %v493 = vunpack.c.l.b16 %v124
  %v494 = vunpack.c.l.b16 %v125
  %v495 = vunpack.c.l.b16 %v126
  %v496 = vunpack.c.l.b16 %v127
  %v497 = vunpack.c.l.b16 %v128
  %v498 = vunpack.c.l.b16 %v129
  %v499 = vunpack.c.l.b16 %v130
  %v500 = vunpack.c.l.b16 %v131
  %v501 = vunpack.c.l.b16 %v132
  %v502 = vunpack.c.l.b16 %v133
  %v503 = vunpack.c.l.b16 %v134
  %v504 = vunpack.c.l.b16 %v135
  %v505 = vunpack.c.l.b16 %v136
  %v506 = vunpack.c.l.b16 %v137
  %v507 = vunpack.c.l.b16 %v138
  %v508 = vunpack.c.l.b16 %v139
  %v509 = vunpack.c.l.b16 %v140
  %v510 = vunpack.c.l.b16 %v141
  %v511 = vunpack.c.l.b16 %v142
  %v512 = vunpack.c.l.b16 %v143
  %v513 = vunpack.c.l.b16 %v144
  %v514 = vunpack.c.l.b16 %v145
  %v515 = vunpack.c.l.b16 %v146
  %v516 = vunpack.c.l.b16 %v147
  %v517 = vunpack.c.l.b16 %v148
  %v518 = vunpack.c.l.b16 %v149
  %v519 = vunpack.c.l.b16 %v150
  %v520 = vunpack.c.l.b16 %v151
  %v521 = vunpack.c.l.b16 %v152
  %v522 = vunpack.c.l.b16 %v153
  %v523 = vunpack.c.l.b16 %v154
  %v524 = vunpack.c.l.b16 %v155
  %v525 = vunpack.c.l.b16 %v156
  %v526 = vunpack.c.l.b16 %v157
  %v527 = vunpack.c.l.b16 %v158
  %v528 = vunpack.c.l.b16 %v159
  %v529 = vunpack.c.l.b16 %v160
  %v530 = vunpack.c.l.b16 %v161
  %v531 = vunpack.c.l.b16 %v162
  %v532 = vunpack.c.l.b16 %v163
  %v533 = vpack.c.b16 %v390, %v389
  %v534 = vpack.c.b16 %v392, %v391
  %v535 = vpack.c.b16 %v394, %v393
  %v536 = vpack.c.b16 %v396, %v395
  %v537 = vpack.c.b16 %v398, %v397
  %v538 = vpack.c.b16 %v400, %v399
  %v539 = vpack.c.b16 %v402, %v401
  %v540 = vpack.c.b16 %v404, %v403
  %v541 = vpack.c.b16 %v406, %v405
  %v542 = vpack.c.b16 %v408, %v407
  %v543 = vpack.c.b16 %v410, %v409
  %v544 = vpack.c.b16 %v412, %v411
  %v545 = vpack.c.b16 %v414, %v413
  %v546 = vpack.c.b16 %v416, %v415
  %v547 = vpack.c.b16 %v418, %v417
  %v548 = vpack.c.b16 %v420, %v419
  %v549 = vpack.c.b16 %v422, %v421
  %v550 = vpack.c.b16 %v424, %v423
  %v551 = vpack.c.b16 %v426, %v425
  %v552 = vpack.c.b16 %v428, %v427
  %v553 = vpack.c.b16 %v430, %v429
  %v554 = vpack.c.b16 %v432, %v431
  %v555 = vpack.c.b16 %v434, %v433
  %v556 = vpack.c.b16 %v436, %v435
  %v557 = vpack.c.b16 %v438, %v437
  %v558 = vpack.c.b16 %v440, %v439
  %v559 = vpack.c.b16 %v442, %v441
  %v560 = vpack.c.b16 %v444, %v443
  %v561 = vpack.c.b16 %v446, %v445
  %v562 = vpack.c.b16 %v448, %v447
  %v563 = vpack.c.b16 %v450, %v449
  %v564 = vpack.c.b16 %v452, %v451
  %v565 = vpack.c.b16 %v454, %v453
  %v566 = vpack.c.b16 %v456, %v455
  %v567 = vpack.c.b16 %v458, %v457
  %v568 = vpack.c.b16 %v460, %v459
  %v569 = vpack.c.b16 %v462, %v461
  %v570 = vpack.c.b16 %v464, %v463
  %v571 = vpack.c.b16 %v466, %v465
  %v572 = vpack.c.b16 %v468, %v467
  %v573 = vpack.c.b16 %v470, %v469
  %v574 = vpack.c.b16 %v472, %v471
  %v575 = vpack.c.b16 %v474, %v473
  %v576 = vpack.c.b16 %v476, %v475
  %v577 = vpack.c.b16 %v478, %v477
  %v578 = vpack.c.b16 %v480, %v479
  %v579 = vpack.c.b16 %v482, %v481
  %v580 = vpack.c.b16 %v484, %v483
  %v581 = vpack.c.b16 %v486, %v485
  %v582 = vpack.c.b16 %v488, %v487
  %v583 = vpack.c.b16 %v490, %v489
  %v584 = vpack.c.b16 %v492, %v491
  %v585 = vpack.c.b16 %v494, %v493
  %v586 = vpack.c.b16 %v496, %v495
  %v587 = vpack.c.b16 %v498, %v497
  %v588 = vpack.c.b16 %v500, %v499
  %v589 = vpack.c.b16 %v502, %v501
  %v590 = vpack.c.b16 %v504, %v503
  %v591 = vpack.c.b16 %v506, %v505
  %v592 = vpack.c.b16 %v508, %v507
  %v593 = vpack.c.b16 %v510, %v509
  %v594 = vpack.c.b16 %v512, %v511
  %v595 = vpack.c.b16 %v514, %v513
  %v596 = vpack.c.b16 %v516, %v515
  %v597 = vpack.c.b16 %v518, %v517
  %v598 = vpack.c.b16 %v520, %v519
  %v599 = vpack.c.b16 %v522, %v521
  %v600 = vpack.c.b16 %v524, %v523
  %v601 = vpack.c.b16 %v526, %v525
  %v602 = vpack.c.b16 %v528, %v527
  %v603 = vpack.c.b16 %v530, %v529
  %v604 = vpack.c.b16 %v532, %v531
  %677 = vmatprep.subr.bf16.mxu0 0
  %678 = vmatpush1.bf16.msra.mxu0 %v533
  %679 = vmatprep.subr.bf16.mxu0 0
  %680 = vmatpush1.bf16.msra.mxu0 %v534
  %681 = vmatprep.subr.bf16.mxu0 0
  %682 = vmatpush1.bf16.msra.mxu0 %v535
  %683 = vmatprep.subr.bf16.mxu0 0
  %684 = vmatpush1.bf16.msra.mxu0 %v536
  %685 = vmatprep.subr.bf16.mxu0 0
  %686 = vmatpush1.bf16.msra.mxu0 %v537
  %687 = vmatprep.subr.bf16.mxu0 0
  %688 = vmatpush1.bf16.msra.mxu0 %v538
  %689 = vmatprep.subr.bf16.mxu0 0
  %690 = vmatpush1.bf16.msra.mxu0 %v539
  %691 = vmatprep.subr.bf16.mxu0 0
  %692 = vmatpush1.bf16.msra.mxu0 %v540
  %693 = vmatprep.subr.bf16.mxu0 0
  %694 = vmatpush1.bf16.msra.mxu0 %v541
  %695 = vmatprep.subr.bf16.mxu0 0
  %696 = vmatpush1.bf16.msra.mxu0 %v542
  %697 = vmatprep.subr.bf16.mxu0 0
  %698 = vmatpush1.bf16.msra.mxu0 %v543
  %699 = vmatprep.subr.bf16.mxu0 0
  %700 = vmatpush1.bf16.msra.mxu0 %v544
  %701 = vmatprep.subr.bf16.mxu0 0
  %702 = vmatpush1.bf16.msra.mxu0 %v545
  %703 = vmatprep.subr.bf16.mxu0 0
  %704 = vmatpush1.bf16.msra.mxu0 %v546
  %705 = vmatprep.subr.bf16.mxu0 0
  %706 = vmatpush1.bf16.msra.mxu0 %v547
  %707 = vmatprep.subr.bf16.mxu0 0
  %708 = vmatpush1.bf16.msra.mxu0 %v548
  %709 = vmatprep.mubr.bf16.mxu0 %v210
  %710 = vmatmul.mubr.bf16.gmra.mrb[0].mxu0 %v196
  %v711 = vpop.f32.mrb[0].mxu0
  %v712 = vadd.f32 %v169, %v711
  %v713 = vpop.f32.mrb[0].mxu0
  %v714 = vpop.f32.mrb[0].mxu0
  %v715 = vpop.f32.mrb[0].mxu0
  %716 = vdwg.mxu0
  %717 = vmatprep.subr.bf16.mxu0 0
  %718 = vmatpush1.bf16.msra.mxu0 %v549
  %719 = vmatprep.subr.bf16.mxu0 0
  %720 = vmatpush1.bf16.msra.mxu0 %v550
  %721 = vmatprep.subr.bf16.mxu0 0
  %722 = vmatpush1.bf16.msra.mxu0 %v551
  %723 = vmatprep.subr.bf16.mxu0 0
  %724 = vmatpush1.bf16.msra.mxu0 %v552
  %725 = vmatprep.subr.bf16.mxu0 0
  %726 = vmatpush1.bf16.msra.mxu0 %v553
  %727 = vmatprep.subr.bf16.mxu0 0
  %728 = vmatpush1.bf16.msra.mxu0 %v554
  %729 = vmatprep.subr.bf16.mxu0 0
  %730 = vmatpush1.bf16.msra.mxu0 %v555
  %731 = vmatprep.subr.bf16.mxu0 0
  %732 = vmatpush1.bf16.msra.mxu0 %v556
  %733 = vmatprep.subr.bf16.mxu0 0
  %734 = vmatpush1.bf16.msra.mxu0 %v557
  %735 = vmatprep.subr.bf16.mxu0 0
  %736 = vmatpush1.bf16.msra.mxu0 %v558
  %737 = vmatprep.subr.bf16.mxu0 0
  %738 = vmatpush1.bf16.msra.mxu0 %v559
  %739 = vmatprep.subr.bf16.mxu0 0
  %740 = vmatpush1.bf16.msra.mxu0 %v560
  %741 = vmatprep.subr.bf16.mxu0 0
  %742 = vmatpush1.bf16.msra.mxu0 %v561
  %743 = vmatprep.subr.bf16.mxu0 0
  %744 = vmatpush1.bf16.msra.mxu0 %v562
  %745 = vmatprep.subr.bf16.mxu0 0
  %746 = vmatpush1.bf16.msra.mxu0 %v563
  %747 = vmatprep.subr.bf16.mxu0 0
  %748 = vmatpush1.bf16.msra.mxu0 %v564
  %749 = vmatprep.mubr.bf16.mxu0 %v220
  %750 = vmatmul.mubr.bf16.gmra.mrb[0].mxu0 %v218
  %v751 = vpop.f32.mrb[0].mxu0
  %v752 = vadd.f32 %v712, %v751
  %v753 = vpop.f32.mrb[0].mxu0
  %v754 = vpop.f32.mrb[0].mxu0
  %v755 = vpop.f32.mrb[0].mxu0
  %756 = vdwg.mxu0
  %757 = vmatprep.subr.bf16.mxu0 0
  %758 = vmatpush1.bf16.msra.mxu0 %v565
  %759 = vmatprep.subr.bf16.mxu0 0
  %760 = vmatpush1.bf16.msra.mxu0 %v566
  %761 = vmatprep.subr.bf16.mxu0 0
  %762 = vmatpush1.bf16.msra.mxu0 %v567
  %763 = vmatprep.subr.bf16.mxu0 0
  %764 = vmatpush1.bf16.msra.mxu0 %v568
  %765 = vmatprep.subr.bf16.mxu0 0
  %766 = vmatpush1.bf16.msra.mxu0 %v569
  %767 = vmatprep.subr.bf16.mxu0 0
  %768 = vmatpush1.bf16.msra.mxu0 %v570
  %769 = vmatprep.subr.bf16.mxu0 0
  %770 = vmatpush1.bf16.msra.mxu0 %v571
  %771 = vmatprep.subr.bf16.mxu0 0
  %772 = vmatpush1.bf16.msra.mxu0 %v572
  %773 = vmatprep.subr.bf16.mxu0 0
  %774 = vmatpush1.bf16.msra.mxu0 %v573
  %775 = vmatprep.subr.bf16.mxu0 0
  %776 = vmatpush1.bf16.msra.mxu0 %v574
  %777 = vmatprep.subr.bf16.mxu0 0
  %778 = vmatpush1.bf16.msra.mxu0 %v575
  %779 = vmatprep.subr.bf16.mxu0 0
  %780 = vmatpush1.bf16.msra.mxu0 %v576
  %781 = vmatprep.subr.bf16.mxu0 0
  %782 = vmatpush1.bf16.msra.mxu0 %v577
  %783 = vmatprep.subr.bf16.mxu0 0
  %784 = vmatpush1.bf16.msra.mxu0 %v578
  %785 = vmatprep.subr.bf16.mxu0 0
  %786 = vmatpush1.bf16.msra.mxu0 %v579
  %787 = vmatprep.subr.bf16.mxu0 0
  %788 = vmatpush1.bf16.msra.mxu0 %v580
  %789 = vmatprep.mubr.bf16.mxu0 %v217
  %790 = vmatmul.mubr.bf16.gmra.mrb[0].mxu0 %v203
  %v791 = vpop.f32.mrb[0].mxu0
  %v792 = vadd.f32 %v752, %v791
  %v793 = vpop.f32.mrb[0].mxu0
  %v794 = vpop.f32.mrb[0].mxu0
  %v795 = vpop.f32.mrb[0].mxu0
  %796 = vdwg.mxu0
  %797 = vmatprep.subr.bf16.mxu0 0
  %798 = vmatpush1.bf16.msra.mxu0 %v581
  %799 = vmatprep.subr.bf16.mxu0 0
  %800 = vmatpush1.bf16.msra.mxu0 %v582
  %801 = vmatprep.subr.bf16.mxu0 0
  %802 = vmatpush1.bf16.msra.mxu0 %v583
  %803 = vmatprep.subr.bf16.mxu0 0
  %804 = vmatpush1.bf16.msra.mxu0 %v584
  %805 = vmatprep.subr.bf16.mxu0 0
  %806 = vmatpush1.bf16.msra.mxu0 %v585
  %807 = vmatprep.subr.bf16.mxu0 0
  %808 = vmatpush1.bf16.msra.mxu0 %v586
  %809 = vmatprep.subr.bf16.mxu0 0
  %810 = vmatpush1.bf16.msra.mxu0 %v587
  %811 = vmatprep.subr.bf16.mxu0 0
  %812 = vmatpush1.bf16.msra.mxu0 %v588
  %813 = vmatprep.subr.bf16.mxu0 0
  %814 = vmatpush1.bf16.msra.mxu0 %v589
  %815 = vmatprep.subr.bf16.mxu0 0
  %816 = vmatpush1.bf16.msra.mxu0 %v590
  %817 = vmatprep.subr.bf16.mxu0 0
  %818 = vmatpush1.bf16.msra.mxu0 %v591
  %819 = vmatprep.subr.bf16.mxu0 0
  %820 = vmatpush1.bf16.msra.mxu0 %v592
  %821 = vmatprep.subr.bf16.mxu0 0
  %822 = vmatpush1.bf16.msra.mxu0 %v593
  %823 = vmatprep.subr.bf16.mxu0 0
  %824 = vmatpush1.bf16.msra.mxu0 %v594
  %825 = vmatprep.subr.bf16.mxu0 0
  %826 = vmatpush1.bf16.msra.mxu0 %v595
  %827 = vmatprep.subr.bf16.mxu0 0
  %828 = vmatpush1.bf16.msra.mxu0 %v596
  %829 = vmatprep.mubr.bf16.mxu0 %v221
  %830 = vmatmul.mubr.bf16.gmra.mrb[0].mxu0 %v219
  %v831 = vpop.f32.mrb[0].mxu0
  %v832 = vadd.f32 %v792, %v831
  %v833 = vpop.f32.mrb[0].mxu0
  %v834 = vpop.f32.mrb[0].mxu0
  %v835 = vpop.f32.mrb[0].mxu0
  %836 = vdwg.mxu0
  %837 = vmatprep.subr.bf16.mxu0 0
  %838 = vmatpush1.bf16.msra.mxu0 %v597
  %839 = vmatprep.subr.bf16.mxu0 0
  %840 = vmatpush1.bf16.msra.mxu0 %v598
  %841 = vmatprep.subr.bf16.mxu0 0
  %842 = vmatpush1.bf16.msra.mxu0 %v599
  %843 = vmatprep.subr.bf16.mxu0 0
  %844 = vmatpush1.bf16.msra.mxu0 %v600
  %845 = vmatprep.subr.bf16.mxu0 0
  %846 = vmatpush1.bf16.msra.mxu0 %v601
  %847 = vmatprep.subr.bf16.mxu0 0
  %848 = vmatpush1.bf16.msra.mxu0 %v602
  %849 = vmatprep.subr.bf16.mxu0 0
  %850 = vmatpush1.bf16.msra.mxu0 %v603
  %851 = vmatprep.subr.bf16.mxu0 0
  %852 = vmatpush1.bf16.msra.mxu0 %v604
  %853 = vmatprep.subr.bf16.mxu0 0
  %854 = vmatpush1.bf16.msra.mxu0 0
  %855 = vmatprep.subr.bf16.mxu0 0
  %856 = vmatpush1.bf16.msra.mxu0 0
  %857 = vmatprep.subr.bf16.mxu0 0
  %858 = vmatpush1.bf16.msra.mxu0 0
  %859 = vmatprep.subr.bf16.mxu0 0
  %860 = vmatpush1.bf16.msra.mxu0 0
  %861 = vmatprep.subr.bf16.mxu0 0
  %862 = vmatpush1.bf16.msra.mxu0 0
  %863 = vmatprep.subr.bf16.mxu0 0
  %864 = vmatpush1.bf16.msra.mxu0 0
  %865 = vmatprep.subr.bf16.mxu0 0
  %866 = vmatpush1.bf16.msra.mxu0 0
  %867 = vmatprep.subr.bf16.mxu0 0
  %868 = vmatpush1.bf16.msra.mxu0 0
  %869 = vmatprep.mubr.bf16.mxu0 0
  %870 = vmatmul.mubr.bf16.gmra.mrb[0].mxu0 %v235
  %v871 = vpop.f32.mrb[0].mxu0
  %v872 = vadd.f32 %v832, %v871
  %v873 = vpop.f32.mrb[0].mxu0
  %v874 = vpop.f32.mrb[0].mxu0
  %v875 = vpop.f32.mrb[0].mxu0
  %876 = vdwg.mxu0
  %v877 = vld [vmem:[%s3] sm:$0x1]
  %v878 = vunpack.c.l.bf16 %v877
  %v879 = vadd.f32 %v872, %v878
  %v880 = vmax.f32 %v879, 0.0
  %v881 = vpack.c.bf16 %v880, %v880
  %882 = vst [vmem:[%s4] sm:$0x1] %v881
  // Predicated region
  $region18: #{_lambda_.20} parent=0 // pred_check
    _
  $region19: #{_lambda_.20} parent=0 // pred_check_branch
    %884 = sbr.rel (0) target = $region21
  $region20: #{_lambda_.20} parent=0 // pred_region
    _
  $region21: #{_lambda_.20} parent=0 // pred_fallthru
    _
  // Predicated region
  $region22: #{_lambda_.20} parent=0 // pred_check
    _
  $region23: #{_lambda_.20} parent=0 // pred_check_branch
    %886 = sbr.rel (0) target = $region25
  $region24: #{_lambda_.20} parent=0 // pred_region
    _
  $region25: #{_lambda_.20} parent=0 // pred_fallthru
    _

</llo_original>
